<compile_context>
chip_gen: v6e
topology: v6e:2x2x1
jax: 0.10.0
libtpu: 0.0.40
codegen_flags: <defaults>
</compile_context>

<pallas_src>
import functools

import jax
import jax.numpy as jnp
import numpy as np
from jax.experimental import pallas as pl
from jax.experimental.pallas import tpu as pltpu


# ----------------------------------------------------------------------------
# Tiling policy (fixed caps + explicit scoped-VMEM limit; safe on v5e/v6e/v7x)
# ----------------------------------------------------------------------------
_TM_CAP = 1024          # K is short in this net -> big M tiles amortize grid cost
_TN_CAP = 512
_K_FULL_MAX = 2048      # K <= this -> single full-extent K block (no K padding)
_TK = 512               # K tile when K > _K_FULL_MAX
# Worst case per-stage footprint with these caps (double-buffered bf16 A/B/out,
# f32 acc) is ~16 MiB, so a 32 MiB scoped limit has 2x headroom and is within
# v7x's 64 MiB physical VMEM while raising v5e's 16 MiB default.
_VMEM_LIMIT = 32 * 1024 * 1024


def _round_up(x, m):
    return (x + m - 1) // m * m


def _pad_tile(d, cap, align):
    """(padded extent, tile size) for one dim; the tile divides the padded extent."""
    dp = _round_up(max(d, align), align)
    if dp <= cap:
        return dp, dp
    return _round_up(d, cap), cap


def _k_plan(K):
    """(padded K, K tile).  Small K -> full-extent block, no padding."""
    if K <= _K_FULL_MAX:
        return K, K
    return _round_up(K, _TK), _TK


# ----------------------------------------------------------------------------
# Pallas kernel: tiled bf16 matmul with fused pre-activation and epilogue
# ----------------------------------------------------------------------------
def _make_mm_kernel(pre_act, post_act, single_k):
    """out = post_act((pre_act(A) @ B) * scale + shift), accumulated in f32."""

    def _pre(a):
        if pre_act == "leaky_relu":
            return jnp.where(a >= 0, a, a * 0.2)
        if pre_act == "relu":
            return jnp.maximum(a, 0)
        return a

    def kernel(a_ref, b_ref, scale_ref, shift_ref, o_ref, *acc_refs):
        def _epi(y):
            y = y * scale_ref[...] + shift_ref[...]
            if post_act == "tanh":
                y = jnp.tanh(y)
            return y.astype(o_ref.dtype)

        if single_k:
            o_ref[...] = _epi(jnp.dot(_pre(a_ref[...]), b_ref[...],
                                      preferred_element_type=jnp.float32))
            return

        acc_ref = acc_refs[0]
        k = pl.program_id(2)

        @pl.when(k == 0)
        def _():
            acc_ref[...] = jnp.zeros_like(acc_ref)

        acc_ref[...] += jnp.dot(_pre(a_ref[...]), b_ref[...],
                                preferred_element_type=jnp.float32)

        @pl.when(k == pl.num_programs(2) - 1)
        def _():
            o_ref[...] = _epi(acc_ref[...])

    return kernel


def fused_matmul(a, b_pad, scale_pad, shift_pad, M, K, N, pre_act, post_act,
                 out_dtype=jnp.bfloat16):
    """(M,K) activations @ pre-padded bf16 weight (Kp,Np), 3-D tiled grid.

    Padding is safe: pre_act(0)=0, padded weight rows/cols and scale/shift are
    all zero, and padded output rows/cols are sliced off afterwards.
    """
    Mp, tm = _pad_tile(M, _TM_CAP, 16)     # 16: bf16 sublane packing
    Kp, tk = _k_plan(K)
    Np, tn = _pad_tile(N, _TN_CAP, 128)
    assert b_pad.shape == (Kp, Np), (b_pad.shape, (Kp, Np))

    a = a.astype(jnp.bfloat16)
    if (M, K) != (Mp, Kp):
        a = jnp.pad(a, ((0, Mp - M), (0, Kp - K)))

    grid = (Mp // tm, Np // tn, Kp // tk)
    single_k = grid[2] == 1
    out = pl.pallas_call(
        _make_mm_kernel(pre_act, post_act, single_k),
        out_shape=jax.ShapeDtypeStruct((Mp, Np), out_dtype),
        grid=grid,
        in_specs=[
            pl.BlockSpec((tm, tk), lambda i, j, k: (i, k)),
            pl.BlockSpec((tk, tn), lambda i, j, k: (k, j)),
            pl.BlockSpec((1, tn), lambda i, j, k: (0, j)),
            pl.BlockSpec((1, tn), lambda i, j, k: (0, j)),
        ],
        out_specs=pl.BlockSpec((tm, tn), lambda i, j, k: (i, j)),
        scratch_shapes=([] if single_k
                        else [pltpu.VMEM((tm, tn), jnp.float32)]),
        compiler_params=pltpu.CompilerParams(
            dimension_semantics=("parallel", "parallel", "arbitrary"),
            vmem_limit_bytes=_VMEM_LIMIT),
    )(a, b_pad, scale_pad, shift_pad)

    if (Mp, Np) != (M, N):
        out = out[:M, :N]
    return out


# ----------------------------------------------------------------------------
# Weight preparation (done once at init: reshape, pad, cast to bf16)
# ----------------------------------------------------------------------------
_SHIFTS = (-1, 0, 1)
# ConvTranspose2d(4,2,1): output-row parity -> {input row shift: kernel row kh}.
_ROW_TAPS = ({0: 1, -1: 3}, {1: 0, 0: 2})


def _pad_scale_shift(scale, shift, Np):
    N = scale.shape[0]
    sc = jnp.pad(scale.reshape(1, N).astype(jnp.float32), ((0, 0), (0, Np - N)))
    sh = jnp.pad(shift.reshape(1, N).astype(jnp.float32), ((0, 0), (0, Np - N)))
    return sc, sh


def _prep_down(w):
    """Conv2d weight (Cout, Cin, 4, 4) -> padded bf16 (16*Cin, Cout) operand."""
    Cout, Cin = w.shape[0], w.shape[1]
    K, N = 16 * Cin, Cout
    Kp, _ = _k_plan(K)
    Np, _ = _pad_tile(N, _TN_CAP, 128)
    b = jnp.transpose(w, (2, 3, 1, 0)).reshape(K, N)        # rows: (kh, kw, cin)
    b = jnp.pad(b, ((0, Kp - K), (0, Np - N))).astype(jnp.bfloat16)
    sc, sh = _pad_scale_shift(jnp.ones((N,), jnp.float32),
                              jnp.zeros((N,), jnp.float32), Np)
    return {"b": b, "scale": sc, "shift": sh, "cin": Cin, "cout": Cout}


def _prep_up(w, bias):
    """ConvTranspose2d weight (Cin, Cout, 4, 4) -> ONE (9*Cin, 4*Cout) operand.

    The 4 output-pixel parities (ph, pw) are packed along N (>=256 lanes for
    the inner layers, filling the 256-wide v6e/v7x MXU); K holds the 9 input
    shift combos shared by all parities.  Unused (shift, parity) pairs are
    zero weights (the net is HBM-bound, the extra MXU work is free).
    """
    wn = np.asarray(w, dtype=np.float32)
    Cin, Cout = wn.shape[0], wn.shape[1]
    K, N = 9 * Cin, 4 * Cout
    Kp, _ = _k_plan(K)
    Np, _ = _pad_tile(N, _TN_CAP, 128)
    bmat = np.zeros((9, Cin, 2, 2, Cout), np.float32)
    for si, sh_ in enumerate(_SHIFTS):
        for sj, sw in enumerate(_SHIFTS):
            for ph in (0, 1):
                for pw in (0, 1):
                    kh = _ROW_TAPS[ph].get(sh_)
                    kw = _ROW_TAPS[pw].get(sw)
                    if kh is not None and kw is not None:
                        bmat[si * 3 + sj, :, ph, pw, :] = wn[:, :, kh, kw]
    b = jnp.asarray(bmat.reshape(K, N))
    b = jnp.pad(b, ((0, Kp - K), (0, Np - N))).astype(jnp.bfloat16)
    shift = (jnp.tile(bias, 4) if bias is not None
             else jnp.zeros((N,), jnp.float32))
    sc, sh = _pad_scale_shift(jnp.ones((N,), jnp.float32), shift, Np)
    return {"b": b, "scale": sc, "shift": sh, "cin": Cin, "cout": Cout}


# ----------------------------------------------------------------------------
# Activations carry a deferred per-channel affine: value = data * scale + shift
# ----------------------------------------------------------------------------
def _resolve(act):
    """Apply the pending per-channel affine (deferred BatchNorm), cast bf16.

    The affine fuses into the tap-gather that follows, so deferred BN costs no
    extra HBM pass.
    """
    x, s, b = act
    if s is not None:
        x = x.astype(jnp.float32) * s + b
    return x.astype(jnp.bfloat16)


def _concat_act(a, b):
    """Channel-concat two activations, concatenating their pending affines."""
    xa, sa, ba = a
    xb, sb, bb = b
    # TODO(synk): the concatenated data could stay unmaterialized by giving the
    # up-conv matmul a 2-long "source" grid axis whose A/B index_maps pull the
    # x- and h- K ranges into the same accumulator tile.
    x = jnp.concatenate([xa.astype(jnp.bfloat16), xb.astype(jnp.bfloat16)], -1)
    if sa is None and sb is None:
        return (x, None, None)
    ca, cb = xa.shape[-1], xb.shape[-1]
    if sa is None:
        sa, ba = jnp.ones((ca,), jnp.float32), jnp.zeros((ca,), jnp.float32)
    if sb is None:
        sb, bb = jnp.ones((cb,), jnp.float32), jnp.zeros((cb,), jnp.float32)
    return (x, jnp.concatenate([sa, sb]), jnp.concatenate([ba, bb]))


def _bn_pending(h, gamma, beta, eps=1e-5):
    """Training-mode BatchNorm2d as a deferred per-channel (scale, shift).

    Stats are one fused read pass over the raw conv output; the normalization
    itself is folded into the next consumer (no normalized tensor written).
    """
    # TODO(synk): per-channel sum / sum-of-squares could be emitted as extra
    # per-M-tile outputs of the matmul kernel to remove this read pass too.
    hf = h.astype(jnp.float32)
    mean = jnp.mean(hf, axis=(0, 1, 2))
    var = jnp.maximum(jnp.mean(hf * hf, axis=(0, 1, 2)) - mean * mean, 0.0)
    scale = gamma * jax.lax.rsqrt(var + eps)
    return scale, beta - mean * scale


# ----------------------------------------------------------------------------
# Conv / ConvTranspose wrappers (NHWC internal layout)
# ----------------------------------------------------------------------------
def conv4x4_down(act, lw, pre_act):
    """Conv2d(k=4, s=2, p=1, bias=False) on NHWC; LeakyReLU fused in-kernel."""
    # TODO(synk): im2col still materializes a replicated bf16 patch matrix in
    # HBM; in-kernel tap accumulation (K grid axis over the 16 taps reading
    # stride-2 windows) would read the input only once.
    x = _resolve(act)
    N_, H, W, Cin = x.shape
    Ho, Wo = H // 2, W // 2
    xp = jnp.pad(x, ((0, 0), (1, 1), (1, 1), (0, 0)))
    taps = [xp[:, kh:kh + 2 * Ho:2, kw:kw + 2 * Wo:2, :]
            for kh in range(4) for kw in range(4)]           # 16 x (N,Ho,Wo,Cin)
    a = jnp.stack(taps, axis=3).reshape(N_ * Ho * Wo, 16 * Cin)
    y = fused_matmul(a, lw["b"], lw["scale"], lw["shift"],
                     M=N_ * Ho * Wo, K=16 * Cin, N=lw["cout"],
                     pre_act=pre_act, post_act=None)
    return y.reshape(N_, Ho, Wo, lw["cout"])


def convT4x4_up(act, lw, pre_act, post_act, out_dtype=jnp.bfloat16):
    """ConvTranspose2d(k=4, s=2, p=1) on NHWC as ONE parity-packed matmul.

    Each output pixel's 4 taps are summed inside the matmul accumulator; the 4
    parities come out as 4*Cout lanes of the same call, then a single
    (w, parity) transpose interleaves the planes.  ReLU / bias / tanh fused.
    """
    x = _resolve(act)
    N_, H, W, Cin = x.shape
    Cout = lw["cout"]
    xp = jnp.pad(x, ((0, 0), (1, 1), (1, 1), (0, 0)))
    taps = [xp[:, 1 + sh:1 + sh + H, 1 + sw:1 + sw + W, :]
            for sh in _SHIFTS for sw in _SHIFTS]             # 9 x (N,H,W,Cin)
    a = jnp.stack(taps, axis=3).reshape(N_ * H * W, 9 * Cin)
    y = fused_matmul(a, lw["b"], lw["scale"], lw["shift"],
                     M=N_ * H * W, K=9 * Cin, N=4 * Cout,
                     pre_act=pre_act, post_act=post_act, out_dtype=out_dtype)
    y = y.reshape(N_, H, W, 2, 2, Cout)                      # (n,h,w,ph,pw,c)
    y = jnp.transpose(y, (0, 1, 3, 2, 4, 5))                 # (n,h,ph,w,pw,c)
    return y.reshape(N_, 2 * H, 2 * W, Cout)


# ----------------------------------------------------------------------------
# U-Net construction (mirrors UnetSkipConnectionBlock / UnetGenerator)
# ----------------------------------------------------------------------------
def _make_block(key, outer_nc, inner_nc, input_nc=None, sub=None,
                outermost=False, innermost=False):
    if input_nc is None:
        input_nc = outer_nc
    k1, k2, k3 = jax.random.split(key, 3)
    p = {"sub": sub}
    # norm_layer == BatchNorm2d -> use_bias=False for all inner convs; the
    # outermost upconv uses the nn.ConvTranspose2d default bias=True.
    down_w = 0.02 * jax.random.normal(k1, (inner_nc, input_nc, 4, 4), jnp.float32)
    p["down"] = _prep_down(down_w)
    if outermost:
        p["kind"] = "outermost"
        up_w = 0.02 * jax.random.normal(k2, (inner_nc * 2, outer_nc, 4, 4), jnp.float32)
        up_b = 0.02 * jax.random.normal(k3, (outer_nc,), jnp.float32)
        p["up"] = _prep_up(up_w, up_b)
    elif innermost:
        p["kind"] = "innermost"
        up_w = 0.02 * jax.random.normal(k2, (inner_nc, outer_nc, 4, 4), jnp.float32)
        p["up"] = _prep_up(up_w, None)
        p["upnorm_g"] = jnp.ones((outer_nc,), jnp.float32)
        p["upnorm_b"] = jnp.zeros((outer_nc,), jnp.float32)
    else:
        p["kind"] = "middle"
        p["downnorm_g"] = jnp.ones((inner_nc,), jnp.float32)
        p["downnorm_b"] = jnp.zeros((inner_nc,), jnp.float32)
        up_w = 0.02 * jax.random.normal(k2, (inner_nc * 2, outer_nc, 4, 4), jnp.float32)
        p["up"] = _prep_up(up_w, None)
        p["upnorm_g"] = jnp.ones((outer_nc,), jnp.float32)
        p["upnorm_b"] = jnp.zeros((outer_nc,), jnp.float32)
    return p


def init_unet_generator(key, input_nc, output_nc, num_downs, ngf):
    keys = jax.random.split(key, num_downs)
    ki = 0
    block = _make_block(keys[ki], ngf * 8, ngf * 8, innermost=True); ki += 1
    for _ in range(num_downs - 5):
        block = _make_block(keys[ki], ngf * 8, ngf * 8, sub=block); ki += 1
    block = _make_block(keys[ki], ngf * 4, ngf * 8, sub=block); ki += 1
    block = _make_block(keys[ki], ngf * 2, ngf * 4, sub=block); ki += 1
    block = _make_block(keys[ki], ngf, ngf * 2, sub=block); ki += 1
    block = _make_block(keys[ki], output_nc, ngf, input_nc=input_nc,
                        sub=block, outermost=True)
    return block


def unet_block_forward(p, act_in):
    """act_in = (NHWC data, pending per-channel scale or None, shift or None)."""
    kind = p["kind"]
    if kind == "outermost":
        # down = [downconv]; up = [ReLU, upconv(bias), Tanh]; no skip concat.
        h = conv4x4_down(act_in, p["down"], pre_act=None)
        sub = unet_block_forward(p["sub"], (h, None, None))
        return convT4x4_up(sub, p["up"], pre_act="relu", post_act="tanh",
                           out_dtype=jnp.float32)
    elif kind == "innermost":
        # down = [LeakyReLU, downconv]; up = [ReLU, upconv, BN]; concat skip.
        h = conv4x4_down(act_in, p["down"], pre_act="leaky_relu")
        u = convT4x4_up((h, None, None), p["up"], pre_act="relu", post_act=None)
        us, ub = _bn_pending(u, p["upnorm_g"], p["upnorm_b"])
        return _concat_act(act_in, (u, us, ub))
    else:
        # down = [LeakyReLU, downconv, BN]; up = [ReLU, upconv, BN]; concat skip.
        h = conv4x4_down(act_in, p["down"], pre_act="leaky_relu")
        hs, hb = _bn_pending(h, p["downnorm_g"], p["downnorm_b"])
        sub = unet_block_forward(p["sub"], (h, hs, hb))
        u = convT4x4_up(sub, p["up"], pre_act="relu", post_act=None)
        us, ub = _bn_pending(u, p["upnorm_g"], p["upnorm_b"])
        return _concat_act(act_in, (u, us, ub))


def unet_generator_forward(params, x_nchw):
    x = jnp.transpose(x_nchw, (0, 2, 3, 1))            # NCHW -> NHWC once
    y = unet_block_forward(params, (x, None, None))
    return jnp.transpose(y, (0, 3, 1, 2))              # NHWC -> NCHW once


# ----------------------------------------------------------------------------
if __name__ == "__main__":
    # Small but structurally complete config: num_downs=5 -> 32x32 input hits a
    # 1x1 bottleneck, exercising outermost / middle / innermost block paths.
    input_nc, output_nc, num_downs, ngf = 3, 3, 5, 8
    N, H, W = 2, 32, 32

    key = jax.random.PRNGKey(0)
    kp, kx = jax.random.split(key)
    params = init_unet_generator(kp, input_nc, output_nc, num_downs, ngf)
    x = jax.random.normal(kx, (N, input_nc, H, W), jnp.float32)   # NCHW

    fwd = jax.jit(functools.partial(unet_generator_forward, params))
    y = fwd(x)
    jax.block_until_ready(y)

    assert y.shape == (N, output_nc, H, W), y.shape
    assert bool(jnp.all(jnp.isfinite(y)))
    assert bool(jnp.all(jnp.abs(y) <= 1.0 + 1e-6))   # tanh output range
    print("KERNEL_OK")
</pallas_src>

<mosaic_0001>
module attributes {stable_mosaic.version = 11 : i64} {
  func.func @kernel(%arg0: i32, %arg1: i32, %arg2: i32, %arg3: memref<512x48xbf16, #tpu.memory_space<vmem>>, %arg4: memref<48x128xbf16, #tpu.memory_space<vmem>>, %arg5: memref<1x128xf32, #tpu.memory_space<vmem>>, %arg6: memref<1x128xf32, #tpu.memory_space<vmem>>, %arg7: memref<512x128xbf16, #tpu.memory_space<vmem>>) attributes {dimension_semantics = [#tpu.dimension_semantics<parallel>, #tpu.dimension_semantics<parallel>, #tpu.dimension_semantics<arbitrary>], iteration_bounds = array<i64: 1, 1, 1>, scalar_prefetch = 0 : i64, scratch_operands = 0 : i64, tpu.core_type = #tpu.core_type<tc>, window_params = [{transform_indices = @transform_0, window_bounds = array<i64: 512, 48>}, {transform_indices = @transform_1, window_bounds = array<i64: 48, 128>}, {transform_indices = @transform_2, window_bounds = array<i64: 1, 128>}, {transform_indices = @transform_3, window_bounds = array<i64: 1, 128>}, {transform_indices = @transform_4, window_bounds = array<i64: 512, 128>}]} {
    %c0 = arith.constant 0 : index
    %c0_0 = arith.constant 0 : index
    %0 = vector.load %arg3[%c0, %c0_0] : memref<512x48xbf16, #tpu.memory_space<vmem>>, vector<512x48xbf16>
    %c0_1 = arith.constant 0 : index
    %c0_2 = arith.constant 0 : index
    %1 = vector.load %arg4[%c0_1, %c0_2] : memref<48x128xbf16, #tpu.memory_space<vmem>>, vector<48x128xbf16>
    %cst = arith.constant dense<0.000000e+00> : vector<512x128xf32>
    %2 = tpu.matmul %0, %1, %cst {dimension_numbers = #tpu.dot_dimension_numbers<[1], [0], [0], [1], [0, 0, 1, 1], [], []>} : vector<512x48xbf16>, vector<48x128xbf16>, vector<512x128xf32> -> vector<512x128xf32>
    %c0_3 = arith.constant 0 : index
    %c0_4 = arith.constant 0 : index
    %3 = vector.load %arg5[%c0_3, %c0_4] : memref<1x128xf32, #tpu.memory_space<vmem>>, vector<1x128xf32>
    %4 = vector.broadcast %3 : vector<1x128xf32> to vector<512x128xf32>
    %5 = arith.mulf %2, %4 : vector<512x128xf32>
    %c0_5 = arith.constant 0 : index
    %c0_6 = arith.constant 0 : index
    %6 = vector.load %arg6[%c0_5, %c0_6] : memref<1x128xf32, #tpu.memory_space<vmem>>, vector<1x128xf32>
    %7 = vector.broadcast %6 : vector<1x128xf32> to vector<512x128xf32>
    %8 = arith.addf %5, %7 : vector<512x128xf32>
    %9 = arith.truncf %8 : vector<512x128xf32> to vector<512x128xbf16>
    %c0_7 = arith.constant 0 : index
    %c0_8 = arith.constant 0 : index
    %10 = vector.load %arg7[%c0_7, %c0_8] : memref<512x128xbf16, #tpu.memory_space<vmem>>, vector<512x128xbf16>
    tpu.vector_store %arg7[%c0_7, %c0_8], %9 {strides = array<i32>} : memref<512x128xbf16, #tpu.memory_space<vmem>>, vector<512x128xbf16>,
    return
  }
  func.func @transform_0(%arg0: i32, %arg1: i32, %arg2: i32) -> (i32, i32) {
    %c0_i32 = arith.constant 0 : i32
    return %arg0, %arg2 : i32, i32
  }
  func.func @transform_1(%arg0: i32, %arg1: i32, %arg2: i32) -> (i32, i32) {
    %c0_i32 = arith.constant 0 : i32
    return %arg2, %arg1 : i32, i32
  }
  func.func @transform_2(%arg0: i32, %arg1: i32, %arg2: i32) -> (i32, i32) {
    %c0_i32 = arith.constant 0 : i32
    %c0_i32_0 = arith.constant 0 : i32
    return %c0_i32, %arg1 : i32, i32
  }
  func.func @transform_3(%arg0: i32, %arg1: i32, %arg2: i32) -> (i32, i32) {
    %c0_i32 = arith.constant 0 : i32
    %c0_i32_0 = arith.constant 0 : i32
    return %c0_i32, %arg1 : i32, i32
  }
  func.func @transform_4(%arg0: i32, %arg1: i32, %arg2: i32) -> (i32, i32) {
    %c0_i32 = arith.constant 0 : i32
    return %arg0, %arg1 : i32, i32
  }
}

module attributes {stable_mosaic.version = 11 : i64} {
  func.func @kernel(%arg0: i32, %arg1: i32, %arg2: i32, %arg3: memref<128x128xbf16, #tpu.memory_space<vmem>>, %arg4: memref<128x128xbf16, #tpu.memory_space<vmem>>, %arg5: memref<1x128xf32, #tpu.memory_space<vmem>>, %arg6: memref<1x128xf32, #tpu.memory_space<vmem>>, %arg7: memref<128x128xbf16, #tpu.memory_space<vmem>>) attributes {dimension_semantics = [#tpu.dimension_semantics<parallel>, #tpu.dimension_semantics<parallel>, #tpu.dimension_semantics<arbitrary>], iteration_bounds = array<i64: 1, 1, 1>, scalar_prefetch = 0 : i64, scratch_operands = 0 : i64, tpu.core_type = #tpu.core_type<tc>, window_params = [{transform_indices = @transform_0, window_bounds = array<i64: 128, 128>}, {transform_indices = @transform_1, window_bounds = array<i64: 128, 128>}, {transform_indices = @transform_2, window_bounds = array<i64: 1, 128>}, {transform_indices = @transform_3, window_bounds = array<i64: 1, 128>}, {transform_indices = @transform_4, window_bounds = array<i64: 128, 128>}]} {
    %c0 = arith.constant 0 : index
    %c0_0 = arith.constant 0 : index
    %0 = vector.load %arg3[%c0, %c0_0] : memref<128x128xbf16, #tpu.memory_space<vmem>>, vector<128x128xbf16>
    %cst = arith.constant 0.000000e+00 : bf16
    %1 = vector.broadcast %cst : bf16 to vector<128x128xbf16>
    %2 = arith.cmpf oge, %0, %1 : vector<128x128xbf16>
    %cst_1 = arith.constant 2.001950e-01 : bf16
    %3 = vector.broadcast %cst_1 : bf16 to vector<128x128xbf16>
    %4 = arith.mulf %0, %3 : vector<128x128xbf16>
    %5 = arith.select %2, %0, %4 : vector<128x128xi1>, vector<128x128xbf16>
    %c0_2 = arith.constant 0 : index
    %c0_3 = arith.constant 0 : index
    %6 = vector.load %arg4[%c0_2, %c0_3] : memref<128x128xbf16, #tpu.memory_space<vmem>>, vector<128x128xbf16>
    %cst_4 = arith.constant dense<0.000000e+00> : vector<128x128xf32>
    %7 = tpu.matmul %5, %6, %cst_4 {dimension_numbers = #tpu.dot_dimension_numbers<[1], [0], [0], [1], [0, 0, 1, 1], [], []>} : vector<128x128xbf16>, vector<128x128xbf16>, vector<128x128xf32> -> vector<128x128xf32>
    %c0_5 = arith.constant 0 : index
    %c0_6 = arith.constant 0 : index
    %8 = vector.load %arg5[%c0_5, %c0_6] : memref<1x128xf32, #tpu.memory_space<vmem>>, vector<1x128xf32>
    %9 = vector.broadcast %8 : vector<1x128xf32> to vector<128x128xf32>
    %10 = arith.mulf %7, %9 : vector<128x128xf32>
    %c0_7 = arith.constant 0 : index
    %c0_8 = arith.constant 0 : index
    %11 = vector.load %arg6[%c0_7, %c0_8] : memref<1x128xf32, #tpu.memory_space<vmem>>, vector<1x128xf32>
    %12 = vector.broadcast %11 : vector<1x128xf32> to vector<128x128xf32>
    %13 = arith.addf %10, %12 : vector<128x128xf32>
    %14 = arith.truncf %13 : vector<128x128xf32> to vector<128x128xbf16>
    %c0_9 = arith.constant 0 : index
    %c0_10 = arith.constant 0 : index
    %15 = vector.load %arg7[%c0_9, %c0_10] : memref<128x128xbf16, #tpu.memory_space<vmem>>, vector<128x128xbf16>
    tpu.vector_store %arg7[%c0_9, %c0_10], %14 {strides = array<i32>} : memref<128x128xbf16, #tpu.memory_space<vmem>>, vector<128x128xbf16>,
    return
  }
  func.func @transform_0(%arg0: i32, %arg1: i32, %arg2: i32) -> (i32, i32) {
    %c0_i32 = arith.constant 0 : i32
    return %arg0, %arg2 : i32, i32
  }
  func.func @transform_1(%arg0: i32, %arg1: i32, %arg2: i32) -> (i32, i32) {
    %c0_i32 = arith.constant 0 : i32
    return %arg2, %arg1 : i32, i32
  }
  func.func @transform_2(%arg0: i32, %arg1: i32, %arg2: i32) -> (i32, i32) {
    %c0_i32 = arith.constant 0 : i32
    %c0_i32_0 = arith.constant 0 : i32
    return %c0_i32, %arg1 : i32, i32
  }
  func.func @transform_3(%arg0: i32, %arg1: i32, %arg2: i32) -> (i32, i32) {
    %c0_i32 = arith.constant 0 : i32
    %c0_i32_0 = arith.constant 0 : i32
    return %c0_i32, %arg1 : i32, i32
  }
  func.func @transform_4(%arg0: i32, %arg1: i32, %arg2: i32) -> (i32, i32) {
    %c0_i32 = arith.constant 0 : i32
    return %arg0, %arg1 : i32, i32
  }
}

module attributes {stable_mosaic.version = 11 : i64} {
  func.func @kernel(%arg0: i32, %arg1: i32, %arg2: i32, %arg3: memref<32x256xbf16, #tpu.memory_space<vmem>>, %arg4: memref<256x128xbf16, #tpu.memory_space<vmem>>, %arg5: memref<1x128xf32, #tpu.memory_space<vmem>>, %arg6: memref<1x128xf32, #tpu.memory_space<vmem>>, %arg7: memref<32x128xbf16, #tpu.memory_space<vmem>>) attributes {dimension_semantics = [#tpu.dimension_semantics<parallel>, #tpu.dimension_semantics<parallel>, #tpu.dimension_semantics<arbitrary>], iteration_bounds = array<i64: 1, 1, 1>, scalar_prefetch = 0 : i64, scratch_operands = 0 : i64, tpu.core_type = #tpu.core_type<tc>, window_params = [{transform_indices = @transform_0, window_bounds = array<i64: 32, 256>}, {transform_indices = @transform_1, window_bounds = array<i64: 256, 128>}, {transform_indices = @transform_2, window_bounds = array<i64: 1, 128>}, {transform_indices = @transform_3, window_bounds = array<i64: 1, 128>}, {transform_indices = @transform_4, window_bounds = array<i64: 32, 128>}]} {
    %c0 = arith.constant 0 : index
    %c0_0 = arith.constant 0 : index
    %0 = vector.load %arg3[%c0, %c0_0] : memref<32x256xbf16, #tpu.memory_space<vmem>>, vector<32x256xbf16>
    %cst = arith.constant 0.000000e+00 : bf16
    %1 = vector.broadcast %cst : bf16 to vector<32x256xbf16>
    %2 = arith.cmpf oge, %0, %1 : vector<32x256xbf16>
    %cst_1 = arith.constant 2.001950e-01 : bf16
    %3 = vector.broadcast %cst_1 : bf16 to vector<32x256xbf16>
    %4 = arith.mulf %0, %3 : vector<32x256xbf16>
    %5 = arith.select %2, %0, %4 : vector<32x256xi1>, vector<32x256xbf16>
    %c0_2 = arith.constant 0 : index
    %c0_3 = arith.constant 0 : index
    %6 = vector.load %arg4[%c0_2, %c0_3] : memref<256x128xbf16, #tpu.memory_space<vmem>>, vector<256x128xbf16>
    %cst_4 = arith.constant dense<0.000000e+00> : vector<32x128xf32>
    %7 = tpu.matmul %5, %6, %cst_4 {dimension_numbers = #tpu.dot_dimension_numbers<[1], [0], [0], [1], [0, 0, 1, 1], [], []>} : vector<32x256xbf16>, vector<256x128xbf16>, vector<32x128xf32> -> vector<32x128xf32>
    %c0_5 = arith.constant 0 : index
    %c0_6 = arith.constant 0 : index
    %8 = vector.load %arg5[%c0_5, %c0_6] : memref<1x128xf32, #tpu.memory_space<vmem>>, vector<1x128xf32>
    %9 = vector.broadcast %8 : vector<1x128xf32> to vector<32x128xf32>
    %10 = arith.mulf %7, %9 : vector<32x128xf32>
    %c0_7 = arith.constant 0 : index
    %c0_8 = arith.constant 0 : index
    %11 = vector.load %arg6[%c0_7, %c0_8] : memref<1x128xf32, #tpu.memory_space<vmem>>, vector<1x128xf32>
    %12 = vector.broadcast %11 : vector<1x128xf32> to vector<32x128xf32>
    %13 = arith.addf %10, %12 : vector<32x128xf32>
    %14 = arith.truncf %13 : vector<32x128xf32> to vector<32x128xbf16>
    %c0_9 = arith.constant 0 : index
    %c0_10 = arith.constant 0 : index
    %15 = vector.load %arg7[%c0_9, %c0_10] : memref<32x128xbf16, #tpu.memory_space<vmem>>, vector<32x128xbf16>
    tpu.vector_store %arg7[%c0_9, %c0_10], %14 {strides = array<i32>} : memref<32x128xbf16, #tpu.memory_space<vmem>>, vector<32x128xbf16>,
    return
  }
  func.func @transform_0(%arg0: i32, %arg1: i32, %arg2: i32) -> (i32, i32) {
    %c0_i32 = arith.constant 0 : i32
    return %arg0, %arg2 : i32, i32
  }
  func.func @transform_1(%arg0: i32, %arg1: i32, %arg2: i32) -> (i32, i32) {
    %c0_i32 = arith.constant 0 : i32
    return %arg2, %arg1 : i32, i32
  }
  func.func @transform_2(%arg0: i32, %arg1: i32, %arg2: i32) -> (i32, i32) {
    %c0_i32 = arith.constant 0 : i32
    %c0_i32_0 = arith.constant 0 : i32
    return %c0_i32, %arg1 : i32, i32
  }
  func.func @transform_3(%arg0: i32, %arg1: i32, %arg2: i32) -> (i32, i32) {
    %c0_i32 = arith.constant 0 : i32
    %c0_i32_0 = arith.constant 0 : i32
    return %c0_i32, %arg1 : i32, i32
  }
  func.func @transform_4(%arg0: i32, %arg1: i32, %arg2: i32) -> (i32, i32) {
    %c0_i32 = arith.constant 0 : i32
    return %arg0, %arg1 : i32, i32
  }
}

module attributes {stable_mosaic.version = 11 : i64} {
  func.func @kernel(%arg0: i32, %arg1: i32, %arg2: i32, %arg3: memref<16x512xbf16, #tpu.memory_space<vmem>>, %arg4: memref<512x128xbf16, #tpu.memory_space<vmem>>, %arg5: memref<1x128xf32, #tpu.memory_space<vmem>>, %arg6: memref<1x128xf32, #tpu.memory_space<vmem>>, %arg7: memref<16x128xbf16, #tpu.memory_space<vmem>>) attributes {dimension_semantics = [#tpu.dimension_semantics<parallel>, #tpu.dimension_semantics<parallel>, #tpu.dimension_semantics<arbitrary>], iteration_bounds = array<i64: 1, 1, 1>, scalar_prefetch = 0 : i64, scratch_operands = 0 : i64, tpu.core_type = #tpu.core_type<tc>, window_params = [{transform_indices = @transform_0, window_bounds = array<i64: 16, 512>}, {transform_indices = @transform_1, window_bounds = array<i64: 512, 128>}, {transform_indices = @transform_2, window_bounds = array<i64: 1, 128>}, {transform_indices = @transform_3, window_bounds = array<i64: 1, 128>}, {transform_indices = @transform_4, window_bounds = array<i64: 16, 128>}]} {
    %c0 = arith.constant 0 : index
    %c0_0 = arith.constant 0 : index
    %0 = vector.load %arg3[%c0, %c0_0] : memref<16x512xbf16, #tpu.memory_space<vmem>>, vector<16x512xbf16>
    %cst = arith.constant 0.000000e+00 : bf16
    %1 = vector.broadcast %cst : bf16 to vector<16x512xbf16>
    %2 = arith.cmpf oge, %0, %1 : vector<16x512xbf16>
    %cst_1 = arith.constant 2.001950e-01 : bf16
    %3 = vector.broadcast %cst_1 : bf16 to vector<16x512xbf16>
    %4 = arith.mulf %0, %3 : vector<16x512xbf16>
    %5 = arith.select %2, %0, %4 : vector<16x512xi1>, vector<16x512xbf16>
    %c0_2 = arith.constant 0 : index
    %c0_3 = arith.constant 0 : index
    %6 = vector.load %arg4[%c0_2, %c0_3] : memref<512x128xbf16, #tpu.memory_space<vmem>>, vector<512x128xbf16>
    %cst_4 = arith.constant dense<0.000000e+00> : vector<16x128xf32>
    %7 = tpu.matmul %5, %6, %cst_4 {dimension_numbers = #tpu.dot_dimension_numbers<[1], [0], [0], [1], [0, 0, 1, 1], [], []>} : vector<16x512xbf16>, vector<512x128xbf16>, vector<16x128xf32> -> vector<16x128xf32>
    %c0_5 = arith.constant 0 : index
    %c0_6 = arith.constant 0 : index
    %8 = vector.load %arg5[%c0_5, %c0_6] : memref<1x128xf32, #tpu.memory_space<vmem>>, vector<1x128xf32>
    %9 = vector.broadcast %8 : vector<1x128xf32> to vector<16x128xf32>
    %10 = arith.mulf %7, %9 : vector<16x128xf32>
    %c0_7 = arith.constant 0 : index
    %c0_8 = arith.constant 0 : index
    %11 = vector.load %arg6[%c0_7, %c0_8] : memref<1x128xf32, #tpu.memory_space<vmem>>, vector<1x128xf32>
    %12 = vector.broadcast %11 : vector<1x128xf32> to vector<16x128xf32>
    %13 = arith.addf %10, %12 : vector<16x128xf32>
    %14 = arith.truncf %13 : vector<16x128xf32> to vector<16x128xbf16>
    %c0_9 = arith.constant 0 : index
    %c0_10 = arith.constant 0 : index
    %15 = vector.load %arg7[%c0_9, %c0_10] : memref<16x128xbf16, #tpu.memory_space<vmem>>, vector<16x128xbf16>
    tpu.vector_store %arg7[%c0_9, %c0_10], %14 {strides = array<i32>} : memref<16x128xbf16, #tpu.memory_space<vmem>>, vector<16x128xbf16>,
    return
  }
  func.func @transform_0(%arg0: i32, %arg1: i32, %arg2: i32) -> (i32, i32) {
    %c0_i32 = arith.constant 0 : i32
    return %arg0, %arg2 : i32, i32
  }
  func.func @transform_1(%arg0: i32, %arg1: i32, %arg2: i32) -> (i32, i32) {
    %c0_i32 = arith.constant 0 : i32
    return %arg2, %arg1 : i32, i32
  }
  func.func @transform_2(%arg0: i32, %arg1: i32, %arg2: i32) -> (i32, i32) {
    %c0_i32 = arith.constant 0 : i32
    %c0_i32_0 = arith.constant 0 : i32
    return %c0_i32, %arg1 : i32, i32
  }
  func.func @transform_3(%arg0: i32, %arg1: i32, %arg2: i32) -> (i32, i32) {
    %c0_i32 = arith.constant 0 : i32
    %c0_i32_0 = arith.constant 0 : i32
    return %c0_i32, %arg1 : i32, i32
  }
  func.func @transform_4(%arg0: i32, %arg1: i32, %arg2: i32) -> (i32, i32) {
    %c0_i32 = arith.constant 0 : i32
    return %arg0, %arg1 : i32, i32
  }
}

module attributes {stable_mosaic.version = 11 : i64} {
  func.func @kernel(%arg0: i32, %arg1: i32, %arg2: i32, %arg3: memref<16x1024xbf16, #tpu.memory_space<vmem>>, %arg4: memref<1024x128xbf16, #tpu.memory_space<vmem>>, %arg5: memref<1x128xf32, #tpu.memory_space<vmem>>, %arg6: memref<1x128xf32, #tpu.memory_space<vmem>>, %arg7: memref<16x128xbf16, #tpu.memory_space<vmem>>) attributes {dimension_semantics = [#tpu.dimension_semantics<parallel>, #tpu.dimension_semantics<parallel>, #tpu.dimension_semantics<arbitrary>], iteration_bounds = array<i64: 1, 1, 1>, scalar_prefetch = 0 : i64, scratch_operands = 0 : i64, tpu.core_type = #tpu.core_type<tc>, window_params = [{transform_indices = @transform_0, window_bounds = array<i64: 16, 1024>}, {transform_indices = @transform_1, window_bounds = array<i64: 1024, 128>}, {transform_indices = @transform_2, window_bounds = array<i64: 1, 128>}, {transform_indices = @transform_3, window_bounds = array<i64: 1, 128>}, {transform_indices = @transform_4, window_bounds = array<i64: 16, 128>}]} {
    %c0 = arith.constant 0 : index
    %c0_0 = arith.constant 0 : index
    %0 = vector.load %arg3[%c0, %c0_0] : memref<16x1024xbf16, #tpu.memory_space<vmem>>, vector<16x1024xbf16>
    %cst = arith.constant 0.000000e+00 : bf16
    %1 = vector.broadcast %cst : bf16 to vector<16x1024xbf16>
    %2 = arith.cmpf oge, %0, %1 : vector<16x1024xbf16>
    %cst_1 = arith.constant 2.001950e-01 : bf16
    %3 = vector.broadcast %cst_1 : bf16 to vector<16x1024xbf16>
    %4 = arith.mulf %0, %3 : vector<16x1024xbf16>
    %5 = arith.select %2, %0, %4 : vector<16x1024xi1>, vector<16x1024xbf16>
    %c0_2 = arith.constant 0 : index
    %c0_3 = arith.constant 0 : index
    %6 = vector.load %arg4[%c0_2, %c0_3] : memref<1024x128xbf16, #tpu.memory_space<vmem>>, vector<1024x128xbf16>
    %cst_4 = arith.constant dense<0.000000e+00> : vector<16x128xf32>
    %7 = tpu.matmul %5, %6, %cst_4 {dimension_numbers = #tpu.dot_dimension_numbers<[1], [0], [0], [1], [0, 0, 1, 1], [], []>} : vector<16x1024xbf16>, vector<1024x128xbf16>, vector<16x128xf32> -> vector<16x128xf32>
    %c0_5 = arith.constant 0 : index
    %c0_6 = arith.constant 0 : index
    %8 = vector.load %arg5[%c0_5, %c0_6] : memref<1x128xf32, #tpu.memory_space<vmem>>, vector<1x128xf32>
    %9 = vector.broadcast %8 : vector<1x128xf32> to vector<16x128xf32>
    %10 = arith.mulf %7, %9 : vector<16x128xf32>
    %c0_7 = arith.constant 0 : index
    %c0_8 = arith.constant 0 : index
    %11 = vector.load %arg6[%c0_7, %c0_8] : memref<1x128xf32, #tpu.memory_space<vmem>>, vector<1x128xf32>
    %12 = vector.broadcast %11 : vector<1x128xf32> to vector<16x128xf32>
    %13 = arith.addf %10, %12 : vector<16x128xf32>
    %14 = arith.truncf %13 : vector<16x128xf32> to vector<16x128xbf16>
    %c0_9 = arith.constant 0 : index
    %c0_10 = arith.constant 0 : index
    %15 = vector.load %arg7[%c0_9, %c0_10] : memref<16x128xbf16, #tpu.memory_space<vmem>>, vector<16x128xbf16>
    tpu.vector_store %arg7[%c0_9, %c0_10], %14 {strides = array<i32>} : memref<16x128xbf16, #tpu.memory_space<vmem>>, vector<16x128xbf16>,
    return
  }
  func.func @transform_0(%arg0: i32, %arg1: i32, %arg2: i32) -> (i32, i32) {
    %c0_i32 = arith.constant 0 : i32
    return %arg0, %arg2 : i32, i32
  }
  func.func @transform_1(%arg0: i32, %arg1: i32, %arg2: i32) -> (i32, i32) {
    %c0_i32 = arith.constant 0 : i32
    return %arg2, %arg1 : i32, i32
  }
  func.func @transform_2(%arg0: i32, %arg1: i32, %arg2: i32) -> (i32, i32) {
    %c0_i32 = arith.constant 0 : i32
    %c0_i32_0 = arith.constant 0 : i32
    return %c0_i32, %arg1 : i32, i32
  }
  func.func @transform_3(%arg0: i32, %arg1: i32, %arg2: i32) -> (i32, i32) {
    %c0_i32 = arith.constant 0 : i32
    %c0_i32_0 = arith.constant 0 : i32
    return %c0_i32, %arg1 : i32, i32
  }
  func.func @transform_4(%arg0: i32, %arg1: i32, %arg2: i32) -> (i32, i32) {
    %c0_i32 = arith.constant 0 : i32
    return %arg0, %arg1 : i32, i32
  }
}

module attributes {stable_mosaic.version = 11 : i64} {
  func.func @kernel(%arg0: i32, %arg1: i32, %arg2: i32, %arg3: memref<16x576xbf16, #tpu.memory_space<vmem>>, %arg4: memref<576x256xbf16, #tpu.memory_space<vmem>>, %arg5: memref<1x256xf32, #tpu.memory_space<vmem>>, %arg6: memref<1x256xf32, #tpu.memory_space<vmem>>, %arg7: memref<16x256xbf16, #tpu.memory_space<vmem>>) attributes {dimension_semantics = [#tpu.dimension_semantics<parallel>, #tpu.dimension_semantics<parallel>, #tpu.dimension_semantics<arbitrary>], iteration_bounds = array<i64: 1, 1, 1>, scalar_prefetch = 0 : i64, scratch_operands = 0 : i64, tpu.core_type = #tpu.core_type<tc>, window_params = [{transform_indices = @transform_0, window_bounds = array<i64: 16, 576>}, {transform_indices = @transform_1, window_bounds = array<i64: 576, 256>}, {transform_indices = @transform_2, window_bounds = array<i64: 1, 256>}, {transform_indices = @transform_3, window_bounds = array<i64: 1, 256>}, {transform_indices = @transform_4, window_bounds = array<i64: 16, 256>}]} {
    %c0 = arith.constant 0 : index
    %c0_0 = arith.constant 0 : index
    %0 = vector.load %arg3[%c0, %c0_0] : memref<16x576xbf16, #tpu.memory_space<vmem>>, vector<16x576xbf16>
    %cst = arith.constant 0.000000e+00 : bf16
    %1 = vector.broadcast %cst : bf16 to vector<16x576xbf16>
    %2 = arith.maximumf %0, %1 : vector<16x576xbf16>
    %c0_1 = arith.constant 0 : index
    %c0_2 = arith.constant 0 : index
    %3 = vector.load %arg4[%c0_1, %c0_2] : memref<576x256xbf16, #tpu.memory_space<vmem>>, vector<576x256xbf16>
    %cst_3 = arith.constant dense<0.000000e+00> : vector<16x256xf32>
    %4 = tpu.matmul %2, %3, %cst_3 {dimension_numbers = #tpu.dot_dimension_numbers<[1], [0], [0], [1], [0, 0, 1, 1], [], []>} : vector<16x576xbf16>, vector<576x256xbf16>, vector<16x256xf32> -> vector<16x256xf32>
    %c0_4 = arith.constant 0 : index
    %c0_5 = arith.constant 0 : index
    %5 = vector.load %arg5[%c0_4, %c0_5] : memref<1x256xf32, #tpu.memory_space<vmem>>, vector<1x256xf32>
    %6 = vector.broadcast %5 : vector<1x256xf32> to vector<16x256xf32>
    %7 = arith.mulf %4, %6 : vector<16x256xf32>
    %c0_6 = arith.constant 0 : index
    %c0_7 = arith.constant 0 : index
    %8 = vector.load %arg6[%c0_6, %c0_7] : memref<1x256xf32, #tpu.memory_space<vmem>>, vector<1x256xf32>
    %9 = vector.broadcast %8 : vector<1x256xf32> to vector<16x256xf32>
    %10 = arith.addf %7, %9 : vector<16x256xf32>
    %11 = arith.truncf %10 : vector<16x256xf32> to vector<16x256xbf16>
    %c0_8 = arith.constant 0 : index
    %c0_9 = arith.constant 0 : index
    %12 = vector.load %arg7[%c0_8, %c0_9] : memref<16x256xbf16, #tpu.memory_space<vmem>>, vector<16x256xbf16>
    tpu.vector_store %arg7[%c0_8, %c0_9], %11 {strides = array<i32>} : memref<16x256xbf16, #tpu.memory_space<vmem>>, vector<16x256xbf16>,
    return
  }
  func.func @transform_0(%arg0: i32, %arg1: i32, %arg2: i32) -> (i32, i32) {
    %c0_i32 = arith.constant 0 : i32
    return %arg0, %arg2 : i32, i32
  }
  func.func @transform_1(%arg0: i32, %arg1: i32, %arg2: i32) -> (i32, i32) {
    %c0_i32 = arith.constant 0 : i32
    return %arg2, %arg1 : i32, i32
  }
  func.func @transform_2(%arg0: i32, %arg1: i32, %arg2: i32) -> (i32, i32) {
    %c0_i32 = arith.constant 0 : i32
    %c0_i32_0 = arith.constant 0 : i32
    return %c0_i32, %arg1 : i32, i32
  }
  func.func @transform_3(%arg0: i32, %arg1: i32, %arg2: i32) -> (i32, i32) {
    %c0_i32 = arith.constant 0 : i32
    %c0_i32_0 = arith.constant 0 : i32
    return %c0_i32, %arg1 : i32, i32
  }
  func.func @transform_4(%arg0: i32, %arg1: i32, %arg2: i32) -> (i32, i32) {
    %c0_i32 = arith.constant 0 : i32
    return %arg0, %arg1 : i32, i32
  }
}

module attributes {stable_mosaic.version = 11 : i64} {
  func.func @kernel(%arg0: i32, %arg1: i32, %arg2: i32, %arg3: memref<16x1152xbf16, #tpu.memory_space<vmem>>, %arg4: memref<1152x128xbf16, #tpu.memory_space<vmem>>, %arg5: memref<1x128xf32, #tpu.memory_space<vmem>>, %arg6: memref<1x128xf32, #tpu.memory_space<vmem>>, %arg7: memref<16x128xbf16, #tpu.memory_space<vmem>>) attributes {dimension_semantics = [#tpu.dimension_semantics<parallel>, #tpu.dimension_semantics<parallel>, #tpu.dimension_semantics<arbitrary>], iteration_bounds = array<i64: 1, 1, 1>, scalar_prefetch = 0 : i64, scratch_operands = 0 : i64, tpu.core_type = #tpu.core_type<tc>, window_params = [{transform_indices = @transform_0, window_bounds = array<i64: 16, 1152>}, {transform_indices = @transform_1, window_bounds = array<i64: 1152, 128>}, {transform_indices = @transform_2, window_bounds = array<i64: 1, 128>}, {transform_indices = @transform_3, window_bounds = array<i64: 1, 128>}, {transform_indices = @transform_4, window_bounds = array<i64: 16, 128>}]} {
    %c0 = arith.constant 0 : index
    %c0_0 = arith.constant 0 : index
    %0 = vector.load %arg3[%c0, %c0_0] : memref<16x1152xbf16, #tpu.memory_space<vmem>>, vector<16x1152xbf16>
    %cst = arith.constant 0.000000e+00 : bf16
    %1 = vector.broadcast %cst : bf16 to vector<16x1152xbf16>
    %2 = arith.maximumf %0, %1 : vector<16x1152xbf16>
    %c0_1 = arith.constant 0 : index
    %c0_2 = arith.constant 0 : index
    %3 = vector.load %arg4[%c0_1, %c0_2] : memref<1152x128xbf16, #tpu.memory_space<vmem>>, vector<1152x128xbf16>
    %cst_3 = arith.constant dense<0.000000e+00> : vector<16x128xf32>
    %4 = tpu.matmul %2, %3, %cst_3 {dimension_numbers = #tpu.dot_dimension_numbers<[1], [0], [0], [1], [0, 0, 1, 1], [], []>} : vector<16x1152xbf16>, vector<1152x128xbf16>, vector<16x128xf32> -> vector<16x128xf32>
    %c0_4 = arith.constant 0 : index
    %c0_5 = arith.constant 0 : index
    %5 = vector.load %arg5[%c0_4, %c0_5] : memref<1x128xf32, #tpu.memory_space<vmem>>, vector<1x128xf32>
    %6 = vector.broadcast %5 : vector<1x128xf32> to vector<16x128xf32>
    %7 = arith.mulf %4, %6 : vector<16x128xf32>
    %c0_6 = arith.constant 0 : index
    %c0_7 = arith.constant 0 : index
    %8 = vector.load %arg6[%c0_6, %c0_7] : memref<1x128xf32, #tpu.memory_space<vmem>>, vector<1x128xf32>
    %9 = vector.broadcast %8 : vector<1x128xf32> to vector<16x128xf32>
    %10 = arith.addf %7, %9 : vector<16x128xf32>
    %11 = arith.truncf %10 : vector<16x128xf32> to vector<16x128xbf16>
    %c0_8 = arith.constant 0 : index
    %c0_9 = arith.constant 0 : index
    %12 = vector.load %arg7[%c0_8, %c0_9] : memref<16x128xbf16, #tpu.memory_space<vmem>>, vector<16x128xbf16>
    tpu.vector_store %arg7[%c0_8, %c0_9], %11 {strides = array<i32>} : memref<16x128xbf16, #tpu.memory_space<vmem>>, vector<16x128xbf16>,
    return
  }
  func.func @transform_0(%arg0: i32, %arg1: i32, %arg2: i32) -> (i32, i32) {
    %c0_i32 = arith.constant 0 : i32
    return %arg0, %arg2 : i32, i32
  }
  func.func @transform_1(%arg0: i32, %arg1: i32, %arg2: i32) -> (i32, i32) {
    %c0_i32 = arith.constant 0 : i32
    return %arg2, %arg1 : i32, i32
  }
  func.func @transform_2(%arg0: i32, %arg1: i32, %arg2: i32) -> (i32, i32) {
    %c0_i32 = arith.constant 0 : i32
    %c0_i32_0 = arith.constant 0 : i32
    return %c0_i32, %arg1 : i32, i32
  }
  func.func @transform_3(%arg0: i32, %arg1: i32, %arg2: i32) -> (i32, i32) {
    %c0_i32 = arith.constant 0 : i32
    %c0_i32_0 = arith.constant 0 : i32
    return %c0_i32, %arg1 : i32, i32
  }
  func.func @transform_4(%arg0: i32, %arg1: i32, %arg2: i32) -> (i32, i32) {
    %c0_i32 = arith.constant 0 : i32
    return %arg0, %arg1 : i32, i32
  }
}

module attributes {stable_mosaic.version = 11 : i64} {
  func.func @kernel(%arg0: i32, %arg1: i32, %arg2: i32, %arg3: memref<32x576xbf16, #tpu.memory_space<vmem>>, %arg4: memref<576x128xbf16, #tpu.memory_space<vmem>>, %arg5: memref<1x128xf32, #tpu.memory_space<vmem>>, %arg6: memref<1x128xf32, #tpu.memory_space<vmem>>, %arg7: memref<32x128xbf16, #tpu.memory_space<vmem>>) attributes {dimension_semantics = [#tpu.dimension_semantics<parallel>, #tpu.dimension_semantics<parallel>, #tpu.dimension_semantics<arbitrary>], iteration_bounds = array<i64: 1, 1, 1>, scalar_prefetch = 0 : i64, scratch_operands = 0 : i64, tpu.core_type = #tpu.core_type<tc>, window_params = [{transform_indices = @transform_0, window_bounds = array<i64: 32, 576>}, {transform_indices = @transform_1, window_bounds = array<i64: 576, 128>}, {transform_indices = @transform_2, window_bounds = array<i64: 1, 128>}, {transform_indices = @transform_3, window_bounds = array<i64: 1, 128>}, {transform_indices = @transform_4, window_bounds = array<i64: 32, 128>}]} {
    %c0 = arith.constant 0 : index
    %c0_0 = arith.constant 0 : index
    %0 = vector.load %arg3[%c0, %c0_0] : memref<32x576xbf16, #tpu.memory_space<vmem>>, vector<32x576xbf16>
    %cst = arith.constant 0.000000e+00 : bf16
    %1 = vector.broadcast %cst : bf16 to vector<32x576xbf16>
    %2 = arith.maximumf %0, %1 : vector<32x576xbf16>
    %c0_1 = arith.constant 0 : index
    %c0_2 = arith.constant 0 : index
    %3 = vector.load %arg4[%c0_1, %c0_2] : memref<576x128xbf16, #tpu.memory_space<vmem>>, vector<576x128xbf16>
    %cst_3 = arith.constant dense<0.000000e+00> : vector<32x128xf32>
    %4 = tpu.matmul %2, %3, %cst_3 {dimension_numbers = #tpu.dot_dimension_numbers<[1], [0], [0], [1], [0, 0, 1, 1], [], []>} : vector<32x576xbf16>, vector<576x128xbf16>, vector<32x128xf32> -> vector<32x128xf32>
    %c0_4 = arith.constant 0 : index
    %c0_5 = arith.constant 0 : index
    %5 = vector.load %arg5[%c0_4, %c0_5] : memref<1x128xf32, #tpu.memory_space<vmem>>, vector<1x128xf32>
    %6 = vector.broadcast %5 : vector<1x128xf32> to vector<32x128xf32>
    %7 = arith.mulf %4, %6 : vector<32x128xf32>
    %c0_6 = arith.constant 0 : index
    %c0_7 = arith.constant 0 : index
    %8 = vector.load %arg6[%c0_6, %c0_7] : memref<1x128xf32, #tpu.memory_space<vmem>>, vector<1x128xf32>
    %9 = vector.broadcast %8 : vector<1x128xf32> to vector<32x128xf32>
    %10 = arith.addf %7, %9 : vector<32x128xf32>
    %11 = arith.truncf %10 : vector<32x128xf32> to vector<32x128xbf16>
    %c0_8 = arith.constant 0 : index
    %c0_9 = arith.constant 0 : index
    %12 = vector.load %arg7[%c0_8, %c0_9] : memref<32x128xbf16, #tpu.memory_space<vmem>>, vector<32x128xbf16>
    tpu.vector_store %arg7[%c0_8, %c0_9], %11 {strides = array<i32>} : memref<32x128xbf16, #tpu.memory_space<vmem>>, vector<32x128xbf16>,
    return
  }
  func.func @transform_0(%arg0: i32, %arg1: i32, %arg2: i32) -> (i32, i32) {
    %c0_i32 = arith.constant 0 : i32
    return %arg0, %arg2 : i32, i32
  }
  func.func @transform_1(%arg0: i32, %arg1: i32, %arg2: i32) -> (i32, i32) {
    %c0_i32 = arith.constant 0 : i32
    return %arg2, %arg1 : i32, i32
  }
  func.func @transform_2(%arg0: i32, %arg1: i32, %arg2: i32) -> (i32, i32) {
    %c0_i32 = arith.constant 0 : i32
    %c0_i32_0 = arith.constant 0 : i32
    return %c0_i32, %arg1 : i32, i32
  }
  func.func @transform_3(%arg0: i32, %arg1: i32, %arg2: i32) -> (i32, i32) {
    %c0_i32 = arith.constant 0 : i32
    %c0_i32_0 = arith.constant 0 : i32
    return %c0_i32, %arg1 : i32, i32
  }
  func.func @transform_4(%arg0: i32, %arg1: i32, %arg2: i32) -> (i32, i32) {
    %c0_i32 = arith.constant 0 : i32
    return %arg0, %arg1 : i32, i32
  }
}

module attributes {stable_mosaic.version = 11 : i64} {
  func.func @kernel(%arg0: i32, %arg1: i32, %arg2: i32, %arg3: memref<128x288xbf16, #tpu.memory_space<vmem>>, %arg4: memref<288x128xbf16, #tpu.memory_space<vmem>>, %arg5: memref<1x128xf32, #tpu.memory_space<vmem>>, %arg6: memref<1x128xf32, #tpu.memory_space<vmem>>, %arg7: memref<128x128xbf16, #tpu.memory_space<vmem>>) attributes {dimension_semantics = [#tpu.dimension_semantics<parallel>, #tpu.dimension_semantics<parallel>, #tpu.dimension_semantics<arbitrary>], iteration_bounds = array<i64: 1, 1, 1>, scalar_prefetch = 0 : i64, scratch_operands = 0 : i64, tpu.core_type = #tpu.core_type<tc>, window_params = [{transform_indices = @transform_0, window_bounds = array<i64: 128, 288>}, {transform_indices = @transform_1, window_bounds = array<i64: 288, 128>}, {transform_indices = @transform_2, window_bounds = array<i64: 1, 128>}, {transform_indices = @transform_3, window_bounds = array<i64: 1, 128>}, {transform_indices = @transform_4, window_bounds = array<i64: 128, 128>}]} {
    %c0 = arith.constant 0 : index
    %c0_0 = arith.constant 0 : index
    %0 = vector.load %arg3[%c0, %c0_0] : memref<128x288xbf16, #tpu.memory_space<vmem>>, vector<128x288xbf16>
    %cst = arith.constant 0.000000e+00 : bf16
    %1 = vector.broadcast %cst : bf16 to vector<128x288xbf16>
    %2 = arith.maximumf %0, %1 : vector<128x288xbf16>
    %c0_1 = arith.constant 0 : index
    %c0_2 = arith.constant 0 : index
    %3 = vector.load %arg4[%c0_1, %c0_2] : memref<288x128xbf16, #tpu.memory_space<vmem>>, vector<288x128xbf16>
    %cst_3 = arith.constant dense<0.000000e+00> : vector<128x128xf32>
    %4 = tpu.matmul %2, %3, %cst_3 {dimension_numbers = #tpu.dot_dimension_numbers<[1], [0], [0], [1], [0, 0, 1, 1], [], []>} : vector<128x288xbf16>, vector<288x128xbf16>, vector<128x128xf32> -> vector<128x128xf32>
    %c0_4 = arith.constant 0 : index
    %c0_5 = arith.constant 0 : index
    %5 = vector.load %arg5[%c0_4, %c0_5] : memref<1x128xf32, #tpu.memory_space<vmem>>, vector<1x128xf32>
    %6 = vector.broadcast %5 : vector<1x128xf32> to vector<128x128xf32>
    %7 = arith.mulf %4, %6 : vector<128x128xf32>
    %c0_6 = arith.constant 0 : index
    %c0_7 = arith.constant 0 : index
    %8 = vector.load %arg6[%c0_6, %c0_7] : memref<1x128xf32, #tpu.memory_space<vmem>>, vector<1x128xf32>
    %9 = vector.broadcast %8 : vector<1x128xf32> to vector<128x128xf32>
    %10 = arith.addf %7, %9 : vector<128x128xf32>
    %11 = arith.truncf %10 : vector<128x128xf32> to vector<128x128xbf16>
    %c0_8 = arith.constant 0 : index
    %c0_9 = arith.constant 0 : index
    %12 = vector.load %arg7[%c0_8, %c0_9] : memref<128x128xbf16, #tpu.memory_space<vmem>>, vector<128x128xbf16>
    tpu.vector_store %arg7[%c0_8, %c0_9], %11 {strides = array<i32>} : memref<128x128xbf16, #tpu.memory_space<vmem>>, vector<128x128xbf16>,
    return
  }
  func.func @transform_0(%arg0: i32, %arg1: i32, %arg2: i32) -> (i32, i32) {
    %c0_i32 = arith.constant 0 : i32
    return %arg0, %arg2 : i32, i32
  }
  func.func @transform_1(%arg0: i32, %arg1: i32, %arg2: i32) -> (i32, i32) {
    %c0_i32 = arith.constant 0 : i32
    return %arg2, %arg1 : i32, i32
  }
  func.func @transform_2(%arg0: i32, %arg1: i32, %arg2: i32) -> (i32, i32) {
    %c0_i32 = arith.constant 0 : i32
    %c0_i32_0 = arith.constant 0 : i32
    return %c0_i32, %arg1 : i32, i32
  }
  func.func @transform_3(%arg0: i32, %arg1: i32, %arg2: i32) -> (i32, i32) {
    %c0_i32 = arith.constant 0 : i32
    %c0_i32_0 = arith.constant 0 : i32
    return %c0_i32, %arg1 : i32, i32
  }
  func.func @transform_4(%arg0: i32, %arg1: i32, %arg2: i32) -> (i32, i32) {
    %c0_i32 = arith.constant 0 : i32
    return %arg0, %arg1 : i32, i32
  }
}

module attributes {stable_mosaic.version = 11 : i64} {
  func.func @kernel(%arg0: i32, %arg1: i32, %arg2: i32, %arg3: memref<512x144xbf16, #tpu.memory_space<vmem>>, %arg4: memref<144x128xbf16, #tpu.memory_space<vmem>>, %arg5: memref<1x128xf32, #tpu.memory_space<vmem>>, %arg6: memref<1x128xf32, #tpu.memory_space<vmem>>, %arg7: memref<512x128xf32, #tpu.memory_space<vmem>>) attributes {dimension_semantics = [#tpu.dimension_semantics<parallel>, #tpu.dimension_semantics<parallel>, #tpu.dimension_semantics<arbitrary>], iteration_bounds = array<i64: 1, 1, 1>, scalar_prefetch = 0 : i64, scratch_operands = 0 : i64, tpu.core_type = #tpu.core_type<tc>, window_params = [{transform_indices = @transform_0, window_bounds = array<i64: 512, 144>}, {transform_indices = @transform_1, window_bounds = array<i64: 144, 128>}, {transform_indices = @transform_2, window_bounds = array<i64: 1, 128>}, {transform_indices = @transform_3, window_bounds = array<i64: 1, 128>}, {transform_indices = @transform_4, window_bounds = array<i64: 512, 128>}]} {
    %c0 = arith.constant 0 : index
    %c0_0 = arith.constant 0 : index
    %0 = vector.load %arg3[%c0, %c0_0] : memref<512x144xbf16, #tpu.memory_space<vmem>>, vector<512x144xbf16>
    %cst = arith.constant 0.000000e+00 : bf16
    %1 = vector.broadcast %cst : bf16 to vector<512x144xbf16>
    %2 = arith.maximumf %0, %1 : vector<512x144xbf16>
    %c0_1 = arith.constant 0 : index
    %c0_2 = arith.constant 0 : index
    %3 = vector.load %arg4[%c0_1, %c0_2] : memref<144x128xbf16, #tpu.memory_space<vmem>>, vector<144x128xbf16>
    %cst_3 = arith.constant dense<0.000000e+00> : vector<512x128xf32>
    %4 = tpu.matmul %2, %3, %cst_3 {dimension_numbers = #tpu.dot_dimension_numbers<[1], [0], [0], [1], [0, 0, 1, 1], [], []>} : vector<512x144xbf16>, vector<144x128xbf16>, vector<512x128xf32> -> vector<512x128xf32>
    %c0_4 = arith.constant 0 : index
    %c0_5 = arith.constant 0 : index
    %5 = vector.load %arg5[%c0_4, %c0_5] : memref<1x128xf32, #tpu.memory_space<vmem>>, vector<1x128xf32>
    %6 = vector.broadcast %5 : vector<1x128xf32> to vector<512x128xf32>
    %7 = arith.mulf %4, %6 : vector<512x128xf32>
    %c0_6 = arith.constant 0 : index
    %c0_7 = arith.constant 0 : index
    %8 = vector.load %arg6[%c0_6, %c0_7] : memref<1x128xf32, #tpu.memory_space<vmem>>, vector<1x128xf32>
    %9 = vector.broadcast %8 : vector<1x128xf32> to vector<512x128xf32>
    %10 = arith.addf %7, %9 : vector<512x128xf32>
    %11 = math.tanh %10 : vector<512x128xf32>
    %c0_8 = arith.constant 0 : index
    %c0_9 = arith.constant 0 : index
    %12 = vector.load %arg7[%c0_8, %c0_9] : memref<512x128xf32, #tpu.memory_space<vmem>>, vector<512x128xf32>
    tpu.vector_store %arg7[%c0_8, %c0_9], %11 {strides = array<i32>} : memref<512x128xf32, #tpu.memory_space<vmem>>, vector<512x128xf32>,
    return
  }
  func.func @transform_0(%arg0: i32, %arg1: i32, %arg2: i32) -> (i32, i32) {
    %c0_i32 = arith.constant 0 : i32
    return %arg0, %arg2 : i32, i32
  }
  func.func @transform_1(%arg0: i32, %arg1: i32, %arg2: i32) -> (i32, i32) {
    %c0_i32 = arith.constant 0 : i32
    return %arg2, %arg1 : i32, i32
  }
  func.func @transform_2(%arg0: i32, %arg1: i32, %arg2: i32) -> (i32, i32) {
    %c0_i32 = arith.constant 0 : i32
    %c0_i32_0 = arith.constant 0 : i32
    return %c0_i32, %arg1 : i32, i32
  }
  func.func @transform_3(%arg0: i32, %arg1: i32, %arg2: i32) -> (i32, i32) {
    %c0_i32 = arith.constant 0 : i32
    %c0_i32_0 = arith.constant 0 : i32
    return %c0_i32, %arg1 : i32, i32
  }
  func.func @transform_4(%arg0: i32, %arg1: i32, %arg2: i32) -> (i32, i32) {
    %c0_i32 = arith.constant 0 : i32
    return %arg0, %arg1 : i32, i32
  }
}

</mosaic_0001>

<llo_original>
// kernel: unet_generator_forward.10
$region0: #{unet_generator_forward.10}
  #allocation0 [shape = 'u32[]', space=smem, size = 0x4, offset = 0x4, fixed_abs, tag = 'smem constant byte address 0x4 - core index']
  #allocation1 [shape = 'u32[144,128]{1,0:T(1,128)}', space=vmem, size = 0x12000, scoped, tag = 'internal scratch']
  %s0 = inlined_call_operand.vmem [shape: bf16[512,48], index: 0, kind: input, shape index: {}]
  %s1 = inlined_call_operand.vmem [shape: bf16[48,128], index: 1, kind: input, shape index: {}]
  %s2 = inlined_call_operand.vmem [shape: f32[1,128], index: 2, kind: input, shape index: {}]
  %s3 = inlined_call_operand.vmem [shape: f32[1,128], index: 3, kind: input, shape index: {}]
  %s4 = inlined_call_operand.vmem [shape: bf16[512,128], index: 4, kind: output, shape index: {}]
  %s5 = sld [smem:[#allocation0]]
  $region26: #{unet_generator_forward.10} parent=0
    _
  %s7 = ssub.s32 1, %s5
  %s8 = scalar_select 0, %s7, %s5
  // Predicated region
  $region2: #{unet_generator_forward.10} parent=0 // pred_check
    _
  $region3: #{unet_generator_forward.10} parent=0 // pred_check_branch
    %10 = sbr.rel (0) target = $region5
  $region4: #{unet_generator_forward.10} parent=0 // pred_region
    _
  $region5: #{unet_generator_forward.10} parent=0 // pred_fallthru
    _
  // Predicated region
  $region6: #{unet_generator_forward.10} parent=0 // pred_check
    _
  $region7: #{unet_generator_forward.10} parent=0 // pred_check_branch
    %12 = sbr.rel (0) target = $region9
  $region8: #{unet_generator_forward.10} parent=0 // pred_region
    _
  $region9: #{unet_generator_forward.10} parent=0 // pred_fallthru
    _
  // Predicated region
  $region10: #{unet_generator_forward.10} parent=0 // pred_check
    _
  $region11: #{unet_generator_forward.10} parent=0 // pred_check_branch
    %14 = sbr.rel (0) target = $region13
  $region12: #{unet_generator_forward.10} parent=0 // pred_region
    _
  $region13: #{unet_generator_forward.10} parent=0 // pred_fallthru
    _
  // Predicated region
  $region14: #{unet_generator_forward.10} parent=0 // pred_check
    _
  $region15: #{unet_generator_forward.10} parent=0 // pred_check_branch
    %16 = sbr.rel (0) target = $region17
  $region16: #{unet_generator_forward.10} parent=0 // pred_region
    _
  $region17: #{unet_generator_forward.10} parent=0 // pred_fallthru
    _
  %v18 = vld [vmem:[%s0] sm:$0xf]
  %v19 = vld [vmem:[%s0 + $0x4] sm:$0xf]
  %v20 = vld [vmem:[%s0 + $0x8] sm:$0xf]
  %v21 = vld [vmem:[%s0 + $0xc] sm:$0xf]
  %v22 = vld [vmem:[%s0 + $0x10] sm:$0xf]
  %v23 = vld [vmem:[%s0 + $0x14] sm:$0xf]
  %v24 = vld [vmem:[%s0 + $0x18] sm:$0xf]
  %v25 = vld [vmem:[%s0 + $0x1c] sm:$0xf]
  %v26 = vld [vmem:[%s0 + $0x20] sm:$0xf]
  %v27 = vld [vmem:[%s0 + $0x24] sm:$0xf]
  %v28 = vld [vmem:[%s0 + $0x28] sm:$0xf]
  %v29 = vld [vmem:[%s0 + $0x2c] sm:$0xf]
  %v30 = vld [vmem:[%s0 + $0x30] sm:$0xf]
  %v31 = vld [vmem:[%s0 + $0x34] sm:$0xf]
  %v32 = vld [vmem:[%s0 + $0x38] sm:$0xf]
  %v33 = vld [vmem:[%s0 + $0x3c] sm:$0xf]
  %v34 = vld [vmem:[%s0 + $0x40] sm:$0xf]
  %v35 = vld [vmem:[%s0 + $0x44] sm:$0xf]
  %v36 = vld [vmem:[%s0 + $0x48] sm:$0xf]
  %v37 = vld [vmem:[%s0 + $0x4c] sm:$0xf]
  %v38 = vld [vmem:[%s0 + $0x50] sm:$0xf]
  %v39 = vld [vmem:[%s0 + $0x54] sm:$0xf]
  %v40 = vld [vmem:[%s0 + $0x58] sm:$0xf]
  %v41 = vld [vmem:[%s0 + $0x5c] sm:$0xf]
  %v42 = vld [vmem:[%s0 + $0x60] sm:$0xf]
  %v43 = vld [vmem:[%s0 + $0x64] sm:$0xf]
  %v44 = vld [vmem:[%s0 + $0x68] sm:$0xf]
  %v45 = vld [vmem:[%s0 + $0x6c] sm:$0xf]
  %v46 = vld [vmem:[%s0 + $0x70] sm:$0xf]
  %v47 = vld [vmem:[%s0 + $0x74] sm:$0xf]
  %v48 = vld [vmem:[%s0 + $0x78] sm:$0xf]
  %v49 = vld [vmem:[%s0 + $0x7c] sm:$0xf]
  %v50 = vld [vmem:[%s0 + $0x80] sm:$0xf]
  %v51 = vld [vmem:[%s0 + $0x84] sm:$0xf]
  %v52 = vld [vmem:[%s0 + $0x88] sm:$0xf]
  %v53 = vld [vmem:[%s0 + $0x8c] sm:$0xf]
  %v54 = vld [vmem:[%s0 + $0x90] sm:$0xf]
  %v55 = vld [vmem:[%s0 + $0x94] sm:$0xf]
  %v56 = vld [vmem:[%s0 + $0x98] sm:$0xf]
  %v57 = vld [vmem:[%s0 + $0x9c] sm:$0xf]
  %v58 = vld [vmem:[%s0 + $0xa0] sm:$0xf]
  %v59 = vld [vmem:[%s0 + $0xa4] sm:$0xf]
  %v60 = vld [vmem:[%s0 + $0xa8] sm:$0xf]
  %v61 = vld [vmem:[%s0 + $0xac] sm:$0xf]
  %v62 = vld [vmem:[%s0 + $0xb0] sm:$0xf]
  %v63 = vld [vmem:[%s0 + $0xb4] sm:$0xf]
  %v64 = vld [vmem:[%s0 + $0xb8] sm:$0xf]
  %v65 = vld [vmem:[%s0 + $0xbc] sm:$0xf]
  %v66 = vld [vmem:[%s0 + $0xc0] sm:$0xf]
  %v67 = vld [vmem:[%s0 + $0xc4] sm:$0xf]
  %v68 = vld [vmem:[%s0 + $0xc8] sm:$0xf]
  %v69 = vld [vmem:[%s0 + $0xcc] sm:$0xf]
  %v70 = vld [vmem:[%s0 + $0xd0] sm:$0xf]
  %v71 = vld [vmem:[%s0 + $0xd4] sm:$0xf]
  %v72 = vld [vmem:[%s0 + $0xd8] sm:$0xf]
  %v73 = vld [vmem:[%s0 + $0xdc] sm:$0xf]
  %v74 = vld [vmem:[%s0 + $0xe0] sm:$0xf]
  %v75 = vld [vmem:[%s0 + $0xe4] sm:$0xf]
  %v76 = vld [vmem:[%s0 + $0xe8] sm:$0xf]
  %v77 = vld [vmem:[%s0 + $0xec] sm:$0xf]
  %v78 = vld [vmem:[%s0 + $0xf0] sm:$0xf]
  %v79 = vld [vmem:[%s0 + $0xf4] sm:$0xf]
  %v80 = vld [vmem:[%s0 + $0xf8] sm:$0xf]
  %v81 = vld [vmem:[%s0 + $0xfc] sm:$0xf]
  %v82 = vld [vmem:[%s1] sm:$0xf]
  %v83 = vld [vmem:[%s1 + $0x4] sm:$0xf]
  %v84 = vld [vmem:[%s1 + $0x8] sm:$0xf]
  %v85 = vld [vmem:[%s1 + $0xc] sm:$0xf]
  %v86 = vld [vmem:[%s1 + $0x10] sm:$0xf]
  %v87 = vld [vmem:[%s1 + $0x14] sm:$0xf]
  %v152 = vunpack.c.l.b16 %v18
  %v153 = vunpack.c.l.b16 %v19
  %v154 = vunpack.c.l.b16 %v20
  %v155 = vunpack.c.l.b16 %v21
  %v156 = vunpack.c.l.b16 %v22
  %v157 = vunpack.c.l.b16 %v23
  %v158 = vunpack.c.l.b16 %v24
  %v159 = vunpack.c.l.b16 %v25
  %v160 = vunpack.c.l.b16 %v26
  %v161 = vunpack.c.l.b16 %v27
  %v162 = vunpack.c.l.b16 %v28
  %v163 = vunpack.c.l.b16 %v29
  %v164 = vunpack.c.l.b16 %v30
  %v165 = vunpack.c.l.b16 %v31
  %v166 = vunpack.c.l.b16 %v32
  %v167 = vunpack.c.l.b16 %v33
  %v168 = vunpack.c.l.b16 %v34
  %v169 = vunpack.c.l.b16 %v35
  %v170 = vunpack.c.l.b16 %v36
  %v171 = vunpack.c.l.b16 %v37
  %v172 = vunpack.c.l.b16 %v38
  %v173 = vunpack.c.l.b16 %v39
  %v174 = vunpack.c.l.b16 %v40
  %v175 = vunpack.c.l.b16 %v41
  %v176 = vunpack.c.l.b16 %v42
  %v177 = vunpack.c.l.b16 %v43
  %v178 = vunpack.c.l.b16 %v44
  %v179 = vunpack.c.l.b16 %v45
  %v180 = vunpack.c.l.b16 %v46
  %v181 = vunpack.c.l.b16 %v47
  %v182 = vunpack.c.l.b16 %v48
  %v183 = vunpack.c.l.b16 %v49
  %v184 = vunpack.c.l.b16 %v50
  %v185 = vunpack.c.l.b16 %v51
  %v186 = vunpack.c.l.b16 %v52
  %v187 = vunpack.c.l.b16 %v53
  %v188 = vunpack.c.l.b16 %v54
  %v189 = vunpack.c.l.b16 %v55
  %v190 = vunpack.c.l.b16 %v56
  %v191 = vunpack.c.l.b16 %v57
  %v192 = vunpack.c.l.b16 %v58
  %v193 = vunpack.c.l.b16 %v59
  %v194 = vunpack.c.l.b16 %v60
  %v195 = vunpack.c.l.b16 %v61
  %v196 = vunpack.c.l.b16 %v62
  %v197 = vunpack.c.l.b16 %v63
  %v198 = vunpack.c.l.b16 %v64
  %v199 = vunpack.c.l.b16 %v65
  %v200 = vunpack.c.l.b16 %v66
  %v201 = vunpack.c.l.b16 %v67
  %v202 = vunpack.c.l.b16 %v68
  %v203 = vunpack.c.l.b16 %v69
  %v204 = vunpack.c.l.b16 %v70
  %v205 = vunpack.c.l.b16 %v71
  %v206 = vunpack.c.l.b16 %v72
  %v207 = vunpack.c.l.b16 %v73
  %v208 = vunpack.c.l.b16 %v74
  %v209 = vunpack.c.l.b16 %v75
  %v210 = vunpack.c.l.b16 %v76
  %v211 = vunpack.c.l.b16 %v77
  %v212 = vunpack.c.l.b16 %v78
  %v213 = vunpack.c.l.b16 %v79
  %v214 = vunpack.c.l.b16 %v80
  %v215 = vunpack.c.l.b16 %v81
  %v216 = vpack.c.b16 %v153, %v152
  %v217 = vpack.c.b16 %v155, %v154
  %v218 = vpack.c.b16 %v157, %v156
  %v219 = vpack.c.b16 %v159, %v158
  %v220 = vpack.c.b16 %v161, %v160
  %v221 = vpack.c.b16 %v163, %v162
  %v222 = vpack.c.b16 %v165, %v164
  %v223 = vpack.c.b16 %v167, %v166
  %v224 = vpack.c.b16 %v169, %v168
  %v225 = vpack.c.b16 %v171, %v170
  %v226 = vpack.c.b16 %v173, %v172
  %v227 = vpack.c.b16 %v175, %v174
  %v228 = vpack.c.b16 %v177, %v176
  %v229 = vpack.c.b16 %v179, %v178
  %v230 = vpack.c.b16 %v181, %v180
  %v231 = vpack.c.b16 %v183, %v182
  %v232 = vpack.c.b16 %v185, %v184
  %v233 = vpack.c.b16 %v187, %v186
  %v234 = vpack.c.b16 %v189, %v188
  %v235 = vpack.c.b16 %v191, %v190
  %v236 = vpack.c.b16 %v193, %v192
  %v237 = vpack.c.b16 %v195, %v194
  %v238 = vpack.c.b16 %v197, %v196
  %v239 = vpack.c.b16 %v199, %v198
  %v240 = vpack.c.b16 %v201, %v200
  %v241 = vpack.c.b16 %v203, %v202
  %v242 = vpack.c.b16 %v205, %v204
  %v243 = vpack.c.b16 %v207, %v206
  %v244 = vpack.c.b16 %v209, %v208
  %v245 = vpack.c.b16 %v211, %v210
  %v246 = vpack.c.b16 %v213, %v212
  %v247 = vpack.c.b16 %v215, %v214
  %v254 = vunpack.c.l.b16 %v82
  %v255 = vunpack.c.l.b16 %v83
  %v256 = vunpack.c.l.b16 %v84
  %v257 = vunpack.c.l.b16 %v85
  %v258 = vunpack.c.l.b16 %v86
  %v259 = vunpack.c.l.b16 %v87
  %v260 = vpack.c.b16 %v255, %v254
  %v261 = vpack.c.b16 %v257, %v256
  %v262 = vpack.c.b16 %v259, %v258
  %vm266 = vcmask 392192
  %v268 = vsel %vm266, %v216, 0
  %v271 = vsel %vm266, %v217, 0
  %v274 = vsel %vm266, %v218, 0
  %v277 = vsel %vm266, %v219, 0
  %v280 = vsel %vm266, %v220, 0
  %v283 = vsel %vm266, %v221, 0
  %v286 = vsel %vm266, %v222, 0
  %v289 = vsel %vm266, %v223, 0
  %v292 = vsel %vm266, %v224, 0
  %v295 = vsel %vm266, %v225, 0
  %v298 = vsel %vm266, %v226, 0
  %v301 = vsel %vm266, %v227, 0
  %v304 = vsel %vm266, %v228, 0
  %v307 = vsel %vm266, %v229, 0
  %v310 = vsel %vm266, %v230, 0
  %v313 = vsel %vm266, %v231, 0
  %v316 = vsel %vm266, %v232, 0
  %v319 = vsel %vm266, %v233, 0
  %v322 = vsel %vm266, %v234, 0
  %v325 = vsel %vm266, %v235, 0
  %v328 = vsel %vm266, %v236, 0
  %v331 = vsel %vm266, %v237, 0
  %v334 = vsel %vm266, %v238, 0
  %v337 = vsel %vm266, %v239, 0
  %v340 = vsel %vm266, %v240, 0
  %v343 = vsel %vm266, %v241, 0
  %v346 = vsel %vm266, %v242, 0
  %v349 = vsel %vm266, %v243, 0
  %v352 = vsel %vm266, %v244, 0
  %v355 = vsel %vm266, %v245, 0
  %v358 = vsel %vm266, %v246, 0
  %v361 = vsel %vm266, %v247, 0
  %363 = vmatprep.subr.bf16.mxu0 0
  %364 = vmatpush1.bf16.msra.mxu0 0
  %365 = vmatprep.subr.bf16.mxu0 0
  %366 = vmatpush1.bf16.msra.mxu0 0
  %367 = vmatprep.subr.bf16.mxu0 0
  %368 = vmatpush1.bf16.msra.mxu0 0
  %369 = vmatprep.subr.bf16.mxu0 0
  %370 = vmatpush1.bf16.msra.mxu0 0
  %371 = vmatprep.subr.bf16.mxu0 0
  %372 = vmatpush1.bf16.msra.mxu0 0
  %373 = vmatprep.subr.bf16.mxu0 0
  %374 = vmatpush1.bf16.msra.mxu0 %v262
  %375 = vmatprep.subr.bf16.mxu0 0
  %376 = vmatpush1.bf16.msra.mxu0 %v261
  %377 = vmatprep.subr.bf16.mxu0 0
  %378 = vmatpush1.bf16.msra.mxu0 %v260
  %379 = vmatprep.subr.bf16.mxu0 0
  %380 = vmatpush2.bf16.msra.mxu0 0
  %381 = vmatprep.subr.bf16.mxu0 0
  %382 = vmatpush2.bf16.msra.mxu0 0
  %383 = vmatprep.subr.bf16.mxu0 0
  %384 = vmatpush2.bf16.msra.mxu0 0
  %385 = vmatprep.subr.bf16.mxu0 0
  %386 = vmatpush2.bf16.msra.mxu0 0
  %387 = vmatprep.subr.bf16.mxu0 0
  %388 = vmatpush2.bf16.msra.mxu0 0
  %389 = vmatprep.subr.bf16.mxu0 0
  %390 = vmatpush2.bf16.msra.mxu0 0
  %391 = vmatprep.subr.bf16.mxu0 0
  %392 = vmatpush2.bf16.msra.mxu0 0
  %393 = vmatprep.subr.bf16.mxu0 0
  %394 = vmatpush2.bf16.msra.mxu0 0
  %395 = vmatprep.mubr.bf16.mxu0 0
  %396 = vmatmul.mubr.bf16.gmra.mxu0 %v268
  %v397 = vpop.f32.mrf.mxu0
  %v398 = vadd.f32 0.0, %v397
  %v399 = vpop.f32.mrf.mxu0
  %v400 = vpop.f32.mrf.mxu0
  %v401 = vadd.f32 0.0, %v400
  %v402 = vpop.f32.mrf.mxu0
  %403 = vmatprep.mubr.bf16.mxu0 0
  %404 = vmatmul.mubr.bf16.gmra.mxu0 %v271
  %v405 = vpop.f32.mrf.mxu0
  %v406 = vadd.f32 0.0, %v405
  %v407 = vpop.f32.mrf.mxu0
  %v408 = vpop.f32.mrf.mxu0
  %v409 = vadd.f32 0.0, %v408
  %v410 = vpop.f32.mrf.mxu0
  %411 = vmatprep.mubr.bf16.mxu0 0
  %412 = vmatmul.mubr.bf16.gmra.mxu0 %v274
  %v413 = vpop.f32.mrf.mxu0
  %v414 = vadd.f32 0.0, %v413
  %v415 = vpop.f32.mrf.mxu0
  %v416 = vpop.f32.mrf.mxu0
  %v417 = vadd.f32 0.0, %v416
  %v418 = vpop.f32.mrf.mxu0
  %419 = vmatprep.mubr.bf16.mxu0 0
  %420 = vmatmul.mubr.bf16.gmra.mxu0 %v277
  %v421 = vpop.f32.mrf.mxu0
  %v422 = vadd.f32 0.0, %v421
  %v423 = vpop.f32.mrf.mxu0
  %v424 = vpop.f32.mrf.mxu0
  %v425 = vadd.f32 0.0, %v424
  %v426 = vpop.f32.mrf.mxu0
  %427 = vmatprep.mubr.bf16.mxu0 0
  %428 = vmatmul.mubr.bf16.gmra.mxu0 %v280
  %v429 = vpop.f32.mrf.mxu0
  %v430 = vadd.f32 0.0, %v429
  %v431 = vpop.f32.mrf.mxu0
  %v432 = vpop.f32.mrf.mxu0
  %v433 = vadd.f32 0.0, %v432
  %v434 = vpop.f32.mrf.mxu0
  %435 = vmatprep.mubr.bf16.mxu0 0
  %436 = vmatmul.mubr.bf16.gmra.mxu0 %v283
  %v437 = vpop.f32.mrf.mxu0
  %v438 = vadd.f32 0.0, %v437
  %v439 = vpop.f32.mrf.mxu0
  %v440 = vpop.f32.mrf.mxu0
  %v441 = vadd.f32 0.0, %v440
  %v442 = vpop.f32.mrf.mxu0
  %443 = vmatprep.mubr.bf16.mxu0 0
  %444 = vmatmul.mubr.bf16.gmra.mxu0 %v286
  %v445 = vpop.f32.mrf.mxu0
  %v446 = vadd.f32 0.0, %v445
  %v447 = vpop.f32.mrf.mxu0
  %v448 = vpop.f32.mrf.mxu0
  %v449 = vadd.f32 0.0, %v448
  %v450 = vpop.f32.mrf.mxu0
  %451 = vmatprep.mubr.bf16.mxu0 0
  %452 = vmatmul.mubr.bf16.gmra.mxu0 %v289
  %v453 = vpop.f32.mrf.mxu0
  %v454 = vadd.f32 0.0, %v453
  %v455 = vpop.f32.mrf.mxu0
  %v456 = vpop.f32.mrf.mxu0
  %v457 = vadd.f32 0.0, %v456
  %v458 = vpop.f32.mrf.mxu0
  %459 = vmatprep.mubr.bf16.mxu0 0
  %460 = vmatmul.mubr.bf16.gmra.mxu0 %v292
  %v461 = vpop.f32.mrf.mxu0
  %v462 = vadd.f32 0.0, %v461
  %v463 = vpop.f32.mrf.mxu0
  %v464 = vpop.f32.mrf.mxu0
  %v465 = vadd.f32 0.0, %v464
  %v466 = vpop.f32.mrf.mxu0
  %467 = vmatprep.mubr.bf16.mxu0 0
  %468 = vmatmul.mubr.bf16.gmra.mxu0 %v295
  %v469 = vpop.f32.mrf.mxu0
  %v470 = vadd.f32 0.0, %v469
  %v471 = vpop.f32.mrf.mxu0
  %v472 = vpop.f32.mrf.mxu0
  %v473 = vadd.f32 0.0, %v472
  %v474 = vpop.f32.mrf.mxu0
  %475 = vmatprep.mubr.bf16.mxu0 0
  %476 = vmatmul.mubr.bf16.gmra.mxu0 %v298
  %v477 = vpop.f32.mrf.mxu0
  %v478 = vadd.f32 0.0, %v477
  %v479 = vpop.f32.mrf.mxu0
  %v480 = vpop.f32.mrf.mxu0
  %v481 = vadd.f32 0.0, %v480
  %v482 = vpop.f32.mrf.mxu0
  %483 = vmatprep.mubr.bf16.mxu0 0
  %484 = vmatmul.mubr.bf16.gmra.mxu0 %v301
  %v485 = vpop.f32.mrf.mxu0
  %v486 = vadd.f32 0.0, %v485
  %v487 = vpop.f32.mrf.mxu0
  %v488 = vpop.f32.mrf.mxu0
  %v489 = vadd.f32 0.0, %v488
  %v490 = vpop.f32.mrf.mxu0
  %491 = vmatprep.mubr.bf16.mxu0 0
  %492 = vmatmul.mubr.bf16.gmra.mxu0 %v304
  %v493 = vpop.f32.mrf.mxu0
  %v494 = vadd.f32 0.0, %v493
  %v495 = vpop.f32.mrf.mxu0
  %v496 = vpop.f32.mrf.mxu0
  %v497 = vadd.f32 0.0, %v496
  %v498 = vpop.f32.mrf.mxu0
  %499 = vmatprep.mubr.bf16.mxu0 0
  %500 = vmatmul.mubr.bf16.gmra.mxu0 %v307
  %v501 = vpop.f32.mrf.mxu0
  %v502 = vadd.f32 0.0, %v501
  %v503 = vpop.f32.mrf.mxu0
  %v504 = vpop.f32.mrf.mxu0
  %v505 = vadd.f32 0.0, %v504
  %v506 = vpop.f32.mrf.mxu0
  %507 = vmatprep.mubr.bf16.mxu0 0
  %508 = vmatmul.mubr.bf16.gmra.mxu0 %v310
  %v509 = vpop.f32.mrf.mxu0
  %v510 = vadd.f32 0.0, %v509
  %v511 = vpop.f32.mrf.mxu0
  %v512 = vpop.f32.mrf.mxu0
  %v513 = vadd.f32 0.0, %v512
  %v514 = vpop.f32.mrf.mxu0
  %515 = vmatprep.mubr.bf16.mxu0 0
  %516 = vmatmul.mubr.bf16.gmra.mxu0 %v313
  %v517 = vpop.f32.mrf.mxu0
  %v518 = vadd.f32 0.0, %v517
  %v519 = vpop.f32.mrf.mxu0
  %v520 = vpop.f32.mrf.mxu0
  %v521 = vadd.f32 0.0, %v520
  %v522 = vpop.f32.mrf.mxu0
  %523 = vmatprep.mubr.bf16.mxu0 0
  %524 = vmatmul.mubr.bf16.gmra.mxu0 %v316
  %v525 = vpop.f32.mrf.mxu0
  %v526 = vadd.f32 0.0, %v525
  %v527 = vpop.f32.mrf.mxu0
  %v528 = vpop.f32.mrf.mxu0
  %v529 = vadd.f32 0.0, %v528
  %v530 = vpop.f32.mrf.mxu0
  %531 = vmatprep.mubr.bf16.mxu0 0
  %532 = vmatmul.mubr.bf16.gmra.mxu0 %v319
  %v533 = vpop.f32.mrf.mxu0
  %v534 = vadd.f32 0.0, %v533
  %v535 = vpop.f32.mrf.mxu0
  %v536 = vpop.f32.mrf.mxu0
  %v537 = vadd.f32 0.0, %v536
  %v538 = vpop.f32.mrf.mxu0
  %539 = vmatprep.mubr.bf16.mxu0 0
  %540 = vmatmul.mubr.bf16.gmra.mxu0 %v322
  %v541 = vpop.f32.mrf.mxu0
  %v542 = vadd.f32 0.0, %v541
  %v543 = vpop.f32.mrf.mxu0
  %v544 = vpop.f32.mrf.mxu0
  %v545 = vadd.f32 0.0, %v544
  %v546 = vpop.f32.mrf.mxu0
  %547 = vmatprep.mubr.bf16.mxu0 0
  %548 = vmatmul.mubr.bf16.gmra.mxu0 %v325
  %v549 = vpop.f32.mrf.mxu0
  %v550 = vadd.f32 0.0, %v549
  %v551 = vpop.f32.mrf.mxu0
  %v552 = vpop.f32.mrf.mxu0
  %v553 = vadd.f32 0.0, %v552
  %v554 = vpop.f32.mrf.mxu0
  %555 = vmatprep.mubr.bf16.mxu0 0
  %556 = vmatmul.mubr.bf16.gmra.mxu0 %v328
  %v557 = vpop.f32.mrf.mxu0
  %v558 = vadd.f32 0.0, %v557
  %v559 = vpop.f32.mrf.mxu0
  %v560 = vpop.f32.mrf.mxu0
  %v561 = vadd.f32 0.0, %v560
  %v562 = vpop.f32.mrf.mxu0
  %563 = vmatprep.mubr.bf16.mxu0 0
  %564 = vmatmul.mubr.bf16.gmra.mxu0 %v331
  %v565 = vpop.f32.mrf.mxu0
  %v566 = vadd.f32 0.0, %v565
  %v567 = vpop.f32.mrf.mxu0
  %v568 = vpop.f32.mrf.mxu0
  %v569 = vadd.f32 0.0, %v568
  %v570 = vpop.f32.mrf.mxu0
  %571 = vmatprep.mubr.bf16.mxu0 0
  %572 = vmatmul.mubr.bf16.gmra.mxu0 %v334
  %v573 = vpop.f32.mrf.mxu0
  %v574 = vadd.f32 0.0, %v573
  %v575 = vpop.f32.mrf.mxu0
  %v576 = vpop.f32.mrf.mxu0
  %v577 = vadd.f32 0.0, %v576
  %v578 = vpop.f32.mrf.mxu0
  %579 = vmatprep.mubr.bf16.mxu0 0
  %580 = vmatmul.mubr.bf16.gmra.mxu0 %v337
  %v581 = vpop.f32.mrf.mxu0
  %v582 = vadd.f32 0.0, %v581
  %v583 = vpop.f32.mrf.mxu0
  %v584 = vpop.f32.mrf.mxu0
  %v585 = vadd.f32 0.0, %v584
  %v586 = vpop.f32.mrf.mxu0
  %587 = vmatprep.mubr.bf16.mxu0 0
  %588 = vmatmul.mubr.bf16.gmra.mxu0 %v340
  %v589 = vpop.f32.mrf.mxu0
  %v590 = vadd.f32 0.0, %v589
  %v591 = vpop.f32.mrf.mxu0
  %v592 = vpop.f32.mrf.mxu0
  %v593 = vadd.f32 0.0, %v592
  %v594 = vpop.f32.mrf.mxu0
  %595 = vmatprep.mubr.bf16.mxu0 0
  %596 = vmatmul.mubr.bf16.gmra.mxu0 %v343
  %v597 = vpop.f32.mrf.mxu0
  %v598 = vadd.f32 0.0, %v597
  %v599 = vpop.f32.mrf.mxu0
  %v600 = vpop.f32.mrf.mxu0
  %v601 = vadd.f32 0.0, %v600
  %v602 = vpop.f32.mrf.mxu0
  %603 = vmatprep.mubr.bf16.mxu0 0
  %604 = vmatmul.mubr.bf16.gmra.mxu0 %v346
  %v605 = vpop.f32.mrf.mxu0
  %v606 = vadd.f32 0.0, %v605
  %v607 = vpop.f32.mrf.mxu0
  %v608 = vpop.f32.mrf.mxu0
  %v609 = vadd.f32 0.0, %v608
  %v610 = vpop.f32.mrf.mxu0
  %611 = vmatprep.mubr.bf16.mxu0 0
  %612 = vmatmul.mubr.bf16.gmra.mxu0 %v349
  %v613 = vpop.f32.mrf.mxu0
  %v614 = vadd.f32 0.0, %v613
  %v615 = vpop.f32.mrf.mxu0
  %v616 = vpop.f32.mrf.mxu0
  %v617 = vadd.f32 0.0, %v616
  %v618 = vpop.f32.mrf.mxu0
  %619 = vmatprep.mubr.bf16.mxu0 0
  %620 = vmatmul.mubr.bf16.gmra.mxu0 %v352
  %v621 = vpop.f32.mrf.mxu0
  %v622 = vadd.f32 0.0, %v621
  %v623 = vpop.f32.mrf.mxu0
  %v624 = vpop.f32.mrf.mxu0
  %v625 = vadd.f32 0.0, %v624
  %v626 = vpop.f32.mrf.mxu0
  %627 = vmatprep.mubr.bf16.mxu0 0
  %628 = vmatmul.mubr.bf16.gmra.mxu0 %v355
  %v629 = vpop.f32.mrf.mxu0
  %v630 = vadd.f32 0.0, %v629
  %v631 = vpop.f32.mrf.mxu0
  %v632 = vpop.f32.mrf.mxu0
  %v633 = vadd.f32 0.0, %v632
  %v634 = vpop.f32.mrf.mxu0
  %635 = vmatprep.mubr.bf16.mxu0 0
  %636 = vmatmul.mubr.bf16.gmra.mxu0 %v358
  %v637 = vpop.f32.mrf.mxu0
  %v638 = vadd.f32 0.0, %v637
  %v639 = vpop.f32.mrf.mxu0
  %v640 = vpop.f32.mrf.mxu0
  %v641 = vadd.f32 0.0, %v640
  %v642 = vpop.f32.mrf.mxu0
  %643 = vmatprep.mubr.bf16.mxu0 0
  %644 = vmatmul.mubr.bf16.gmra.mxu0 %v361
  %v645 = vpop.f32.mrf.mxu0
  %v646 = vadd.f32 0.0, %v645
  %v647 = vpop.f32.mrf.mxu0
  %v648 = vpop.f32.mrf.mxu0
  %v649 = vadd.f32 0.0, %v648
  %v650 = vpop.f32.mrf.mxu0
  %651 = vdwg.mxu0
  %v652 = vld [vmem:[%s2] sm:$0x1]
  %v654 = vlaneseq
  %v655 = vshrl.u32 %v654, 7
  %v656 = vsub.s32 0, %v655
  %v657 = vrot.slane %v652, %v656
  %v659 = vmul.f32 %v398, %v657
  %v660 = vmul.f32 %v401, %v657
  %v661 = vmul.f32 %v406, %v657
  %v662 = vmul.f32 %v409, %v657
  %v663 = vmul.f32 %v414, %v657
  %v664 = vmul.f32 %v417, %v657
  %v665 = vmul.f32 %v422, %v657
  %v666 = vmul.f32 %v425, %v657
  %v667 = vmul.f32 %v430, %v657
  %v668 = vmul.f32 %v433, %v657
  %v669 = vmul.f32 %v438, %v657
  %v670 = vmul.f32 %v441, %v657
  %v671 = vmul.f32 %v446, %v657
  %v672 = vmul.f32 %v449, %v657
  %v673 = vmul.f32 %v454, %v657
  %v674 = vmul.f32 %v457, %v657
  %v675 = vmul.f32 %v462, %v657
  %v676 = vmul.f32 %v465, %v657
  %v677 = vmul.f32 %v470, %v657
  %v678 = vmul.f32 %v473, %v657
  %v679 = vmul.f32 %v478, %v657
  %v680 = vmul.f32 %v481, %v657
  %v681 = vmul.f32 %v486, %v657
  %v682 = vmul.f32 %v489, %v657
  %v683 = vmul.f32 %v494, %v657
  %v684 = vmul.f32 %v497, %v657
  %v685 = vmul.f32 %v502, %v657
  %v686 = vmul.f32 %v505, %v657
  %v687 = vmul.f32 %v510, %v657
  %v688 = vmul.f32 %v513, %v657
  %v689 = vmul.f32 %v518, %v657
  %v690 = vmul.f32 %v521, %v657
  %v691 = vmul.f32 %v526, %v657
  %v692 = vmul.f32 %v529, %v657
  %v693 = vmul.f32 %v534, %v657
  %v694 = vmul.f32 %v537, %v657
  %v695 = vmul.f32 %v542, %v657
  %v696 = vmul.f32 %v545, %v657
  %v697 = vmul.f32 %v550, %v657
  %v698 = vmul.f32 %v553, %v657
  %v699 = vmul.f32 %v558, %v657
  %v700 = vmul.f32 %v561, %v657
  %v701 = vmul.f32 %v566, %v657
  %v702 = vmul.f32 %v569, %v657
  %v703 = vmul.f32 %v574, %v657
  %v704 = vmul.f32 %v577, %v657
  %v705 = vmul.f32 %v582, %v657
  %v706 = vmul.f32 %v585, %v657
  %v707 = vmul.f32 %v590, %v657
  %v708 = vmul.f32 %v593, %v657
  %v709 = vmul.f32 %v598, %v657
  %v710 = vmul.f32 %v601, %v657
  %v711 = vmul.f32 %v606, %v657
  %v712 = vmul.f32 %v609, %v657
  %v713 = vmul.f32 %v614, %v657
  %v714 = vmul.f32 %v617, %v657
  %v715 = vmul.f32 %v622, %v657
  %v716 = vmul.f32 %v625, %v657
  %v717 = vmul.f32 %v630, %v657
  %v718 = vmul.f32 %v633, %v657
  %v719 = vmul.f32 %v638, %v657
  %v720 = vmul.f32 %v641, %v657
  %v721 = vmul.f32 %v646, %v657
  %v722 = vmul.f32 %v649, %v657
  %v723 = vld [vmem:[%s3] sm:$0x1]
  %v725 = vlaneseq
  %v726 = vshrl.u32 %v725, 7
  %v727 = vsub.s32 0, %v726
  %v728 = vrot.slane %v723, %v727
  %v730 = vadd.f32 %v659, %v728
  %v731 = vadd.f32 %v660, %v728
  %v732 = vadd.f32 %v661, %v728
  %v733 = vadd.f32 %v662, %v728
  %v734 = vadd.f32 %v663, %v728
  %v735 = vadd.f32 %v664, %v728
  %v736 = vadd.f32 %v665, %v728
  %v737 = vadd.f32 %v666, %v728
  %v738 = vadd.f32 %v667, %v728
  %v739 = vadd.f32 %v668, %v728
  %v740 = vadd.f32 %v669, %v728
  %v741 = vadd.f32 %v670, %v728
  %v742 = vadd.f32 %v671, %v728
  %v743 = vadd.f32 %v672, %v728
  %v744 = vadd.f32 %v673, %v728
  %v745 = vadd.f32 %v674, %v728
  %v746 = vadd.f32 %v675, %v728
  %v747 = vadd.f32 %v676, %v728
  %v748 = vadd.f32 %v677, %v728
  %v749 = vadd.f32 %v678, %v728
  %v750 = vadd.f32 %v679, %v728
  %v751 = vadd.f32 %v680, %v728
  %v752 = vadd.f32 %v681, %v728
  %v753 = vadd.f32 %v682, %v728
  %v754 = vadd.f32 %v683, %v728
  %v755 = vadd.f32 %v684, %v728
  %v756 = vadd.f32 %v685, %v728
  %v757 = vadd.f32 %v686, %v728
  %v758 = vadd.f32 %v687, %v728
  %v759 = vadd.f32 %v688, %v728
  %v760 = vadd.f32 %v689, %v728
  %v761 = vadd.f32 %v690, %v728
  %v762 = vadd.f32 %v691, %v728
  %v763 = vadd.f32 %v692, %v728
  %v764 = vadd.f32 %v693, %v728
  %v765 = vadd.f32 %v694, %v728
  %v766 = vadd.f32 %v695, %v728
  %v767 = vadd.f32 %v696, %v728
  %v768 = vadd.f32 %v697, %v728
  %v769 = vadd.f32 %v698, %v728
  %v770 = vadd.f32 %v699, %v728
  %v771 = vadd.f32 %v700, %v728
  %v772 = vadd.f32 %v701, %v728
  %v773 = vadd.f32 %v702, %v728
  %v774 = vadd.f32 %v703, %v728
  %v775 = vadd.f32 %v704, %v728
  %v776 = vadd.f32 %v705, %v728
  %v777 = vadd.f32 %v706, %v728
  %v778 = vadd.f32 %v707, %v728
  %v779 = vadd.f32 %v708, %v728
  %v780 = vadd.f32 %v709, %v728
  %v781 = vadd.f32 %v710, %v728
  %v782 = vadd.f32 %v711, %v728
  %v783 = vadd.f32 %v712, %v728
  %v784 = vadd.f32 %v713, %v728
  %v785 = vadd.f32 %v714, %v728
  %v786 = vadd.f32 %v715, %v728
  %v787 = vadd.f32 %v716, %v728
  %v788 = vadd.f32 %v717, %v728
  %v789 = vadd.f32 %v718, %v728
  %v790 = vadd.f32 %v719, %v728
  %v791 = vadd.f32 %v720, %v728
  %v792 = vadd.f32 %v721, %v728
  %v793 = vadd.f32 %v722, %v728
  %v794 = vpack.c.bf16 %v731, %v730
  %v795 = vpack.c.bf16 %v733, %v732
  %v796 = vpack.c.bf16 %v735, %v734
  %v797 = vpack.c.bf16 %v737, %v736
  %v798 = vpack.c.bf16 %v739, %v738
  %v799 = vpack.c.bf16 %v741, %v740
  %v800 = vpack.c.bf16 %v743, %v742
  %v801 = vpack.c.bf16 %v745, %v744
  %v802 = vpack.c.bf16 %v747, %v746
  %v803 = vpack.c.bf16 %v749, %v748
  %v804 = vpack.c.bf16 %v751, %v750
  %v805 = vpack.c.bf16 %v753, %v752
  %v806 = vpack.c.bf16 %v755, %v754
  %v807 = vpack.c.bf16 %v757, %v756
  %v808 = vpack.c.bf16 %v759, %v758
  %v809 = vpack.c.bf16 %v761, %v760
  %v810 = vpack.c.bf16 %v763, %v762
  %v811 = vpack.c.bf16 %v765, %v764
  %v812 = vpack.c.bf16 %v767, %v766
  %v813 = vpack.c.bf16 %v769, %v768
  %v814 = vpack.c.bf16 %v771, %v770
  %v815 = vpack.c.bf16 %v773, %v772
  %v816 = vpack.c.bf16 %v775, %v774
  %v817 = vpack.c.bf16 %v777, %v776
  %v818 = vpack.c.bf16 %v779, %v778
  %v819 = vpack.c.bf16 %v781, %v780
  %v820 = vpack.c.bf16 %v783, %v782
  %v821 = vpack.c.bf16 %v785, %v784
  %v822 = vpack.c.bf16 %v787, %v786
  %v823 = vpack.c.bf16 %v789, %v788
  %v824 = vpack.c.bf16 %v791, %v790
  %v825 = vpack.c.bf16 %v793, %v792
  %v858 = vunpack.c.l.b16 %v794
  %v859 = vunpack.c.h.b16 %v794
  %v860 = vunpack.c.l.b16 %v795
  %v861 = vunpack.c.h.b16 %v795
  %v862 = vunpack.c.l.b16 %v796
  %v863 = vunpack.c.h.b16 %v796
  %v864 = vunpack.c.l.b16 %v797
  %v865 = vunpack.c.h.b16 %v797
  %v866 = vunpack.c.l.b16 %v798
  %v867 = vunpack.c.h.b16 %v798
  %v868 = vunpack.c.l.b16 %v799
  %v869 = vunpack.c.h.b16 %v799
  %v870 = vunpack.c.l.b16 %v800
  %v871 = vunpack.c.h.b16 %v800
  %v872 = vunpack.c.l.b16 %v801
  %v873 = vunpack.c.h.b16 %v801
  %v874 = vunpack.c.l.b16 %v802
  %v875 = vunpack.c.h.b16 %v802
  %v876 = vunpack.c.l.b16 %v803
  %v877 = vunpack.c.h.b16 %v803
  %v878 = vunpack.c.l.b16 %v804
  %v879 = vunpack.c.h.b16 %v804
  %v880 = vunpack.c.l.b16 %v805
  %v881 = vunpack.c.h.b16 %v805
  %v882 = vunpack.c.l.b16 %v806
  %v883 = vunpack.c.h.b16 %v806
  %v884 = vunpack.c.l.b16 %v807
  %v885 = vunpack.c.h.b16 %v807
  %v886 = vunpack.c.l.b16 %v808
  %v887 = vunpack.c.h.b16 %v808
  %v888 = vunpack.c.l.b16 %v809
  %v889 = vunpack.c.h.b16 %v809
  %v890 = vunpack.c.l.b16 %v810
  %v891 = vunpack.c.h.b16 %v810
  %v892 = vunpack.c.l.b16 %v811
  %v893 = vunpack.c.h.b16 %v811
  %v894 = vunpack.c.l.b16 %v812
  %v895 = vunpack.c.h.b16 %v812
  %v896 = vunpack.c.l.b16 %v813
  %v897 = vunpack.c.h.b16 %v813
  %v898 = vunpack.c.l.b16 %v814
  %v899 = vunpack.c.h.b16 %v814
  %v900 = vunpack.c.l.b16 %v815
  %v901 = vunpack.c.h.b16 %v815
  %v902 = vunpack.c.l.b16 %v816
  %v903 = vunpack.c.h.b16 %v816
  %v904 = vunpack.c.l.b16 %v817
  %v905 = vunpack.c.h.b16 %v817
  %v906 = vunpack.c.l.b16 %v818
  %v907 = vunpack.c.h.b16 %v818
  %v908 = vunpack.c.l.b16 %v819
  %v909 = vunpack.c.h.b16 %v819
  %v910 = vunpack.c.l.b16 %v820
  %v911 = vunpack.c.h.b16 %v820
  %v912 = vunpack.c.l.b16 %v821
  %v913 = vunpack.c.h.b16 %v821
  %v914 = vunpack.c.l.b16 %v822
  %v915 = vunpack.c.h.b16 %v822
  %v916 = vunpack.c.l.b16 %v823
  %v917 = vunpack.c.h.b16 %v823
  %v918 = vunpack.c.l.b16 %v824
  %v919 = vunpack.c.h.b16 %v824
  %v920 = vunpack.c.l.b16 %v825
  %v921 = vunpack.c.h.b16 %v825
  %v922 = vpack.c.b16 %v858, %v858
  %v923 = vpack.c.b16 %v859, %v859
  %v924 = vpack.c.b16 %v860, %v860
  %v925 = vpack.c.b16 %v861, %v861
  %v926 = vpack.c.b16 %v862, %v862
  %v927 = vpack.c.b16 %v863, %v863
  %v928 = vpack.c.b16 %v864, %v864
  %v929 = vpack.c.b16 %v865, %v865
  %v930 = vpack.c.b16 %v866, %v866
  %v931 = vpack.c.b16 %v867, %v867
  %v932 = vpack.c.b16 %v868, %v868
  %v933 = vpack.c.b16 %v869, %v869
  %v934 = vpack.c.b16 %v870, %v870
  %v935 = vpack.c.b16 %v871, %v871
  %v936 = vpack.c.b16 %v872, %v872
  %v937 = vpack.c.b16 %v873, %v873
  %v938 = vpack.c.b16 %v874, %v874
  %v939 = vpack.c.b16 %v875, %v875
  %v940 = vpack.c.b16 %v876, %v876
  %v941 = vpack.c.b16 %v877, %v877
  %v942 = vpack.c.b16 %v878, %v878
  %v943 = vpack.c.b16 %v879, %v879
  %v944 = vpack.c.b16 %v880, %v880
  %v945 = vpack.c.b16 %v881, %v881
  %v946 = vpack.c.b16 %v882, %v882
  %v947 = vpack.c.b16 %v883, %v883
  %v948 = vpack.c.b16 %v884, %v884
  %v949 = vpack.c.b16 %v885, %v885
  %v950 = vpack.c.b16 %v886, %v886
  %v951 = vpack.c.b16 %v887, %v887
  %v952 = vpack.c.b16 %v888, %v888
  %v953 = vpack.c.b16 %v889, %v889
  %v954 = vpack.c.b16 %v890, %v890
  %v955 = vpack.c.b16 %v891, %v891
  %v956 = vpack.c.b16 %v892, %v892
  %v957 = vpack.c.b16 %v893, %v893
  %v958 = vpack.c.b16 %v894, %v894
  %v959 = vpack.c.b16 %v895, %v895
  %v960 = vpack.c.b16 %v896, %v896
  %v961 = vpack.c.b16 %v897, %v897
  %v962 = vpack.c.b16 %v898, %v898
  %v963 = vpack.c.b16 %v899, %v899
  %v964 = vpack.c.b16 %v900, %v900
  %v965 = vpack.c.b16 %v901, %v901
  %v966 = vpack.c.b16 %v902, %v902
  %v967 = vpack.c.b16 %v903, %v903
  %v968 = vpack.c.b16 %v904, %v904
  %v969 = vpack.c.b16 %v905, %v905
  %v970 = vpack.c.b16 %v906, %v906
  %v971 = vpack.c.b16 %v907, %v907
  %v972 = vpack.c.b16 %v908, %v908
  %v973 = vpack.c.b16 %v909, %v909
  %v974 = vpack.c.b16 %v910, %v910
  %v975 = vpack.c.b16 %v911, %v911
  %v976 = vpack.c.b16 %v912, %v912
  %v977 = vpack.c.b16 %v913, %v913
  %v978 = vpack.c.b16 %v914, %v914
  %v979 = vpack.c.b16 %v915, %v915
  %v980 = vpack.c.b16 %v916, %v916
  %v981 = vpack.c.b16 %v917, %v917
  %v982 = vpack.c.b16 %v918, %v918
  %v983 = vpack.c.b16 %v919, %v919
  %v984 = vpack.c.b16 %v920, %v920
  %v985 = vpack.c.b16 %v921, %v921
  %1050 = vst [vmem:[%s4] sm:$0xf] %v922
  %1051 = vst [vmem:[%s4 + $0x4] sm:$0xf] %v923
  %1052 = vst [vmem:[%s4 + $0x8] sm:$0xf] %v924
  %1053 = vst [vmem:[%s4 + $0xc] sm:$0xf] %v925
  %1054 = vst [vmem:[%s4 + $0x10] sm:$0xf] %v926
  %1055 = vst [vmem:[%s4 + $0x14] sm:$0xf] %v927
  %1056 = vst [vmem:[%s4 + $0x18] sm:$0xf] %v928
  %1057 = vst [vmem:[%s4 + $0x1c] sm:$0xf] %v929
  %1058 = vst [vmem:[%s4 + $0x20] sm:$0xf] %v930
  %1059 = vst [vmem:[%s4 + $0x24] sm:$0xf] %v931
  %1060 = vst [vmem:[%s4 + $0x28] sm:$0xf] %v932
  %1061 = vst [vmem:[%s4 + $0x2c] sm:$0xf] %v933
  %1062 = vst [vmem:[%s4 + $0x30] sm:$0xf] %v934
  %1063 = vst [vmem:[%s4 + $0x34] sm:$0xf] %v935
  %1064 = vst [vmem:[%s4 + $0x38] sm:$0xf] %v936
  %1065 = vst [vmem:[%s4 + $0x3c] sm:$0xf] %v937
  %1066 = vst [vmem:[%s4 + $0x40] sm:$0xf] %v938
  %1067 = vst [vmem:[%s4 + $0x44] sm:$0xf] %v939
  %1068 = vst [vmem:[%s4 + $0x48] sm:$0xf] %v940
  %1069 = vst [vmem:[%s4 + $0x4c] sm:$0xf] %v941
  %1070 = vst [vmem:[%s4 + $0x50] sm:$0xf] %v942
  %1071 = vst [vmem:[%s4 + $0x54] sm:$0xf] %v943
  %1072 = vst [vmem:[%s4 + $0x58] sm:$0xf] %v944
  %1073 = vst [vmem:[%s4 + $0x5c] sm:$0xf] %v945
  %1074 = vst [vmem:[%s4 + $0x60] sm:$0xf] %v946
  %1075 = vst [vmem:[%s4 + $0x64] sm:$0xf] %v947
  %1076 = vst [vmem:[%s4 + $0x68] sm:$0xf] %v948
  %1077 = vst [vmem:[%s4 + $0x6c] sm:$0xf] %v949
  %1078 = vst [vmem:[%s4 + $0x70] sm:$0xf] %v950
  %1079 = vst [vmem:[%s4 + $0x74] sm:$0xf] %v951
  %1080 = vst [vmem:[%s4 + $0x78] sm:$0xf] %v952
  %1081 = vst [vmem:[%s4 + $0x7c] sm:$0xf] %v953
  %1082 = vst [vmem:[%s4 + $0x80] sm:$0xf] %v954
  %1083 = vst [vmem:[%s4 + $0x84] sm:$0xf] %v955
  %1084 = vst [vmem:[%s4 + $0x88] sm:$0xf] %v956
  %1085 = vst [vmem:[%s4 + $0x8c] sm:$0xf] %v957
  %1086 = vst [vmem:[%s4 + $0x90] sm:$0xf] %v958
  %1087 = vst [vmem:[%s4 + $0x94] sm:$0xf] %v959
  %1088 = vst [vmem:[%s4 + $0x98] sm:$0xf] %v960
  %1089 = vst [vmem:[%s4 + $0x9c] sm:$0xf] %v961
  %1090 = vst [vmem:[%s4 + $0xa0] sm:$0xf] %v962
  %1091 = vst [vmem:[%s4 + $0xa4] sm:$0xf] %v963
  %1092 = vst [vmem:[%s4 + $0xa8] sm:$0xf] %v964
  %1093 = vst [vmem:[%s4 + $0xac] sm:$0xf] %v965
  %1094 = vst [vmem:[%s4 + $0xb0] sm:$0xf] %v966
  %1095 = vst [vmem:[%s4 + $0xb4] sm:$0xf] %v967
  %1096 = vst [vmem:[%s4 + $0xb8] sm:$0xf] %v968
  %1097 = vst [vmem:[%s4 + $0xbc] sm:$0xf] %v969
  %1098 = vst [vmem:[%s4 + $0xc0] sm:$0xf] %v970
  %1099 = vst [vmem:[%s4 + $0xc4] sm:$0xf] %v971
  %1100 = vst [vmem:[%s4 + $0xc8] sm:$0xf] %v972
  %1101 = vst [vmem:[%s4 + $0xcc] sm:$0xf] %v973
  %1102 = vst [vmem:[%s4 + $0xd0] sm:$0xf] %v974
  %1103 = vst [vmem:[%s4 + $0xd4] sm:$0xf] %v975
  %1104 = vst [vmem:[%s4 + $0xd8] sm:$0xf] %v976
  %1105 = vst [vmem:[%s4 + $0xdc] sm:$0xf] %v977
  %1106 = vst [vmem:[%s4 + $0xe0] sm:$0xf] %v978
  %1107 = vst [vmem:[%s4 + $0xe4] sm:$0xf] %v979
  %1108 = vst [vmem:[%s4 + $0xe8] sm:$0xf] %v980
  %1109 = vst [vmem:[%s4 + $0xec] sm:$0xf] %v981
  %1110 = vst [vmem:[%s4 + $0xf0] sm:$0xf] %v982
  %1111 = vst [vmem:[%s4 + $0xf4] sm:$0xf] %v983
  %1112 = vst [vmem:[%s4 + $0xf8] sm:$0xf] %v984
  %1113 = vst [vmem:[%s4 + $0xfc] sm:$0xf] %v985
  // Predicated region
  $region18: #{unet_generator_forward.10} parent=0 // pred_check
    _
  $region19: #{unet_generator_forward.10} parent=0 // pred_check_branch
    %1115 = sbr.rel (0) target = $region21
  $region20: #{unet_generator_forward.10} parent=0 // pred_region
    _
  $region21: #{unet_generator_forward.10} parent=0 // pred_fallthru
    _
  // Predicated region
  $region22: #{unet_generator_forward.10} parent=0 // pred_check
    _
  $region23: #{unet_generator_forward.10} parent=0 // pred_check_branch
    %1117 = sbr.rel (0) target = $region25
  $region24: #{unet_generator_forward.10} parent=0 // pred_region
    _
  $region25: #{unet_generator_forward.10} parent=0 // pred_fallthru
    _

// kernel: unet_generator_forward.11
$region0: #{unet_generator_forward.11}
  #allocation0 [shape = 'u32[]', space=smem, size = 0x4, offset = 0x4, fixed_abs, tag = 'smem constant byte address 0x4 - core index']
  #allocation1 [shape = 'u32[144,128]{1,0:T(1,128)}', space=vmem, size = 0x12000, scoped, tag = 'internal scratch']
  %s0 = inlined_call_operand.vmem [shape: bf16[128,128], index: 0, kind: input, shape index: {}]
  %s1 = inlined_call_operand.vmem [shape: bf16[128,128], index: 1, kind: input, shape index: {}]
  %s2 = inlined_call_operand.vmem [shape: f32[1,128], index: 2, kind: input, shape index: {}]
  %s3 = inlined_call_operand.vmem [shape: f32[1,128], index: 3, kind: input, shape index: {}]
  %s4 = inlined_call_operand.vmem [shape: bf16[128,128], index: 4, kind: output, shape index: {}]
  %s5 = sld [smem:[#allocation0]]
  $region26: #{unet_generator_forward.11} parent=0
    _
  %s7 = ssub.s32 1, %s5
  %s8 = scalar_select 0, %s7, %s5
  // Predicated region
  $region2: #{unet_generator_forward.11} parent=0 // pred_check
    _
  $region3: #{unet_generator_forward.11} parent=0 // pred_check_branch
    %10 = sbr.rel (0) target = $region5
  $region4: #{unet_generator_forward.11} parent=0 // pred_region
    _
  $region5: #{unet_generator_forward.11} parent=0 // pred_fallthru
    _
  // Predicated region
  $region6: #{unet_generator_forward.11} parent=0 // pred_check
    _
  $region7: #{unet_generator_forward.11} parent=0 // pred_check_branch
    %12 = sbr.rel (0) target = $region9
  $region8: #{unet_generator_forward.11} parent=0 // pred_region
    _
  $region9: #{unet_generator_forward.11} parent=0 // pred_fallthru
    _
  // Predicated region
  $region10: #{unet_generator_forward.11} parent=0 // pred_check
    _
  $region11: #{unet_generator_forward.11} parent=0 // pred_check_branch
    %14 = sbr.rel (0) target = $region13
  $region12: #{unet_generator_forward.11} parent=0 // pred_region
    _
  $region13: #{unet_generator_forward.11} parent=0 // pred_fallthru
    _
  // Predicated region
  $region14: #{unet_generator_forward.11} parent=0 // pred_check
    _
  $region15: #{unet_generator_forward.11} parent=0 // pred_check_branch
    %16 = sbr.rel (0) target = $region17
  $region16: #{unet_generator_forward.11} parent=0 // pred_region
    _
  $region17: #{unet_generator_forward.11} parent=0 // pred_fallthru
    _
  %v19 = vld [vmem:[%s0] sm:$0xf]
  %v20 = vld [vmem:[%s0 + $0x4] sm:$0xf]
  %v21 = vld [vmem:[%s0 + $0x8] sm:$0xf]
  %v22 = vld [vmem:[%s0 + $0xc] sm:$0xf]
  %v23 = vld [vmem:[%s0 + $0x10] sm:$0xf]
  %v24 = vld [vmem:[%s0 + $0x14] sm:$0xf]
  %v25 = vld [vmem:[%s0 + $0x18] sm:$0xf]
  %v26 = vld [vmem:[%s0 + $0x1c] sm:$0xf]
  %v27 = vld [vmem:[%s0 + $0x20] sm:$0xf]
  %v28 = vld [vmem:[%s0 + $0x24] sm:$0xf]
  %v29 = vld [vmem:[%s0 + $0x28] sm:$0xf]
  %v30 = vld [vmem:[%s0 + $0x2c] sm:$0xf]
  %v31 = vld [vmem:[%s0 + $0x30] sm:$0xf]
  %v32 = vld [vmem:[%s0 + $0x34] sm:$0xf]
  %v33 = vld [vmem:[%s0 + $0x38] sm:$0xf]
  %v34 = vld [vmem:[%s0 + $0x3c] sm:$0xf]
  %vm35 = vcmp.ge.bf16.partialorder %v19, 0
  %vm36 = vcmp.ge.bf16.partialorder %v20, 0
  %vm37 = vcmp.ge.bf16.partialorder %v21, 0
  %vm38 = vcmp.ge.bf16.partialorder %v22, 0
  %vm39 = vcmp.ge.bf16.partialorder %v23, 0
  %vm40 = vcmp.ge.bf16.partialorder %v24, 0
  %vm41 = vcmp.ge.bf16.partialorder %v25, 0
  %vm42 = vcmp.ge.bf16.partialorder %v26, 0
  %vm43 = vcmp.ge.bf16.partialorder %v27, 0
  %vm44 = vcmp.ge.bf16.partialorder %v28, 0
  %vm45 = vcmp.ge.bf16.partialorder %v29, 0
  %vm46 = vcmp.ge.bf16.partialorder %v30, 0
  %vm47 = vcmp.ge.bf16.partialorder %v31, 0
  %vm48 = vcmp.ge.bf16.partialorder %v32, 0
  %vm49 = vcmp.ge.bf16.partialorder %v33, 0
  %vm50 = vcmp.ge.bf16.partialorder %v34, 0
  %v51 = vmul.bf16 %v19, 1045249613
  %v52 = vmul.bf16 %v20, 1045249613
  %v53 = vmul.bf16 %v21, 1045249613
  %v54 = vmul.bf16 %v22, 1045249613
  %v55 = vmul.bf16 %v23, 1045249613
  %v56 = vmul.bf16 %v24, 1045249613
  %v57 = vmul.bf16 %v25, 1045249613
  %v58 = vmul.bf16 %v26, 1045249613
  %v59 = vmul.bf16 %v27, 1045249613
  %v60 = vmul.bf16 %v28, 1045249613
  %v61 = vmul.bf16 %v29, 1045249613
  %v62 = vmul.bf16 %v30, 1045249613
  %v63 = vmul.bf16 %v31, 1045249613
  %v64 = vmul.bf16 %v32, 1045249613
  %v65 = vmul.bf16 %v33, 1045249613
  %v66 = vmul.bf16 %v34, 1045249613
  %v67 = vsel %vm35, %v19, %v51
  %v68 = vsel %vm36, %v20, %v52
  %v69 = vsel %vm37, %v21, %v53
  %v70 = vsel %vm38, %v22, %v54
  %v71 = vsel %vm39, %v23, %v55
  %v72 = vsel %vm40, %v24, %v56
  %v73 = vsel %vm41, %v25, %v57
  %v74 = vsel %vm42, %v26, %v58
  %v75 = vsel %vm43, %v27, %v59
  %v76 = vsel %vm44, %v28, %v60
  %v77 = vsel %vm45, %v29, %v61
  %v78 = vsel %vm46, %v30, %v62
  %v79 = vsel %vm47, %v31, %v63
  %v80 = vsel %vm48, %v32, %v64
  %v81 = vsel %vm49, %v33, %v65
  %v82 = vsel %vm50, %v34, %v66
  %v83 = vld [vmem:[%s1] sm:$0xf]
  %v84 = vld [vmem:[%s1 + $0x4] sm:$0xf]
  %v85 = vld [vmem:[%s1 + $0x8] sm:$0xf]
  %v86 = vld [vmem:[%s1 + $0xc] sm:$0xf]
  %v87 = vld [vmem:[%s1 + $0x10] sm:$0xf]
  %v88 = vld [vmem:[%s1 + $0x14] sm:$0xf]
  %v89 = vld [vmem:[%s1 + $0x18] sm:$0xf]
  %v90 = vld [vmem:[%s1 + $0x1c] sm:$0xf]
  %v91 = vld [vmem:[%s1 + $0x20] sm:$0xf]
  %v92 = vld [vmem:[%s1 + $0x24] sm:$0xf]
  %v93 = vld [vmem:[%s1 + $0x28] sm:$0xf]
  %v94 = vld [vmem:[%s1 + $0x2c] sm:$0xf]
  %v95 = vld [vmem:[%s1 + $0x30] sm:$0xf]
  %v96 = vld [vmem:[%s1 + $0x34] sm:$0xf]
  %v97 = vld [vmem:[%s1 + $0x38] sm:$0xf]
  %v98 = vld [vmem:[%s1 + $0x3c] sm:$0xf]
  %v115 = vunpack.c.l.b16 %v67
  %v116 = vunpack.c.l.b16 %v68
  %v117 = vunpack.c.l.b16 %v69
  %v118 = vunpack.c.l.b16 %v70
  %v119 = vunpack.c.l.b16 %v71
  %v120 = vunpack.c.l.b16 %v72
  %v121 = vunpack.c.l.b16 %v73
  %v122 = vunpack.c.l.b16 %v74
  %v123 = vunpack.c.l.b16 %v75
  %v124 = vunpack.c.l.b16 %v76
  %v125 = vunpack.c.l.b16 %v77
  %v126 = vunpack.c.l.b16 %v78
  %v127 = vunpack.c.l.b16 %v79
  %v128 = vunpack.c.l.b16 %v80
  %v129 = vunpack.c.l.b16 %v81
  %v130 = vunpack.c.l.b16 %v82
  %v131 = vpack.c.b16 %v116, %v115
  %v132 = vpack.c.b16 %v118, %v117
  %v133 = vpack.c.b16 %v120, %v119
  %v134 = vpack.c.b16 %v122, %v121
  %v135 = vpack.c.b16 %v124, %v123
  %v136 = vpack.c.b16 %v126, %v125
  %v137 = vpack.c.b16 %v128, %v127
  %v138 = vpack.c.b16 %v130, %v129
  %v163 = vunpack.c.l.b16 %v83
  %v164 = vunpack.c.l.b16 %v84
  %v165 = vunpack.c.l.b16 %v85
  %v166 = vunpack.c.l.b16 %v86
  %v167 = vunpack.c.l.b16 %v87
  %v168 = vunpack.c.l.b16 %v88
  %v169 = vunpack.c.l.b16 %v89
  %v170 = vunpack.c.l.b16 %v90
  %v171 = vunpack.c.l.b16 %v91
  %v172 = vunpack.c.l.b16 %v92
  %v173 = vunpack.c.l.b16 %v93
  %v174 = vunpack.c.l.b16 %v94
  %v175 = vunpack.c.l.b16 %v95
  %v176 = vunpack.c.l.b16 %v96
  %v177 = vunpack.c.l.b16 %v97
  %v178 = vunpack.c.l.b16 %v98
  %v179 = vpack.c.b16 %v164, %v163
  %v180 = vpack.c.b16 %v166, %v165
  %v181 = vpack.c.b16 %v168, %v167
  %v182 = vpack.c.b16 %v170, %v169
  %v183 = vpack.c.b16 %v172, %v171
  %v184 = vpack.c.b16 %v174, %v173
  %v185 = vpack.c.b16 %v176, %v175
  %v186 = vpack.c.b16 %v178, %v177
  %195 = vmatprep.subr.bf16.mxu0 0
  %196 = vmatpush1.bf16.msra.mxu0 %v186
  %197 = vmatprep.subr.bf16.mxu0 0
  %198 = vmatpush1.bf16.msra.mxu0 %v185
  %199 = vmatprep.subr.bf16.mxu0 0
  %200 = vmatpush1.bf16.msra.mxu0 %v184
  %201 = vmatprep.subr.bf16.mxu0 0
  %202 = vmatpush1.bf16.msra.mxu0 %v183
  %203 = vmatprep.subr.bf16.mxu0 0
  %204 = vmatpush1.bf16.msra.mxu0 %v182
  %205 = vmatprep.subr.bf16.mxu0 0
  %206 = vmatpush1.bf16.msra.mxu0 %v181
  %207 = vmatprep.subr.bf16.mxu0 0
  %208 = vmatpush1.bf16.msra.mxu0 %v180
  %209 = vmatprep.subr.bf16.mxu0 0
  %210 = vmatpush1.bf16.msra.mxu0 %v179
  %211 = vmatprep.subr.bf16.mxu0 0
  %212 = vmatpush2.bf16.msra.mxu0 0
  %213 = vmatprep.subr.bf16.mxu0 0
  %214 = vmatpush2.bf16.msra.mxu0 0
  %215 = vmatprep.subr.bf16.mxu0 0
  %216 = vmatpush2.bf16.msra.mxu0 0
  %217 = vmatprep.subr.bf16.mxu0 0
  %218 = vmatpush2.bf16.msra.mxu0 0
  %219 = vmatprep.subr.bf16.mxu0 0
  %220 = vmatpush2.bf16.msra.mxu0 0
  %221 = vmatprep.subr.bf16.mxu0 0
  %222 = vmatpush2.bf16.msra.mxu0 0
  %223 = vmatprep.subr.bf16.mxu0 0
  %224 = vmatpush2.bf16.msra.mxu0 0
  %225 = vmatprep.subr.bf16.mxu0 0
  %226 = vmatpush2.bf16.msra.mxu0 0
  %227 = vmatprep.mubr.bf16.mxu0 0
  %228 = vmatmul.mubr.bf16.gmra.mxu0 %v131
  %v229 = vpop.f32.mrf.mxu0
  %v230 = vadd.f32 0.0, %v229
  %v231 = vpop.f32.mrf.mxu0
  %v232 = vpop.f32.mrf.mxu0
  %v233 = vadd.f32 0.0, %v232
  %v234 = vpop.f32.mrf.mxu0
  %235 = vmatprep.mubr.bf16.mxu0 0
  %236 = vmatmul.mubr.bf16.gmra.mxu0 %v132
  %v237 = vpop.f32.mrf.mxu0
  %v238 = vadd.f32 0.0, %v237
  %v239 = vpop.f32.mrf.mxu0
  %v240 = vpop.f32.mrf.mxu0
  %v241 = vadd.f32 0.0, %v240
  %v242 = vpop.f32.mrf.mxu0
  %243 = vmatprep.mubr.bf16.mxu0 0
  %244 = vmatmul.mubr.bf16.gmra.mxu0 %v133
  %v245 = vpop.f32.mrf.mxu0
  %v246 = vadd.f32 0.0, %v245
  %v247 = vpop.f32.mrf.mxu0
  %v248 = vpop.f32.mrf.mxu0
  %v249 = vadd.f32 0.0, %v248
  %v250 = vpop.f32.mrf.mxu0
  %251 = vmatprep.mubr.bf16.mxu0 0
  %252 = vmatmul.mubr.bf16.gmra.mxu0 %v134
  %v253 = vpop.f32.mrf.mxu0
  %v254 = vadd.f32 0.0, %v253
  %v255 = vpop.f32.mrf.mxu0
  %v256 = vpop.f32.mrf.mxu0
  %v257 = vadd.f32 0.0, %v256
  %v258 = vpop.f32.mrf.mxu0
  %259 = vmatprep.mubr.bf16.mxu0 0
  %260 = vmatmul.mubr.bf16.gmra.mxu0 %v135
  %v261 = vpop.f32.mrf.mxu0
  %v262 = vadd.f32 0.0, %v261
  %v263 = vpop.f32.mrf.mxu0
  %v264 = vpop.f32.mrf.mxu0
  %v265 = vadd.f32 0.0, %v264
  %v266 = vpop.f32.mrf.mxu0
  %267 = vmatprep.mubr.bf16.mxu0 0
  %268 = vmatmul.mubr.bf16.gmra.mxu0 %v136
  %v269 = vpop.f32.mrf.mxu0
  %v270 = vadd.f32 0.0, %v269
  %v271 = vpop.f32.mrf.mxu0
  %v272 = vpop.f32.mrf.mxu0
  %v273 = vadd.f32 0.0, %v272
  %v274 = vpop.f32.mrf.mxu0
  %275 = vmatprep.mubr.bf16.mxu0 0
  %276 = vmatmul.mubr.bf16.gmra.mxu0 %v137
  %v277 = vpop.f32.mrf.mxu0
  %v278 = vadd.f32 0.0, %v277
  %v279 = vpop.f32.mrf.mxu0
  %v280 = vpop.f32.mrf.mxu0
  %v281 = vadd.f32 0.0, %v280
  %v282 = vpop.f32.mrf.mxu0
  %283 = vmatprep.mubr.bf16.mxu0 0
  %284 = vmatmul.mubr.bf16.gmra.mxu0 %v138
  %v285 = vpop.f32.mrf.mxu0
  %v286 = vadd.f32 0.0, %v285
  %v287 = vpop.f32.mrf.mxu0
  %v288 = vpop.f32.mrf.mxu0
  %v289 = vadd.f32 0.0, %v288
  %v290 = vpop.f32.mrf.mxu0
  %291 = vdwg.mxu0
  %v292 = vld [vmem:[%s2] sm:$0x1]
  %v294 = vlaneseq
  %v295 = vshrl.u32 %v294, 7
  %v296 = vsub.s32 0, %v295
  %v297 = vrot.slane %v292, %v296
  %v299 = vmul.f32 %v230, %v297
  %v300 = vmul.f32 %v233, %v297
  %v301 = vmul.f32 %v238, %v297
  %v302 = vmul.f32 %v241, %v297
  %v303 = vmul.f32 %v246, %v297
  %v304 = vmul.f32 %v249, %v297
  %v305 = vmul.f32 %v254, %v297
  %v306 = vmul.f32 %v257, %v297
  %v307 = vmul.f32 %v262, %v297
  %v308 = vmul.f32 %v265, %v297
  %v309 = vmul.f32 %v270, %v297
  %v310 = vmul.f32 %v273, %v297
  %v311 = vmul.f32 %v278, %v297
  %v312 = vmul.f32 %v281, %v297
  %v313 = vmul.f32 %v286, %v297
  %v314 = vmul.f32 %v289, %v297
  %v315 = vld [vmem:[%s3] sm:$0x1]
  %v317 = vlaneseq
  %v318 = vshrl.u32 %v317, 7
  %v319 = vsub.s32 0, %v318
  %v320 = vrot.slane %v315, %v319
  %v322 = vadd.f32 %v299, %v320
  %v323 = vadd.f32 %v300, %v320
  %v324 = vadd.f32 %v301, %v320
  %v325 = vadd.f32 %v302, %v320
  %v326 = vadd.f32 %v303, %v320
  %v327 = vadd.f32 %v304, %v320
  %v328 = vadd.f32 %v305, %v320
  %v329 = vadd.f32 %v306, %v320
  %v330 = vadd.f32 %v307, %v320
  %v331 = vadd.f32 %v308, %v320
  %v332 = vadd.f32 %v309, %v320
  %v333 = vadd.f32 %v310, %v320
  %v334 = vadd.f32 %v311, %v320
  %v335 = vadd.f32 %v312, %v320
  %v336 = vadd.f32 %v313, %v320
  %v337 = vadd.f32 %v314, %v320
  %v338 = vpack.c.bf16 %v323, %v322
  %v339 = vpack.c.bf16 %v325, %v324
  %v340 = vpack.c.bf16 %v327, %v326
  %v341 = vpack.c.bf16 %v329, %v328
  %v342 = vpack.c.bf16 %v331, %v330
  %v343 = vpack.c.bf16 %v333, %v332
  %v344 = vpack.c.bf16 %v335, %v334
  %v345 = vpack.c.bf16 %v337, %v336
  %v354 = vunpack.c.l.b16 %v338
  %v355 = vunpack.c.h.b16 %v338
  %v356 = vunpack.c.l.b16 %v339
  %v357 = vunpack.c.h.b16 %v339
  %v358 = vunpack.c.l.b16 %v340
  %v359 = vunpack.c.h.b16 %v340
  %v360 = vunpack.c.l.b16 %v341
  %v361 = vunpack.c.h.b16 %v341
  %v362 = vunpack.c.l.b16 %v342
  %v363 = vunpack.c.h.b16 %v342
  %v364 = vunpack.c.l.b16 %v343
  %v365 = vunpack.c.h.b16 %v343
  %v366 = vunpack.c.l.b16 %v344
  %v367 = vunpack.c.h.b16 %v344
  %v368 = vunpack.c.l.b16 %v345
  %v369 = vunpack.c.h.b16 %v345
  %v370 = vpack.c.b16 %v354, %v354
  %v371 = vpack.c.b16 %v355, %v355
  %v372 = vpack.c.b16 %v356, %v356
  %v373 = vpack.c.b16 %v357, %v357
  %v374 = vpack.c.b16 %v358, %v358
  %v375 = vpack.c.b16 %v359, %v359
  %v376 = vpack.c.b16 %v360, %v360
  %v377 = vpack.c.b16 %v361, %v361
  %v378 = vpack.c.b16 %v362, %v362
  %v379 = vpack.c.b16 %v363, %v363
  %v380 = vpack.c.b16 %v364, %v364
  %v381 = vpack.c.b16 %v365, %v365
  %v382 = vpack.c.b16 %v366, %v366
  %v383 = vpack.c.b16 %v367, %v367
  %v384 = vpack.c.b16 %v368, %v368
  %v385 = vpack.c.b16 %v369, %v369
  %402 = vst [vmem:[%s4] sm:$0xf] %v370
  %403 = vst [vmem:[%s4 + $0x4] sm:$0xf] %v371
  %404 = vst [vmem:[%s4 + $0x8] sm:$0xf] %v372
  %405 = vst [vmem:[%s4 + $0xc] sm:$0xf] %v373
  %406 = vst [vmem:[%s4 + $0x10] sm:$0xf] %v374
  %407 = vst [vmem:[%s4 + $0x14] sm:$0xf] %v375
  %408 = vst [vmem:[%s4 + $0x18] sm:$0xf] %v376
  %409 = vst [vmem:[%s4 + $0x1c] sm:$0xf] %v377
  %410 = vst [vmem:[%s4 + $0x20] sm:$0xf] %v378
  %411 = vst [vmem:[%s4 + $0x24] sm:$0xf] %v379
  %412 = vst [vmem:[%s4 + $0x28] sm:$0xf] %v380
  %413 = vst [vmem:[%s4 + $0x2c] sm:$0xf] %v381
  %414 = vst [vmem:[%s4 + $0x30] sm:$0xf] %v382
  %415 = vst [vmem:[%s4 + $0x34] sm:$0xf] %v383
  %416 = vst [vmem:[%s4 + $0x38] sm:$0xf] %v384
  %417 = vst [vmem:[%s4 + $0x3c] sm:$0xf] %v385
  // Predicated region
  $region18: #{unet_generator_forward.11} parent=0 // pred_check
    _
  $region19: #{unet_generator_forward.11} parent=0 // pred_check_branch
    %419 = sbr.rel (0) target = $region21
  $region20: #{unet_generator_forward.11} parent=0 // pred_region
    _
  $region21: #{unet_generator_forward.11} parent=0 // pred_fallthru
    _
  // Predicated region
  $region22: #{unet_generator_forward.11} parent=0 // pred_check
    _
  $region23: #{unet_generator_forward.11} parent=0 // pred_check_branch
    %421 = sbr.rel (0) target = $region25
  $region24: #{unet_generator_forward.11} parent=0 // pred_region
    _
  $region25: #{unet_generator_forward.11} parent=0 // pred_fallthru
    _

// kernel: unet_generator_forward.12
$region0: #{unet_generator_forward.12}
  #allocation0 [shape = 'u32[]', space=smem, size = 0x4, offset = 0x4, fixed_abs, tag = 'smem constant byte address 0x4 - core index']
  #allocation1 [shape = 'u32[144,128]{1,0:T(1,128)}', space=vmem, size = 0x12000, scoped, tag = 'internal scratch']
  %s0 = inlined_call_operand.vmem [shape: bf16[32,256], index: 0, kind: input, shape index: {}]
  %s1 = inlined_call_operand.vmem [shape: bf16[256,128], index: 1, kind: input, shape index: {}]
  %s2 = inlined_call_operand.vmem [shape: f32[1,128], index: 2, kind: input, shape index: {}]
  %s3 = inlined_call_operand.vmem [shape: f32[1,128], index: 3, kind: input, shape index: {}]
  %s4 = inlined_call_operand.vmem [shape: bf16[32,128], index: 4, kind: output, shape index: {}]
  %s5 = sld [smem:[#allocation0]]
  $region26: #{unet_generator_forward.12} parent=0
    _
  %s7 = ssub.s32 1, %s5
  %s8 = scalar_select 0, %s7, %s5
  // Predicated region
  $region2: #{unet_generator_forward.12} parent=0 // pred_check
    _
  $region3: #{unet_generator_forward.12} parent=0 // pred_check_branch
    %10 = sbr.rel (0) target = $region5
  $region4: #{unet_generator_forward.12} parent=0 // pred_region
    _
  $region5: #{unet_generator_forward.12} parent=0 // pred_fallthru
    _
  // Predicated region
  $region6: #{unet_generator_forward.12} parent=0 // pred_check
    _
  $region7: #{unet_generator_forward.12} parent=0 // pred_check_branch
    %12 = sbr.rel (0) target = $region9
  $region8: #{unet_generator_forward.12} parent=0 // pred_region
    _
  $region9: #{unet_generator_forward.12} parent=0 // pred_fallthru
    _
  // Predicated region
  $region10: #{unet_generator_forward.12} parent=0 // pred_check
    _
  $region11: #{unet_generator_forward.12} parent=0 // pred_check_branch
    %14 = sbr.rel (0) target = $region13
  $region12: #{unet_generator_forward.12} parent=0 // pred_region
    _
  $region13: #{unet_generator_forward.12} parent=0 // pred_fallthru
    _
  // Predicated region
  $region14: #{unet_generator_forward.12} parent=0 // pred_check
    _
  $region15: #{unet_generator_forward.12} parent=0 // pred_check_branch
    %16 = sbr.rel (0) target = $region17
  $region16: #{unet_generator_forward.12} parent=0 // pred_region
    _
  $region17: #{unet_generator_forward.12} parent=0 // pred_fallthru
    _
  %v19 = vld [vmem:[%s0] sm:$0xff]
  %v20 = vld [vmem:[%s0 + $0x8] sm:$0xff]
  %v21 = vld [vmem:[%s0 + $0x10] sm:$0xff]
  %v22 = vld [vmem:[%s0 + $0x18] sm:$0xff]
  %vm23 = vcmp.ge.bf16.partialorder %v19, 0
  %vm24 = vcmp.ge.bf16.partialorder %v20, 0
  %vm25 = vcmp.ge.bf16.partialorder %v21, 0
  %vm26 = vcmp.ge.bf16.partialorder %v22, 0
  %v27 = vmul.bf16 %v19, 1045249613
  %v28 = vmul.bf16 %v20, 1045249613
  %v29 = vmul.bf16 %v21, 1045249613
  %v30 = vmul.bf16 %v22, 1045249613
  %v31 = vsel %vm23, %v19, %v27
  %v32 = vsel %vm24, %v20, %v28
  %v33 = vsel %vm25, %v21, %v29
  %v34 = vsel %vm26, %v22, %v30
  %v35 = vld [vmem:[%s1] sm:$0xf]
  %v36 = vld [vmem:[%s1 + $0x4] sm:$0xf]
  %v37 = vld [vmem:[%s1 + $0x8] sm:$0xf]
  %v38 = vld [vmem:[%s1 + $0xc] sm:$0xf]
  %v39 = vld [vmem:[%s1 + $0x10] sm:$0xf]
  %v40 = vld [vmem:[%s1 + $0x14] sm:$0xf]
  %v41 = vld [vmem:[%s1 + $0x18] sm:$0xf]
  %v42 = vld [vmem:[%s1 + $0x1c] sm:$0xf]
  %v43 = vld [vmem:[%s1 + $0x20] sm:$0xf]
  %v44 = vld [vmem:[%s1 + $0x24] sm:$0xf]
  %v45 = vld [vmem:[%s1 + $0x28] sm:$0xf]
  %v46 = vld [vmem:[%s1 + $0x2c] sm:$0xf]
  %v47 = vld [vmem:[%s1 + $0x30] sm:$0xf]
  %v48 = vld [vmem:[%s1 + $0x34] sm:$0xf]
  %v49 = vld [vmem:[%s1 + $0x38] sm:$0xf]
  %v50 = vld [vmem:[%s1 + $0x3c] sm:$0xf]
  %v51 = vld [vmem:[%s1 + $0x40] sm:$0xf]
  %v52 = vld [vmem:[%s1 + $0x44] sm:$0xf]
  %v53 = vld [vmem:[%s1 + $0x48] sm:$0xf]
  %v54 = vld [vmem:[%s1 + $0x4c] sm:$0xf]
  %v55 = vld [vmem:[%s1 + $0x50] sm:$0xf]
  %v56 = vld [vmem:[%s1 + $0x54] sm:$0xf]
  %v57 = vld [vmem:[%s1 + $0x58] sm:$0xf]
  %v58 = vld [vmem:[%s1 + $0x5c] sm:$0xf]
  %v59 = vld [vmem:[%s1 + $0x60] sm:$0xf]
  %v60 = vld [vmem:[%s1 + $0x64] sm:$0xf]
  %v61 = vld [vmem:[%s1 + $0x68] sm:$0xf]
  %v62 = vld [vmem:[%s1 + $0x6c] sm:$0xf]
  %v63 = vld [vmem:[%s1 + $0x70] sm:$0xf]
  %v64 = vld [vmem:[%s1 + $0x74] sm:$0xf]
  %v65 = vld [vmem:[%s1 + $0x78] sm:$0xf]
  %v66 = vld [vmem:[%s1 + $0x7c] sm:$0xf]
  %v71 = vunpack.c.l.b16 %v31
  %v72 = vunpack.c.h.b16 %v31
  %v73 = vunpack.c.l.b16 %v32
  %v74 = vunpack.c.h.b16 %v32
  %v75 = vunpack.c.l.b16 %v33
  %v76 = vunpack.c.h.b16 %v33
  %v77 = vunpack.c.l.b16 %v34
  %v78 = vunpack.c.h.b16 %v34
  %v79 = vpack.c.b16 %v73, %v71
  %v80 = vpack.c.b16 %v74, %v72
  %v81 = vpack.c.b16 %v77, %v75
  %v82 = vpack.c.b16 %v78, %v76
  %v119 = vunpack.c.l.b16 %v35
  %v120 = vunpack.c.l.b16 %v36
  %v121 = vunpack.c.l.b16 %v37
  %v122 = vunpack.c.l.b16 %v38
  %v123 = vunpack.c.l.b16 %v39
  %v124 = vunpack.c.l.b16 %v40
  %v125 = vunpack.c.l.b16 %v41
  %v126 = vunpack.c.l.b16 %v42
  %v127 = vunpack.c.l.b16 %v43
  %v128 = vunpack.c.l.b16 %v44
  %v129 = vunpack.c.l.b16 %v45
  %v130 = vunpack.c.l.b16 %v46
  %v131 = vunpack.c.l.b16 %v47
  %v132 = vunpack.c.l.b16 %v48
  %v133 = vunpack.c.l.b16 %v49
  %v134 = vunpack.c.l.b16 %v50
  %v135 = vunpack.c.l.b16 %v51
  %v136 = vunpack.c.l.b16 %v52
  %v137 = vunpack.c.l.b16 %v53
  %v138 = vunpack.c.l.b16 %v54
  %v139 = vunpack.c.l.b16 %v55
  %v140 = vunpack.c.l.b16 %v56
  %v141 = vunpack.c.l.b16 %v57
  %v142 = vunpack.c.l.b16 %v58
  %v143 = vunpack.c.l.b16 %v59
  %v144 = vunpack.c.l.b16 %v60
  %v145 = vunpack.c.l.b16 %v61
  %v146 = vunpack.c.l.b16 %v62
  %v147 = vunpack.c.l.b16 %v63
  %v148 = vunpack.c.l.b16 %v64
  %v149 = vunpack.c.l.b16 %v65
  %v150 = vunpack.c.l.b16 %v66
  %v151 = vpack.c.b16 %v120, %v119
  %v152 = vpack.c.b16 %v122, %v121
  %v153 = vpack.c.b16 %v124, %v123
  %v154 = vpack.c.b16 %v126, %v125
  %v155 = vpack.c.b16 %v128, %v127
  %v156 = vpack.c.b16 %v130, %v129
  %v157 = vpack.c.b16 %v132, %v131
  %v158 = vpack.c.b16 %v134, %v133
  %v159 = vpack.c.b16 %v136, %v135
  %v160 = vpack.c.b16 %v138, %v137
  %v161 = vpack.c.b16 %v140, %v139
  %v162 = vpack.c.b16 %v142, %v141
  %v163 = vpack.c.b16 %v144, %v143
  %v164 = vpack.c.b16 %v146, %v145
  %v165 = vpack.c.b16 %v148, %v147
  %v166 = vpack.c.b16 %v150, %v149
  %183 = vmatprep.subr.bf16.mxu0 0
  %184 = vmatpush1.bf16.msra.mxu0 %v158
  %185 = vmatprep.subr.bf16.mxu0 0
  %186 = vmatpush1.bf16.msra.mxu0 %v157
  %187 = vmatprep.subr.bf16.mxu0 0
  %188 = vmatpush1.bf16.msra.mxu0 %v156
  %189 = vmatprep.subr.bf16.mxu0 0
  %190 = vmatpush1.bf16.msra.mxu0 %v155
  %191 = vmatprep.subr.bf16.mxu0 0
  %192 = vmatpush1.bf16.msra.mxu0 %v154
  %193 = vmatprep.subr.bf16.mxu0 0
  %194 = vmatpush1.bf16.msra.mxu0 %v153
  %195 = vmatprep.subr.bf16.mxu0 0
  %196 = vmatpush1.bf16.msra.mxu0 %v152
  %197 = vmatprep.subr.bf16.mxu0 0
  %198 = vmatpush1.bf16.msra.mxu0 %v151
  %199 = vmatprep.subr.bf16.mxu0 0
  %200 = vmatpush2.bf16.msra.mxu0 %v166
  %201 = vmatprep.subr.bf16.mxu0 0
  %202 = vmatpush2.bf16.msra.mxu0 %v165
  %203 = vmatprep.subr.bf16.mxu0 0
  %204 = vmatpush2.bf16.msra.mxu0 %v164
  %205 = vmatprep.subr.bf16.mxu0 0
  %206 = vmatpush2.bf16.msra.mxu0 %v163
  %207 = vmatprep.subr.bf16.mxu0 0
  %208 = vmatpush2.bf16.msra.mxu0 %v162
  %209 = vmatprep.subr.bf16.mxu0 0
  %210 = vmatpush2.bf16.msra.mxu0 %v161
  %211 = vmatprep.subr.bf16.mxu0 0
  %212 = vmatpush2.bf16.msra.mxu0 %v160
  %213 = vmatprep.subr.bf16.mxu0 0
  %214 = vmatpush2.bf16.msra.mxu0 %v159
  %215 = vmatprep.mubr.bf16.mxu0 %v80
  %216 = vmatmul.mubr.bf16.gmra.mxu0 %v79
  %v217 = vpop.f32.mrf.mxu0
  %v218 = vadd.f32 0.0, %v217
  %v219 = vpop.f32.mrf.mxu0
  %v220 = vpop.f32.mrf.mxu0
  %v221 = vadd.f32 0.0, %v220
  %v222 = vpop.f32.mrf.mxu0
  %223 = vmatprep.mubr.bf16.mxu0 %v82
  %224 = vmatmul.mubr.bf16.gmra.mxu0 %v81
  %v225 = vpop.f32.mrf.mxu0
  %v226 = vadd.f32 0.0, %v225
  %v227 = vpop.f32.mrf.mxu0
  %v228 = vpop.f32.mrf.mxu0
  %v229 = vadd.f32 0.0, %v228
  %v230 = vpop.f32.mrf.mxu0
  %231 = vdwg.mxu0
  %v232 = vld [vmem:[%s2] sm:$0x1]
  %v234 = vlaneseq
  %v235 = vshrl.u32 %v234, 7
  %v236 = vsub.s32 0, %v235
  %v237 = vrot.slane %v232, %v236
  %v239 = vmul.f32 %v218, %v237
  %v240 = vmul.f32 %v221, %v237
  %v241 = vmul.f32 %v226, %v237
  %v242 = vmul.f32 %v229, %v237
  %v243 = vld [vmem:[%s3] sm:$0x1]
  %v245 = vlaneseq
  %v246 = vshrl.u32 %v245, 7
  %v247 = vsub.s32 0, %v246
  %v248 = vrot.slane %v243, %v247
  %v250 = vadd.f32 %v239, %v248
  %v251 = vadd.f32 %v240, %v248
  %v252 = vadd.f32 %v241, %v248
  %v253 = vadd.f32 %v242, %v248
  %v254 = vpack.c.bf16 %v251, %v250
  %v255 = vpack.c.bf16 %v253, %v252
  %v258 = vunpack.c.l.b16 %v254
  %v259 = vunpack.c.h.b16 %v254
  %v260 = vunpack.c.l.b16 %v255
  %v261 = vunpack.c.h.b16 %v255
  %v262 = vpack.c.b16 %v258, %v258
  %v263 = vpack.c.b16 %v259, %v259
  %v264 = vpack.c.b16 %v260, %v260
  %v265 = vpack.c.b16 %v261, %v261
  %270 = vst [vmem:[%s4] sm:$0xf] %v262
  %271 = vst [vmem:[%s4 + $0x4] sm:$0xf] %v263
  %272 = vst [vmem:[%s4 + $0x8] sm:$0xf] %v264
  %273 = vst [vmem:[%s4 + $0xc] sm:$0xf] %v265
  // Predicated region
  $region18: #{unet_generator_forward.12} parent=0 // pred_check
    _
  $region19: #{unet_generator_forward.12} parent=0 // pred_check_branch
    %275 = sbr.rel (0) target = $region21
  $region20: #{unet_generator_forward.12} parent=0 // pred_region
    _
  $region21: #{unet_generator_forward.12} parent=0 // pred_fallthru
    _
  // Predicated region
  $region22: #{unet_generator_forward.12} parent=0 // pred_check
    _
  $region23: #{unet_generator_forward.12} parent=0 // pred_check_branch
    %277 = sbr.rel (0) target = $region25
  $region24: #{unet_generator_forward.12} parent=0 // pred_region
    _
  $region25: #{unet_generator_forward.12} parent=0 // pred_fallthru
    _

// kernel: unet_generator_forward.13
$region0: #{unet_generator_forward.13}
  #allocation0 [shape = 'u32[]', space=smem, size = 0x4, offset = 0x4, fixed_abs, tag = 'smem constant byte address 0x4 - core index']
  #allocation1 [shape = 'u32[144,128]{1,0:T(1,128)}', space=vmem, size = 0x12000, scoped, tag = 'internal scratch']
  %s0 = inlined_call_operand.vmem [shape: bf16[16,512], index: 0, kind: input, shape index: {}]
  %s1 = inlined_call_operand.vmem [shape: bf16[512,128], index: 1, kind: input, shape index: {}]
  %s2 = inlined_call_operand.vmem [shape: f32[1,128], index: 2, kind: input, shape index: {}]
  %s3 = inlined_call_operand.vmem [shape: f32[1,128], index: 3, kind: input, shape index: {}]
  %s4 = inlined_call_operand.vmem [shape: bf16[16,128], index: 4, kind: output, shape index: {}]
  %s5 = sld [smem:[#allocation0]]
  $region26: #{unet_generator_forward.13} parent=0
    _
  %s7 = ssub.s32 1, %s5
  %s8 = scalar_select 0, %s7, %s5
  // Predicated region
  $region2: #{unet_generator_forward.13} parent=0 // pred_check
    _
  $region3: #{unet_generator_forward.13} parent=0 // pred_check_branch
    %10 = sbr.rel (0) target = $region5
  $region4: #{unet_generator_forward.13} parent=0 // pred_region
    _
  $region5: #{unet_generator_forward.13} parent=0 // pred_fallthru
    _
  // Predicated region
  $region6: #{unet_generator_forward.13} parent=0 // pred_check
    _
  $region7: #{unet_generator_forward.13} parent=0 // pred_check_branch
    %12 = sbr.rel (0) target = $region9
  $region8: #{unet_generator_forward.13} parent=0 // pred_region
    _
  $region9: #{unet_generator_forward.13} parent=0 // pred_fallthru
    _
  // Predicated region
  $region10: #{unet_generator_forward.13} parent=0 // pred_check
    _
  $region11: #{unet_generator_forward.13} parent=0 // pred_check_branch
    %14 = sbr.rel (0) target = $region13
  $region12: #{unet_generator_forward.13} parent=0 // pred_region
    _
  $region13: #{unet_generator_forward.13} parent=0 // pred_fallthru
    _
  // Predicated region
  $region14: #{unet_generator_forward.13} parent=0 // pred_check
    _
  $region15: #{unet_generator_forward.13} parent=0 // pred_check_branch
    %16 = sbr.rel (0) target = $region17
  $region16: #{unet_generator_forward.13} parent=0 // pred_region
    _
  $region17: #{unet_generator_forward.13} parent=0 // pred_fallthru
    _
  %v19 = vld [vmem:[%s0] sm:$0xff]
  %v20 = vld [vmem:[%s0 + $0x8] sm:$0xff]
  %v21 = vld [vmem:[%s0 + $0x10] sm:$0xff]
  %v22 = vld [vmem:[%s0 + $0x18] sm:$0xff]
  %vm23 = vcmp.ge.bf16.partialorder %v19, 0
  %vm24 = vcmp.ge.bf16.partialorder %v20, 0
  %vm25 = vcmp.ge.bf16.partialorder %v21, 0
  %vm26 = vcmp.ge.bf16.partialorder %v22, 0
  %v27 = vmul.bf16 %v19, 1045249613
  %v28 = vmul.bf16 %v20, 1045249613
  %v29 = vmul.bf16 %v21, 1045249613
  %v30 = vmul.bf16 %v22, 1045249613
  %v31 = vsel %vm23, %v19, %v27
  %v32 = vsel %vm24, %v20, %v28
  %v33 = vsel %vm25, %v21, %v29
  %v34 = vsel %vm26, %v22, %v30
  %v35 = vld [vmem:[%s1] sm:$0xf]
  %v36 = vld [vmem:[%s1 + $0x4] sm:$0xf]
  %v37 = vld [vmem:[%s1 + $0x8] sm:$0xf]
  %v38 = vld [vmem:[%s1 + $0xc] sm:$0xf]
  %v39 = vld [vmem:[%s1 + $0x10] sm:$0xf]
  %v40 = vld [vmem:[%s1 + $0x14] sm:$0xf]
  %v41 = vld [vmem:[%s1 + $0x18] sm:$0xf]
  %v42 = vld [vmem:[%s1 + $0x1c] sm:$0xf]
  %v43 = vld [vmem:[%s1 + $0x20] sm:$0xf]
  %v44 = vld [vmem:[%s1 + $0x24] sm:$0xf]
  %v45 = vld [vmem:[%s1 + $0x28] sm:$0xf]
  %v46 = vld [vmem:[%s1 + $0x2c] sm:$0xf]
  %v47 = vld [vmem:[%s1 + $0x30] sm:$0xf]
  %v48 = vld [vmem:[%s1 + $0x34] sm:$0xf]
  %v49 = vld [vmem:[%s1 + $0x38] sm:$0xf]
  %v50 = vld [vmem:[%s1 + $0x3c] sm:$0xf]
  %v51 = vld [vmem:[%s1 + $0x40] sm:$0xf]
  %v52 = vld [vmem:[%s1 + $0x44] sm:$0xf]
  %v53 = vld [vmem:[%s1 + $0x48] sm:$0xf]
  %v54 = vld [vmem:[%s1 + $0x4c] sm:$0xf]
  %v55 = vld [vmem:[%s1 + $0x50] sm:$0xf]
  %v56 = vld [vmem:[%s1 + $0x54] sm:$0xf]
  %v57 = vld [vmem:[%s1 + $0x58] sm:$0xf]
  %v58 = vld [vmem:[%s1 + $0x5c] sm:$0xf]
  %v59 = vld [vmem:[%s1 + $0x60] sm:$0xf]
  %v60 = vld [vmem:[%s1 + $0x64] sm:$0xf]
  %v61 = vld [vmem:[%s1 + $0x68] sm:$0xf]
  %v62 = vld [vmem:[%s1 + $0x6c] sm:$0xf]
  %v63 = vld [vmem:[%s1 + $0x70] sm:$0xf]
  %v64 = vld [vmem:[%s1 + $0x74] sm:$0xf]
  %v65 = vld [vmem:[%s1 + $0x78] sm:$0xf]
  %v66 = vld [vmem:[%s1 + $0x7c] sm:$0xf]
  %v67 = vld [vmem:[%s1 + $0x80] sm:$0xf]
  %v68 = vld [vmem:[%s1 + $0x84] sm:$0xf]
  %v69 = vld [vmem:[%s1 + $0x88] sm:$0xf]
  %v70 = vld [vmem:[%s1 + $0x8c] sm:$0xf]
  %v71 = vld [vmem:[%s1 + $0x90] sm:$0xf]
  %v72 = vld [vmem:[%s1 + $0x94] sm:$0xf]
  %v73 = vld [vmem:[%s1 + $0x98] sm:$0xf]
  %v74 = vld [vmem:[%s1 + $0x9c] sm:$0xf]
  %v75 = vld [vmem:[%s1 + $0xa0] sm:$0xf]
  %v76 = vld [vmem:[%s1 + $0xa4] sm:$0xf]
  %v77 = vld [vmem:[%s1 + $0xa8] sm:$0xf]
  %v78 = vld [vmem:[%s1 + $0xac] sm:$0xf]
  %v79 = vld [vmem:[%s1 + $0xb0] sm:$0xf]
  %v80 = vld [vmem:[%s1 + $0xb4] sm:$0xf]
  %v81 = vld [vmem:[%s1 + $0xb8] sm:$0xf]
  %v82 = vld [vmem:[%s1 + $0xbc] sm:$0xf]
  %v83 = vld [vmem:[%s1 + $0xc0] sm:$0xf]
  %v84 = vld [vmem:[%s1 + $0xc4] sm:$0xf]
  %v85 = vld [vmem:[%s1 + $0xc8] sm:$0xf]
  %v86 = vld [vmem:[%s1 + $0xcc] sm:$0xf]
  %v87 = vld [vmem:[%s1 + $0xd0] sm:$0xf]
  %v88 = vld [vmem:[%s1 + $0xd4] sm:$0xf]
  %v89 = vld [vmem:[%s1 + $0xd8] sm:$0xf]
  %v90 = vld [vmem:[%s1 + $0xdc] sm:$0xf]
  %v91 = vld [vmem:[%s1 + $0xe0] sm:$0xf]
  %v92 = vld [vmem:[%s1 + $0xe4] sm:$0xf]
  %v93 = vld [vmem:[%s1 + $0xe8] sm:$0xf]
  %v94 = vld [vmem:[%s1 + $0xec] sm:$0xf]
  %v95 = vld [vmem:[%s1 + $0xf0] sm:$0xf]
  %v96 = vld [vmem:[%s1 + $0xf4] sm:$0xf]
  %v97 = vld [vmem:[%s1 + $0xf8] sm:$0xf]
  %v98 = vld [vmem:[%s1 + $0xfc] sm:$0xf]
  %v103 = vunpack.c.l.b16 %v31
  %v104 = vunpack.c.h.b16 %v31
  %v105 = vunpack.c.l.b16 %v32
  %v106 = vunpack.c.h.b16 %v32
  %v107 = vunpack.c.l.b16 %v33
  %v108 = vunpack.c.h.b16 %v33
  %v109 = vunpack.c.l.b16 %v34
  %v110 = vunpack.c.h.b16 %v34
  %v111 = vpack.c.b16 %v107, %v103
  %v112 = vpack.c.b16 %v108, %v104
  %v113 = vpack.c.b16 %v109, %v105
  %v114 = vpack.c.b16 %v110, %v106
  %v183 = vunpack.c.l.b16 %v35
  %v184 = vunpack.c.l.b16 %v36
  %v185 = vunpack.c.l.b16 %v37
  %v186 = vunpack.c.l.b16 %v38
  %v187 = vunpack.c.l.b16 %v39
  %v188 = vunpack.c.l.b16 %v40
  %v189 = vunpack.c.l.b16 %v41
  %v190 = vunpack.c.l.b16 %v42
  %v191 = vunpack.c.l.b16 %v43
  %v192 = vunpack.c.l.b16 %v44
  %v193 = vunpack.c.l.b16 %v45
  %v194 = vunpack.c.l.b16 %v46
  %v195 = vunpack.c.l.b16 %v47
  %v196 = vunpack.c.l.b16 %v48
  %v197 = vunpack.c.l.b16 %v49
  %v198 = vunpack.c.l.b16 %v50
  %v199 = vunpack.c.l.b16 %v51
  %v200 = vunpack.c.l.b16 %v52
  %v201 = vunpack.c.l.b16 %v53
  %v202 = vunpack.c.l.b16 %v54
  %v203 = vunpack.c.l.b16 %v55
  %v204 = vunpack.c.l.b16 %v56
  %v205 = vunpack.c.l.b16 %v57
  %v206 = vunpack.c.l.b16 %v58
  %v207 = vunpack.c.l.b16 %v59
  %v208 = vunpack.c.l.b16 %v60
  %v209 = vunpack.c.l.b16 %v61
  %v210 = vunpack.c.l.b16 %v62
  %v211 = vunpack.c.l.b16 %v63
  %v212 = vunpack.c.l.b16 %v64
  %v213 = vunpack.c.l.b16 %v65
  %v214 = vunpack.c.l.b16 %v66
  %v215 = vunpack.c.l.b16 %v67
  %v216 = vunpack.c.l.b16 %v68
  %v217 = vunpack.c.l.b16 %v69
  %v218 = vunpack.c.l.b16 %v70
  %v219 = vunpack.c.l.b16 %v71
  %v220 = vunpack.c.l.b16 %v72
  %v221 = vunpack.c.l.b16 %v73
  %v222 = vunpack.c.l.b16 %v74
  %v223 = vunpack.c.l.b16 %v75
  %v224 = vunpack.c.l.b16 %v76
  %v225 = vunpack.c.l.b16 %v77
  %v226 = vunpack.c.l.b16 %v78
  %v227 = vunpack.c.l.b16 %v79
  %v228 = vunpack.c.l.b16 %v80
  %v229 = vunpack.c.l.b16 %v81
  %v230 = vunpack.c.l.b16 %v82
  %v231 = vunpack.c.l.b16 %v83
  %v232 = vunpack.c.l.b16 %v84
  %v233 = vunpack.c.l.b16 %v85
  %v234 = vunpack.c.l.b16 %v86
  %v235 = vunpack.c.l.b16 %v87
  %v236 = vunpack.c.l.b16 %v88
  %v237 = vunpack.c.l.b16 %v89
  %v238 = vunpack.c.l.b16 %v90
  %v239 = vunpack.c.l.b16 %v91
  %v240 = vunpack.c.l.b16 %v92
  %v241 = vunpack.c.l.b16 %v93
  %v242 = vunpack.c.l.b16 %v94
  %v243 = vunpack.c.l.b16 %v95
  %v244 = vunpack.c.l.b16 %v96
  %v245 = vunpack.c.l.b16 %v97
  %v246 = vunpack.c.l.b16 %v98
  %v247 = vpack.c.b16 %v184, %v183
  %v248 = vpack.c.b16 %v186, %v185
  %v249 = vpack.c.b16 %v188, %v187
  %v250 = vpack.c.b16 %v190, %v189
  %v251 = vpack.c.b16 %v192, %v191
  %v252 = vpack.c.b16 %v194, %v193
  %v253 = vpack.c.b16 %v196, %v195
  %v254 = vpack.c.b16 %v198, %v197
  %v255 = vpack.c.b16 %v200, %v199
  %v256 = vpack.c.b16 %v202, %v201
  %v257 = vpack.c.b16 %v204, %v203
  %v258 = vpack.c.b16 %v206, %v205
  %v259 = vpack.c.b16 %v208, %v207
  %v260 = vpack.c.b16 %v210, %v209
  %v261 = vpack.c.b16 %v212, %v211
  %v262 = vpack.c.b16 %v214, %v213
  %v263 = vpack.c.b16 %v216, %v215
  %v264 = vpack.c.b16 %v218, %v217
  %v265 = vpack.c.b16 %v220, %v219
  %v266 = vpack.c.b16 %v222, %v221
  %v267 = vpack.c.b16 %v224, %v223
  %v268 = vpack.c.b16 %v226, %v225
  %v269 = vpack.c.b16 %v228, %v227
  %v270 = vpack.c.b16 %v230, %v229
  %v271 = vpack.c.b16 %v232, %v231
  %v272 = vpack.c.b16 %v234, %v233
  %v273 = vpack.c.b16 %v236, %v235
  %v274 = vpack.c.b16 %v238, %v237
  %v275 = vpack.c.b16 %v240, %v239
  %v276 = vpack.c.b16 %v242, %v241
  %v277 = vpack.c.b16 %v244, %v243
  %v278 = vpack.c.b16 %v246, %v245
  %311 = vmatprep.subr.bf16.mxu0 0
  %312 = vmatpush1.bf16.msra.mxu0 %v254
  %313 = vmatprep.subr.bf16.mxu0 0
  %314 = vmatpush1.bf16.msra.mxu0 %v253
  %315 = vmatprep.subr.bf16.mxu0 0
  %316 = vmatpush1.bf16.msra.mxu0 %v252
  %317 = vmatprep.subr.bf16.mxu0 0
  %318 = vmatpush1.bf16.msra.mxu0 %v251
  %319 = vmatprep.subr.bf16.mxu0 0
  %320 = vmatpush1.bf16.msra.mxu0 %v250
  %321 = vmatprep.subr.bf16.mxu0 0
  %322 = vmatpush1.bf16.msra.mxu0 %v249
  %323 = vmatprep.subr.bf16.mxu0 0
  %324 = vmatpush1.bf16.msra.mxu0 %v248
  %325 = vmatprep.subr.bf16.mxu0 0
  %326 = vmatpush1.bf16.msra.mxu0 %v247
  %327 = vmatprep.subr.bf16.mxu0 0
  %328 = vmatpush2.bf16.msra.mxu0 %v262
  %329 = vmatprep.subr.bf16.mxu0 0
  %330 = vmatpush2.bf16.msra.mxu0 %v261
  %331 = vmatprep.subr.bf16.mxu0 0
  %332 = vmatpush2.bf16.msra.mxu0 %v260
  %333 = vmatprep.subr.bf16.mxu0 0
  %334 = vmatpush2.bf16.msra.mxu0 %v259
  %335 = vmatprep.subr.bf16.mxu0 0
  %336 = vmatpush2.bf16.msra.mxu0 %v258
  %337 = vmatprep.subr.bf16.mxu0 0
  %338 = vmatpush2.bf16.msra.mxu0 %v257
  %339 = vmatprep.subr.bf16.mxu0 0
  %340 = vmatpush2.bf16.msra.mxu0 %v256
  %341 = vmatprep.subr.bf16.mxu0 0
  %342 = vmatpush2.bf16.msra.mxu0 %v255
  %343 = vmatprep.mubr.bf16.mxu0 %v112
  %344 = vmatmul.mubr.bf16.gmra.mxu0 %v111
  %v345 = vpop.f32.mrf.mxu0
  %v346 = vadd.f32 0.0, %v345
  %v347 = vpop.f32.mrf.mxu0
  %v348 = vpop.f32.mrf.mxu0
  %v349 = vadd.f32 0.0, %v348
  %v350 = vpop.f32.mrf.mxu0
  %351 = vdwg.mxu0
  %352 = vmatprep.subr.bf16.mxu0 0
  %353 = vmatpush1.bf16.msra.mxu0 %v270
  %354 = vmatprep.subr.bf16.mxu0 0
  %355 = vmatpush1.bf16.msra.mxu0 %v269
  %356 = vmatprep.subr.bf16.mxu0 0
  %357 = vmatpush1.bf16.msra.mxu0 %v268
  %358 = vmatprep.subr.bf16.mxu0 0
  %359 = vmatpush1.bf16.msra.mxu0 %v267
  %360 = vmatprep.subr.bf16.mxu0 0
  %361 = vmatpush1.bf16.msra.mxu0 %v266
  %362 = vmatprep.subr.bf16.mxu0 0
  %363 = vmatpush1.bf16.msra.mxu0 %v265
  %364 = vmatprep.subr.bf16.mxu0 0
  %365 = vmatpush1.bf16.msra.mxu0 %v264
  %366 = vmatprep.subr.bf16.mxu0 0
  %367 = vmatpush1.bf16.msra.mxu0 %v263
  %368 = vmatprep.subr.bf16.mxu0 0
  %369 = vmatpush2.bf16.msra.mxu0 %v278
  %370 = vmatprep.subr.bf16.mxu0 0
  %371 = vmatpush2.bf16.msra.mxu0 %v277
  %372 = vmatprep.subr.bf16.mxu0 0
  %373 = vmatpush2.bf16.msra.mxu0 %v276
  %374 = vmatprep.subr.bf16.mxu0 0
  %375 = vmatpush2.bf16.msra.mxu0 %v275
  %376 = vmatprep.subr.bf16.mxu0 0
  %377 = vmatpush2.bf16.msra.mxu0 %v274
  %378 = vmatprep.subr.bf16.mxu0 0
  %379 = vmatpush2.bf16.msra.mxu0 %v273
  %380 = vmatprep.subr.bf16.mxu0 0
  %381 = vmatpush2.bf16.msra.mxu0 %v272
  %382 = vmatprep.subr.bf16.mxu0 0
  %383 = vmatpush2.bf16.msra.mxu0 %v271
  %384 = vmatprep.mubr.bf16.mxu0 %v114
  %385 = vmatmul.mubr.bf16.gmra.mxu0 %v113
  %v386 = vpop.f32.mrf.mxu0
  %v387 = vadd.f32 %v346, %v386
  %v388 = vpop.f32.mrf.mxu0
  %v389 = vpop.f32.mrf.mxu0
  %v390 = vadd.f32 %v349, %v389
  %v391 = vpop.f32.mrf.mxu0
  %392 = vdwg.mxu0
  %v393 = vld [vmem:[%s2] sm:$0x1]
  %v395 = vlaneseq
  %v396 = vshrl.u32 %v395, 7
  %v397 = vsub.s32 0, %v396
  %v398 = vrot.slane %v393, %v397
  %v400 = vmul.f32 %v387, %v398
  %v401 = vmul.f32 %v390, %v398
  %v402 = vld [vmem:[%s3] sm:$0x1]
  %v404 = vlaneseq
  %v405 = vshrl.u32 %v404, 7
  %v406 = vsub.s32 0, %v405
  %v407 = vrot.slane %v402, %v406
  %v409 = vadd.f32 %v400, %v407
  %v410 = vadd.f32 %v401, %v407
  %v411 = vpack.c.bf16 %v410, %v409
  %v413 = vunpack.c.l.b16 %v411
  %v414 = vunpack.c.h.b16 %v411
  %v415 = vpack.c.b16 %v413, %v413
  %v416 = vpack.c.b16 %v414, %v414
  %419 = vst [vmem:[%s4] sm:$0xf] %v415
  %420 = vst [vmem:[%s4 + $0x4] sm:$0xf] %v416
  // Predicated region
  $region18: #{unet_generator_forward.13} parent=0 // pred_check
    _
  $region19: #{unet_generator_forward.13} parent=0 // pred_check_branch
    %422 = sbr.rel (0) target = $region21
  $region20: #{unet_generator_forward.13} parent=0 // pred_region
    _
  $region21: #{unet_generator_forward.13} parent=0 // pred_fallthru
    _
  // Predicated region
  $region22: #{unet_generator_forward.13} parent=0 // pred_check
    _
  $region23: #{unet_generator_forward.13} parent=0 // pred_check_branch
    %424 = sbr.rel (0) target = $region25
  $region24: #{unet_generator_forward.13} parent=0 // pred_region
    _
  $region25: #{unet_generator_forward.13} parent=0 // pred_fallthru
    _

// kernel: unet_generator_forward.14
$region0: #{unet_generator_forward.14}
  #allocation0 [shape = 'u32[]', space=smem, size = 0x4, offset = 0x4, fixed_abs, tag = 'smem constant byte address 0x4 - core index']
  #allocation1 [shape = 'u32[144,128]{1,0:T(1,128)}', space=vmem, size = 0x12000, scoped, tag = 'internal scratch']
  %s0 = inlined_call_operand.vmem [shape: bf16[16,1024], index: 0, kind: input, shape index: {}]
  %s1 = inlined_call_operand.vmem [shape: bf16[1024,128], index: 1, kind: input, shape index: {}]
  %s2 = inlined_call_operand.vmem [shape: f32[1,128], index: 2, kind: input, shape index: {}]
  %s3 = inlined_call_operand.vmem [shape: f32[1,128], index: 3, kind: input, shape index: {}]
  %s4 = inlined_call_operand.vmem [shape: bf16[16,128], index: 4, kind: output, shape index: {}]
  %s5 = sld [smem:[#allocation0]]
  $region26: #{unet_generator_forward.14} parent=0
    _
  %s7 = ssub.s32 1, %s5
  %s8 = scalar_select 0, %s7, %s5
  // Predicated region
  $region2: #{unet_generator_forward.14} parent=0 // pred_check
    _
  $region3: #{unet_generator_forward.14} parent=0 // pred_check_branch
    %10 = sbr.rel (0) target = $region5
  $region4: #{unet_generator_forward.14} parent=0 // pred_region
    _
  $region5: #{unet_generator_forward.14} parent=0 // pred_fallthru
    _
  // Predicated region
  $region6: #{unet_generator_forward.14} parent=0 // pred_check
    _
  $region7: #{unet_generator_forward.14} parent=0 // pred_check_branch
    %12 = sbr.rel (0) target = $region9
  $region8: #{unet_generator_forward.14} parent=0 // pred_region
    _
  $region9: #{unet_generator_forward.14} parent=0 // pred_fallthru
    _
  // Predicated region
  $region10: #{unet_generator_forward.14} parent=0 // pred_check
    _
  $region11: #{unet_generator_forward.14} parent=0 // pred_check_branch
    %14 = sbr.rel (0) target = $region13
  $region12: #{unet_generator_forward.14} parent=0 // pred_region
    _
  $region13: #{unet_generator_forward.14} parent=0 // pred_fallthru
    _
  // Predicated region
  $region14: #{unet_generator_forward.14} parent=0 // pred_check
    _
  $region15: #{unet_generator_forward.14} parent=0 // pred_check_branch
    %16 = sbr.rel (0) target = $region17
  $region16: #{unet_generator_forward.14} parent=0 // pred_region
    _
  $region17: #{unet_generator_forward.14} parent=0 // pred_fallthru
    _
  %v19 = vld [vmem:[%s0] sm:$0xff]
  %v20 = vld [vmem:[%s0 + $0x8] sm:$0xff]
  %v21 = vld [vmem:[%s0 + $0x10] sm:$0xff]
  %v22 = vld [vmem:[%s0 + $0x18] sm:$0xff]
  %v23 = vld [vmem:[%s0 + $0x20] sm:$0xff]
  %v24 = vld [vmem:[%s0 + $0x28] sm:$0xff]
  %v25 = vld [vmem:[%s0 + $0x30] sm:$0xff]
  %v26 = vld [vmem:[%s0 + $0x38] sm:$0xff]
  %vm27 = vcmp.ge.bf16.partialorder %v19, 0
  %vm28 = vcmp.ge.bf16.partialorder %v20, 0
  %vm29 = vcmp.ge.bf16.partialorder %v21, 0
  %vm30 = vcmp.ge.bf16.partialorder %v22, 0
  %vm31 = vcmp.ge.bf16.partialorder %v23, 0
  %vm32 = vcmp.ge.bf16.partialorder %v24, 0
  %vm33 = vcmp.ge.bf16.partialorder %v25, 0
  %vm34 = vcmp.ge.bf16.partialorder %v26, 0
  %v35 = vmul.bf16 %v19, 1045249613
  %v36 = vmul.bf16 %v20, 1045249613
  %v37 = vmul.bf16 %v21, 1045249613
  %v38 = vmul.bf16 %v22, 1045249613
  %v39 = vmul.bf16 %v23, 1045249613
  %v40 = vmul.bf16 %v24, 1045249613
  %v41 = vmul.bf16 %v25, 1045249613
  %v42 = vmul.bf16 %v26, 1045249613
  %v43 = vsel %vm27, %v19, %v35
  %v44 = vsel %vm28, %v20, %v36
  %v45 = vsel %vm29, %v21, %v37
  %v46 = vsel %vm30, %v22, %v38
  %v47 = vsel %vm31, %v23, %v39
  %v48 = vsel %vm32, %v24, %v40
  %v49 = vsel %vm33, %v25, %v41
  %v50 = vsel %vm34, %v26, %v42
  %v51 = vld [vmem:[%s1] sm:$0xf]
  %v52 = vld [vmem:[%s1 + $0x4] sm:$0xf]
  %v53 = vld [vmem:[%s1 + $0x8] sm:$0xf]
  %v54 = vld [vmem:[%s1 + $0xc] sm:$0xf]
  %v55 = vld [vmem:[%s1 + $0x10] sm:$0xf]
  %v56 = vld [vmem:[%s1 + $0x14] sm:$0xf]
  %v57 = vld [vmem:[%s1 + $0x18] sm:$0xf]
  %v58 = vld [vmem:[%s1 + $0x1c] sm:$0xf]
  %v59 = vld [vmem:[%s1 + $0x20] sm:$0xf]
  %v60 = vld [vmem:[%s1 + $0x24] sm:$0xf]
  %v61 = vld [vmem:[%s1 + $0x28] sm:$0xf]
  %v62 = vld [vmem:[%s1 + $0x2c] sm:$0xf]
  %v63 = vld [vmem:[%s1 + $0x30] sm:$0xf]
  %v64 = vld [vmem:[%s1 + $0x34] sm:$0xf]
  %v65 = vld [vmem:[%s1 + $0x38] sm:$0xf]
  %v66 = vld [vmem:[%s1 + $0x3c] sm:$0xf]
  %v67 = vld [vmem:[%s1 + $0x40] sm:$0xf]
  %v68 = vld [vmem:[%s1 + $0x44] sm:$0xf]
  %v69 = vld [vmem:[%s1 + $0x48] sm:$0xf]
  %v70 = vld [vmem:[%s1 + $0x4c] sm:$0xf]
  %v71 = vld [vmem:[%s1 + $0x50] sm:$0xf]
  %v72 = vld [vmem:[%s1 + $0x54] sm:$0xf]
  %v73 = vld [vmem:[%s1 + $0x58] sm:$0xf]
  %v74 = vld [vmem:[%s1 + $0x5c] sm:$0xf]
  %v75 = vld [vmem:[%s1 + $0x60] sm:$0xf]
  %v76 = vld [vmem:[%s1 + $0x64] sm:$0xf]
  %v77 = vld [vmem:[%s1 + $0x68] sm:$0xf]
  %v78 = vld [vmem:[%s1 + $0x6c] sm:$0xf]
  %v79 = vld [vmem:[%s1 + $0x70] sm:$0xf]
  %v80 = vld [vmem:[%s1 + $0x74] sm:$0xf]
  %v81 = vld [vmem:[%s1 + $0x78] sm:$0xf]
  %v82 = vld [vmem:[%s1 + $0x7c] sm:$0xf]
  %v83 = vld [vmem:[%s1 + $0x80] sm:$0xf]
  %v84 = vld [vmem:[%s1 + $0x84] sm:$0xf]
  %v85 = vld [vmem:[%s1 + $0x88] sm:$0xf]
  %v86 = vld [vmem:[%s1 + $0x8c] sm:$0xf]
  %v87 = vld [vmem:[%s1 + $0x90] sm:$0xf]
  %v88 = vld [vmem:[%s1 + $0x94] sm:$0xf]
  %v89 = vld [vmem:[%s1 + $0x98] sm:$0xf]
  %v90 = vld [vmem:[%s1 + $0x9c] sm:$0xf]
  %v91 = vld [vmem:[%s1 + $0xa0] sm:$0xf]
  %v92 = vld [vmem:[%s1 + $0xa4] sm:$0xf]
  %v93 = vld [vmem:[%s1 + $0xa8] sm:$0xf]
  %v94 = vld [vmem:[%s1 + $0xac] sm:$0xf]
  %v95 = vld [vmem:[%s1 + $0xb0] sm:$0xf]
  %v96 = vld [vmem:[%s1 + $0xb4] sm:$0xf]
  %v97 = vld [vmem:[%s1 + $0xb8] sm:$0xf]
  %v98 = vld [vmem:[%s1 + $0xbc] sm:$0xf]
  %v99 = vld [vmem:[%s1 + $0xc0] sm:$0xf]
  %v100 = vld [vmem:[%s1 + $0xc4] sm:$0xf]
  %v101 = vld [vmem:[%s1 + $0xc8] sm:$0xf]
  %v102 = vld [vmem:[%s1 + $0xcc] sm:$0xf]
  %v103 = vld [vmem:[%s1 + $0xd0] sm:$0xf]
  %v104 = vld [vmem:[%s1 + $0xd4] sm:$0xf]
  %v105 = vld [vmem:[%s1 + $0xd8] sm:$0xf]
  %v106 = vld [vmem:[%s1 + $0xdc] sm:$0xf]
  %v107 = vld [vmem:[%s1 + $0xe0] sm:$0xf]
  %v108 = vld [vmem:[%s1 + $0xe4] sm:$0xf]
  %v109 = vld [vmem:[%s1 + $0xe8] sm:$0xf]
  %v110 = vld [vmem:[%s1 + $0xec] sm:$0xf]
  %v111 = vld [vmem:[%s1 + $0xf0] sm:$0xf]
  %v112 = vld [vmem:[%s1 + $0xf4] sm:$0xf]
  %v113 = vld [vmem:[%s1 + $0xf8] sm:$0xf]
  %v114 = vld [vmem:[%s1 + $0xfc] sm:$0xf]
  %v115 = vld [vmem:[%s1 + $0x100] sm:$0xf]
  %v116 = vld [vmem:[%s1 + $0x104] sm:$0xf]
  %v117 = vld [vmem:[%s1 + $0x108] sm:$0xf]
  %v118 = vld [vmem:[%s1 + $0x10c] sm:$0xf]
  %v119 = vld [vmem:[%s1 + $0x110] sm:$0xf]
  %v120 = vld [vmem:[%s1 + $0x114] sm:$0xf]
  %v121 = vld [vmem:[%s1 + $0x118] sm:$0xf]
  %v122 = vld [vmem:[%s1 + $0x11c] sm:$0xf]
  %v123 = vld [vmem:[%s1 + $0x120] sm:$0xf]
  %v124 = vld [vmem:[%s1 + $0x124] sm:$0xf]
  %v125 = vld [vmem:[%s1 + $0x128] sm:$0xf]
  %v126 = vld [vmem:[%s1 + $0x12c] sm:$0xf]
  %v127 = vld [vmem:[%s1 + $0x130] sm:$0xf]
  %v128 = vld [vmem:[%s1 + $0x134] sm:$0xf]
  %v129 = vld [vmem:[%s1 + $0x138] sm:$0xf]
  %v130 = vld [vmem:[%s1 + $0x13c] sm:$0xf]
  %v131 = vld [vmem:[%s1 + $0x140] sm:$0xf]
  %v132 = vld [vmem:[%s1 + $0x144] sm:$0xf]
  %v133 = vld [vmem:[%s1 + $0x148] sm:$0xf]
  %v134 = vld [vmem:[%s1 + $0x14c] sm:$0xf]
  %v135 = vld [vmem:[%s1 + $0x150] sm:$0xf]
  %v136 = vld [vmem:[%s1 + $0x154] sm:$0xf]
  %v137 = vld [vmem:[%s1 + $0x158] sm:$0xf]
  %v138 = vld [vmem:[%s1 + $0x15c] sm:$0xf]
  %v139 = vld [vmem:[%s1 + $0x160] sm:$0xf]
  %v140 = vld [vmem:[%s1 + $0x164] sm:$0xf]
  %v141 = vld [vmem:[%s1 + $0x168] sm:$0xf]
  %v142 = vld [vmem:[%s1 + $0x16c] sm:$0xf]
  %v143 = vld [vmem:[%s1 + $0x170] sm:$0xf]
  %v144 = vld [vmem:[%s1 + $0x174] sm:$0xf]
  %v145 = vld [vmem:[%s1 + $0x178] sm:$0xf]
  %v146 = vld [vmem:[%s1 + $0x17c] sm:$0xf]
  %v147 = vld [vmem:[%s1 + $0x180] sm:$0xf]
  %v148 = vld [vmem:[%s1 + $0x184] sm:$0xf]
  %v149 = vld [vmem:[%s1 + $0x188] sm:$0xf]
  %v150 = vld [vmem:[%s1 + $0x18c] sm:$0xf]
  %v151 = vld [vmem:[%s1 + $0x190] sm:$0xf]
  %v152 = vld [vmem:[%s1 + $0x194] sm:$0xf]
  %v153 = vld [vmem:[%s1 + $0x198] sm:$0xf]
  %v154 = vld [vmem:[%s1 + $0x19c] sm:$0xf]
  %v155 = vld [vmem:[%s1 + $0x1a0] sm:$0xf]
  %v156 = vld [vmem:[%s1 + $0x1a4] sm:$0xf]
  %v157 = vld [vmem:[%s1 + $0x1a8] sm:$0xf]
  %v158 = vld [vmem:[%s1 + $0x1ac] sm:$0xf]
  %v159 = vld [vmem:[%s1 + $0x1b0] sm:$0xf]
  %v160 = vld [vmem:[%s1 + $0x1b4] sm:$0xf]
  %v161 = vld [vmem:[%s1 + $0x1b8] sm:$0xf]
  %v162 = vld [vmem:[%s1 + $0x1bc] sm:$0xf]
  %v163 = vld [vmem:[%s1 + $0x1c0] sm:$0xf]
  %v164 = vld [vmem:[%s1 + $0x1c4] sm:$0xf]
  %v165 = vld [vmem:[%s1 + $0x1c8] sm:$0xf]
  %v166 = vld [vmem:[%s1 + $0x1cc] sm:$0xf]
  %v167 = vld [vmem:[%s1 + $0x1d0] sm:$0xf]
  %v168 = vld [vmem:[%s1 + $0x1d4] sm:$0xf]
  %v169 = vld [vmem:[%s1 + $0x1d8] sm:$0xf]
  %v170 = vld [vmem:[%s1 + $0x1dc] sm:$0xf]
  %v171 = vld [vmem:[%s1 + $0x1e0] sm:$0xf]
  %v172 = vld [vmem:[%s1 + $0x1e4] sm:$0xf]
  %v173 = vld [vmem:[%s1 + $0x1e8] sm:$0xf]
  %v174 = vld [vmem:[%s1 + $0x1ec] sm:$0xf]
  %v175 = vld [vmem:[%s1 + $0x1f0] sm:$0xf]
  %v176 = vld [vmem:[%s1 + $0x1f4] sm:$0xf]
  %v177 = vld [vmem:[%s1 + $0x1f8] sm:$0xf]
  %v178 = vld [vmem:[%s1 + $0x1fc] sm:$0xf]
  %v187 = vunpack.c.l.b16 %v43
  %v188 = vunpack.c.h.b16 %v43
  %v189 = vunpack.c.l.b16 %v44
  %v190 = vunpack.c.h.b16 %v44
  %v191 = vunpack.c.l.b16 %v45
  %v192 = vunpack.c.h.b16 %v45
  %v193 = vunpack.c.l.b16 %v46
  %v194 = vunpack.c.h.b16 %v46
  %v195 = vunpack.c.l.b16 %v47
  %v196 = vunpack.c.h.b16 %v47
  %v197 = vunpack.c.l.b16 %v48
  %v198 = vunpack.c.h.b16 %v48
  %v199 = vunpack.c.l.b16 %v49
  %v200 = vunpack.c.h.b16 %v49
  %v201 = vunpack.c.l.b16 %v50
  %v202 = vunpack.c.h.b16 %v50
  %v203 = vpack.c.b16 %v195, %v187
  %v204 = vpack.c.b16 %v196, %v188
  %v205 = vpack.c.b16 %v197, %v189
  %v206 = vpack.c.b16 %v198, %v190
  %v207 = vpack.c.b16 %v199, %v191
  %v208 = vpack.c.b16 %v200, %v192
  %v209 = vpack.c.b16 %v201, %v193
  %v210 = vpack.c.b16 %v202, %v194
  %v347 = vunpack.c.l.b16 %v51
  %v348 = vunpack.c.l.b16 %v52
  %v349 = vunpack.c.l.b16 %v53
  %v350 = vunpack.c.l.b16 %v54
  %v351 = vunpack.c.l.b16 %v55
  %v352 = vunpack.c.l.b16 %v56
  %v353 = vunpack.c.l.b16 %v57
  %v354 = vunpack.c.l.b16 %v58
  %v355 = vunpack.c.l.b16 %v59
  %v356 = vunpack.c.l.b16 %v60
  %v357 = vunpack.c.l.b16 %v61
  %v358 = vunpack.c.l.b16 %v62
  %v359 = vunpack.c.l.b16 %v63
  %v360 = vunpack.c.l.b16 %v64
  %v361 = vunpack.c.l.b16 %v65
  %v362 = vunpack.c.l.b16 %v66
  %v363 = vunpack.c.l.b16 %v67
  %v364 = vunpack.c.l.b16 %v68
  %v365 = vunpack.c.l.b16 %v69
  %v366 = vunpack.c.l.b16 %v70
  %v367 = vunpack.c.l.b16 %v71
  %v368 = vunpack.c.l.b16 %v72
  %v369 = vunpack.c.l.b16 %v73
  %v370 = vunpack.c.l.b16 %v74
  %v371 = vunpack.c.l.b16 %v75
  %v372 = vunpack.c.l.b16 %v76
  %v373 = vunpack.c.l.b16 %v77
  %v374 = vunpack.c.l.b16 %v78
  %v375 = vunpack.c.l.b16 %v79
  %v376 = vunpack.c.l.b16 %v80
  %v377 = vunpack.c.l.b16 %v81
  %v378 = vunpack.c.l.b16 %v82
  %v379 = vunpack.c.l.b16 %v83
  %v380 = vunpack.c.l.b16 %v84
  %v381 = vunpack.c.l.b16 %v85
  %v382 = vunpack.c.l.b16 %v86
  %v383 = vunpack.c.l.b16 %v87
  %v384 = vunpack.c.l.b16 %v88
  %v385 = vunpack.c.l.b16 %v89
  %v386 = vunpack.c.l.b16 %v90
  %v387 = vunpack.c.l.b16 %v91
  %v388 = vunpack.c.l.b16 %v92
  %v389 = vunpack.c.l.b16 %v93
  %v390 = vunpack.c.l.b16 %v94
  %v391 = vunpack.c.l.b16 %v95
  %v392 = vunpack.c.l.b16 %v96
  %v393 = vunpack.c.l.b16 %v97
  %v394 = vunpack.c.l.b16 %v98
  %v395 = vunpack.c.l.b16 %v99
  %v396 = vunpack.c.l.b16 %v100
  %v397 = vunpack.c.l.b16 %v101
  %v398 = vunpack.c.l.b16 %v102
  %v399 = vunpack.c.l.b16 %v103
  %v400 = vunpack.c.l.b16 %v104
  %v401 = vunpack.c.l.b16 %v105
  %v402 = vunpack.c.l.b16 %v106
  %v403 = vunpack.c.l.b16 %v107
  %v404 = vunpack.c.l.b16 %v108
  %v405 = vunpack.c.l.b16 %v109
  %v406 = vunpack.c.l.b16 %v110
  %v407 = vunpack.c.l.b16 %v111
  %v408 = vunpack.c.l.b16 %v112
  %v409 = vunpack.c.l.b16 %v113
  %v410 = vunpack.c.l.b16 %v114
  %v411 = vunpack.c.l.b16 %v115
  %v412 = vunpack.c.l.b16 %v116
  %v413 = vunpack.c.l.b16 %v117
  %v414 = vunpack.c.l.b16 %v118
  %v415 = vunpack.c.l.b16 %v119
  %v416 = vunpack.c.l.b16 %v120
  %v417 = vunpack.c.l.b16 %v121
  %v418 = vunpack.c.l.b16 %v122
  %v419 = vunpack.c.l.b16 %v123
  %v420 = vunpack.c.l.b16 %v124
  %v421 = vunpack.c.l.b16 %v125
  %v422 = vunpack.c.l.b16 %v126
  %v423 = vunpack.c.l.b16 %v127
  %v424 = vunpack.c.l.b16 %v128
  %v425 = vunpack.c.l.b16 %v129
  %v426 = vunpack.c.l.b16 %v130
  %v427 = vunpack.c.l.b16 %v131
  %v428 = vunpack.c.l.b16 %v132
  %v429 = vunpack.c.l.b16 %v133
  %v430 = vunpack.c.l.b16 %v134
  %v431 = vunpack.c.l.b16 %v135
  %v432 = vunpack.c.l.b16 %v136
  %v433 = vunpack.c.l.b16 %v137
  %v434 = vunpack.c.l.b16 %v138
  %v435 = vunpack.c.l.b16 %v139
  %v436 = vunpack.c.l.b16 %v140
  %v437 = vunpack.c.l.b16 %v141
  %v438 = vunpack.c.l.b16 %v142
  %v439 = vunpack.c.l.b16 %v143
  %v440 = vunpack.c.l.b16 %v144
  %v441 = vunpack.c.l.b16 %v145
  %v442 = vunpack.c.l.b16 %v146
  %v443 = vunpack.c.l.b16 %v147
  %v444 = vunpack.c.l.b16 %v148
  %v445 = vunpack.c.l.b16 %v149
  %v446 = vunpack.c.l.b16 %v150
  %v447 = vunpack.c.l.b16 %v151
  %v448 = vunpack.c.l.b16 %v152
  %v449 = vunpack.c.l.b16 %v153
  %v450 = vunpack.c.l.b16 %v154
  %v451 = vunpack.c.l.b16 %v155
  %v452 = vunpack.c.l.b16 %v156
  %v453 = vunpack.c.l.b16 %v157
  %v454 = vunpack.c.l.b16 %v158
  %v455 = vunpack.c.l.b16 %v159
  %v456 = vunpack.c.l.b16 %v160
  %v457 = vunpack.c.l.b16 %v161
  %v458 = vunpack.c.l.b16 %v162
  %v459 = vunpack.c.l.b16 %v163
  %v460 = vunpack.c.l.b16 %v164
  %v461 = vunpack.c.l.b16 %v165
  %v462 = vunpack.c.l.b16 %v166
  %v463 = vunpack.c.l.b16 %v167
  %v464 = vunpack.c.l.b16 %v168
  %v465 = vunpack.c.l.b16 %v169
  %v466 = vunpack.c.l.b16 %v170
  %v467 = vunpack.c.l.b16 %v171
  %v468 = vunpack.c.l.b16 %v172
  %v469 = vunpack.c.l.b16 %v173
  %v470 = vunpack.c.l.b16 %v174
  %v471 = vunpack.c.l.b16 %v175
  %v472 = vunpack.c.l.b16 %v176
  %v473 = vunpack.c.l.b16 %v177
  %v474 = vunpack.c.l.b16 %v178
  %v475 = vpack.c.b16 %v348, %v347
  %v476 = vpack.c.b16 %v350, %v349
  %v477 = vpack.c.b16 %v352, %v351
  %v478 = vpack.c.b16 %v354, %v353
  %v479 = vpack.c.b16 %v356, %v355
  %v480 = vpack.c.b16 %v358, %v357
  %v481 = vpack.c.b16 %v360, %v359
  %v482 = vpack.c.b16 %v362, %v361
  %v483 = vpack.c.b16 %v364, %v363
  %v484 = vpack.c.b16 %v366, %v365
  %v485 = vpack.c.b16 %v368, %v367
  %v486 = vpack.c.b16 %v370, %v369
  %v487 = vpack.c.b16 %v372, %v371
  %v488 = vpack.c.b16 %v374, %v373
  %v489 = vpack.c.b16 %v376, %v375
  %v490 = vpack.c.b16 %v378, %v377
  %v491 = vpack.c.b16 %v380, %v379
  %v492 = vpack.c.b16 %v382, %v381
  %v493 = vpack.c.b16 %v384, %v383
  %v494 = vpack.c.b16 %v386, %v385
  %v495 = vpack.c.b16 %v388, %v387
  %v496 = vpack.c.b16 %v390, %v389
  %v497 = vpack.c.b16 %v392, %v391
  %v498 = vpack.c.b16 %v394, %v393
  %v499 = vpack.c.b16 %v396, %v395
  %v500 = vpack.c.b16 %v398, %v397
  %v501 = vpack.c.b16 %v400, %v399
  %v502 = vpack.c.b16 %v402, %v401
  %v503 = vpack.c.b16 %v404, %v403
  %v504 = vpack.c.b16 %v406, %v405
  %v505 = vpack.c.b16 %v408, %v407
  %v506 = vpack.c.b16 %v410, %v409
  %v507 = vpack.c.b16 %v412, %v411
  %v508 = vpack.c.b16 %v414, %v413
  %v509 = vpack.c.b16 %v416, %v415
  %v510 = vpack.c.b16 %v418, %v417
  %v511 = vpack.c.b16 %v420, %v419
  %v512 = vpack.c.b16 %v422, %v421
  %v513 = vpack.c.b16 %v424, %v423
  %v514 = vpack.c.b16 %v426, %v425
  %v515 = vpack.c.b16 %v428, %v427
  %v516 = vpack.c.b16 %v430, %v429
  %v517 = vpack.c.b16 %v432, %v431
  %v518 = vpack.c.b16 %v434, %v433
  %v519 = vpack.c.b16 %v436, %v435
  %v520 = vpack.c.b16 %v438, %v437
  %v521 = vpack.c.b16 %v440, %v439
  %v522 = vpack.c.b16 %v442, %v441
  %v523 = vpack.c.b16 %v444, %v443
  %v524 = vpack.c.b16 %v446, %v445
  %v525 = vpack.c.b16 %v448, %v447
  %v526 = vpack.c.b16 %v450, %v449
  %v527 = vpack.c.b16 %v452, %v451
  %v528 = vpack.c.b16 %v454, %v453
  %v529 = vpack.c.b16 %v456, %v455
  %v530 = vpack.c.b16 %v458, %v457
  %v531 = vpack.c.b16 %v460, %v459
  %v532 = vpack.c.b16 %v462, %v461
  %v533 = vpack.c.b16 %v464, %v463
  %v534 = vpack.c.b16 %v466, %v465
  %v535 = vpack.c.b16 %v468, %v467
  %v536 = vpack.c.b16 %v470, %v469
  %v537 = vpack.c.b16 %v472, %v471
  %v538 = vpack.c.b16 %v474, %v473
  %603 = vmatprep.subr.bf16.mxu0 0
  %604 = vmatpush1.bf16.msra.mxu0 %v482
  %605 = vmatprep.subr.bf16.mxu0 0
  %606 = vmatpush1.bf16.msra.mxu0 %v481
  %607 = vmatprep.subr.bf16.mxu0 0
  %608 = vmatpush1.bf16.msra.mxu0 %v480
  %609 = vmatprep.subr.bf16.mxu0 0
  %610 = vmatpush1.bf16.msra.mxu0 %v479
  %611 = vmatprep.subr.bf16.mxu0 0
  %612 = vmatpush1.bf16.msra.mxu0 %v478
  %613 = vmatprep.subr.bf16.mxu0 0
  %614 = vmatpush1.bf16.msra.mxu0 %v477
  %615 = vmatprep.subr.bf16.mxu0 0
  %616 = vmatpush1.bf16.msra.mxu0 %v476
  %617 = vmatprep.subr.bf16.mxu0 0
  %618 = vmatpush1.bf16.msra.mxu0 %v475
  %619 = vmatprep.subr.bf16.mxu0 0
  %620 = vmatpush2.bf16.msra.mxu0 %v490
  %621 = vmatprep.subr.bf16.mxu0 0
  %622 = vmatpush2.bf16.msra.mxu0 %v489
  %623 = vmatprep.subr.bf16.mxu0 0
  %624 = vmatpush2.bf16.msra.mxu0 %v488
  %625 = vmatprep.subr.bf16.mxu0 0
  %626 = vmatpush2.bf16.msra.mxu0 %v487
  %627 = vmatprep.subr.bf16.mxu0 0
  %628 = vmatpush2.bf16.msra.mxu0 %v486
  %629 = vmatprep.subr.bf16.mxu0 0
  %630 = vmatpush2.bf16.msra.mxu0 %v485
  %631 = vmatprep.subr.bf16.mxu0 0
  %632 = vmatpush2.bf16.msra.mxu0 %v484
  %633 = vmatprep.subr.bf16.mxu0 0
  %634 = vmatpush2.bf16.msra.mxu0 %v483
  %635 = vmatprep.mubr.bf16.mxu0 %v204
  %636 = vmatmul.mubr.bf16.gmra.mxu0 %v203
  %v637 = vpop.f32.mrf.mxu0
  %v638 = vadd.f32 0.0, %v637
  %v639 = vpop.f32.mrf.mxu0
  %v640 = vpop.f32.mrf.mxu0
  %v641 = vadd.f32 0.0, %v640
  %v642 = vpop.f32.mrf.mxu0
  %643 = vdwg.mxu0
  %644 = vmatprep.subr.bf16.mxu0 0
  %645 = vmatpush1.bf16.msra.mxu0 %v498
  %646 = vmatprep.subr.bf16.mxu0 0
  %647 = vmatpush1.bf16.msra.mxu0 %v497
  %648 = vmatprep.subr.bf16.mxu0 0
  %649 = vmatpush1.bf16.msra.mxu0 %v496
  %650 = vmatprep.subr.bf16.mxu0 0
  %651 = vmatpush1.bf16.msra.mxu0 %v495
  %652 = vmatprep.subr.bf16.mxu0 0
  %653 = vmatpush1.bf16.msra.mxu0 %v494
  %654 = vmatprep.subr.bf16.mxu0 0
  %655 = vmatpush1.bf16.msra.mxu0 %v493
  %656 = vmatprep.subr.bf16.mxu0 0
  %657 = vmatpush1.bf16.msra.mxu0 %v492
  %658 = vmatprep.subr.bf16.mxu0 0
  %659 = vmatpush1.bf16.msra.mxu0 %v491
  %660 = vmatprep.subr.bf16.mxu0 0
  %661 = vmatpush2.bf16.msra.mxu0 %v506
  %662 = vmatprep.subr.bf16.mxu0 0
  %663 = vmatpush2.bf16.msra.mxu0 %v505
  %664 = vmatprep.subr.bf16.mxu0 0
  %665 = vmatpush2.bf16.msra.mxu0 %v504
  %666 = vmatprep.subr.bf16.mxu0 0
  %667 = vmatpush2.bf16.msra.mxu0 %v503
  %668 = vmatprep.subr.bf16.mxu0 0
  %669 = vmatpush2.bf16.msra.mxu0 %v502
  %670 = vmatprep.subr.bf16.mxu0 0
  %671 = vmatpush2.bf16.msra.mxu0 %v501
  %672 = vmatprep.subr.bf16.mxu0 0
  %673 = vmatpush2.bf16.msra.mxu0 %v500
  %674 = vmatprep.subr.bf16.mxu0 0
  %675 = vmatpush2.bf16.msra.mxu0 %v499
  %676 = vmatprep.mubr.bf16.mxu0 %v206
  %677 = vmatmul.mubr.bf16.gmra.mxu0 %v205
  %v678 = vpop.f32.mrf.mxu0
  %v679 = vadd.f32 %v638, %v678
  %v680 = vpop.f32.mrf.mxu0
  %v681 = vpop.f32.mrf.mxu0
  %v682 = vadd.f32 %v641, %v681
  %v683 = vpop.f32.mrf.mxu0
  %684 = vdwg.mxu0
  %685 = vmatprep.subr.bf16.mxu0 0
  %686 = vmatpush1.bf16.msra.mxu0 %v514
  %687 = vmatprep.subr.bf16.mxu0 0
  %688 = vmatpush1.bf16.msra.mxu0 %v513
  %689 = vmatprep.subr.bf16.mxu0 0
  %690 = vmatpush1.bf16.msra.mxu0 %v512
  %691 = vmatprep.subr.bf16.mxu0 0
  %692 = vmatpush1.bf16.msra.mxu0 %v511
  %693 = vmatprep.subr.bf16.mxu0 0
  %694 = vmatpush1.bf16.msra.mxu0 %v510
  %695 = vmatprep.subr.bf16.mxu0 0
  %696 = vmatpush1.bf16.msra.mxu0 %v509
  %697 = vmatprep.subr.bf16.mxu0 0
  %698 = vmatpush1.bf16.msra.mxu0 %v508
  %699 = vmatprep.subr.bf16.mxu0 0
  %700 = vmatpush1.bf16.msra.mxu0 %v507
  %701 = vmatprep.subr.bf16.mxu0 0
  %702 = vmatpush2.bf16.msra.mxu0 %v522
  %703 = vmatprep.subr.bf16.mxu0 0
  %704 = vmatpush2.bf16.msra.mxu0 %v521
  %705 = vmatprep.subr.bf16.mxu0 0
  %706 = vmatpush2.bf16.msra.mxu0 %v520
  %707 = vmatprep.subr.bf16.mxu0 0
  %708 = vmatpush2.bf16.msra.mxu0 %v519
  %709 = vmatprep.subr.bf16.mxu0 0
  %710 = vmatpush2.bf16.msra.mxu0 %v518
  %711 = vmatprep.subr.bf16.mxu0 0
  %712 = vmatpush2.bf16.msra.mxu0 %v517
  %713 = vmatprep.subr.bf16.mxu0 0
  %714 = vmatpush2.bf16.msra.mxu0 %v516
  %715 = vmatprep.subr.bf16.mxu0 0
  %716 = vmatpush2.bf16.msra.mxu0 %v515
  %717 = vmatprep.mubr.bf16.mxu0 %v208
  %718 = vmatmul.mubr.bf16.gmra.mxu0 %v207
  %v719 = vpop.f32.mrf.mxu0
  %v720 = vadd.f32 %v679, %v719
  %v721 = vpop.f32.mrf.mxu0
  %v722 = vpop.f32.mrf.mxu0
  %v723 = vadd.f32 %v682, %v722
  %v724 = vpop.f32.mrf.mxu0
  %725 = vdwg.mxu0
  %726 = vmatprep.subr.bf16.mxu0 0
  %727 = vmatpush1.bf16.msra.mxu0 %v530
  %728 = vmatprep.subr.bf16.mxu0 0
  %729 = vmatpush1.bf16.msra.mxu0 %v529
  %730 = vmatprep.subr.bf16.mxu0 0
  %731 = vmatpush1.bf16.msra.mxu0 %v528
  %732 = vmatprep.subr.bf16.mxu0 0
  %733 = vmatpush1.bf16.msra.mxu0 %v527
  %734 = vmatprep.subr.bf16.mxu0 0
  %735 = vmatpush1.bf16.msra.mxu0 %v526
  %736 = vmatprep.subr.bf16.mxu0 0
  %737 = vmatpush1.bf16.msra.mxu0 %v525
  %738 = vmatprep.subr.bf16.mxu0 0
  %739 = vmatpush1.bf16.msra.mxu0 %v524
  %740 = vmatprep.subr.bf16.mxu0 0
  %741 = vmatpush1.bf16.msra.mxu0 %v523
  %742 = vmatprep.subr.bf16.mxu0 0
  %743 = vmatpush2.bf16.msra.mxu0 %v538
  %744 = vmatprep.subr.bf16.mxu0 0
  %745 = vmatpush2.bf16.msra.mxu0 %v537
  %746 = vmatprep.subr.bf16.mxu0 0
  %747 = vmatpush2.bf16.msra.mxu0 %v536
  %748 = vmatprep.subr.bf16.mxu0 0
  %749 = vmatpush2.bf16.msra.mxu0 %v535
  %750 = vmatprep.subr.bf16.mxu0 0
  %751 = vmatpush2.bf16.msra.mxu0 %v534
  %752 = vmatprep.subr.bf16.mxu0 0
  %753 = vmatpush2.bf16.msra.mxu0 %v533
  %754 = vmatprep.subr.bf16.mxu0 0
  %755 = vmatpush2.bf16.msra.mxu0 %v532
  %756 = vmatprep.subr.bf16.mxu0 0
  %757 = vmatpush2.bf16.msra.mxu0 %v531
  %758 = vmatprep.mubr.bf16.mxu0 %v210
  %759 = vmatmul.mubr.bf16.gmra.mxu0 %v209
  %v760 = vpop.f32.mrf.mxu0
  %v761 = vadd.f32 %v720, %v760
  %v762 = vpop.f32.mrf.mxu0
  %v763 = vpop.f32.mrf.mxu0
  %v764 = vadd.f32 %v723, %v763
  %v765 = vpop.f32.mrf.mxu0
  %766 = vdwg.mxu0
  %v767 = vld [vmem:[%s2] sm:$0x1]
  %v769 = vlaneseq
  %v770 = vshrl.u32 %v769, 7
  %v771 = vsub.s32 0, %v770
  %v772 = vrot.slane %v767, %v771
  %v774 = vmul.f32 %v761, %v772
  %v775 = vmul.f32 %v764, %v772
  %v776 = vld [vmem:[%s3] sm:$0x1]
  %v778 = vlaneseq
  %v779 = vshrl.u32 %v778, 7
  %v780 = vsub.s32 0, %v779
  %v781 = vrot.slane %v776, %v780
  %v783 = vadd.f32 %v774, %v781
  %v784 = vadd.f32 %v775, %v781
  %v785 = vpack.c.bf16 %v784, %v783
  %v787 = vunpack.c.l.b16 %v785
  %v788 = vunpack.c.h.b16 %v785
  %v789 = vpack.c.b16 %v787, %v787
  %v790 = vpack.c.b16 %v788, %v788
  %793 = vst [vmem:[%s4] sm:$0xf] %v789
  %794 = vst [vmem:[%s4 + $0x4] sm:$0xf] %v790
  // Predicated region
  $region18: #{unet_generator_forward.14} parent=0 // pred_check
    _
  $region19: #{unet_generator_forward.14} parent=0 // pred_check_branch
    %796 = sbr.rel (0) target = $region21
  $region20: #{unet_generator_forward.14} parent=0 // pred_region
    _
  $region21: #{unet_generator_forward.14} parent=0 // pred_fallthru
    _
  // Predicated region
  $region22: #{unet_generator_forward.14} parent=0 // pred_check
    _
  $region23: #{unet_generator_forward.14} parent=0 // pred_check_branch
    %798 = sbr.rel (0) target = $region25
  $region24: #{unet_generator_forward.14} parent=0 // pred_region
    _
  $region25: #{unet_generator_forward.14} parent=0 // pred_fallthru
    _

// kernel: unet_generator_forward.15
$region0: #{unet_generator_forward.15}
  #allocation0 [shape = 'u32[]', space=smem, size = 0x4, offset = 0x4, fixed_abs, tag = 'smem constant byte address 0x4 - core index']
  #allocation1 [shape = 'u32[144,128]{1,0:T(1,128)}', space=vmem, size = 0x12000, scoped, tag = 'internal scratch']
  %s0 = inlined_call_operand.vmem [shape: bf16[16,576], index: 0, kind: input, shape index: {}]
  %s1 = inlined_call_operand.vmem [shape: bf16[576,256], index: 1, kind: input, shape index: {}]
  %s2 = inlined_call_operand.vmem [shape: f32[1,256], index: 2, kind: input, shape index: {}]
  %s3 = inlined_call_operand.vmem [shape: f32[1,256], index: 3, kind: input, shape index: {}]
  %s4 = inlined_call_operand.vmem [shape: bf16[16,256], index: 4, kind: output, shape index: {}]
  %s5 = sld [smem:[#allocation0]]
  $region26: #{unet_generator_forward.15} parent=0
    _
  %s7 = ssub.s32 1, %s5
  %s8 = scalar_select 0, %s7, %s5
  // Predicated region
  $region2: #{unet_generator_forward.15} parent=0 // pred_check
    _
  $region3: #{unet_generator_forward.15} parent=0 // pred_check_branch
    %10 = sbr.rel (0) target = $region5
  $region4: #{unet_generator_forward.15} parent=0 // pred_region
    _
  $region5: #{unet_generator_forward.15} parent=0 // pred_fallthru
    _
  // Predicated region
  $region6: #{unet_generator_forward.15} parent=0 // pred_check
    _
  $region7: #{unet_generator_forward.15} parent=0 // pred_check_branch
    %12 = sbr.rel (0) target = $region9
  $region8: #{unet_generator_forward.15} parent=0 // pred_region
    _
  $region9: #{unet_generator_forward.15} parent=0 // pred_fallthru
    _
  // Predicated region
  $region10: #{unet_generator_forward.15} parent=0 // pred_check
    _
  $region11: #{unet_generator_forward.15} parent=0 // pred_check_branch
    %14 = sbr.rel (0) target = $region13
  $region12: #{unet_generator_forward.15} parent=0 // pred_region
    _
  $region13: #{unet_generator_forward.15} parent=0 // pred_fallthru
    _
  // Predicated region
  $region14: #{unet_generator_forward.15} parent=0 // pred_check
    _
  $region15: #{unet_generator_forward.15} parent=0 // pred_check_branch
    %16 = sbr.rel (0) target = $region17
  $region16: #{unet_generator_forward.15} parent=0 // pred_region
    _
  $region17: #{unet_generator_forward.15} parent=0 // pred_fallthru
    _
  %v18 = vld [vmem:[%s0] sm:$0xff]
  %v19 = vld [vmem:[%s0 + $0x8] sm:$0xff]
  %v20 = vld [vmem:[%s0 + $0x10] sm:$0xf]
  %v21 = vld [vmem:[%s0 + $0x14] sm:$0xff]
  %v22 = vld [vmem:[%s0 + $0x1c] sm:$0xff]
  %v23 = vld [vmem:[%s0 + $0x24] sm:$0xf]
  %v24 = vmax.bf16 %v18, 0
  %v25 = vmax.bf16 %v19, 0
  %v26 = vmax.bf16 %v20, 0
  %v27 = vmax.bf16 %v21, 0
  %v28 = vmax.bf16 %v22, 0
  %v29 = vmax.bf16 %v23, 0
  %v30 = vld [vmem:[%s1] sm:$0xff]
  %v31 = vld [vmem:[%s1 + $0x8] sm:$0xff]
  %v32 = vld [vmem:[%s1 + $0x10] sm:$0xff]
  %v33 = vld [vmem:[%s1 + $0x18] sm:$0xff]
  %v34 = vld [vmem:[%s1 + $0x20] sm:$0xff]
  %v35 = vld [vmem:[%s1 + $0x28] sm:$0xff]
  %v36 = vld [vmem:[%s1 + $0x30] sm:$0xff]
  %v37 = vld [vmem:[%s1 + $0x38] sm:$0xff]
  %v38 = vld [vmem:[%s1 + $0x40] sm:$0xff]
  %v39 = vld [vmem:[%s1 + $0x48] sm:$0xff]
  %v40 = vld [vmem:[%s1 + $0x50] sm:$0xff]
  %v41 = vld [vmem:[%s1 + $0x58] sm:$0xff]
  %v42 = vld [vmem:[%s1 + $0x60] sm:$0xff]
  %v43 = vld [vmem:[%s1 + $0x68] sm:$0xff]
  %v44 = vld [vmem:[%s1 + $0x70] sm:$0xff]
  %v45 = vld [vmem:[%s1 + $0x78] sm:$0xff]
  %v46 = vld [vmem:[%s1 + $0x80] sm:$0xff]
  %v47 = vld [vmem:[%s1 + $0x88] sm:$0xff]
  %v48 = vld [vmem:[%s1 + $0x90] sm:$0xff]
  %v49 = vld [vmem:[%s1 + $0x98] sm:$0xff]
  %v50 = vld [vmem:[%s1 + $0xa0] sm:$0xff]
  %v51 = vld [vmem:[%s1 + $0xa8] sm:$0xff]
  %v52 = vld [vmem:[%s1 + $0xb0] sm:$0xff]
  %v53 = vld [vmem:[%s1 + $0xb8] sm:$0xff]
  %v54 = vld [vmem:[%s1 + $0xc0] sm:$0xff]
  %v55 = vld [vmem:[%s1 + $0xc8] sm:$0xff]
  %v56 = vld [vmem:[%s1 + $0xd0] sm:$0xff]
  %v57 = vld [vmem:[%s1 + $0xd8] sm:$0xff]
  %v58 = vld [vmem:[%s1 + $0xe0] sm:$0xff]
  %v59 = vld [vmem:[%s1 + $0xe8] sm:$0xff]
  %v60 = vld [vmem:[%s1 + $0xf0] sm:$0xff]
  %v61 = vld [vmem:[%s1 + $0xf8] sm:$0xff]
  %v62 = vld [vmem:[%s1 + $0x100] sm:$0xff]
  %v63 = vld [vmem:[%s1 + $0x108] sm:$0xff]
  %v64 = vld [vmem:[%s1 + $0x110] sm:$0xff]
  %v65 = vld [vmem:[%s1 + $0x118] sm:$0xff]
  %v66 = vld [vmem:[%s1 + $0x120] sm:$0xff]
  %v67 = vld [vmem:[%s1 + $0x128] sm:$0xff]
  %v68 = vld [vmem:[%s1 + $0x130] sm:$0xff]
  %v69 = vld [vmem:[%s1 + $0x138] sm:$0xff]
  %v70 = vld [vmem:[%s1 + $0x140] sm:$0xff]
  %v71 = vld [vmem:[%s1 + $0x148] sm:$0xff]
  %v72 = vld [vmem:[%s1 + $0x150] sm:$0xff]
  %v73 = vld [vmem:[%s1 + $0x158] sm:$0xff]
  %v74 = vld [vmem:[%s1 + $0x160] sm:$0xff]
  %v75 = vld [vmem:[%s1 + $0x168] sm:$0xff]
  %v76 = vld [vmem:[%s1 + $0x170] sm:$0xff]
  %v77 = vld [vmem:[%s1 + $0x178] sm:$0xff]
  %v78 = vld [vmem:[%s1 + $0x180] sm:$0xff]
  %v79 = vld [vmem:[%s1 + $0x188] sm:$0xff]
  %v80 = vld [vmem:[%s1 + $0x190] sm:$0xff]
  %v81 = vld [vmem:[%s1 + $0x198] sm:$0xff]
  %v82 = vld [vmem:[%s1 + $0x1a0] sm:$0xff]
  %v83 = vld [vmem:[%s1 + $0x1a8] sm:$0xff]
  %v84 = vld [vmem:[%s1 + $0x1b0] sm:$0xff]
  %v85 = vld [vmem:[%s1 + $0x1b8] sm:$0xff]
  %v86 = vld [vmem:[%s1 + $0x1c0] sm:$0xff]
  %v87 = vld [vmem:[%s1 + $0x1c8] sm:$0xff]
  %v88 = vld [vmem:[%s1 + $0x1d0] sm:$0xff]
  %v89 = vld [vmem:[%s1 + $0x1d8] sm:$0xff]
  %v90 = vld [vmem:[%s1 + $0x1e0] sm:$0xff]
  %v91 = vld [vmem:[%s1 + $0x1e8] sm:$0xff]
  %v92 = vld [vmem:[%s1 + $0x1f0] sm:$0xff]
  %v93 = vld [vmem:[%s1 + $0x1f8] sm:$0xff]
  %v94 = vld [vmem:[%s1 + $0x200] sm:$0xff]
  %v95 = vld [vmem:[%s1 + $0x208] sm:$0xff]
  %v96 = vld [vmem:[%s1 + $0x210] sm:$0xff]
  %v97 = vld [vmem:[%s1 + $0x218] sm:$0xff]
  %v98 = vld [vmem:[%s1 + $0x220] sm:$0xff]
  %v99 = vld [vmem:[%s1 + $0x228] sm:$0xff]
  %v100 = vld [vmem:[%s1 + $0x230] sm:$0xff]
  %v101 = vld [vmem:[%s1 + $0x238] sm:$0xff]
  %v108 = vunpack.c.l.b16 %v24
  %v109 = vunpack.c.h.b16 %v24
  %v110 = vunpack.c.l.b16 %v25
  %v111 = vunpack.c.h.b16 %v25
  %v112 = vunpack.c.l.b16 %v26
  %v113 = vunpack.c.l.b16 %v27
  %v114 = vunpack.c.h.b16 %v27
  %v115 = vunpack.c.l.b16 %v28
  %v116 = vunpack.c.h.b16 %v28
  %v117 = vunpack.c.l.b16 %v29
  %v118 = vpack.c.b16 %v113, %v108
  %v119 = vpack.c.b16 %v114, %v109
  %v120 = vpack.c.b16 %v115, %v110
  %v121 = vpack.c.b16 %v116, %v111
  %v122 = vpack.c.b16 %v117, %v112
  %v199 = vunpack.c.l.b16 %v30
  %v200 = vunpack.c.h.b16 %v30
  %v201 = vunpack.c.l.b16 %v31
  %v202 = vunpack.c.h.b16 %v31
  %v203 = vunpack.c.l.b16 %v32
  %v204 = vunpack.c.h.b16 %v32
  %v205 = vunpack.c.l.b16 %v33
  %v206 = vunpack.c.h.b16 %v33
  %v207 = vunpack.c.l.b16 %v34
  %v208 = vunpack.c.h.b16 %v34
  %v209 = vunpack.c.l.b16 %v35
  %v210 = vunpack.c.h.b16 %v35
  %v211 = vunpack.c.l.b16 %v36
  %v212 = vunpack.c.h.b16 %v36
  %v213 = vunpack.c.l.b16 %v37
  %v214 = vunpack.c.h.b16 %v37
  %v215 = vunpack.c.l.b16 %v38
  %v216 = vunpack.c.h.b16 %v38
  %v217 = vunpack.c.l.b16 %v39
  %v218 = vunpack.c.h.b16 %v39
  %v219 = vunpack.c.l.b16 %v40
  %v220 = vunpack.c.h.b16 %v40
  %v221 = vunpack.c.l.b16 %v41
  %v222 = vunpack.c.h.b16 %v41
  %v223 = vunpack.c.l.b16 %v42
  %v224 = vunpack.c.h.b16 %v42
  %v225 = vunpack.c.l.b16 %v43
  %v226 = vunpack.c.h.b16 %v43
  %v227 = vunpack.c.l.b16 %v44
  %v228 = vunpack.c.h.b16 %v44
  %v229 = vunpack.c.l.b16 %v45
  %v230 = vunpack.c.h.b16 %v45
  %v231 = vunpack.c.l.b16 %v46
  %v232 = vunpack.c.h.b16 %v46
  %v233 = vunpack.c.l.b16 %v47
  %v234 = vunpack.c.h.b16 %v47
  %v235 = vunpack.c.l.b16 %v48
  %v236 = vunpack.c.h.b16 %v48
  %v237 = vunpack.c.l.b16 %v49
  %v238 = vunpack.c.h.b16 %v49
  %v239 = vunpack.c.l.b16 %v50
  %v240 = vunpack.c.h.b16 %v50
  %v241 = vunpack.c.l.b16 %v51
  %v242 = vunpack.c.h.b16 %v51
  %v243 = vunpack.c.l.b16 %v52
  %v244 = vunpack.c.h.b16 %v52
  %v245 = vunpack.c.l.b16 %v53
  %v246 = vunpack.c.h.b16 %v53
  %v247 = vunpack.c.l.b16 %v54
  %v248 = vunpack.c.h.b16 %v54
  %v249 = vunpack.c.l.b16 %v55
  %v250 = vunpack.c.h.b16 %v55
  %v251 = vunpack.c.l.b16 %v56
  %v252 = vunpack.c.h.b16 %v56
  %v253 = vunpack.c.l.b16 %v57
  %v254 = vunpack.c.h.b16 %v57
  %v255 = vunpack.c.l.b16 %v58
  %v256 = vunpack.c.h.b16 %v58
  %v257 = vunpack.c.l.b16 %v59
  %v258 = vunpack.c.h.b16 %v59
  %v259 = vunpack.c.l.b16 %v60
  %v260 = vunpack.c.h.b16 %v60
  %v261 = vunpack.c.l.b16 %v61
  %v262 = vunpack.c.h.b16 %v61
  %v263 = vunpack.c.l.b16 %v62
  %v264 = vunpack.c.h.b16 %v62
  %v265 = vunpack.c.l.b16 %v63
  %v266 = vunpack.c.h.b16 %v63
  %v267 = vunpack.c.l.b16 %v64
  %v268 = vunpack.c.h.b16 %v64
  %v269 = vunpack.c.l.b16 %v65
  %v270 = vunpack.c.h.b16 %v65
  %v271 = vunpack.c.l.b16 %v66
  %v272 = vunpack.c.h.b16 %v66
  %v273 = vunpack.c.l.b16 %v67
  %v274 = vunpack.c.h.b16 %v67
  %v275 = vunpack.c.l.b16 %v68
  %v276 = vunpack.c.h.b16 %v68
  %v277 = vunpack.c.l.b16 %v69
  %v278 = vunpack.c.h.b16 %v69
  %v279 = vunpack.c.l.b16 %v70
  %v280 = vunpack.c.h.b16 %v70
  %v281 = vunpack.c.l.b16 %v71
  %v282 = vunpack.c.h.b16 %v71
  %v283 = vunpack.c.l.b16 %v72
  %v284 = vunpack.c.h.b16 %v72
  %v285 = vunpack.c.l.b16 %v73
  %v286 = vunpack.c.h.b16 %v73
  %v287 = vunpack.c.l.b16 %v74
  %v288 = vunpack.c.h.b16 %v74
  %v289 = vunpack.c.l.b16 %v75
  %v290 = vunpack.c.h.b16 %v75
  %v291 = vunpack.c.l.b16 %v76
  %v292 = vunpack.c.h.b16 %v76
  %v293 = vunpack.c.l.b16 %v77
  %v294 = vunpack.c.h.b16 %v77
  %v295 = vunpack.c.l.b16 %v78
  %v296 = vunpack.c.h.b16 %v78
  %v297 = vunpack.c.l.b16 %v79
  %v298 = vunpack.c.h.b16 %v79
  %v299 = vunpack.c.l.b16 %v80
  %v300 = vunpack.c.h.b16 %v80
  %v301 = vunpack.c.l.b16 %v81
  %v302 = vunpack.c.h.b16 %v81
  %v303 = vunpack.c.l.b16 %v82
  %v304 = vunpack.c.h.b16 %v82
  %v305 = vunpack.c.l.b16 %v83
  %v306 = vunpack.c.h.b16 %v83
  %v307 = vunpack.c.l.b16 %v84
  %v308 = vunpack.c.h.b16 %v84
  %v309 = vunpack.c.l.b16 %v85
  %v310 = vunpack.c.h.b16 %v85
  %v311 = vunpack.c.l.b16 %v86
  %v312 = vunpack.c.h.b16 %v86
  %v313 = vunpack.c.l.b16 %v87
  %v314 = vunpack.c.h.b16 %v87
  %v315 = vunpack.c.l.b16 %v88
  %v316 = vunpack.c.h.b16 %v88
  %v317 = vunpack.c.l.b16 %v89
  %v318 = vunpack.c.h.b16 %v89
  %v319 = vunpack.c.l.b16 %v90
  %v320 = vunpack.c.h.b16 %v90
  %v321 = vunpack.c.l.b16 %v91
  %v322 = vunpack.c.h.b16 %v91
  %v323 = vunpack.c.l.b16 %v92
  %v324 = vunpack.c.h.b16 %v92
  %v325 = vunpack.c.l.b16 %v93
  %v326 = vunpack.c.h.b16 %v93
  %v327 = vunpack.c.l.b16 %v94
  %v328 = vunpack.c.h.b16 %v94
  %v329 = vunpack.c.l.b16 %v95
  %v330 = vunpack.c.h.b16 %v95
  %v331 = vunpack.c.l.b16 %v96
  %v332 = vunpack.c.h.b16 %v96
  %v333 = vunpack.c.l.b16 %v97
  %v334 = vunpack.c.h.b16 %v97
  %v335 = vunpack.c.l.b16 %v98
  %v336 = vunpack.c.h.b16 %v98
  %v337 = vunpack.c.l.b16 %v99
  %v338 = vunpack.c.h.b16 %v99
  %v339 = vunpack.c.l.b16 %v100
  %v340 = vunpack.c.h.b16 %v100
  %v341 = vunpack.c.l.b16 %v101
  %v342 = vunpack.c.h.b16 %v101
  %v343 = vpack.c.b16 %v201, %v199
  %v344 = vpack.c.b16 %v202, %v200
  %v345 = vpack.c.b16 %v205, %v203
  %v346 = vpack.c.b16 %v206, %v204
  %v347 = vpack.c.b16 %v209, %v207
  %v348 = vpack.c.b16 %v210, %v208
  %v349 = vpack.c.b16 %v213, %v211
  %v350 = vpack.c.b16 %v214, %v212
  %v351 = vpack.c.b16 %v217, %v215
  %v352 = vpack.c.b16 %v218, %v216
  %v353 = vpack.c.b16 %v221, %v219
  %v354 = vpack.c.b16 %v222, %v220
  %v355 = vpack.c.b16 %v225, %v223
  %v356 = vpack.c.b16 %v226, %v224
  %v357 = vpack.c.b16 %v229, %v227
  %v358 = vpack.c.b16 %v230, %v228
  %v359 = vpack.c.b16 %v233, %v231
  %v360 = vpack.c.b16 %v234, %v232
  %v361 = vpack.c.b16 %v237, %v235
  %v362 = vpack.c.b16 %v238, %v236
  %v363 = vpack.c.b16 %v241, %v239
  %v364 = vpack.c.b16 %v242, %v240
  %v365 = vpack.c.b16 %v245, %v243
  %v366 = vpack.c.b16 %v246, %v244
  %v367 = vpack.c.b16 %v249, %v247
  %v368 = vpack.c.b16 %v250, %v248
  %v369 = vpack.c.b16 %v253, %v251
  %v370 = vpack.c.b16 %v254, %v252
  %v371 = vpack.c.b16 %v257, %v255
  %v372 = vpack.c.b16 %v258, %v256
  %v373 = vpack.c.b16 %v261, %v259
  %v374 = vpack.c.b16 %v262, %v260
  %v375 = vpack.c.b16 %v265, %v263
  %v376 = vpack.c.b16 %v266, %v264
  %v377 = vpack.c.b16 %v269, %v267
  %v378 = vpack.c.b16 %v270, %v268
  %v379 = vpack.c.b16 %v273, %v271
  %v380 = vpack.c.b16 %v274, %v272
  %v381 = vpack.c.b16 %v277, %v275
  %v382 = vpack.c.b16 %v278, %v276
  %v383 = vpack.c.b16 %v281, %v279
  %v384 = vpack.c.b16 %v282, %v280
  %v385 = vpack.c.b16 %v285, %v283
  %v386 = vpack.c.b16 %v286, %v284
  %v387 = vpack.c.b16 %v289, %v287
  %v388 = vpack.c.b16 %v290, %v288
  %v389 = vpack.c.b16 %v293, %v291
  %v390 = vpack.c.b16 %v294, %v292
  %v391 = vpack.c.b16 %v297, %v295
  %v392 = vpack.c.b16 %v298, %v296
  %v393 = vpack.c.b16 %v301, %v299
  %v394 = vpack.c.b16 %v302, %v300
  %v395 = vpack.c.b16 %v305, %v303
  %v396 = vpack.c.b16 %v306, %v304
  %v397 = vpack.c.b16 %v309, %v307
  %v398 = vpack.c.b16 %v310, %v308
  %v399 = vpack.c.b16 %v313, %v311
  %v400 = vpack.c.b16 %v314, %v312
  %v401 = vpack.c.b16 %v317, %v315
  %v402 = vpack.c.b16 %v318, %v316
  %v403 = vpack.c.b16 %v321, %v319
  %v404 = vpack.c.b16 %v322, %v320
  %v405 = vpack.c.b16 %v325, %v323
  %v406 = vpack.c.b16 %v326, %v324
  %v407 = vpack.c.b16 %v329, %v327
  %v408 = vpack.c.b16 %v330, %v328
  %v409 = vpack.c.b16 %v333, %v331
  %v410 = vpack.c.b16 %v334, %v332
  %v411 = vpack.c.b16 %v337, %v335
  %v412 = vpack.c.b16 %v338, %v336
  %v413 = vpack.c.b16 %v341, %v339
  %v414 = vpack.c.b16 %v342, %v340
  %vm487 = vcmask 523264
  %v489 = vsel %vm487, %v122, 0
  %491 = vmatprep.subr.bf16.mxu0 %v358
  %492 = vmatpush1.bf16.msra.mxu0 %v357
  %493 = vmatprep.subr.bf16.mxu0 %v356
  %494 = vmatpush1.bf16.msra.mxu0 %v355
  %495 = vmatprep.subr.bf16.mxu0 %v354
  %496 = vmatpush1.bf16.msra.mxu0 %v353
  %497 = vmatprep.subr.bf16.mxu0 %v352
  %498 = vmatpush1.bf16.msra.mxu0 %v351
  %499 = vmatprep.subr.bf16.mxu0 %v350
  %500 = vmatpush1.bf16.msra.mxu0 %v349
  %501 = vmatprep.subr.bf16.mxu0 %v348
  %502 = vmatpush1.bf16.msra.mxu0 %v347
  %503 = vmatprep.subr.bf16.mxu0 %v346
  %504 = vmatpush1.bf16.msra.mxu0 %v345
  %505 = vmatprep.subr.bf16.mxu0 %v344
  %506 = vmatpush1.bf16.msra.mxu0 %v343
  %507 = vmatprep.subr.bf16.mxu0 %v374
  %508 = vmatpush2.bf16.msra.mxu0 %v373
  %509 = vmatprep.subr.bf16.mxu0 %v372
  %510 = vmatpush2.bf16.msra.mxu0 %v371
  %511 = vmatprep.subr.bf16.mxu0 %v370
  %512 = vmatpush2.bf16.msra.mxu0 %v369
  %513 = vmatprep.subr.bf16.mxu0 %v368
  %514 = vmatpush2.bf16.msra.mxu0 %v367
  %515 = vmatprep.subr.bf16.mxu0 %v366
  %516 = vmatpush2.bf16.msra.mxu0 %v365
  %517 = vmatprep.subr.bf16.mxu0 %v364
  %518 = vmatpush2.bf16.msra.mxu0 %v363
  %519 = vmatprep.subr.bf16.mxu0 %v362
  %520 = vmatpush2.bf16.msra.mxu0 %v361
  %521 = vmatprep.subr.bf16.mxu0 %v360
  %522 = vmatpush2.bf16.msra.mxu0 %v359
  %523 = vmatprep.mubr.bf16.mxu0 %v119
  %524 = vmatmul.mubr.bf16.gmra.mxu0 %v118
  %v525 = vpop.f32.mrf.mxu0
  %v526 = vadd.f32 0.0, %v525
  %v527 = vpop.f32.mrf.mxu0
  %v528 = vadd.f32 0.0, %v527
  %v529 = vpop.f32.mrf.mxu0
  %v530 = vadd.f32 0.0, %v529
  %v531 = vpop.f32.mrf.mxu0
  %v532 = vadd.f32 0.0, %v531
  %533 = vdwg.mxu0
  %534 = vmatprep.subr.bf16.mxu0 %v390
  %535 = vmatpush1.bf16.msra.mxu0 %v389
  %536 = vmatprep.subr.bf16.mxu0 %v388
  %537 = vmatpush1.bf16.msra.mxu0 %v387
  %538 = vmatprep.subr.bf16.mxu0 %v386
  %539 = vmatpush1.bf16.msra.mxu0 %v385
  %540 = vmatprep.subr.bf16.mxu0 %v384
  %541 = vmatpush1.bf16.msra.mxu0 %v383
  %542 = vmatprep.subr.bf16.mxu0 %v382
  %543 = vmatpush1.bf16.msra.mxu0 %v381
  %544 = vmatprep.subr.bf16.mxu0 %v380
  %545 = vmatpush1.bf16.msra.mxu0 %v379
  %546 = vmatprep.subr.bf16.mxu0 %v378
  %547 = vmatpush1.bf16.msra.mxu0 %v377
  %548 = vmatprep.subr.bf16.mxu0 %v376
  %549 = vmatpush1.bf16.msra.mxu0 %v375
  %550 = vmatprep.subr.bf16.mxu0 %v406
  %551 = vmatpush2.bf16.msra.mxu0 %v405
  %552 = vmatprep.subr.bf16.mxu0 %v404
  %553 = vmatpush2.bf16.msra.mxu0 %v403
  %554 = vmatprep.subr.bf16.mxu0 %v402
  %555 = vmatpush2.bf16.msra.mxu0 %v401
  %556 = vmatprep.subr.bf16.mxu0 %v400
  %557 = vmatpush2.bf16.msra.mxu0 %v399
  %558 = vmatprep.subr.bf16.mxu0 %v398
  %559 = vmatpush2.bf16.msra.mxu0 %v397
  %560 = vmatprep.subr.bf16.mxu0 %v396
  %561 = vmatpush2.bf16.msra.mxu0 %v395
  %562 = vmatprep.subr.bf16.mxu0 %v394
  %563 = vmatpush2.bf16.msra.mxu0 %v393
  %564 = vmatprep.subr.bf16.mxu0 %v392
  %565 = vmatpush2.bf16.msra.mxu0 %v391
  %566 = vmatprep.mubr.bf16.mxu0 %v121
  %567 = vmatmul.mubr.bf16.gmra.mxu0 %v120
  %v568 = vpop.f32.mrf.mxu0
  %v569 = vadd.f32 %v526, %v568
  %v570 = vpop.f32.mrf.mxu0
  %v571 = vadd.f32 %v528, %v570
  %v572 = vpop.f32.mrf.mxu0
  %v573 = vadd.f32 %v530, %v572
  %v574 = vpop.f32.mrf.mxu0
  %v575 = vadd.f32 %v532, %v574
  %576 = vdwg.mxu0
  %577 = vmatprep.subr.bf16.mxu0 0
  %578 = vmatpush1.bf16.msra.mxu0 0
  %579 = vmatprep.subr.bf16.mxu0 0
  %580 = vmatpush1.bf16.msra.mxu0 0
  %581 = vmatprep.subr.bf16.mxu0 0
  %582 = vmatpush1.bf16.msra.mxu0 0
  %583 = vmatprep.subr.bf16.mxu0 0
  %584 = vmatpush1.bf16.msra.mxu0 0
  %585 = vmatprep.subr.bf16.mxu0 %v414
  %586 = vmatpush1.bf16.msra.mxu0 %v413
  %587 = vmatprep.subr.bf16.mxu0 %v412
  %588 = vmatpush1.bf16.msra.mxu0 %v411
  %589 = vmatprep.subr.bf16.mxu0 %v410
  %590 = vmatpush1.bf16.msra.mxu0 %v409
  %591 = vmatprep.subr.bf16.mxu0 %v408
  %592 = vmatpush1.bf16.msra.mxu0 %v407
  %593 = vmatprep.subr.bf16.mxu0 0
  %594 = vmatpush2.bf16.msra.mxu0 0
  %595 = vmatprep.subr.bf16.mxu0 0
  %596 = vmatpush2.bf16.msra.mxu0 0
  %597 = vmatprep.subr.bf16.mxu0 0
  %598 = vmatpush2.bf16.msra.mxu0 0
  %599 = vmatprep.subr.bf16.mxu0 0
  %600 = vmatpush2.bf16.msra.mxu0 0
  %601 = vmatprep.subr.bf16.mxu0 0
  %602 = vmatpush2.bf16.msra.mxu0 0
  %603 = vmatprep.subr.bf16.mxu0 0
  %604 = vmatpush2.bf16.msra.mxu0 0
  %605 = vmatprep.subr.bf16.mxu0 0
  %606 = vmatpush2.bf16.msra.mxu0 0
  %607 = vmatprep.subr.bf16.mxu0 0
  %608 = vmatpush2.bf16.msra.mxu0 0
  %609 = vmatprep.mubr.bf16.mxu0 0
  %610 = vmatmul.mubr.bf16.gmra.mxu0 %v489
  %v611 = vpop.f32.mrf.mxu0
  %v612 = vadd.f32 %v569, %v611
  %v613 = vpop.f32.mrf.mxu0
  %v614 = vadd.f32 %v571, %v613
  %v615 = vpop.f32.mrf.mxu0
  %v616 = vadd.f32 %v573, %v615
  %v617 = vpop.f32.mrf.mxu0
  %v618 = vadd.f32 %v575, %v617
  %619 = vdwg.mxu0
  %v620 = vld [vmem:[%s2] sm:$0x3]
  %v622 = vlaneseq
  %v623 = vshrl.u32 %v622, 7
  %v624 = vsub.s32 0, %v623
  %v625 = vrot.slane %v620, %v624
  %v626 = vlaneseq
  %v627 = vshrl.u32 %v626, 7
  %v628 = vsub.s32 1, %v627
  %v629 = vrot.slane %v620, %v628
  %v632 = vmul.f32 %v612, %v625
  %v633 = vmul.f32 %v614, %v629
  %v634 = vmul.f32 %v616, %v625
  %v635 = vmul.f32 %v618, %v629
  %v636 = vld [vmem:[%s3] sm:$0x3]
  %v638 = vlaneseq
  %v639 = vshrl.u32 %v638, 7
  %v640 = vsub.s32 0, %v639
  %v641 = vrot.slane %v636, %v640
  %v642 = vlaneseq
  %v643 = vshrl.u32 %v642, 7
  %v644 = vsub.s32 1, %v643
  %v645 = vrot.slane %v636, %v644
  %v648 = vadd.f32 %v632, %v641
  %v649 = vadd.f32 %v633, %v645
  %v650 = vadd.f32 %v634, %v641
  %v651 = vadd.f32 %v635, %v645
  %v652 = vpack.c.bf16 %v650, %v648
  %v653 = vpack.c.bf16 %v651, %v649
  %v656 = vunpack.c.l.b16 %v652
  %v657 = vunpack.c.l.b16 %v653
  %v658 = vunpack.c.h.b16 %v652
  %v659 = vunpack.c.h.b16 %v653
  %v660 = vpack.c.b16 %v657, %v656
  %v661 = vpack.c.b16 %v659, %v658
  %664 = vst [vmem:[%s4] sm:$0xff] %v660
  %665 = vst [vmem:[%s4 + $0x8] sm:$0xff] %v661
  // Predicated region
  $region18: #{unet_generator_forward.15} parent=0 // pred_check
    _
  $region19: #{unet_generator_forward.15} parent=0 // pred_check_branch
    %667 = sbr.rel (0) target = $region21
  $region20: #{unet_generator_forward.15} parent=0 // pred_region
    _
  $region21: #{unet_generator_forward.15} parent=0 // pred_fallthru
    _
  // Predicated region
  $region22: #{unet_generator_forward.15} parent=0 // pred_check
    _
  $region23: #{unet_generator_forward.15} parent=0 // pred_check_branch
    %669 = sbr.rel (0) target = $region25
  $region24: #{unet_generator_forward.15} parent=0 // pred_region
    _
  $region25: #{unet_generator_forward.15} parent=0 // pred_fallthru
    _

// kernel: unet_generator_forward.16
$region0: #{unet_generator_forward.16}
  #allocation0 [shape = 'u32[]', space=smem, size = 0x4, offset = 0x4, fixed_abs, tag = 'smem constant byte address 0x4 - core index']
  #allocation1 [shape = 'u32[144,128]{1,0:T(1,128)}', space=vmem, size = 0x12000, scoped, tag = 'internal scratch']
  %s0 = inlined_call_operand.vmem [shape: bf16[16,1152], index: 0, kind: input, shape index: {}]
  %s1 = inlined_call_operand.vmem [shape: bf16[1152,128], index: 1, kind: input, shape index: {}]
  %s2 = inlined_call_operand.vmem [shape: f32[1,128], index: 2, kind: input, shape index: {}]
  %s3 = inlined_call_operand.vmem [shape: f32[1,128], index: 3, kind: input, shape index: {}]
  %s4 = inlined_call_operand.vmem [shape: bf16[16,128], index: 4, kind: output, shape index: {}]
  %s5 = sld [smem:[#allocation0]]
  $region26: #{unet_generator_forward.16} parent=0
    _
  %s7 = ssub.s32 1, %s5
  %s8 = scalar_select 0, %s7, %s5
  // Predicated region
  $region2: #{unet_generator_forward.16} parent=0 // pred_check
    _
  $region3: #{unet_generator_forward.16} parent=0 // pred_check_branch
    %10 = sbr.rel (0) target = $region5
  $region4: #{unet_generator_forward.16} parent=0 // pred_region
    _
  $region5: #{unet_generator_forward.16} parent=0 // pred_fallthru
    _
  // Predicated region
  $region6: #{unet_generator_forward.16} parent=0 // pred_check
    _
  $region7: #{unet_generator_forward.16} parent=0 // pred_check_branch
    %12 = sbr.rel (0) target = $region9
  $region8: #{unet_generator_forward.16} parent=0 // pred_region
    _
  $region9: #{unet_generator_forward.16} parent=0 // pred_fallthru
    _
  // Predicated region
  $region10: #{unet_generator_forward.16} parent=0 // pred_check
    _
  $region11: #{unet_generator_forward.16} parent=0 // pred_check_branch
    %14 = sbr.rel (0) target = $region13
  $region12: #{unet_generator_forward.16} parent=0 // pred_region
    _
  $region13: #{unet_generator_forward.16} parent=0 // pred_fallthru
    _
  // Predicated region
  $region14: #{unet_generator_forward.16} parent=0 // pred_check
    _
  $region15: #{unet_generator_forward.16} parent=0 // pred_check_branch
    %16 = sbr.rel (0) target = $region17
  $region16: #{unet_generator_forward.16} parent=0 // pred_region
    _
  $region17: #{unet_generator_forward.16} parent=0 // pred_fallthru
    _
  %v18 = vld [vmem:[%s0] sm:$0xff]
  %v19 = vld [vmem:[%s0 + $0x8] sm:$0xff]
  %v20 = vld [vmem:[%s0 + $0x10] sm:$0xff]
  %v21 = vld [vmem:[%s0 + $0x18] sm:$0xff]
  %v22 = vld [vmem:[%s0 + $0x20] sm:$0xf]
  %v23 = vld [vmem:[%s0 + $0x24] sm:$0xff]
  %v24 = vld [vmem:[%s0 + $0x2c] sm:$0xff]
  %v25 = vld [vmem:[%s0 + $0x34] sm:$0xff]
  %v26 = vld [vmem:[%s0 + $0x3c] sm:$0xff]
  %v27 = vld [vmem:[%s0 + $0x44] sm:$0xf]
  %v28 = vmax.bf16 %v18, 0
  %v29 = vmax.bf16 %v19, 0
  %v30 = vmax.bf16 %v20, 0
  %v31 = vmax.bf16 %v21, 0
  %v32 = vmax.bf16 %v22, 0
  %v33 = vmax.bf16 %v23, 0
  %v34 = vmax.bf16 %v24, 0
  %v35 = vmax.bf16 %v25, 0
  %v36 = vmax.bf16 %v26, 0
  %v37 = vmax.bf16 %v27, 0
  %v38 = vld [vmem:[%s1] sm:$0xf]
  %v39 = vld [vmem:[%s1 + $0x4] sm:$0xf]
  %v40 = vld [vmem:[%s1 + $0x8] sm:$0xf]
  %v41 = vld [vmem:[%s1 + $0xc] sm:$0xf]
  %v42 = vld [vmem:[%s1 + $0x10] sm:$0xf]
  %v43 = vld [vmem:[%s1 + $0x14] sm:$0xf]
  %v44 = vld [vmem:[%s1 + $0x18] sm:$0xf]
  %v45 = vld [vmem:[%s1 + $0x1c] sm:$0xf]
  %v46 = vld [vmem:[%s1 + $0x20] sm:$0xf]
  %v47 = vld [vmem:[%s1 + $0x24] sm:$0xf]
  %v48 = vld [vmem:[%s1 + $0x28] sm:$0xf]
  %v49 = vld [vmem:[%s1 + $0x2c] sm:$0xf]
  %v50 = vld [vmem:[%s1 + $0x30] sm:$0xf]
  %v51 = vld [vmem:[%s1 + $0x34] sm:$0xf]
  %v52 = vld [vmem:[%s1 + $0x38] sm:$0xf]
  %v53 = vld [vmem:[%s1 + $0x3c] sm:$0xf]
  %v54 = vld [vmem:[%s1 + $0x40] sm:$0xf]
  %v55 = vld [vmem:[%s1 + $0x44] sm:$0xf]
  %v56 = vld [vmem:[%s1 + $0x48] sm:$0xf]
  %v57 = vld [vmem:[%s1 + $0x4c] sm:$0xf]
  %v58 = vld [vmem:[%s1 + $0x50] sm:$0xf]
  %v59 = vld [vmem:[%s1 + $0x54] sm:$0xf]
  %v60 = vld [vmem:[%s1 + $0x58] sm:$0xf]
  %v61 = vld [vmem:[%s1 + $0x5c] sm:$0xf]
  %v62 = vld [vmem:[%s1 + $0x60] sm:$0xf]
  %v63 = vld [vmem:[%s1 + $0x64] sm:$0xf]
  %v64 = vld [vmem:[%s1 + $0x68] sm:$0xf]
  %v65 = vld [vmem:[%s1 + $0x6c] sm:$0xf]
  %v66 = vld [vmem:[%s1 + $0x70] sm:$0xf]
  %v67 = vld [vmem:[%s1 + $0x74] sm:$0xf]
  %v68 = vld [vmem:[%s1 + $0x78] sm:$0xf]
  %v69 = vld [vmem:[%s1 + $0x7c] sm:$0xf]
  %v70 = vld [vmem:[%s1 + $0x80] sm:$0xf]
  %v71 = vld [vmem:[%s1 + $0x84] sm:$0xf]
  %v72 = vld [vmem:[%s1 + $0x88] sm:$0xf]
  %v73 = vld [vmem:[%s1 + $0x8c] sm:$0xf]
  %v74 = vld [vmem:[%s1 + $0x90] sm:$0xf]
  %v75 = vld [vmem:[%s1 + $0x94] sm:$0xf]
  %v76 = vld [vmem:[%s1 + $0x98] sm:$0xf]
  %v77 = vld [vmem:[%s1 + $0x9c] sm:$0xf]
  %v78 = vld [vmem:[%s1 + $0xa0] sm:$0xf]
  %v79 = vld [vmem:[%s1 + $0xa4] sm:$0xf]
  %v80 = vld [vmem:[%s1 + $0xa8] sm:$0xf]
  %v81 = vld [vmem:[%s1 + $0xac] sm:$0xf]
  %v82 = vld [vmem:[%s1 + $0xb0] sm:$0xf]
  %v83 = vld [vmem:[%s1 + $0xb4] sm:$0xf]
  %v84 = vld [vmem:[%s1 + $0xb8] sm:$0xf]
  %v85 = vld [vmem:[%s1 + $0xbc] sm:$0xf]
  %v86 = vld [vmem:[%s1 + $0xc0] sm:$0xf]
  %v87 = vld [vmem:[%s1 + $0xc4] sm:$0xf]
  %v88 = vld [vmem:[%s1 + $0xc8] sm:$0xf]
  %v89 = vld [vmem:[%s1 + $0xcc] sm:$0xf]
  %v90 = vld [vmem:[%s1 + $0xd0] sm:$0xf]
  %v91 = vld [vmem:[%s1 + $0xd4] sm:$0xf]
  %v92 = vld [vmem:[%s1 + $0xd8] sm:$0xf]
  %v93 = vld [vmem:[%s1 + $0xdc] sm:$0xf]
  %v94 = vld [vmem:[%s1 + $0xe0] sm:$0xf]
  %v95 = vld [vmem:[%s1 + $0xe4] sm:$0xf]
  %v96 = vld [vmem:[%s1 + $0xe8] sm:$0xf]
  %v97 = vld [vmem:[%s1 + $0xec] sm:$0xf]
  %v98 = vld [vmem:[%s1 + $0xf0] sm:$0xf]
  %v99 = vld [vmem:[%s1 + $0xf4] sm:$0xf]
  %v100 = vld [vmem:[%s1 + $0xf8] sm:$0xf]
  %v101 = vld [vmem:[%s1 + $0xfc] sm:$0xf]
  %v102 = vld [vmem:[%s1 + $0x100] sm:$0xf]
  %v103 = vld [vmem:[%s1 + $0x104] sm:$0xf]
  %v104 = vld [vmem:[%s1 + $0x108] sm:$0xf]
  %v105 = vld [vmem:[%s1 + $0x10c] sm:$0xf]
  %v106 = vld [vmem:[%s1 + $0x110] sm:$0xf]
  %v107 = vld [vmem:[%s1 + $0x114] sm:$0xf]
  %v108 = vld [vmem:[%s1 + $0x118] sm:$0xf]
  %v109 = vld [vmem:[%s1 + $0x11c] sm:$0xf]
  %v110 = vld [vmem:[%s1 + $0x120] sm:$0xf]
  %v111 = vld [vmem:[%s1 + $0x124] sm:$0xf]
  %v112 = vld [vmem:[%s1 + $0x128] sm:$0xf]
  %v113 = vld [vmem:[%s1 + $0x12c] sm:$0xf]
  %v114 = vld [vmem:[%s1 + $0x130] sm:$0xf]
  %v115 = vld [vmem:[%s1 + $0x134] sm:$0xf]
  %v116 = vld [vmem:[%s1 + $0x138] sm:$0xf]
  %v117 = vld [vmem:[%s1 + $0x13c] sm:$0xf]
  %v118 = vld [vmem:[%s1 + $0x140] sm:$0xf]
  %v119 = vld [vmem:[%s1 + $0x144] sm:$0xf]
  %v120 = vld [vmem:[%s1 + $0x148] sm:$0xf]
  %v121 = vld [vmem:[%s1 + $0x14c] sm:$0xf]
  %v122 = vld [vmem:[%s1 + $0x150] sm:$0xf]
  %v123 = vld [vmem:[%s1 + $0x154] sm:$0xf]
  %v124 = vld [vmem:[%s1 + $0x158] sm:$0xf]
  %v125 = vld [vmem:[%s1 + $0x15c] sm:$0xf]
  %v126 = vld [vmem:[%s1 + $0x160] sm:$0xf]
  %v127 = vld [vmem:[%s1 + $0x164] sm:$0xf]
  %v128 = vld [vmem:[%s1 + $0x168] sm:$0xf]
  %v129 = vld [vmem:[%s1 + $0x16c] sm:$0xf]
  %v130 = vld [vmem:[%s1 + $0x170] sm:$0xf]
  %v131 = vld [vmem:[%s1 + $0x174] sm:$0xf]
  %v132 = vld [vmem:[%s1 + $0x178] sm:$0xf]
  %v133 = vld [vmem:[%s1 + $0x17c] sm:$0xf]
  %v134 = vld [vmem:[%s1 + $0x180] sm:$0xf]
  %v135 = vld [vmem:[%s1 + $0x184] sm:$0xf]
  %v136 = vld [vmem:[%s1 + $0x188] sm:$0xf]
  %v137 = vld [vmem:[%s1 + $0x18c] sm:$0xf]
  %v138 = vld [vmem:[%s1 + $0x190] sm:$0xf]
  %v139 = vld [vmem:[%s1 + $0x194] sm:$0xf]
  %v140 = vld [vmem:[%s1 + $0x198] sm:$0xf]
  %v141 = vld [vmem:[%s1 + $0x19c] sm:$0xf]
  %v142 = vld [vmem:[%s1 + $0x1a0] sm:$0xf]
  %v143 = vld [vmem:[%s1 + $0x1a4] sm:$0xf]
  %v144 = vld [vmem:[%s1 + $0x1a8] sm:$0xf]
  %v145 = vld [vmem:[%s1 + $0x1ac] sm:$0xf]
  %v146 = vld [vmem:[%s1 + $0x1b0] sm:$0xf]
  %v147 = vld [vmem:[%s1 + $0x1b4] sm:$0xf]
  %v148 = vld [vmem:[%s1 + $0x1b8] sm:$0xf]
  %v149 = vld [vmem:[%s1 + $0x1bc] sm:$0xf]
  %v150 = vld [vmem:[%s1 + $0x1c0] sm:$0xf]
  %v151 = vld [vmem:[%s1 + $0x1c4] sm:$0xf]
  %v152 = vld [vmem:[%s1 + $0x1c8] sm:$0xf]
  %v153 = vld [vmem:[%s1 + $0x1cc] sm:$0xf]
  %v154 = vld [vmem:[%s1 + $0x1d0] sm:$0xf]
  %v155 = vld [vmem:[%s1 + $0x1d4] sm:$0xf]
  %v156 = vld [vmem:[%s1 + $0x1d8] sm:$0xf]
  %v157 = vld [vmem:[%s1 + $0x1dc] sm:$0xf]
  %v158 = vld [vmem:[%s1 + $0x1e0] sm:$0xf]
  %v159 = vld [vmem:[%s1 + $0x1e4] sm:$0xf]
  %v160 = vld [vmem:[%s1 + $0x1e8] sm:$0xf]
  %v161 = vld [vmem:[%s1 + $0x1ec] sm:$0xf]
  %v162 = vld [vmem:[%s1 + $0x1f0] sm:$0xf]
  %v163 = vld [vmem:[%s1 + $0x1f4] sm:$0xf]
  %v164 = vld [vmem:[%s1 + $0x1f8] sm:$0xf]
  %v165 = vld [vmem:[%s1 + $0x1fc] sm:$0xf]
  %v166 = vld [vmem:[%s1 + $0x200] sm:$0xf]
  %v167 = vld [vmem:[%s1 + $0x204] sm:$0xf]
  %v168 = vld [vmem:[%s1 + $0x208] sm:$0xf]
  %v169 = vld [vmem:[%s1 + $0x20c] sm:$0xf]
  %v170 = vld [vmem:[%s1 + $0x210] sm:$0xf]
  %v171 = vld [vmem:[%s1 + $0x214] sm:$0xf]
  %v172 = vld [vmem:[%s1 + $0x218] sm:$0xf]
  %v173 = vld [vmem:[%s1 + $0x21c] sm:$0xf]
  %v174 = vld [vmem:[%s1 + $0x220] sm:$0xf]
  %v175 = vld [vmem:[%s1 + $0x224] sm:$0xf]
  %v176 = vld [vmem:[%s1 + $0x228] sm:$0xf]
  %v177 = vld [vmem:[%s1 + $0x22c] sm:$0xf]
  %v178 = vld [vmem:[%s1 + $0x230] sm:$0xf]
  %v179 = vld [vmem:[%s1 + $0x234] sm:$0xf]
  %v180 = vld [vmem:[%s1 + $0x238] sm:$0xf]
  %v181 = vld [vmem:[%s1 + $0x23c] sm:$0xf]
  %v192 = vunpack.c.l.b16 %v28
  %v193 = vunpack.c.h.b16 %v28
  %v194 = vunpack.c.l.b16 %v29
  %v195 = vunpack.c.h.b16 %v29
  %v196 = vunpack.c.l.b16 %v30
  %v197 = vunpack.c.h.b16 %v30
  %v198 = vunpack.c.l.b16 %v31
  %v199 = vunpack.c.h.b16 %v31
  %v200 = vunpack.c.l.b16 %v32
  %v201 = vunpack.c.l.b16 %v33
  %v202 = vunpack.c.h.b16 %v33
  %v203 = vunpack.c.l.b16 %v34
  %v204 = vunpack.c.h.b16 %v34
  %v205 = vunpack.c.l.b16 %v35
  %v206 = vunpack.c.h.b16 %v35
  %v207 = vunpack.c.l.b16 %v36
  %v208 = vunpack.c.h.b16 %v36
  %v209 = vunpack.c.l.b16 %v37
  %v210 = vpack.c.b16 %v201, %v192
  %v211 = vpack.c.b16 %v202, %v193
  %v212 = vpack.c.b16 %v203, %v194
  %v213 = vpack.c.b16 %v204, %v195
  %v214 = vpack.c.b16 %v205, %v196
  %v215 = vpack.c.b16 %v206, %v197
  %v216 = vpack.c.b16 %v207, %v198
  %v217 = vpack.c.b16 %v208, %v199
  %v218 = vpack.c.b16 %v209, %v200
  %v372 = vunpack.c.l.b16 %v38
  %v373 = vunpack.c.l.b16 %v39
  %v374 = vunpack.c.l.b16 %v40
  %v375 = vunpack.c.l.b16 %v41
  %v376 = vunpack.c.l.b16 %v42
  %v377 = vunpack.c.l.b16 %v43
  %v378 = vunpack.c.l.b16 %v44
  %v379 = vunpack.c.l.b16 %v45
  %v380 = vunpack.c.l.b16 %v46
  %v381 = vunpack.c.l.b16 %v47
  %v382 = vunpack.c.l.b16 %v48
  %v383 = vunpack.c.l.b16 %v49
  %v384 = vunpack.c.l.b16 %v50
  %v385 = vunpack.c.l.b16 %v51
  %v386 = vunpack.c.l.b16 %v52
  %v387 = vunpack.c.l.b16 %v53
  %v388 = vunpack.c.l.b16 %v54
  %v389 = vunpack.c.l.b16 %v55
  %v390 = vunpack.c.l.b16 %v56
  %v391 = vunpack.c.l.b16 %v57
  %v392 = vunpack.c.l.b16 %v58
  %v393 = vunpack.c.l.b16 %v59
  %v394 = vunpack.c.l.b16 %v60
  %v395 = vunpack.c.l.b16 %v61
  %v396 = vunpack.c.l.b16 %v62
  %v397 = vunpack.c.l.b16 %v63
  %v398 = vunpack.c.l.b16 %v64
  %v399 = vunpack.c.l.b16 %v65
  %v400 = vunpack.c.l.b16 %v66
  %v401 = vunpack.c.l.b16 %v67
  %v402 = vunpack.c.l.b16 %v68
  %v403 = vunpack.c.l.b16 %v69
  %v404 = vunpack.c.l.b16 %v70
  %v405 = vunpack.c.l.b16 %v71
  %v406 = vunpack.c.l.b16 %v72
  %v407 = vunpack.c.l.b16 %v73
  %v408 = vunpack.c.l.b16 %v74
  %v409 = vunpack.c.l.b16 %v75
  %v410 = vunpack.c.l.b16 %v76
  %v411 = vunpack.c.l.b16 %v77
  %v412 = vunpack.c.l.b16 %v78
  %v413 = vunpack.c.l.b16 %v79
  %v414 = vunpack.c.l.b16 %v80
  %v415 = vunpack.c.l.b16 %v81
  %v416 = vunpack.c.l.b16 %v82
  %v417 = vunpack.c.l.b16 %v83
  %v418 = vunpack.c.l.b16 %v84
  %v419 = vunpack.c.l.b16 %v85
  %v420 = vunpack.c.l.b16 %v86
  %v421 = vunpack.c.l.b16 %v87
  %v422 = vunpack.c.l.b16 %v88
  %v423 = vunpack.c.l.b16 %v89
  %v424 = vunpack.c.l.b16 %v90
  %v425 = vunpack.c.l.b16 %v91
  %v426 = vunpack.c.l.b16 %v92
  %v427 = vunpack.c.l.b16 %v93
  %v428 = vunpack.c.l.b16 %v94
  %v429 = vunpack.c.l.b16 %v95
  %v430 = vunpack.c.l.b16 %v96
  %v431 = vunpack.c.l.b16 %v97
  %v432 = vunpack.c.l.b16 %v98
  %v433 = vunpack.c.l.b16 %v99
  %v434 = vunpack.c.l.b16 %v100
  %v435 = vunpack.c.l.b16 %v101
  %v436 = vunpack.c.l.b16 %v102
  %v437 = vunpack.c.l.b16 %v103
  %v438 = vunpack.c.l.b16 %v104
  %v439 = vunpack.c.l.b16 %v105
  %v440 = vunpack.c.l.b16 %v106
  %v441 = vunpack.c.l.b16 %v107
  %v442 = vunpack.c.l.b16 %v108
  %v443 = vunpack.c.l.b16 %v109
  %v444 = vunpack.c.l.b16 %v110
  %v445 = vunpack.c.l.b16 %v111
  %v446 = vunpack.c.l.b16 %v112
  %v447 = vunpack.c.l.b16 %v113
  %v448 = vunpack.c.l.b16 %v114
  %v449 = vunpack.c.l.b16 %v115
  %v450 = vunpack.c.l.b16 %v116
  %v451 = vunpack.c.l.b16 %v117
  %v452 = vunpack.c.l.b16 %v118
  %v453 = vunpack.c.l.b16 %v119
  %v454 = vunpack.c.l.b16 %v120
  %v455 = vunpack.c.l.b16 %v121
  %v456 = vunpack.c.l.b16 %v122
  %v457 = vunpack.c.l.b16 %v123
  %v458 = vunpack.c.l.b16 %v124
  %v459 = vunpack.c.l.b16 %v125
  %v460 = vunpack.c.l.b16 %v126
  %v461 = vunpack.c.l.b16 %v127
  %v462 = vunpack.c.l.b16 %v128
  %v463 = vunpack.c.l.b16 %v129
  %v464 = vunpack.c.l.b16 %v130
  %v465 = vunpack.c.l.b16 %v131
  %v466 = vunpack.c.l.b16 %v132
  %v467 = vunpack.c.l.b16 %v133
  %v468 = vunpack.c.l.b16 %v134
  %v469 = vunpack.c.l.b16 %v135
  %v470 = vunpack.c.l.b16 %v136
  %v471 = vunpack.c.l.b16 %v137
  %v472 = vunpack.c.l.b16 %v138
  %v473 = vunpack.c.l.b16 %v139
  %v474 = vunpack.c.l.b16 %v140
  %v475 = vunpack.c.l.b16 %v141
  %v476 = vunpack.c.l.b16 %v142
  %v477 = vunpack.c.l.b16 %v143
  %v478 = vunpack.c.l.b16 %v144
  %v479 = vunpack.c.l.b16 %v145
  %v480 = vunpack.c.l.b16 %v146
  %v481 = vunpack.c.l.b16 %v147
  %v482 = vunpack.c.l.b16 %v148
  %v483 = vunpack.c.l.b16 %v149
  %v484 = vunpack.c.l.b16 %v150
  %v485 = vunpack.c.l.b16 %v151
  %v486 = vunpack.c.l.b16 %v152
  %v487 = vunpack.c.l.b16 %v153
  %v488 = vunpack.c.l.b16 %v154
  %v489 = vunpack.c.l.b16 %v155
  %v490 = vunpack.c.l.b16 %v156
  %v491 = vunpack.c.l.b16 %v157
  %v492 = vunpack.c.l.b16 %v158
  %v493 = vunpack.c.l.b16 %v159
  %v494 = vunpack.c.l.b16 %v160
  %v495 = vunpack.c.l.b16 %v161
  %v496 = vunpack.c.l.b16 %v162
  %v497 = vunpack.c.l.b16 %v163
  %v498 = vunpack.c.l.b16 %v164
  %v499 = vunpack.c.l.b16 %v165
  %v500 = vunpack.c.l.b16 %v166
  %v501 = vunpack.c.l.b16 %v167
  %v502 = vunpack.c.l.b16 %v168
  %v503 = vunpack.c.l.b16 %v169
  %v504 = vunpack.c.l.b16 %v170
  %v505 = vunpack.c.l.b16 %v171
  %v506 = vunpack.c.l.b16 %v172
  %v507 = vunpack.c.l.b16 %v173
  %v508 = vunpack.c.l.b16 %v174
  %v509 = vunpack.c.l.b16 %v175
  %v510 = vunpack.c.l.b16 %v176
  %v511 = vunpack.c.l.b16 %v177
  %v512 = vunpack.c.l.b16 %v178
  %v513 = vunpack.c.l.b16 %v179
  %v514 = vunpack.c.l.b16 %v180
  %v515 = vunpack.c.l.b16 %v181
  %v516 = vpack.c.b16 %v373, %v372
  %v517 = vpack.c.b16 %v375, %v374
  %v518 = vpack.c.b16 %v377, %v376
  %v519 = vpack.c.b16 %v379, %v378
  %v520 = vpack.c.b16 %v381, %v380
  %v521 = vpack.c.b16 %v383, %v382
  %v522 = vpack.c.b16 %v385, %v384
  %v523 = vpack.c.b16 %v387, %v386
  %v524 = vpack.c.b16 %v389, %v388
  %v525 = vpack.c.b16 %v391, %v390
  %v526 = vpack.c.b16 %v393, %v392
  %v527 = vpack.c.b16 %v395, %v394
  %v528 = vpack.c.b16 %v397, %v396
  %v529 = vpack.c.b16 %v399, %v398
  %v530 = vpack.c.b16 %v401, %v400
  %v531 = vpack.c.b16 %v403, %v402
  %v532 = vpack.c.b16 %v405, %v404
  %v533 = vpack.c.b16 %v407, %v406
  %v534 = vpack.c.b16 %v409, %v408
  %v535 = vpack.c.b16 %v411, %v410
  %v536 = vpack.c.b16 %v413, %v412
  %v537 = vpack.c.b16 %v415, %v414
  %v538 = vpack.c.b16 %v417, %v416
  %v539 = vpack.c.b16 %v419, %v418
  %v540 = vpack.c.b16 %v421, %v420
  %v541 = vpack.c.b16 %v423, %v422
  %v542 = vpack.c.b16 %v425, %v424
  %v543 = vpack.c.b16 %v427, %v426
  %v544 = vpack.c.b16 %v429, %v428
  %v545 = vpack.c.b16 %v431, %v430
  %v546 = vpack.c.b16 %v433, %v432
  %v547 = vpack.c.b16 %v435, %v434
  %v548 = vpack.c.b16 %v437, %v436
  %v549 = vpack.c.b16 %v439, %v438
  %v550 = vpack.c.b16 %v441, %v440
  %v551 = vpack.c.b16 %v443, %v442
  %v552 = vpack.c.b16 %v445, %v444
  %v553 = vpack.c.b16 %v447, %v446
  %v554 = vpack.c.b16 %v449, %v448
  %v555 = vpack.c.b16 %v451, %v450
  %v556 = vpack.c.b16 %v453, %v452
  %v557 = vpack.c.b16 %v455, %v454
  %v558 = vpack.c.b16 %v457, %v456
  %v559 = vpack.c.b16 %v459, %v458
  %v560 = vpack.c.b16 %v461, %v460
  %v561 = vpack.c.b16 %v463, %v462
  %v562 = vpack.c.b16 %v465, %v464
  %v563 = vpack.c.b16 %v467, %v466
  %v564 = vpack.c.b16 %v469, %v468
  %v565 = vpack.c.b16 %v471, %v470
  %v566 = vpack.c.b16 %v473, %v472
  %v567 = vpack.c.b16 %v475, %v474
  %v568 = vpack.c.b16 %v477, %v476
  %v569 = vpack.c.b16 %v479, %v478
  %v570 = vpack.c.b16 %v481, %v480
  %v571 = vpack.c.b16 %v483, %v482
  %v572 = vpack.c.b16 %v485, %v484
  %v573 = vpack.c.b16 %v487, %v486
  %v574 = vpack.c.b16 %v489, %v488
  %v575 = vpack.c.b16 %v491, %v490
  %v576 = vpack.c.b16 %v493, %v492
  %v577 = vpack.c.b16 %v495, %v494
  %v578 = vpack.c.b16 %v497, %v496
  %v579 = vpack.c.b16 %v499, %v498
  %v580 = vpack.c.b16 %v501, %v500
  %v581 = vpack.c.b16 %v503, %v502
  %v582 = vpack.c.b16 %v505, %v504
  %v583 = vpack.c.b16 %v507, %v506
  %v584 = vpack.c.b16 %v509, %v508
  %v585 = vpack.c.b16 %v511, %v510
  %v586 = vpack.c.b16 %v513, %v512
  %v587 = vpack.c.b16 %v515, %v514
  %660 = vmatprep.subr.bf16.mxu0 0
  %661 = vmatpush1.bf16.msra.mxu0 %v523
  %662 = vmatprep.subr.bf16.mxu0 0
  %663 = vmatpush1.bf16.msra.mxu0 %v522
  %664 = vmatprep.subr.bf16.mxu0 0
  %665 = vmatpush1.bf16.msra.mxu0 %v521
  %666 = vmatprep.subr.bf16.mxu0 0
  %667 = vmatpush1.bf16.msra.mxu0 %v520
  %668 = vmatprep.subr.bf16.mxu0 0
  %669 = vmatpush1.bf16.msra.mxu0 %v519
  %670 = vmatprep.subr.bf16.mxu0 0
  %671 = vmatpush1.bf16.msra.mxu0 %v518
  %672 = vmatprep.subr.bf16.mxu0 0
  %673 = vmatpush1.bf16.msra.mxu0 %v517
  %674 = vmatprep.subr.bf16.mxu0 0
  %675 = vmatpush1.bf16.msra.mxu0 %v516
  %676 = vmatprep.subr.bf16.mxu0 0
  %677 = vmatpush2.bf16.msra.mxu0 %v531
  %678 = vmatprep.subr.bf16.mxu0 0
  %679 = vmatpush2.bf16.msra.mxu0 %v530
  %680 = vmatprep.subr.bf16.mxu0 0
  %681 = vmatpush2.bf16.msra.mxu0 %v529
  %682 = vmatprep.subr.bf16.mxu0 0
  %683 = vmatpush2.bf16.msra.mxu0 %v528
  %684 = vmatprep.subr.bf16.mxu0 0
  %685 = vmatpush2.bf16.msra.mxu0 %v527
  %686 = vmatprep.subr.bf16.mxu0 0
  %687 = vmatpush2.bf16.msra.mxu0 %v526
  %688 = vmatprep.subr.bf16.mxu0 0
  %689 = vmatpush2.bf16.msra.mxu0 %v525
  %690 = vmatprep.subr.bf16.mxu0 0
  %691 = vmatpush2.bf16.msra.mxu0 %v524
  %692 = vmatprep.mubr.bf16.mxu0 %v211
  %693 = vmatmul.mubr.bf16.gmra.mxu0 %v210
  %v694 = vpop.f32.mrf.mxu0
  %v695 = vadd.f32 0.0, %v694
  %v696 = vpop.f32.mrf.mxu0
  %v697 = vpop.f32.mrf.mxu0
  %v698 = vadd.f32 0.0, %v697
  %v699 = vpop.f32.mrf.mxu0
  %700 = vdwg.mxu0
  %701 = vmatprep.subr.bf16.mxu0 0
  %702 = vmatpush1.bf16.msra.mxu0 %v539
  %703 = vmatprep.subr.bf16.mxu0 0
  %704 = vmatpush1.bf16.msra.mxu0 %v538
  %705 = vmatprep.subr.bf16.mxu0 0
  %706 = vmatpush1.bf16.msra.mxu0 %v537
  %707 = vmatprep.subr.bf16.mxu0 0
  %708 = vmatpush1.bf16.msra.mxu0 %v536
  %709 = vmatprep.subr.bf16.mxu0 0
  %710 = vmatpush1.bf16.msra.mxu0 %v535
  %711 = vmatprep.subr.bf16.mxu0 0
  %712 = vmatpush1.bf16.msra.mxu0 %v534
  %713 = vmatprep.subr.bf16.mxu0 0
  %714 = vmatpush1.bf16.msra.mxu0 %v533
  %715 = vmatprep.subr.bf16.mxu0 0
  %716 = vmatpush1.bf16.msra.mxu0 %v532
  %717 = vmatprep.subr.bf16.mxu0 0
  %718 = vmatpush2.bf16.msra.mxu0 %v547
  %719 = vmatprep.subr.bf16.mxu0 0
  %720 = vmatpush2.bf16.msra.mxu0 %v546
  %721 = vmatprep.subr.bf16.mxu0 0
  %722 = vmatpush2.bf16.msra.mxu0 %v545
  %723 = vmatprep.subr.bf16.mxu0 0
  %724 = vmatpush2.bf16.msra.mxu0 %v544
  %725 = vmatprep.subr.bf16.mxu0 0
  %726 = vmatpush2.bf16.msra.mxu0 %v543
  %727 = vmatprep.subr.bf16.mxu0 0
  %728 = vmatpush2.bf16.msra.mxu0 %v542
  %729 = vmatprep.subr.bf16.mxu0 0
  %730 = vmatpush2.bf16.msra.mxu0 %v541
  %731 = vmatprep.subr.bf16.mxu0 0
  %732 = vmatpush2.bf16.msra.mxu0 %v540
  %733 = vmatprep.mubr.bf16.mxu0 %v213
  %734 = vmatmul.mubr.bf16.gmra.mxu0 %v212
  %v735 = vpop.f32.mrf.mxu0
  %v736 = vadd.f32 %v695, %v735
  %v737 = vpop.f32.mrf.mxu0
  %v738 = vpop.f32.mrf.mxu0
  %v739 = vadd.f32 %v698, %v738
  %v740 = vpop.f32.mrf.mxu0
  %741 = vdwg.mxu0
  %742 = vmatprep.subr.bf16.mxu0 0
  %743 = vmatpush1.bf16.msra.mxu0 %v555
  %744 = vmatprep.subr.bf16.mxu0 0
  %745 = vmatpush1.bf16.msra.mxu0 %v554
  %746 = vmatprep.subr.bf16.mxu0 0
  %747 = vmatpush1.bf16.msra.mxu0 %v553
  %748 = vmatprep.subr.bf16.mxu0 0
  %749 = vmatpush1.bf16.msra.mxu0 %v552
  %750 = vmatprep.subr.bf16.mxu0 0
  %751 = vmatpush1.bf16.msra.mxu0 %v551
  %752 = vmatprep.subr.bf16.mxu0 0
  %753 = vmatpush1.bf16.msra.mxu0 %v550
  %754 = vmatprep.subr.bf16.mxu0 0
  %755 = vmatpush1.bf16.msra.mxu0 %v549
  %756 = vmatprep.subr.bf16.mxu0 0
  %757 = vmatpush1.bf16.msra.mxu0 %v548
  %758 = vmatprep.subr.bf16.mxu0 0
  %759 = vmatpush2.bf16.msra.mxu0 %v563
  %760 = vmatprep.subr.bf16.mxu0 0
  %761 = vmatpush2.bf16.msra.mxu0 %v562
  %762 = vmatprep.subr.bf16.mxu0 0
  %763 = vmatpush2.bf16.msra.mxu0 %v561
  %764 = vmatprep.subr.bf16.mxu0 0
  %765 = vmatpush2.bf16.msra.mxu0 %v560
  %766 = vmatprep.subr.bf16.mxu0 0
  %767 = vmatpush2.bf16.msra.mxu0 %v559
  %768 = vmatprep.subr.bf16.mxu0 0
  %769 = vmatpush2.bf16.msra.mxu0 %v558
  %770 = vmatprep.subr.bf16.mxu0 0
  %771 = vmatpush2.bf16.msra.mxu0 %v557
  %772 = vmatprep.subr.bf16.mxu0 0
  %773 = vmatpush2.bf16.msra.mxu0 %v556
  %774 = vmatprep.mubr.bf16.mxu0 %v215
  %775 = vmatmul.mubr.bf16.gmra.mxu0 %v214
  %v776 = vpop.f32.mrf.mxu0
  %v777 = vadd.f32 %v736, %v776
  %v778 = vpop.f32.mrf.mxu0
  %v779 = vpop.f32.mrf.mxu0
  %v780 = vadd.f32 %v739, %v779
  %v781 = vpop.f32.mrf.mxu0
  %782 = vdwg.mxu0
  %783 = vmatprep.subr.bf16.mxu0 0
  %784 = vmatpush1.bf16.msra.mxu0 %v571
  %785 = vmatprep.subr.bf16.mxu0 0
  %786 = vmatpush1.bf16.msra.mxu0 %v570
  %787 = vmatprep.subr.bf16.mxu0 0
  %788 = vmatpush1.bf16.msra.mxu0 %v569
  %789 = vmatprep.subr.bf16.mxu0 0
  %790 = vmatpush1.bf16.msra.mxu0 %v568
  %791 = vmatprep.subr.bf16.mxu0 0
  %792 = vmatpush1.bf16.msra.mxu0 %v567
  %793 = vmatprep.subr.bf16.mxu0 0
  %794 = vmatpush1.bf16.msra.mxu0 %v566
  %795 = vmatprep.subr.bf16.mxu0 0
  %796 = vmatpush1.bf16.msra.mxu0 %v565
  %797 = vmatprep.subr.bf16.mxu0 0
  %798 = vmatpush1.bf16.msra.mxu0 %v564
  %799 = vmatprep.subr.bf16.mxu0 0
  %800 = vmatpush2.bf16.msra.mxu0 %v579
  %801 = vmatprep.subr.bf16.mxu0 0
  %802 = vmatpush2.bf16.msra.mxu0 %v578
  %803 = vmatprep.subr.bf16.mxu0 0
  %804 = vmatpush2.bf16.msra.mxu0 %v577
  %805 = vmatprep.subr.bf16.mxu0 0
  %806 = vmatpush2.bf16.msra.mxu0 %v576
  %807 = vmatprep.subr.bf16.mxu0 0
  %808 = vmatpush2.bf16.msra.mxu0 %v575
  %809 = vmatprep.subr.bf16.mxu0 0
  %810 = vmatpush2.bf16.msra.mxu0 %v574
  %811 = vmatprep.subr.bf16.mxu0 0
  %812 = vmatpush2.bf16.msra.mxu0 %v573
  %813 = vmatprep.subr.bf16.mxu0 0
  %814 = vmatpush2.bf16.msra.mxu0 %v572
  %815 = vmatprep.mubr.bf16.mxu0 %v217
  %816 = vmatmul.mubr.bf16.gmra.mxu0 %v216
  %v817 = vpop.f32.mrf.mxu0
  %v818 = vadd.f32 %v777, %v817
  %v819 = vpop.f32.mrf.mxu0
  %v820 = vpop.f32.mrf.mxu0
  %v821 = vadd.f32 %v780, %v820
  %v822 = vpop.f32.mrf.mxu0
  %823 = vdwg.mxu0
  %824 = vmatprep.subr.bf16.mxu0 0
  %825 = vmatpush1.bf16.msra.mxu0 %v587
  %826 = vmatprep.subr.bf16.mxu0 0
  %827 = vmatpush1.bf16.msra.mxu0 %v586
  %828 = vmatprep.subr.bf16.mxu0 0
  %829 = vmatpush1.bf16.msra.mxu0 %v585
  %830 = vmatprep.subr.bf16.mxu0 0
  %831 = vmatpush1.bf16.msra.mxu0 %v584
  %832 = vmatprep.subr.bf16.mxu0 0
  %833 = vmatpush1.bf16.msra.mxu0 %v583
  %834 = vmatprep.subr.bf16.mxu0 0
  %835 = vmatpush1.bf16.msra.mxu0 %v582
  %836 = vmatprep.subr.bf16.mxu0 0
  %837 = vmatpush1.bf16.msra.mxu0 %v581
  %838 = vmatprep.subr.bf16.mxu0 0
  %839 = vmatpush1.bf16.msra.mxu0 %v580
  %840 = vmatprep.subr.bf16.mxu0 0
  %841 = vmatpush2.bf16.msra.mxu0 0
  %842 = vmatprep.subr.bf16.mxu0 0
  %843 = vmatpush2.bf16.msra.mxu0 0
  %844 = vmatprep.subr.bf16.mxu0 0
  %845 = vmatpush2.bf16.msra.mxu0 0
  %846 = vmatprep.subr.bf16.mxu0 0
  %847 = vmatpush2.bf16.msra.mxu0 0
  %848 = vmatprep.subr.bf16.mxu0 0
  %849 = vmatpush2.bf16.msra.mxu0 0
  %850 = vmatprep.subr.bf16.mxu0 0
  %851 = vmatpush2.bf16.msra.mxu0 0
  %852 = vmatprep.subr.bf16.mxu0 0
  %853 = vmatpush2.bf16.msra.mxu0 0
  %854 = vmatprep.subr.bf16.mxu0 0
  %855 = vmatpush2.bf16.msra.mxu0 0
  %856 = vmatprep.mubr.bf16.mxu0 0
  %857 = vmatmul.mubr.bf16.gmra.mxu0 %v218
  %v858 = vpop.f32.mrf.mxu0
  %v859 = vadd.f32 %v818, %v858
  %v860 = vpop.f32.mrf.mxu0
  %v861 = vpop.f32.mrf.mxu0
  %v862 = vadd.f32 %v821, %v861
  %v863 = vpop.f32.mrf.mxu0
  %864 = vdwg.mxu0
  %v865 = vld [vmem:[%s2] sm:$0x1]
  %v867 = vlaneseq
  %v868 = vshrl.u32 %v867, 7
  %v869 = vsub.s32 0, %v868
  %v870 = vrot.slane %v865, %v869
  %v872 = vmul.f32 %v859, %v870
  %v873 = vmul.f32 %v862, %v870
  %v874 = vld [vmem:[%s3] sm:$0x1]
  %v876 = vlaneseq
  %v877 = vshrl.u32 %v876, 7
  %v878 = vsub.s32 0, %v877
  %v879 = vrot.slane %v874, %v878
  %v881 = vadd.f32 %v872, %v879
  %v882 = vadd.f32 %v873, %v879
  %v883 = vpack.c.bf16 %v882, %v881
  %v885 = vunpack.c.l.b16 %v883
  %v886 = vunpack.c.h.b16 %v883
  %v887 = vpack.c.b16 %v885, %v885
  %v888 = vpack.c.b16 %v886, %v886
  %891 = vst [vmem:[%s4] sm:$0xf] %v887
  %892 = vst [vmem:[%s4 + $0x4] sm:$0xf] %v888
  // Predicated region
  $region18: #{unet_generator_forward.16} parent=0 // pred_check
    _
  $region19: #{unet_generator_forward.16} parent=0 // pred_check_branch
    %894 = sbr.rel (0) target = $region21
  $region20: #{unet_generator_forward.16} parent=0 // pred_region
    _
  $region21: #{unet_generator_forward.16} parent=0 // pred_fallthru
    _
  // Predicated region
  $region22: #{unet_generator_forward.16} parent=0 // pred_check
    _
  $region23: #{unet_generator_forward.16} parent=0 // pred_check_branch
    %896 = sbr.rel (0) target = $region25
  $region24: #{unet_generator_forward.16} parent=0 // pred_region
    _
  $region25: #{unet_generator_forward.16} parent=0 // pred_fallthru
    _

// kernel: unet_generator_forward.17
$region0: #{unet_generator_forward.17}
  #allocation0 [shape = 'u32[]', space=smem, size = 0x4, offset = 0x4, fixed_abs, tag = 'smem constant byte address 0x4 - core index']
  #allocation1 [shape = 'u32[144,128]{1,0:T(1,128)}', space=vmem, size = 0x12000, scoped, tag = 'internal scratch']
  %s0 = inlined_call_operand.vmem [shape: bf16[32,576], index: 0, kind: input, shape index: {}]
  %s1 = inlined_call_operand.vmem [shape: bf16[576,128], index: 1, kind: input, shape index: {}]
  %s2 = inlined_call_operand.vmem [shape: f32[1,128], index: 2, kind: input, shape index: {}]
  %s3 = inlined_call_operand.vmem [shape: f32[1,128], index: 3, kind: input, shape index: {}]
  %s4 = inlined_call_operand.vmem [shape: bf16[32,128], index: 4, kind: output, shape index: {}]
  %s5 = sld [smem:[#allocation0]]
  $region26: #{unet_generator_forward.17} parent=0
    _
  %s7 = ssub.s32 1, %s5
  %s8 = scalar_select 0, %s7, %s5
  // Predicated region
  $region2: #{unet_generator_forward.17} parent=0 // pred_check
    _
  $region3: #{unet_generator_forward.17} parent=0 // pred_check_branch
    %10 = sbr.rel (0) target = $region5
  $region4: #{unet_generator_forward.17} parent=0 // pred_region
    _
  $region5: #{unet_generator_forward.17} parent=0 // pred_fallthru
    _
  // Predicated region
  $region6: #{unet_generator_forward.17} parent=0 // pred_check
    _
  $region7: #{unet_generator_forward.17} parent=0 // pred_check_branch
    %12 = sbr.rel (0) target = $region9
  $region8: #{unet_generator_forward.17} parent=0 // pred_region
    _
  $region9: #{unet_generator_forward.17} parent=0 // pred_fallthru
    _
  // Predicated region
  $region10: #{unet_generator_forward.17} parent=0 // pred_check
    _
  $region11: #{unet_generator_forward.17} parent=0 // pred_check_branch
    %14 = sbr.rel (0) target = $region13
  $region12: #{unet_generator_forward.17} parent=0 // pred_region
    _
  $region13: #{unet_generator_forward.17} parent=0 // pred_fallthru
    _
  // Predicated region
  $region14: #{unet_generator_forward.17} parent=0 // pred_check
    _
  $region15: #{unet_generator_forward.17} parent=0 // pred_check_branch
    %16 = sbr.rel (0) target = $region17
  $region16: #{unet_generator_forward.17} parent=0 // pred_region
    _
  $region17: #{unet_generator_forward.17} parent=0 // pred_fallthru
    _
  %v18 = vld [vmem:[%s0] sm:$0xff]
  %v19 = vld [vmem:[%s0 + $0x8] sm:$0xff]
  %v20 = vld [vmem:[%s0 + $0x10] sm:$0xf]
  %v21 = vld [vmem:[%s0 + $0x14] sm:$0xff]
  %v22 = vld [vmem:[%s0 + $0x1c] sm:$0xff]
  %v23 = vld [vmem:[%s0 + $0x24] sm:$0xf]
  %v24 = vld [vmem:[%s0 + $0x28] sm:$0xff]
  %v25 = vld [vmem:[%s0 + $0x30] sm:$0xff]
  %v26 = vld [vmem:[%s0 + $0x38] sm:$0xf]
  %v27 = vld [vmem:[%s0 + $0x3c] sm:$0xff]
  %v28 = vld [vmem:[%s0 + $0x44] sm:$0xff]
  %v29 = vld [vmem:[%s0 + $0x4c] sm:$0xf]
  %v30 = vmax.bf16 %v18, 0
  %v31 = vmax.bf16 %v19, 0
  %v32 = vmax.bf16 %v20, 0
  %v33 = vmax.bf16 %v21, 0
  %v34 = vmax.bf16 %v22, 0
  %v35 = vmax.bf16 %v23, 0
  %v36 = vmax.bf16 %v24, 0
  %v37 = vmax.bf16 %v25, 0
  %v38 = vmax.bf16 %v26, 0
  %v39 = vmax.bf16 %v27, 0
  %v40 = vmax.bf16 %v28, 0
  %v41 = vmax.bf16 %v29, 0
  %v42 = vld [vmem:[%s1] sm:$0xf]
  %v43 = vld [vmem:[%s1 + $0x4] sm:$0xf]
  %v44 = vld [vmem:[%s1 + $0x8] sm:$0xf]
  %v45 = vld [vmem:[%s1 + $0xc] sm:$0xf]
  %v46 = vld [vmem:[%s1 + $0x10] sm:$0xf]
  %v47 = vld [vmem:[%s1 + $0x14] sm:$0xf]
  %v48 = vld [vmem:[%s1 + $0x18] sm:$0xf]
  %v49 = vld [vmem:[%s1 + $0x1c] sm:$0xf]
  %v50 = vld [vmem:[%s1 + $0x20] sm:$0xf]
  %v51 = vld [vmem:[%s1 + $0x24] sm:$0xf]
  %v52 = vld [vmem:[%s1 + $0x28] sm:$0xf]
  %v53 = vld [vmem:[%s1 + $0x2c] sm:$0xf]
  %v54 = vld [vmem:[%s1 + $0x30] sm:$0xf]
  %v55 = vld [vmem:[%s1 + $0x34] sm:$0xf]
  %v56 = vld [vmem:[%s1 + $0x38] sm:$0xf]
  %v57 = vld [vmem:[%s1 + $0x3c] sm:$0xf]
  %v58 = vld [vmem:[%s1 + $0x40] sm:$0xf]
  %v59 = vld [vmem:[%s1 + $0x44] sm:$0xf]
  %v60 = vld [vmem:[%s1 + $0x48] sm:$0xf]
  %v61 = vld [vmem:[%s1 + $0x4c] sm:$0xf]
  %v62 = vld [vmem:[%s1 + $0x50] sm:$0xf]
  %v63 = vld [vmem:[%s1 + $0x54] sm:$0xf]
  %v64 = vld [vmem:[%s1 + $0x58] sm:$0xf]
  %v65 = vld [vmem:[%s1 + $0x5c] sm:$0xf]
  %v66 = vld [vmem:[%s1 + $0x60] sm:$0xf]
  %v67 = vld [vmem:[%s1 + $0x64] sm:$0xf]
  %v68 = vld [vmem:[%s1 + $0x68] sm:$0xf]
  %v69 = vld [vmem:[%s1 + $0x6c] sm:$0xf]
  %v70 = vld [vmem:[%s1 + $0x70] sm:$0xf]
  %v71 = vld [vmem:[%s1 + $0x74] sm:$0xf]
  %v72 = vld [vmem:[%s1 + $0x78] sm:$0xf]
  %v73 = vld [vmem:[%s1 + $0x7c] sm:$0xf]
  %v74 = vld [vmem:[%s1 + $0x80] sm:$0xf]
  %v75 = vld [vmem:[%s1 + $0x84] sm:$0xf]
  %v76 = vld [vmem:[%s1 + $0x88] sm:$0xf]
  %v77 = vld [vmem:[%s1 + $0x8c] sm:$0xf]
  %v78 = vld [vmem:[%s1 + $0x90] sm:$0xf]
  %v79 = vld [vmem:[%s1 + $0x94] sm:$0xf]
  %v80 = vld [vmem:[%s1 + $0x98] sm:$0xf]
  %v81 = vld [vmem:[%s1 + $0x9c] sm:$0xf]
  %v82 = vld [vmem:[%s1 + $0xa0] sm:$0xf]
  %v83 = vld [vmem:[%s1 + $0xa4] sm:$0xf]
  %v84 = vld [vmem:[%s1 + $0xa8] sm:$0xf]
  %v85 = vld [vmem:[%s1 + $0xac] sm:$0xf]
  %v86 = vld [vmem:[%s1 + $0xb0] sm:$0xf]
  %v87 = vld [vmem:[%s1 + $0xb4] sm:$0xf]
  %v88 = vld [vmem:[%s1 + $0xb8] sm:$0xf]
  %v89 = vld [vmem:[%s1 + $0xbc] sm:$0xf]
  %v90 = vld [vmem:[%s1 + $0xc0] sm:$0xf]
  %v91 = vld [vmem:[%s1 + $0xc4] sm:$0xf]
  %v92 = vld [vmem:[%s1 + $0xc8] sm:$0xf]
  %v93 = vld [vmem:[%s1 + $0xcc] sm:$0xf]
  %v94 = vld [vmem:[%s1 + $0xd0] sm:$0xf]
  %v95 = vld [vmem:[%s1 + $0xd4] sm:$0xf]
  %v96 = vld [vmem:[%s1 + $0xd8] sm:$0xf]
  %v97 = vld [vmem:[%s1 + $0xdc] sm:$0xf]
  %v98 = vld [vmem:[%s1 + $0xe0] sm:$0xf]
  %v99 = vld [vmem:[%s1 + $0xe4] sm:$0xf]
  %v100 = vld [vmem:[%s1 + $0xe8] sm:$0xf]
  %v101 = vld [vmem:[%s1 + $0xec] sm:$0xf]
  %v102 = vld [vmem:[%s1 + $0xf0] sm:$0xf]
  %v103 = vld [vmem:[%s1 + $0xf4] sm:$0xf]
  %v104 = vld [vmem:[%s1 + $0xf8] sm:$0xf]
  %v105 = vld [vmem:[%s1 + $0xfc] sm:$0xf]
  %v106 = vld [vmem:[%s1 + $0x100] sm:$0xf]
  %v107 = vld [vmem:[%s1 + $0x104] sm:$0xf]
  %v108 = vld [vmem:[%s1 + $0x108] sm:$0xf]
  %v109 = vld [vmem:[%s1 + $0x10c] sm:$0xf]
  %v110 = vld [vmem:[%s1 + $0x110] sm:$0xf]
  %v111 = vld [vmem:[%s1 + $0x114] sm:$0xf]
  %v112 = vld [vmem:[%s1 + $0x118] sm:$0xf]
  %v113 = vld [vmem:[%s1 + $0x11c] sm:$0xf]
  %v126 = vunpack.c.l.b16 %v30
  %v127 = vunpack.c.h.b16 %v30
  %v128 = vunpack.c.l.b16 %v31
  %v129 = vunpack.c.h.b16 %v31
  %v130 = vunpack.c.l.b16 %v32
  %v131 = vunpack.c.l.b16 %v33
  %v132 = vunpack.c.h.b16 %v33
  %v133 = vunpack.c.l.b16 %v34
  %v134 = vunpack.c.h.b16 %v34
  %v135 = vunpack.c.l.b16 %v35
  %v136 = vunpack.c.l.b16 %v36
  %v137 = vunpack.c.h.b16 %v36
  %v138 = vunpack.c.l.b16 %v37
  %v139 = vunpack.c.h.b16 %v37
  %v140 = vunpack.c.l.b16 %v38
  %v141 = vunpack.c.l.b16 %v39
  %v142 = vunpack.c.h.b16 %v39
  %v143 = vunpack.c.l.b16 %v40
  %v144 = vunpack.c.h.b16 %v40
  %v145 = vunpack.c.l.b16 %v41
  %v146 = vpack.c.b16 %v131, %v126
  %v147 = vpack.c.b16 %v132, %v127
  %v148 = vpack.c.b16 %v133, %v128
  %v149 = vpack.c.b16 %v134, %v129
  %v150 = vpack.c.b16 %v135, %v130
  %v151 = vpack.c.b16 %v141, %v136
  %v152 = vpack.c.b16 %v142, %v137
  %v153 = vpack.c.b16 %v143, %v138
  %v154 = vpack.c.b16 %v144, %v139
  %v155 = vpack.c.b16 %v145, %v140
  %v236 = vunpack.c.l.b16 %v42
  %v237 = vunpack.c.l.b16 %v43
  %v238 = vunpack.c.l.b16 %v44
  %v239 = vunpack.c.l.b16 %v45
  %v240 = vunpack.c.l.b16 %v46
  %v241 = vunpack.c.l.b16 %v47
  %v242 = vunpack.c.l.b16 %v48
  %v243 = vunpack.c.l.b16 %v49
  %v244 = vunpack.c.l.b16 %v50
  %v245 = vunpack.c.l.b16 %v51
  %v246 = vunpack.c.l.b16 %v52
  %v247 = vunpack.c.l.b16 %v53
  %v248 = vunpack.c.l.b16 %v54
  %v249 = vunpack.c.l.b16 %v55
  %v250 = vunpack.c.l.b16 %v56
  %v251 = vunpack.c.l.b16 %v57
  %v252 = vunpack.c.l.b16 %v58
  %v253 = vunpack.c.l.b16 %v59
  %v254 = vunpack.c.l.b16 %v60
  %v255 = vunpack.c.l.b16 %v61
  %v256 = vunpack.c.l.b16 %v62
  %v257 = vunpack.c.l.b16 %v63
  %v258 = vunpack.c.l.b16 %v64
  %v259 = vunpack.c.l.b16 %v65
  %v260 = vunpack.c.l.b16 %v66
  %v261 = vunpack.c.l.b16 %v67
  %v262 = vunpack.c.l.b16 %v68
  %v263 = vunpack.c.l.b16 %v69
  %v264 = vunpack.c.l.b16 %v70
  %v265 = vunpack.c.l.b16 %v71
  %v266 = vunpack.c.l.b16 %v72
  %v267 = vunpack.c.l.b16 %v73
  %v268 = vunpack.c.l.b16 %v74
  %v269 = vunpack.c.l.b16 %v75
  %v270 = vunpack.c.l.b16 %v76
  %v271 = vunpack.c.l.b16 %v77
  %v272 = vunpack.c.l.b16 %v78
  %v273 = vunpack.c.l.b16 %v79
  %v274 = vunpack.c.l.b16 %v80
  %v275 = vunpack.c.l.b16 %v81
  %v276 = vunpack.c.l.b16 %v82
  %v277 = vunpack.c.l.b16 %v83
  %v278 = vunpack.c.l.b16 %v84
  %v279 = vunpack.c.l.b16 %v85
  %v280 = vunpack.c.l.b16 %v86
  %v281 = vunpack.c.l.b16 %v87
  %v282 = vunpack.c.l.b16 %v88
  %v283 = vunpack.c.l.b16 %v89
  %v284 = vunpack.c.l.b16 %v90
  %v285 = vunpack.c.l.b16 %v91
  %v286 = vunpack.c.l.b16 %v92
  %v287 = vunpack.c.l.b16 %v93
  %v288 = vunpack.c.l.b16 %v94
  %v289 = vunpack.c.l.b16 %v95
  %v290 = vunpack.c.l.b16 %v96
  %v291 = vunpack.c.l.b16 %v97
  %v292 = vunpack.c.l.b16 %v98
  %v293 = vunpack.c.l.b16 %v99
  %v294 = vunpack.c.l.b16 %v100
  %v295 = vunpack.c.l.b16 %v101
  %v296 = vunpack.c.l.b16 %v102
  %v297 = vunpack.c.l.b16 %v103
  %v298 = vunpack.c.l.b16 %v104
  %v299 = vunpack.c.l.b16 %v105
  %v300 = vunpack.c.l.b16 %v106
  %v301 = vunpack.c.l.b16 %v107
  %v302 = vunpack.c.l.b16 %v108
  %v303 = vunpack.c.l.b16 %v109
  %v304 = vunpack.c.l.b16 %v110
  %v305 = vunpack.c.l.b16 %v111
  %v306 = vunpack.c.l.b16 %v112
  %v307 = vunpack.c.l.b16 %v113
  %v308 = vpack.c.b16 %v237, %v236
  %v309 = vpack.c.b16 %v239, %v238
  %v310 = vpack.c.b16 %v241, %v240
  %v311 = vpack.c.b16 %v243, %v242
  %v312 = vpack.c.b16 %v245, %v244
  %v313 = vpack.c.b16 %v247, %v246
  %v314 = vpack.c.b16 %v249, %v248
  %v315 = vpack.c.b16 %v251, %v250
  %v316 = vpack.c.b16 %v253, %v252
  %v317 = vpack.c.b16 %v255, %v254
  %v318 = vpack.c.b16 %v257, %v256
  %v319 = vpack.c.b16 %v259, %v258
  %v320 = vpack.c.b16 %v261, %v260
  %v321 = vpack.c.b16 %v263, %v262
  %v322 = vpack.c.b16 %v265, %v264
  %v323 = vpack.c.b16 %v267, %v266
  %v324 = vpack.c.b16 %v269, %v268
  %v325 = vpack.c.b16 %v271, %v270
  %v326 = vpack.c.b16 %v273, %v272
  %v327 = vpack.c.b16 %v275, %v274
  %v328 = vpack.c.b16 %v277, %v276
  %v329 = vpack.c.b16 %v279, %v278
  %v330 = vpack.c.b16 %v281, %v280
  %v331 = vpack.c.b16 %v283, %v282
  %v332 = vpack.c.b16 %v285, %v284
  %v333 = vpack.c.b16 %v287, %v286
  %v334 = vpack.c.b16 %v289, %v288
  %v335 = vpack.c.b16 %v291, %v290
  %v336 = vpack.c.b16 %v293, %v292
  %v337 = vpack.c.b16 %v295, %v294
  %v338 = vpack.c.b16 %v297, %v296
  %v339 = vpack.c.b16 %v299, %v298
  %v340 = vpack.c.b16 %v301, %v300
  %v341 = vpack.c.b16 %v303, %v302
  %v342 = vpack.c.b16 %v305, %v304
  %v343 = vpack.c.b16 %v307, %v306
  %vm380 = vcmask 523264
  %v382 = vsel %vm380, %v150, 0
  %v385 = vsel %vm380, %v155, 0
  %387 = vmatprep.subr.bf16.mxu0 0
  %388 = vmatpush1.bf16.msra.mxu0 %v315
  %389 = vmatprep.subr.bf16.mxu0 0
  %390 = vmatpush1.bf16.msra.mxu0 %v314
  %391 = vmatprep.subr.bf16.mxu0 0
  %392 = vmatpush1.bf16.msra.mxu0 %v313
  %393 = vmatprep.subr.bf16.mxu0 0
  %394 = vmatpush1.bf16.msra.mxu0 %v312
  %395 = vmatprep.subr.bf16.mxu0 0
  %396 = vmatpush1.bf16.msra.mxu0 %v311
  %397 = vmatprep.subr.bf16.mxu0 0
  %398 = vmatpush1.bf16.msra.mxu0 %v310
  %399 = vmatprep.subr.bf16.mxu0 0
  %400 = vmatpush1.bf16.msra.mxu0 %v309
  %401 = vmatprep.subr.bf16.mxu0 0
  %402 = vmatpush1.bf16.msra.mxu0 %v308
  %403 = vmatprep.subr.bf16.mxu0 0
  %404 = vmatpush2.bf16.msra.mxu0 %v323
  %405 = vmatprep.subr.bf16.mxu0 0
  %406 = vmatpush2.bf16.msra.mxu0 %v322
  %407 = vmatprep.subr.bf16.mxu0 0
  %408 = vmatpush2.bf16.msra.mxu0 %v321
  %409 = vmatprep.subr.bf16.mxu0 0
  %410 = vmatpush2.bf16.msra.mxu0 %v320
  %411 = vmatprep.subr.bf16.mxu0 0
  %412 = vmatpush2.bf16.msra.mxu0 %v319
  %413 = vmatprep.subr.bf16.mxu0 0
  %414 = vmatpush2.bf16.msra.mxu0 %v318
  %415 = vmatprep.subr.bf16.mxu0 0
  %416 = vmatpush2.bf16.msra.mxu0 %v317
  %417 = vmatprep.subr.bf16.mxu0 0
  %418 = vmatpush2.bf16.msra.mxu0 %v316
  %419 = vmatprep.mubr.bf16.mxu0 %v147
  %420 = vmatmul.mubr.bf16.gmra.mxu0 %v146
  %v421 = vpop.f32.mrf.mxu0
  %v422 = vadd.f32 0.0, %v421
  %v423 = vpop.f32.mrf.mxu0
  %v424 = vpop.f32.mrf.mxu0
  %v425 = vadd.f32 0.0, %v424
  %v426 = vpop.f32.mrf.mxu0
  %427 = vmatprep.mubr.bf16.mxu0 %v152
  %428 = vmatmul.mubr.bf16.gmra.mxu0 %v151
  %v429 = vpop.f32.mrf.mxu0
  %v430 = vadd.f32 0.0, %v429
  %v431 = vpop.f32.mrf.mxu0
  %v432 = vpop.f32.mrf.mxu0
  %v433 = vadd.f32 0.0, %v432
  %v434 = vpop.f32.mrf.mxu0
  %435 = vdwg.mxu0
  %436 = vmatprep.subr.bf16.mxu0 0
  %437 = vmatpush1.bf16.msra.mxu0 %v331
  %438 = vmatprep.subr.bf16.mxu0 0
  %439 = vmatpush1.bf16.msra.mxu0 %v330
  %440 = vmatprep.subr.bf16.mxu0 0
  %441 = vmatpush1.bf16.msra.mxu0 %v329
  %442 = vmatprep.subr.bf16.mxu0 0
  %443 = vmatpush1.bf16.msra.mxu0 %v328
  %444 = vmatprep.subr.bf16.mxu0 0
  %445 = vmatpush1.bf16.msra.mxu0 %v327
  %446 = vmatprep.subr.bf16.mxu0 0
  %447 = vmatpush1.bf16.msra.mxu0 %v326
  %448 = vmatprep.subr.bf16.mxu0 0
  %449 = vmatpush1.bf16.msra.mxu0 %v325
  %450 = vmatprep.subr.bf16.mxu0 0
  %451 = vmatpush1.bf16.msra.mxu0 %v324
  %452 = vmatprep.subr.bf16.mxu0 0
  %453 = vmatpush2.bf16.msra.mxu0 %v339
  %454 = vmatprep.subr.bf16.mxu0 0
  %455 = vmatpush2.bf16.msra.mxu0 %v338
  %456 = vmatprep.subr.bf16.mxu0 0
  %457 = vmatpush2.bf16.msra.mxu0 %v337
  %458 = vmatprep.subr.bf16.mxu0 0
  %459 = vmatpush2.bf16.msra.mxu0 %v336
  %460 = vmatprep.subr.bf16.mxu0 0
  %461 = vmatpush2.bf16.msra.mxu0 %v335
  %462 = vmatprep.subr.bf16.mxu0 0
  %463 = vmatpush2.bf16.msra.mxu0 %v334
  %464 = vmatprep.subr.bf16.mxu0 0
  %465 = vmatpush2.bf16.msra.mxu0 %v333
  %466 = vmatprep.subr.bf16.mxu0 0
  %467 = vmatpush2.bf16.msra.mxu0 %v332
  %468 = vmatprep.mubr.bf16.mxu0 %v149
  %469 = vmatmul.mubr.bf16.gmra.mxu0 %v148
  %v470 = vpop.f32.mrf.mxu0
  %v471 = vadd.f32 %v422, %v470
  %v472 = vpop.f32.mrf.mxu0
  %v473 = vpop.f32.mrf.mxu0
  %v474 = vadd.f32 %v425, %v473
  %v475 = vpop.f32.mrf.mxu0
  %476 = vmatprep.mubr.bf16.mxu0 %v154
  %477 = vmatmul.mubr.bf16.gmra.mxu0 %v153
  %v478 = vpop.f32.mrf.mxu0
  %v479 = vadd.f32 %v430, %v478
  %v480 = vpop.f32.mrf.mxu0
  %v481 = vpop.f32.mrf.mxu0
  %v482 = vadd.f32 %v433, %v481
  %v483 = vpop.f32.mrf.mxu0
  %484 = vdwg.mxu0
  %485 = vmatprep.subr.bf16.mxu0 0
  %486 = vmatpush1.bf16.msra.mxu0 0
  %487 = vmatprep.subr.bf16.mxu0 0
  %488 = vmatpush1.bf16.msra.mxu0 0
  %489 = vmatprep.subr.bf16.mxu0 0
  %490 = vmatpush1.bf16.msra.mxu0 0
  %491 = vmatprep.subr.bf16.mxu0 0
  %492 = vmatpush1.bf16.msra.mxu0 0
  %493 = vmatprep.subr.bf16.mxu0 0
  %494 = vmatpush1.bf16.msra.mxu0 %v343
  %495 = vmatprep.subr.bf16.mxu0 0
  %496 = vmatpush1.bf16.msra.mxu0 %v342
  %497 = vmatprep.subr.bf16.mxu0 0
  %498 = vmatpush1.bf16.msra.mxu0 %v341
  %499 = vmatprep.subr.bf16.mxu0 0
  %500 = vmatpush1.bf16.msra.mxu0 %v340
  %501 = vmatprep.subr.bf16.mxu0 0
  %502 = vmatpush2.bf16.msra.mxu0 0
  %503 = vmatprep.subr.bf16.mxu0 0
  %504 = vmatpush2.bf16.msra.mxu0 0
  %505 = vmatprep.subr.bf16.mxu0 0
  %506 = vmatpush2.bf16.msra.mxu0 0
  %507 = vmatprep.subr.bf16.mxu0 0
  %508 = vmatpush2.bf16.msra.mxu0 0
  %509 = vmatprep.subr.bf16.mxu0 0
  %510 = vmatpush2.bf16.msra.mxu0 0
  %511 = vmatprep.subr.bf16.mxu0 0
  %512 = vmatpush2.bf16.msra.mxu0 0
  %513 = vmatprep.subr.bf16.mxu0 0
  %514 = vmatpush2.bf16.msra.mxu0 0
  %515 = vmatprep.subr.bf16.mxu0 0
  %516 = vmatpush2.bf16.msra.mxu0 0
  %517 = vmatprep.mubr.bf16.mxu0 0
  %518 = vmatmul.mubr.bf16.gmra.mxu0 %v382
  %v519 = vpop.f32.mrf.mxu0
  %v520 = vadd.f32 %v471, %v519
  %v521 = vpop.f32.mrf.mxu0
  %v522 = vpop.f32.mrf.mxu0
  %v523 = vadd.f32 %v474, %v522
  %v524 = vpop.f32.mrf.mxu0
  %525 = vmatprep.mubr.bf16.mxu0 0
  %526 = vmatmul.mubr.bf16.gmra.mxu0 %v385
  %v527 = vpop.f32.mrf.mxu0
  %v528 = vadd.f32 %v479, %v527
  %v529 = vpop.f32.mrf.mxu0
  %v530 = vpop.f32.mrf.mxu0
  %v531 = vadd.f32 %v482, %v530
  %v532 = vpop.f32.mrf.mxu0
  %533 = vdwg.mxu0
  %v534 = vld [vmem:[%s2] sm:$0x1]
  %v536 = vlaneseq
  %v537 = vshrl.u32 %v536, 7
  %v538 = vsub.s32 0, %v537
  %v539 = vrot.slane %v534, %v538
  %v541 = vmul.f32 %v520, %v539
  %v542 = vmul.f32 %v523, %v539
  %v543 = vmul.f32 %v528, %v539
  %v544 = vmul.f32 %v531, %v539
  %v545 = vld [vmem:[%s3] sm:$0x1]
  %v547 = vlaneseq
  %v548 = vshrl.u32 %v547, 7
  %v549 = vsub.s32 0, %v548
  %v550 = vrot.slane %v545, %v549
  %v552 = vadd.f32 %v541, %v550
  %v553 = vadd.f32 %v542, %v550
  %v554 = vadd.f32 %v543, %v550
  %v555 = vadd.f32 %v544, %v550
  %v556 = vpack.c.bf16 %v553, %v552
  %v557 = vpack.c.bf16 %v555, %v554
  %v560 = vunpack.c.l.b16 %v556
  %v561 = vunpack.c.h.b16 %v556
  %v562 = vunpack.c.l.b16 %v557
  %v563 = vunpack.c.h.b16 %v557
  %v564 = vpack.c.b16 %v560, %v560
  %v565 = vpack.c.b16 %v561, %v561
  %v566 = vpack.c.b16 %v562, %v562
  %v567 = vpack.c.b16 %v563, %v563
  %572 = vst [vmem:[%s4] sm:$0xf] %v564
  %573 = vst [vmem:[%s4 + $0x4] sm:$0xf] %v565
  %574 = vst [vmem:[%s4 + $0x8] sm:$0xf] %v566
  %575 = vst [vmem:[%s4 + $0xc] sm:$0xf] %v567
  // Predicated region
  $region18: #{unet_generator_forward.17} parent=0 // pred_check
    _
  $region19: #{unet_generator_forward.17} parent=0 // pred_check_branch
    %577 = sbr.rel (0) target = $region21
  $region20: #{unet_generator_forward.17} parent=0 // pred_region
    _
  $region21: #{unet_generator_forward.17} parent=0 // pred_fallthru
    _
  // Predicated region
  $region22: #{unet_generator_forward.17} parent=0 // pred_check
    _
  $region23: #{unet_generator_forward.17} parent=0 // pred_check_branch
    %579 = sbr.rel (0) target = $region25
  $region24: #{unet_generator_forward.17} parent=0 // pred_region
    _
  $region25: #{unet_generator_forward.17} parent=0 // pred_fallthru
    _

// kernel: unet_generator_forward.18
$region0: #{unet_generator_forward.18}
  #allocation0 [shape = 'u32[]', space=smem, size = 0x4, offset = 0x4, fixed_abs, tag = 'smem constant byte address 0x4 - core index']
  #allocation1 [shape = 'u32[144,128]{1,0:T(1,128)}', space=vmem, size = 0x12000, scoped, tag = 'internal scratch']
  %s0 = inlined_call_operand.vmem [shape: bf16[128,288], index: 0, kind: input, shape index: {}]
  %s1 = inlined_call_operand.vmem [shape: bf16[288,128], index: 1, kind: input, shape index: {}]
  %s2 = inlined_call_operand.vmem [shape: f32[1,128], index: 2, kind: input, shape index: {}]
  %s3 = inlined_call_operand.vmem [shape: f32[1,128], index: 3, kind: input, shape index: {}]
  %s4 = inlined_call_operand.vmem [shape: bf16[128,128], index: 4, kind: output, shape index: {}]
  %s5 = sld [smem:[#allocation0]]
  $region26: #{unet_generator_forward.18} parent=0
    _
  %s7 = ssub.s32 1, %s5
  %s8 = scalar_select 0, %s7, %s5
  // Predicated region
  $region2: #{unet_generator_forward.18} parent=0 // pred_check
    _
  $region3: #{unet_generator_forward.18} parent=0 // pred_check_branch
    %10 = sbr.rel (0) target = $region5
  $region4: #{unet_generator_forward.18} parent=0 // pred_region
    _
  $region5: #{unet_generator_forward.18} parent=0 // pred_fallthru
    _
  // Predicated region
  $region6: #{unet_generator_forward.18} parent=0 // pred_check
    _
  $region7: #{unet_generator_forward.18} parent=0 // pred_check_branch
    %12 = sbr.rel (0) target = $region9
  $region8: #{unet_generator_forward.18} parent=0 // pred_region
    _
  $region9: #{unet_generator_forward.18} parent=0 // pred_fallthru
    _
  // Predicated region
  $region10: #{unet_generator_forward.18} parent=0 // pred_check
    _
  $region11: #{unet_generator_forward.18} parent=0 // pred_check_branch
    %14 = sbr.rel (0) target = $region13
  $region12: #{unet_generator_forward.18} parent=0 // pred_region
    _
  $region13: #{unet_generator_forward.18} parent=0 // pred_fallthru
    _
  // Predicated region
  $region14: #{unet_generator_forward.18} parent=0 // pred_check
    _
  $region15: #{unet_generator_forward.18} parent=0 // pred_check_branch
    %16 = sbr.rel (0) target = $region17
  $region16: #{unet_generator_forward.18} parent=0 // pred_region
    _
  $region17: #{unet_generator_forward.18} parent=0 // pred_fallthru
    _
  %v18 = vld [vmem:[%s0] sm:$0xff]
  %v19 = vld [vmem:[%s0 + $0x8] sm:$0xf]
  %v20 = vld [vmem:[%s0 + $0xc] sm:$0xff]
  %v21 = vld [vmem:[%s0 + $0x14] sm:$0xf]
  %v22 = vld [vmem:[%s0 + $0x18] sm:$0xff]
  %v23 = vld [vmem:[%s0 + $0x20] sm:$0xf]
  %v24 = vld [vmem:[%s0 + $0x24] sm:$0xff]
  %v25 = vld [vmem:[%s0 + $0x2c] sm:$0xf]
  %v26 = vld [vmem:[%s0 + $0x30] sm:$0xff]
  %v27 = vld [vmem:[%s0 + $0x38] sm:$0xf]
  %v28 = vld [vmem:[%s0 + $0x3c] sm:$0xff]
  %v29 = vld [vmem:[%s0 + $0x44] sm:$0xf]
  %v30 = vld [vmem:[%s0 + $0x48] sm:$0xff]
  %v31 = vld [vmem:[%s0 + $0x50] sm:$0xf]
  %v32 = vld [vmem:[%s0 + $0x54] sm:$0xff]
  %v33 = vld [vmem:[%s0 + $0x5c] sm:$0xf]
  %v34 = vld [vmem:[%s0 + $0x60] sm:$0xff]
  %v35 = vld [vmem:[%s0 + $0x68] sm:$0xf]
  %v36 = vld [vmem:[%s0 + $0x6c] sm:$0xff]
  %v37 = vld [vmem:[%s0 + $0x74] sm:$0xf]
  %v38 = vld [vmem:[%s0 + $0x78] sm:$0xff]
  %v39 = vld [vmem:[%s0 + $0x80] sm:$0xf]
  %v40 = vld [vmem:[%s0 + $0x84] sm:$0xff]
  %v41 = vld [vmem:[%s0 + $0x8c] sm:$0xf]
  %v42 = vld [vmem:[%s0 + $0x90] sm:$0xff]
  %v43 = vld [vmem:[%s0 + $0x98] sm:$0xf]
  %v44 = vld [vmem:[%s0 + $0x9c] sm:$0xff]
  %v45 = vld [vmem:[%s0 + $0xa4] sm:$0xf]
  %v46 = vld [vmem:[%s0 + $0xa8] sm:$0xff]
  %v47 = vld [vmem:[%s0 + $0xb0] sm:$0xf]
  %v48 = vld [vmem:[%s0 + $0xb4] sm:$0xff]
  %v49 = vld [vmem:[%s0 + $0xbc] sm:$0xf]
  %v50 = vmax.bf16 %v18, 0
  %v51 = vmax.bf16 %v19, 0
  %v52 = vmax.bf16 %v20, 0
  %v53 = vmax.bf16 %v21, 0
  %v54 = vmax.bf16 %v22, 0
  %v55 = vmax.bf16 %v23, 0
  %v56 = vmax.bf16 %v24, 0
  %v57 = vmax.bf16 %v25, 0
  %v58 = vmax.bf16 %v26, 0
  %v59 = vmax.bf16 %v27, 0
  %v60 = vmax.bf16 %v28, 0
  %v61 = vmax.bf16 %v29, 0
  %v62 = vmax.bf16 %v30, 0
  %v63 = vmax.bf16 %v31, 0
  %v64 = vmax.bf16 %v32, 0
  %v65 = vmax.bf16 %v33, 0
  %v66 = vmax.bf16 %v34, 0
  %v67 = vmax.bf16 %v35, 0
  %v68 = vmax.bf16 %v36, 0
  %v69 = vmax.bf16 %v37, 0
  %v70 = vmax.bf16 %v38, 0
  %v71 = vmax.bf16 %v39, 0
  %v72 = vmax.bf16 %v40, 0
  %v73 = vmax.bf16 %v41, 0
  %v74 = vmax.bf16 %v42, 0
  %v75 = vmax.bf16 %v43, 0
  %v76 = vmax.bf16 %v44, 0
  %v77 = vmax.bf16 %v45, 0
  %v78 = vmax.bf16 %v46, 0
  %v79 = vmax.bf16 %v47, 0
  %v80 = vmax.bf16 %v48, 0
  %v81 = vmax.bf16 %v49, 0
  %v82 = vld [vmem:[%s1] sm:$0xf]
  %v83 = vld [vmem:[%s1 + $0x4] sm:$0xf]
  %v84 = vld [vmem:[%s1 + $0x8] sm:$0xf]
  %v85 = vld [vmem:[%s1 + $0xc] sm:$0xf]
  %v86 = vld [vmem:[%s1 + $0x10] sm:$0xf]
  %v87 = vld [vmem:[%s1 + $0x14] sm:$0xf]
  %v88 = vld [vmem:[%s1 + $0x18] sm:$0xf]
  %v89 = vld [vmem:[%s1 + $0x1c] sm:$0xf]
  %v90 = vld [vmem:[%s1 + $0x20] sm:$0xf]
  %v91 = vld [vmem:[%s1 + $0x24] sm:$0xf]
  %v92 = vld [vmem:[%s1 + $0x28] sm:$0xf]
  %v93 = vld [vmem:[%s1 + $0x2c] sm:$0xf]
  %v94 = vld [vmem:[%s1 + $0x30] sm:$0xf]
  %v95 = vld [vmem:[%s1 + $0x34] sm:$0xf]
  %v96 = vld [vmem:[%s1 + $0x38] sm:$0xf]
  %v97 = vld [vmem:[%s1 + $0x3c] sm:$0xf]
  %v98 = vld [vmem:[%s1 + $0x40] sm:$0xf]
  %v99 = vld [vmem:[%s1 + $0x44] sm:$0xf]
  %v100 = vld [vmem:[%s1 + $0x48] sm:$0xf]
  %v101 = vld [vmem:[%s1 + $0x4c] sm:$0xf]
  %v102 = vld [vmem:[%s1 + $0x50] sm:$0xf]
  %v103 = vld [vmem:[%s1 + $0x54] sm:$0xf]
  %v104 = vld [vmem:[%s1 + $0x58] sm:$0xf]
  %v105 = vld [vmem:[%s1 + $0x5c] sm:$0xf]
  %v106 = vld [vmem:[%s1 + $0x60] sm:$0xf]
  %v107 = vld [vmem:[%s1 + $0x64] sm:$0xf]
  %v108 = vld [vmem:[%s1 + $0x68] sm:$0xf]
  %v109 = vld [vmem:[%s1 + $0x6c] sm:$0xf]
  %v110 = vld [vmem:[%s1 + $0x70] sm:$0xf]
  %v111 = vld [vmem:[%s1 + $0x74] sm:$0xf]
  %v112 = vld [vmem:[%s1 + $0x78] sm:$0xf]
  %v113 = vld [vmem:[%s1 + $0x7c] sm:$0xf]
  %v114 = vld [vmem:[%s1 + $0x80] sm:$0xf]
  %v115 = vld [vmem:[%s1 + $0x84] sm:$0xf]
  %v116 = vld [vmem:[%s1 + $0x88] sm:$0xf]
  %v117 = vld [vmem:[%s1 + $0x8c] sm:$0xf]
  %v150 = vunpack.c.l.b16 %v50
  %v151 = vunpack.c.h.b16 %v50
  %v152 = vunpack.c.l.b16 %v51
  %v153 = vunpack.c.l.b16 %v52
  %v154 = vunpack.c.h.b16 %v52
  %v155 = vunpack.c.l.b16 %v53
  %v156 = vunpack.c.l.b16 %v54
  %v157 = vunpack.c.h.b16 %v54
  %v158 = vunpack.c.l.b16 %v55
  %v159 = vunpack.c.l.b16 %v56
  %v160 = vunpack.c.h.b16 %v56
  %v161 = vunpack.c.l.b16 %v57
  %v162 = vunpack.c.l.b16 %v58
  %v163 = vunpack.c.h.b16 %v58
  %v164 = vunpack.c.l.b16 %v59
  %v165 = vunpack.c.l.b16 %v60
  %v166 = vunpack.c.h.b16 %v60
  %v167 = vunpack.c.l.b16 %v61
  %v168 = vunpack.c.l.b16 %v62
  %v169 = vunpack.c.h.b16 %v62
  %v170 = vunpack.c.l.b16 %v63
  %v171 = vunpack.c.l.b16 %v64
  %v172 = vunpack.c.h.b16 %v64
  %v173 = vunpack.c.l.b16 %v65
  %v174 = vunpack.c.l.b16 %v66
  %v175 = vunpack.c.h.b16 %v66
  %v176 = vunpack.c.l.b16 %v67
  %v177 = vunpack.c.l.b16 %v68
  %v178 = vunpack.c.h.b16 %v68
  %v179 = vunpack.c.l.b16 %v69
  %v180 = vunpack.c.l.b16 %v70
  %v181 = vunpack.c.h.b16 %v70
  %v182 = vunpack.c.l.b16 %v71
  %v183 = vunpack.c.l.b16 %v72
  %v184 = vunpack.c.h.b16 %v72
  %v185 = vunpack.c.l.b16 %v73
  %v186 = vunpack.c.l.b16 %v74
  %v187 = vunpack.c.h.b16 %v74
  %v188 = vunpack.c.l.b16 %v75
  %v189 = vunpack.c.l.b16 %v76
  %v190 = vunpack.c.h.b16 %v76
  %v191 = vunpack.c.l.b16 %v77
  %v192 = vunpack.c.l.b16 %v78
  %v193 = vunpack.c.h.b16 %v78
  %v194 = vunpack.c.l.b16 %v79
  %v195 = vunpack.c.l.b16 %v80
  %v196 = vunpack.c.h.b16 %v80
  %v197 = vunpack.c.l.b16 %v81
  %v198 = vpack.c.b16 %v153, %v150
  %v199 = vpack.c.b16 %v154, %v151
  %v200 = vpack.c.b16 %v155, %v152
  %v201 = vpack.c.b16 %v159, %v156
  %v202 = vpack.c.b16 %v160, %v157
  %v203 = vpack.c.b16 %v161, %v158
  %v204 = vpack.c.b16 %v165, %v162
  %v205 = vpack.c.b16 %v166, %v163
  %v206 = vpack.c.b16 %v167, %v164
  %v207 = vpack.c.b16 %v171, %v168
  %v208 = vpack.c.b16 %v172, %v169
  %v209 = vpack.c.b16 %v173, %v170
  %v210 = vpack.c.b16 %v177, %v174
  %v211 = vpack.c.b16 %v178, %v175
  %v212 = vpack.c.b16 %v179, %v176
  %v213 = vpack.c.b16 %v183, %v180
  %v214 = vpack.c.b16 %v184, %v181
  %v215 = vpack.c.b16 %v185, %v182
  %v216 = vpack.c.b16 %v189, %v186
  %v217 = vpack.c.b16 %v190, %v187
  %v218 = vpack.c.b16 %v191, %v188
  %v219 = vpack.c.b16 %v195, %v192
  %v220 = vpack.c.b16 %v196, %v193
  %v221 = vpack.c.b16 %v197, %v194
  %v274 = vunpack.c.l.b16 %v82
  %v275 = vunpack.c.l.b16 %v83
  %v276 = vunpack.c.l.b16 %v84
  %v277 = vunpack.c.l.b16 %v85
  %v278 = vunpack.c.l.b16 %v86
  %v279 = vunpack.c.l.b16 %v87
  %v280 = vunpack.c.l.b16 %v88
  %v281 = vunpack.c.l.b16 %v89
  %v282 = vunpack.c.l.b16 %v90
  %v283 = vunpack.c.l.b16 %v91
  %v284 = vunpack.c.l.b16 %v92
  %v285 = vunpack.c.l.b16 %v93
  %v286 = vunpack.c.l.b16 %v94
  %v287 = vunpack.c.l.b16 %v95
  %v288 = vunpack.c.l.b16 %v96
  %v289 = vunpack.c.l.b16 %v97
  %v290 = vunpack.c.l.b16 %v98
  %v291 = vunpack.c.l.b16 %v99
  %v292 = vunpack.c.l.b16 %v100
  %v293 = vunpack.c.l.b16 %v101
  %v294 = vunpack.c.l.b16 %v102
  %v295 = vunpack.c.l.b16 %v103
  %v296 = vunpack.c.l.b16 %v104
  %v297 = vunpack.c.l.b16 %v105
  %v298 = vunpack.c.l.b16 %v106
  %v299 = vunpack.c.l.b16 %v107
  %v300 = vunpack.c.l.b16 %v108
  %v301 = vunpack.c.l.b16 %v109
  %v302 = vunpack.c.l.b16 %v110
  %v303 = vunpack.c.l.b16 %v111
  %v304 = vunpack.c.l.b16 %v112
  %v305 = vunpack.c.l.b16 %v113
  %v306 = vunpack.c.l.b16 %v114
  %v307 = vunpack.c.l.b16 %v115
  %v308 = vunpack.c.l.b16 %v116
  %v309 = vunpack.c.l.b16 %v117
  %v310 = vpack.c.b16 %v275, %v274
  %v311 = vpack.c.b16 %v277, %v276
  %v312 = vpack.c.b16 %v279, %v278
  %v313 = vpack.c.b16 %v281, %v280
  %v314 = vpack.c.b16 %v283, %v282
  %v315 = vpack.c.b16 %v285, %v284
  %v316 = vpack.c.b16 %v287, %v286
  %v317 = vpack.c.b16 %v289, %v288
  %v318 = vpack.c.b16 %v291, %v290
  %v319 = vpack.c.b16 %v293, %v292
  %v320 = vpack.c.b16 %v295, %v294
  %v321 = vpack.c.b16 %v297, %v296
  %v322 = vpack.c.b16 %v299, %v298
  %v323 = vpack.c.b16 %v301, %v300
  %v324 = vpack.c.b16 %v303, %v302
  %v325 = vpack.c.b16 %v305, %v304
  %v326 = vpack.c.b16 %v307, %v306
  %v327 = vpack.c.b16 %v309, %v308
  %vm346 = vcmask 261120
  %v348 = vsel %vm346, %v200, 0
  %v351 = vsel %vm346, %v203, 0
  %v354 = vsel %vm346, %v206, 0
  %v357 = vsel %vm346, %v209, 0
  %v360 = vsel %vm346, %v212, 0
  %v363 = vsel %vm346, %v215, 0
  %v366 = vsel %vm346, %v218, 0
  %v369 = vsel %vm346, %v221, 0
  %371 = vmatprep.subr.bf16.mxu0 0
  %372 = vmatpush1.bf16.msra.mxu0 %v317
  %373 = vmatprep.subr.bf16.mxu0 0
  %374 = vmatpush1.bf16.msra.mxu0 %v316
  %375 = vmatprep.subr.bf16.mxu0 0
  %376 = vmatpush1.bf16.msra.mxu0 %v315
  %377 = vmatprep.subr.bf16.mxu0 0
  %378 = vmatpush1.bf16.msra.mxu0 %v314
  %379 = vmatprep.subr.bf16.mxu0 0
  %380 = vmatpush1.bf16.msra.mxu0 %v313
  %381 = vmatprep.subr.bf16.mxu0 0
  %382 = vmatpush1.bf16.msra.mxu0 %v312
  %383 = vmatprep.subr.bf16.mxu0 0
  %384 = vmatpush1.bf16.msra.mxu0 %v311
  %385 = vmatprep.subr.bf16.mxu0 0
  %386 = vmatpush1.bf16.msra.mxu0 %v310
  %387 = vmatprep.subr.bf16.mxu0 0
  %388 = vmatpush2.bf16.msra.mxu0 %v325
  %389 = vmatprep.subr.bf16.mxu0 0
  %390 = vmatpush2.bf16.msra.mxu0 %v324
  %391 = vmatprep.subr.bf16.mxu0 0
  %392 = vmatpush2.bf16.msra.mxu0 %v323
  %393 = vmatprep.subr.bf16.mxu0 0
  %394 = vmatpush2.bf16.msra.mxu0 %v322
  %395 = vmatprep.subr.bf16.mxu0 0
  %396 = vmatpush2.bf16.msra.mxu0 %v321
  %397 = vmatprep.subr.bf16.mxu0 0
  %398 = vmatpush2.bf16.msra.mxu0 %v320
  %399 = vmatprep.subr.bf16.mxu0 0
  %400 = vmatpush2.bf16.msra.mxu0 %v319
  %401 = vmatprep.subr.bf16.mxu0 0
  %402 = vmatpush2.bf16.msra.mxu0 %v318
  %403 = vmatprep.mubr.bf16.mxu0 %v199
  %404 = vmatmul.mubr.bf16.gmra.mxu0 %v198
  %v405 = vpop.f32.mrf.mxu0
  %v406 = vadd.f32 0.0, %v405
  %v407 = vpop.f32.mrf.mxu0
  %v408 = vpop.f32.mrf.mxu0
  %v409 = vadd.f32 0.0, %v408
  %v410 = vpop.f32.mrf.mxu0
  %411 = vmatprep.mubr.bf16.mxu0 %v202
  %412 = vmatmul.mubr.bf16.gmra.mxu0 %v201
  %v413 = vpop.f32.mrf.mxu0
  %v414 = vadd.f32 0.0, %v413
  %v415 = vpop.f32.mrf.mxu0
  %v416 = vpop.f32.mrf.mxu0
  %v417 = vadd.f32 0.0, %v416
  %v418 = vpop.f32.mrf.mxu0
  %419 = vmatprep.mubr.bf16.mxu0 %v205
  %420 = vmatmul.mubr.bf16.gmra.mxu0 %v204
  %v421 = vpop.f32.mrf.mxu0
  %v422 = vadd.f32 0.0, %v421
  %v423 = vpop.f32.mrf.mxu0
  %v424 = vpop.f32.mrf.mxu0
  %v425 = vadd.f32 0.0, %v424
  %v426 = vpop.f32.mrf.mxu0
  %427 = vmatprep.mubr.bf16.mxu0 %v208
  %428 = vmatmul.mubr.bf16.gmra.mxu0 %v207
  %v429 = vpop.f32.mrf.mxu0
  %v430 = vadd.f32 0.0, %v429
  %v431 = vpop.f32.mrf.mxu0
  %v432 = vpop.f32.mrf.mxu0
  %v433 = vadd.f32 0.0, %v432
  %v434 = vpop.f32.mrf.mxu0
  %435 = vmatprep.mubr.bf16.mxu0 %v211
  %436 = vmatmul.mubr.bf16.gmra.mxu0 %v210
  %v437 = vpop.f32.mrf.mxu0
  %v438 = vadd.f32 0.0, %v437
  %v439 = vpop.f32.mrf.mxu0
  %v440 = vpop.f32.mrf.mxu0
  %v441 = vadd.f32 0.0, %v440
  %v442 = vpop.f32.mrf.mxu0
  %443 = vmatprep.mubr.bf16.mxu0 %v214
  %444 = vmatmul.mubr.bf16.gmra.mxu0 %v213
  %v445 = vpop.f32.mrf.mxu0
  %v446 = vadd.f32 0.0, %v445
  %v447 = vpop.f32.mrf.mxu0
  %v448 = vpop.f32.mrf.mxu0
  %v449 = vadd.f32 0.0, %v448
  %v450 = vpop.f32.mrf.mxu0
  %451 = vmatprep.mubr.bf16.mxu0 %v217
  %452 = vmatmul.mubr.bf16.gmra.mxu0 %v216
  %v453 = vpop.f32.mrf.mxu0
  %v454 = vadd.f32 0.0, %v453
  %v455 = vpop.f32.mrf.mxu0
  %v456 = vpop.f32.mrf.mxu0
  %v457 = vadd.f32 0.0, %v456
  %v458 = vpop.f32.mrf.mxu0
  %459 = vmatprep.mubr.bf16.mxu0 %v220
  %460 = vmatmul.mubr.bf16.gmra.mxu0 %v219
  %v461 = vpop.f32.mrf.mxu0
  %v462 = vadd.f32 0.0, %v461
  %v463 = vpop.f32.mrf.mxu0
  %v464 = vpop.f32.mrf.mxu0
  %v465 = vadd.f32 0.0, %v464
  %v466 = vpop.f32.mrf.mxu0
  %467 = vdwg.mxu0
  %468 = vmatprep.subr.bf16.mxu0 0
  %469 = vmatpush1.bf16.msra.mxu0 0
  %470 = vmatprep.subr.bf16.mxu0 0
  %471 = vmatpush1.bf16.msra.mxu0 0
  %472 = vmatprep.subr.bf16.mxu0 0
  %473 = vmatpush1.bf16.msra.mxu0 0
  %474 = vmatprep.subr.bf16.mxu0 0
  %475 = vmatpush1.bf16.msra.mxu0 0
  %476 = vmatprep.subr.bf16.mxu0 0
  %477 = vmatpush1.bf16.msra.mxu0 0
  %478 = vmatprep.subr.bf16.mxu0 0
  %479 = vmatpush1.bf16.msra.mxu0 0
  %480 = vmatprep.subr.bf16.mxu0 0
  %481 = vmatpush1.bf16.msra.mxu0 %v327
  %482 = vmatprep.subr.bf16.mxu0 0
  %483 = vmatpush1.bf16.msra.mxu0 %v326
  %484 = vmatprep.subr.bf16.mxu0 0
  %485 = vmatpush2.bf16.msra.mxu0 0
  %486 = vmatprep.subr.bf16.mxu0 0
  %487 = vmatpush2.bf16.msra.mxu0 0
  %488 = vmatprep.subr.bf16.mxu0 0
  %489 = vmatpush2.bf16.msra.mxu0 0
  %490 = vmatprep.subr.bf16.mxu0 0
  %491 = vmatpush2.bf16.msra.mxu0 0
  %492 = vmatprep.subr.bf16.mxu0 0
  %493 = vmatpush2.bf16.msra.mxu0 0
  %494 = vmatprep.subr.bf16.mxu0 0
  %495 = vmatpush2.bf16.msra.mxu0 0
  %496 = vmatprep.subr.bf16.mxu0 0
  %497 = vmatpush2.bf16.msra.mxu0 0
  %498 = vmatprep.subr.bf16.mxu0 0
  %499 = vmatpush2.bf16.msra.mxu0 0
  %500 = vmatprep.mubr.bf16.mxu0 0
  %501 = vmatmul.mubr.bf16.gmra.mxu0 %v348
  %v502 = vpop.f32.mrf.mxu0
  %v503 = vadd.f32 %v406, %v502
  %v504 = vpop.f32.mrf.mxu0
  %v505 = vpop.f32.mrf.mxu0
  %v506 = vadd.f32 %v409, %v505
  %v507 = vpop.f32.mrf.mxu0
  %508 = vmatprep.mubr.bf16.mxu0 0
  %509 = vmatmul.mubr.bf16.gmra.mxu0 %v351
  %v510 = vpop.f32.mrf.mxu0
  %v511 = vadd.f32 %v414, %v510
  %v512 = vpop.f32.mrf.mxu0
  %v513 = vpop.f32.mrf.mxu0
  %v514 = vadd.f32 %v417, %v513
  %v515 = vpop.f32.mrf.mxu0
  %516 = vmatprep.mubr.bf16.mxu0 0
  %517 = vmatmul.mubr.bf16.gmra.mxu0 %v354
  %v518 = vpop.f32.mrf.mxu0
  %v519 = vadd.f32 %v422, %v518
  %v520 = vpop.f32.mrf.mxu0
  %v521 = vpop.f32.mrf.mxu0
  %v522 = vadd.f32 %v425, %v521
  %v523 = vpop.f32.mrf.mxu0
  %524 = vmatprep.mubr.bf16.mxu0 0
  %525 = vmatmul.mubr.bf16.gmra.mxu0 %v357
  %v526 = vpop.f32.mrf.mxu0
  %v527 = vadd.f32 %v430, %v526
  %v528 = vpop.f32.mrf.mxu0
  %v529 = vpop.f32.mrf.mxu0
  %v530 = vadd.f32 %v433, %v529
  %v531 = vpop.f32.mrf.mxu0
  %532 = vmatprep.mubr.bf16.mxu0 0
  %533 = vmatmul.mubr.bf16.gmra.mxu0 %v360
  %v534 = vpop.f32.mrf.mxu0
  %v535 = vadd.f32 %v438, %v534
  %v536 = vpop.f32.mrf.mxu0
  %v537 = vpop.f32.mrf.mxu0
  %v538 = vadd.f32 %v441, %v537
  %v539 = vpop.f32.mrf.mxu0
  %540 = vmatprep.mubr.bf16.mxu0 0
  %541 = vmatmul.mubr.bf16.gmra.mxu0 %v363
  %v542 = vpop.f32.mrf.mxu0
  %v543 = vadd.f32 %v446, %v542
  %v544 = vpop.f32.mrf.mxu0
  %v545 = vpop.f32.mrf.mxu0
  %v546 = vadd.f32 %v449, %v545
  %v547 = vpop.f32.mrf.mxu0
  %548 = vmatprep.mubr.bf16.mxu0 0
  %549 = vmatmul.mubr.bf16.gmra.mxu0 %v366
  %v550 = vpop.f32.mrf.mxu0
  %v551 = vadd.f32 %v454, %v550
  %v552 = vpop.f32.mrf.mxu0
  %v553 = vpop.f32.mrf.mxu0
  %v554 = vadd.f32 %v457, %v553
  %v555 = vpop.f32.mrf.mxu0
  %556 = vmatprep.mubr.bf16.mxu0 0
  %557 = vmatmul.mubr.bf16.gmra.mxu0 %v369
  %v558 = vpop.f32.mrf.mxu0
  %v559 = vadd.f32 %v462, %v558
  %v560 = vpop.f32.mrf.mxu0
  %v561 = vpop.f32.mrf.mxu0
  %v562 = vadd.f32 %v465, %v561
  %v563 = vpop.f32.mrf.mxu0
  %564 = vdwg.mxu0
  %v565 = vld [vmem:[%s2] sm:$0x1]
  %v567 = vlaneseq
  %v568 = vshrl.u32 %v567, 7
  %v569 = vsub.s32 0, %v568
  %v570 = vrot.slane %v565, %v569
  %v572 = vmul.f32 %v503, %v570
  %v573 = vmul.f32 %v506, %v570
  %v574 = vmul.f32 %v511, %v570
  %v575 = vmul.f32 %v514, %v570
  %v576 = vmul.f32 %v519, %v570
  %v577 = vmul.f32 %v522, %v570
  %v578 = vmul.f32 %v527, %v570
  %v579 = vmul.f32 %v530, %v570
  %v580 = vmul.f32 %v535, %v570
  %v581 = vmul.f32 %v538, %v570
  %v582 = vmul.f32 %v543, %v570
  %v583 = vmul.f32 %v546, %v570
  %v584 = vmul.f32 %v551, %v570
  %v585 = vmul.f32 %v554, %v570
  %v586 = vmul.f32 %v559, %v570
  %v587 = vmul.f32 %v562, %v570
  %v588 = vld [vmem:[%s3] sm:$0x1]
  %v590 = vlaneseq
  %v591 = vshrl.u32 %v590, 7
  %v592 = vsub.s32 0, %v591
  %v593 = vrot.slane %v588, %v592
  %v595 = vadd.f32 %v572, %v593
  %v596 = vadd.f32 %v573, %v593
  %v597 = vadd.f32 %v574, %v593
  %v598 = vadd.f32 %v575, %v593
  %v599 = vadd.f32 %v576, %v593
  %v600 = vadd.f32 %v577, %v593
  %v601 = vadd.f32 %v578, %v593
  %v602 = vadd.f32 %v579, %v593
  %v603 = vadd.f32 %v580, %v593
  %v604 = vadd.f32 %v581, %v593
  %v605 = vadd.f32 %v582, %v593
  %v606 = vadd.f32 %v583, %v593
  %v607 = vadd.f32 %v584, %v593
  %v608 = vadd.f32 %v585, %v593
  %v609 = vadd.f32 %v586, %v593
  %v610 = vadd.f32 %v587, %v593
  %v611 = vpack.c.bf16 %v596, %v595
  %v612 = vpack.c.bf16 %v598, %v597
  %v613 = vpack.c.bf16 %v600, %v599
  %v614 = vpack.c.bf16 %v602, %v601
  %v615 = vpack.c.bf16 %v604, %v603
  %v616 = vpack.c.bf16 %v606, %v605
  %v617 = vpack.c.bf16 %v608, %v607
  %v618 = vpack.c.bf16 %v610, %v609
  %v627 = vunpack.c.l.b16 %v611
  %v628 = vunpack.c.h.b16 %v611
  %v629 = vunpack.c.l.b16 %v612
  %v630 = vunpack.c.h.b16 %v612
  %v631 = vunpack.c.l.b16 %v613
  %v632 = vunpack.c.h.b16 %v613
  %v633 = vunpack.c.l.b16 %v614
  %v634 = vunpack.c.h.b16 %v614
  %v635 = vunpack.c.l.b16 %v615
  %v636 = vunpack.c.h.b16 %v615
  %v637 = vunpack.c.l.b16 %v616
  %v638 = vunpack.c.h.b16 %v616
  %v639 = vunpack.c.l.b16 %v617
  %v640 = vunpack.c.h.b16 %v617
  %v641 = vunpack.c.l.b16 %v618
  %v642 = vunpack.c.h.b16 %v618
  %v643 = vpack.c.b16 %v627, %v627
  %v644 = vpack.c.b16 %v628, %v628
  %v645 = vpack.c.b16 %v629, %v629
  %v646 = vpack.c.b16 %v630, %v630
  %v647 = vpack.c.b16 %v631, %v631
  %v648 = vpack.c.b16 %v632, %v632
  %v649 = vpack.c.b16 %v633, %v633
  %v650 = vpack.c.b16 %v634, %v634
  %v651 = vpack.c.b16 %v635, %v635
  %v652 = vpack.c.b16 %v636, %v636
  %v653 = vpack.c.b16 %v637, %v637
  %v654 = vpack.c.b16 %v638, %v638
  %v655 = vpack.c.b16 %v639, %v639
  %v656 = vpack.c.b16 %v640, %v640
  %v657 = vpack.c.b16 %v641, %v641
  %v658 = vpack.c.b16 %v642, %v642
  %675 = vst [vmem:[%s4] sm:$0xf] %v643
  %676 = vst [vmem:[%s4 + $0x4] sm:$0xf] %v644
  %677 = vst [vmem:[%s4 + $0x8] sm:$0xf] %v645
  %678 = vst [vmem:[%s4 + $0xc] sm:$0xf] %v646
  %679 = vst [vmem:[%s4 + $0x10] sm:$0xf] %v647
  %680 = vst [vmem:[%s4 + $0x14] sm:$0xf] %v648
  %681 = vst [vmem:[%s4 + $0x18] sm:$0xf] %v649
  %682 = vst [vmem:[%s4 + $0x1c] sm:$0xf] %v650
  %683 = vst [vmem:[%s4 + $0x20] sm:$0xf] %v651
  %684 = vst [vmem:[%s4 + $0x24] sm:$0xf] %v652
  %685 = vst [vmem:[%s4 + $0x28] sm:$0xf] %v653
  %686 = vst [vmem:[%s4 + $0x2c] sm:$0xf] %v654
  %687 = vst [vmem:[%s4 + $0x30] sm:$0xf] %v655
  %688 = vst [vmem:[%s4 + $0x34] sm:$0xf] %v656
  %689 = vst [vmem:[%s4 + $0x38] sm:$0xf] %v657
  %690 = vst [vmem:[%s4 + $0x3c] sm:$0xf] %v658
  // Predicated region
  $region18: #{unet_generator_forward.18} parent=0 // pred_check
    _
  $region19: #{unet_generator_forward.18} parent=0 // pred_check_branch
    %692 = sbr.rel (0) target = $region21
  $region20: #{unet_generator_forward.18} parent=0 // pred_region
    _
  $region21: #{unet_generator_forward.18} parent=0 // pred_fallthru
    _
  // Predicated region
  $region22: #{unet_generator_forward.18} parent=0 // pred_check
    _
  $region23: #{unet_generator_forward.18} parent=0 // pred_check_branch
    %694 = sbr.rel (0) target = $region25
  $region24: #{unet_generator_forward.18} parent=0 // pred_region
    _
  $region25: #{unet_generator_forward.18} parent=0 // pred_fallthru
    _

// kernel: unet_generator_forward.19
$region0: #{unet_generator_forward.19}
  #allocation0 [shape = 'u32[]', space=smem, size = 0x4, offset = 0x4, fixed_abs, tag = 'smem constant byte address 0x4 - core index']
  #allocation1 [shape = 'u32[144,128]{1,0:T(1,128)}', space=vmem, size = 0x12000, scoped, tag = 'internal scratch']
  %s0 = inlined_call_operand.vmem [shape: bf16[512,144], index: 0, kind: input, shape index: {}]
  %s1 = inlined_call_operand.vmem [shape: bf16[144,128], index: 1, kind: input, shape index: {}]
  %s2 = inlined_call_operand.vmem [shape: f32[1,128], index: 2, kind: input, shape index: {}]
  %s3 = inlined_call_operand.vmem [shape: f32[1,128], index: 3, kind: input, shape index: {}]
  %s4 = inlined_call_operand.vmem [shape: f32[512,128], index: 4, kind: output, shape index: {}]
  %s5 = sld [smem:[#allocation0]]
  $region26: #{unet_generator_forward.19} parent=0
    _
  %s7 = ssub.s32 1, %s5
  %s8 = scalar_select 0, %s7, %s5
  // Predicated region
  $region2: #{unet_generator_forward.19} parent=0 // pred_check
    _
  $region3: #{unet_generator_forward.19} parent=0 // pred_check_branch
    %10 = sbr.rel (0) target = $region5
  $region4: #{unet_generator_forward.19} parent=0 // pred_region
    _
  $region5: #{unet_generator_forward.19} parent=0 // pred_fallthru
    _
  // Predicated region
  $region6: #{unet_generator_forward.19} parent=0 // pred_check
    _
  $region7: #{unet_generator_forward.19} parent=0 // pred_check_branch
    %12 = sbr.rel (0) target = $region9
  $region8: #{unet_generator_forward.19} parent=0 // pred_region
    _
  $region9: #{unet_generator_forward.19} parent=0 // pred_fallthru
    _
  // Predicated region
  $region10: #{unet_generator_forward.19} parent=0 // pred_check
    _
  $region11: #{unet_generator_forward.19} parent=0 // pred_check_branch
    %14 = sbr.rel (0) target = $region13
  $region12: #{unet_generator_forward.19} parent=0 // pred_region
    _
  $region13: #{unet_generator_forward.19} parent=0 // pred_fallthru
    _
  // Predicated region
  $region14: #{unet_generator_forward.19} parent=0 // pred_check
    _
  $region15: #{unet_generator_forward.19} parent=0 // pred_check_branch
    %16 = sbr.rel (0) target = $region17
  $region16: #{unet_generator_forward.19} parent=0 // pred_region
    _
  $region17: #{unet_generator_forward.19} parent=0 // pred_fallthru
    _
  %v18 = vld [vmem:[%s0] sm:$0xff]
  %v19 = vld [vmem:[%s0 + $0x8] sm:$0xff]
  %v20 = vld [vmem:[%s0 + $0x10] sm:$0xff]
  %v21 = vld [vmem:[%s0 + $0x18] sm:$0xff]
  %v22 = vld [vmem:[%s0 + $0x20] sm:$0xff]
  %v23 = vld [vmem:[%s0 + $0x28] sm:$0xff]
  %v24 = vld [vmem:[%s0 + $0x30] sm:$0xff]
  %v25 = vld [vmem:[%s0 + $0x38] sm:$0xff]
  %v26 = vld [vmem:[%s0 + $0x40] sm:$0xff]
  %v27 = vld [vmem:[%s0 + $0x48] sm:$0xff]
  %v28 = vld [vmem:[%s0 + $0x50] sm:$0xff]
  %v29 = vld [vmem:[%s0 + $0x58] sm:$0xff]
  %v30 = vld [vmem:[%s0 + $0x60] sm:$0xff]
  %v31 = vld [vmem:[%s0 + $0x68] sm:$0xff]
  %v32 = vld [vmem:[%s0 + $0x70] sm:$0xff]
  %v33 = vld [vmem:[%s0 + $0x78] sm:$0xff]
  %v34 = vld [vmem:[%s0 + $0x80] sm:$0xff]
  %v35 = vld [vmem:[%s0 + $0x88] sm:$0xff]
  %v36 = vld [vmem:[%s0 + $0x90] sm:$0xff]
  %v37 = vld [vmem:[%s0 + $0x98] sm:$0xff]
  %v38 = vld [vmem:[%s0 + $0xa0] sm:$0xff]
  %v39 = vld [vmem:[%s0 + $0xa8] sm:$0xff]
  %v40 = vld [vmem:[%s0 + $0xb0] sm:$0xff]
  %v41 = vld [vmem:[%s0 + $0xb8] sm:$0xff]
  %v42 = vld [vmem:[%s0 + $0xc0] sm:$0xff]
  %v43 = vld [vmem:[%s0 + $0xc8] sm:$0xff]
  %v44 = vld [vmem:[%s0 + $0xd0] sm:$0xff]
  %v45 = vld [vmem:[%s0 + $0xd8] sm:$0xff]
  %v46 = vld [vmem:[%s0 + $0xe0] sm:$0xff]
  %v47 = vld [vmem:[%s0 + $0xe8] sm:$0xff]
  %v48 = vld [vmem:[%s0 + $0xf0] sm:$0xff]
  %v49 = vld [vmem:[%s0 + $0xf8] sm:$0xff]
  %v50 = vld [vmem:[%s0 + $0x100] sm:$0xff]
  %v51 = vld [vmem:[%s0 + $0x108] sm:$0xff]
  %v52 = vld [vmem:[%s0 + $0x110] sm:$0xff]
  %v53 = vld [vmem:[%s0 + $0x118] sm:$0xff]
  %v54 = vld [vmem:[%s0 + $0x120] sm:$0xff]
  %v55 = vld [vmem:[%s0 + $0x128] sm:$0xff]
  %v56 = vld [vmem:[%s0 + $0x130] sm:$0xff]
  %v57 = vld [vmem:[%s0 + $0x138] sm:$0xff]
  %v58 = vld [vmem:[%s0 + $0x140] sm:$0xff]
  %v59 = vld [vmem:[%s0 + $0x148] sm:$0xff]
  %v60 = vld [vmem:[%s0 + $0x150] sm:$0xff]
  %v61 = vld [vmem:[%s0 + $0x158] sm:$0xff]
  %v62 = vld [vmem:[%s0 + $0x160] sm:$0xff]
  %v63 = vld [vmem:[%s0 + $0x168] sm:$0xff]
  %v64 = vld [vmem:[%s0 + $0x170] sm:$0xff]
  %v65 = vld [vmem:[%s0 + $0x178] sm:$0xff]
  %v66 = vld [vmem:[%s0 + $0x180] sm:$0xff]
  %v67 = vld [vmem:[%s0 + $0x188] sm:$0xff]
  %v68 = vld [vmem:[%s0 + $0x190] sm:$0xff]
  %v69 = vld [vmem:[%s0 + $0x198] sm:$0xff]
  %v70 = vld [vmem:[%s0 + $0x1a0] sm:$0xff]
  %v71 = vld [vmem:[%s0 + $0x1a8] sm:$0xff]
  %v72 = vld [vmem:[%s0 + $0x1b0] sm:$0xff]
  %v73 = vld [vmem:[%s0 + $0x1b8] sm:$0xff]
  %v74 = vld [vmem:[%s0 + $0x1c0] sm:$0xff]
  %v75 = vld [vmem:[%s0 + $0x1c8] sm:$0xff]
  %v76 = vld [vmem:[%s0 + $0x1d0] sm:$0xff]
  %v77 = vld [vmem:[%s0 + $0x1d8] sm:$0xff]
  %v78 = vld [vmem:[%s0 + $0x1e0] sm:$0xff]
  %v79 = vld [vmem:[%s0 + $0x1e8] sm:$0xff]
  %v80 = vld [vmem:[%s0 + $0x1f0] sm:$0xff]
  %v81 = vld [vmem:[%s0 + $0x1f8] sm:$0xff]
  %v82 = vmax.bf16 %v18, 0
  %v83 = vmax.bf16 %v19, 0
  %v84 = vmax.bf16 %v20, 0
  %v85 = vmax.bf16 %v21, 0
  %v86 = vmax.bf16 %v22, 0
  %v87 = vmax.bf16 %v23, 0
  %v88 = vmax.bf16 %v24, 0
  %v89 = vmax.bf16 %v25, 0
  %v90 = vmax.bf16 %v26, 0
  %v91 = vmax.bf16 %v27, 0
  %v92 = vmax.bf16 %v28, 0
  %v93 = vmax.bf16 %v29, 0
  %v94 = vmax.bf16 %v30, 0
  %v95 = vmax.bf16 %v31, 0
  %v96 = vmax.bf16 %v32, 0
  %v97 = vmax.bf16 %v33, 0
  %v98 = vmax.bf16 %v34, 0
  %v99 = vmax.bf16 %v35, 0
  %v100 = vmax.bf16 %v36, 0
  %v101 = vmax.bf16 %v37, 0
  %v102 = vmax.bf16 %v38, 0
  %v103 = vmax.bf16 %v39, 0
  %v104 = vmax.bf16 %v40, 0
  %v105 = vmax.bf16 %v41, 0
  %v106 = vmax.bf16 %v42, 0
  %v107 = vmax.bf16 %v43, 0
  %v108 = vmax.bf16 %v44, 0
  %v109 = vmax.bf16 %v45, 0
  %v110 = vmax.bf16 %v46, 0
  %v111 = vmax.bf16 %v47, 0
  %v112 = vmax.bf16 %v48, 0
  %v113 = vmax.bf16 %v49, 0
  %v114 = vmax.bf16 %v50, 0
  %v115 = vmax.bf16 %v51, 0
  %v116 = vmax.bf16 %v52, 0
  %v117 = vmax.bf16 %v53, 0
  %v118 = vmax.bf16 %v54, 0
  %v119 = vmax.bf16 %v55, 0
  %v120 = vmax.bf16 %v56, 0
  %v121 = vmax.bf16 %v57, 0
  %v122 = vmax.bf16 %v58, 0
  %v123 = vmax.bf16 %v59, 0
  %v124 = vmax.bf16 %v60, 0
  %v125 = vmax.bf16 %v61, 0
  %v126 = vmax.bf16 %v62, 0
  %v127 = vmax.bf16 %v63, 0
  %v128 = vmax.bf16 %v64, 0
  %v129 = vmax.bf16 %v65, 0
  %v130 = vmax.bf16 %v66, 0
  %v131 = vmax.bf16 %v67, 0
  %v132 = vmax.bf16 %v68, 0
  %v133 = vmax.bf16 %v69, 0
  %v134 = vmax.bf16 %v70, 0
  %v135 = vmax.bf16 %v71, 0
  %v136 = vmax.bf16 %v72, 0
  %v137 = vmax.bf16 %v73, 0
  %v138 = vmax.bf16 %v74, 0
  %v139 = vmax.bf16 %v75, 0
  %v140 = vmax.bf16 %v76, 0
  %v141 = vmax.bf16 %v77, 0
  %v142 = vmax.bf16 %v78, 0
  %v143 = vmax.bf16 %v79, 0
  %v144 = vmax.bf16 %v80, 0
  %v145 = vmax.bf16 %v81, 0
  %v146 = vld [vmem:[%s1] sm:$0xf]
  %v147 = vld [vmem:[%s1 + $0x4] sm:$0xf]
  %v148 = vld [vmem:[%s1 + $0x8] sm:$0xf]
  %v149 = vld [vmem:[%s1 + $0xc] sm:$0xf]
  %v150 = vld [vmem:[%s1 + $0x10] sm:$0xf]
  %v151 = vld [vmem:[%s1 + $0x14] sm:$0xf]
  %v152 = vld [vmem:[%s1 + $0x18] sm:$0xf]
  %v153 = vld [vmem:[%s1 + $0x1c] sm:$0xf]
  %v154 = vld [vmem:[%s1 + $0x20] sm:$0xf]
  %v155 = vld [vmem:[%s1 + $0x24] sm:$0xf]
  %v156 = vld [vmem:[%s1 + $0x28] sm:$0xf]
  %v157 = vld [vmem:[%s1 + $0x2c] sm:$0xf]
  %v158 = vld [vmem:[%s1 + $0x30] sm:$0xf]
  %v159 = vld [vmem:[%s1 + $0x34] sm:$0xf]
  %v160 = vld [vmem:[%s1 + $0x38] sm:$0xf]
  %v161 = vld [vmem:[%s1 + $0x3c] sm:$0xf]
  %v162 = vld [vmem:[%s1 + $0x40] sm:$0xf]
  %v163 = vld [vmem:[%s1 + $0x44] sm:$0xf]
  %v228 = vunpack.c.l.b16 %v82
  %v229 = vunpack.c.h.b16 %v82
  %v230 = vunpack.c.l.b16 %v83
  %v231 = vunpack.c.h.b16 %v83
  %v232 = vunpack.c.l.b16 %v84
  %v233 = vunpack.c.h.b16 %v84
  %v234 = vunpack.c.l.b16 %v85
  %v235 = vunpack.c.h.b16 %v85
  %v236 = vunpack.c.l.b16 %v86
  %v237 = vunpack.c.h.b16 %v86
  %v238 = vunpack.c.l.b16 %v87
  %v239 = vunpack.c.h.b16 %v87
  %v240 = vunpack.c.l.b16 %v88
  %v241 = vunpack.c.h.b16 %v88
  %v242 = vunpack.c.l.b16 %v89
  %v243 = vunpack.c.h.b16 %v89
  %v244 = vunpack.c.l.b16 %v90
  %v245 = vunpack.c.h.b16 %v90
  %v246 = vunpack.c.l.b16 %v91
  %v247 = vunpack.c.h.b16 %v91
  %v248 = vunpack.c.l.b16 %v92
  %v249 = vunpack.c.h.b16 %v92
  %v250 = vunpack.c.l.b16 %v93
  %v251 = vunpack.c.h.b16 %v93
  %v252 = vunpack.c.l.b16 %v94
  %v253 = vunpack.c.h.b16 %v94
  %v254 = vunpack.c.l.b16 %v95
  %v255 = vunpack.c.h.b16 %v95
  %v256 = vunpack.c.l.b16 %v96
  %v257 = vunpack.c.h.b16 %v96
  %v258 = vunpack.c.l.b16 %v97
  %v259 = vunpack.c.h.b16 %v97
  %v260 = vunpack.c.l.b16 %v98
  %v261 = vunpack.c.h.b16 %v98
  %v262 = vunpack.c.l.b16 %v99
  %v263 = vunpack.c.h.b16 %v99
  %v264 = vunpack.c.l.b16 %v100
  %v265 = vunpack.c.h.b16 %v100
  %v266 = vunpack.c.l.b16 %v101
  %v267 = vunpack.c.h.b16 %v101
  %v268 = vunpack.c.l.b16 %v102
  %v269 = vunpack.c.h.b16 %v102
  %v270 = vunpack.c.l.b16 %v103
  %v271 = vunpack.c.h.b16 %v103
  %v272 = vunpack.c.l.b16 %v104
  %v273 = vunpack.c.h.b16 %v104
  %v274 = vunpack.c.l.b16 %v105
  %v275 = vunpack.c.h.b16 %v105
  %v276 = vunpack.c.l.b16 %v106
  %v277 = vunpack.c.h.b16 %v106
  %v278 = vunpack.c.l.b16 %v107
  %v279 = vunpack.c.h.b16 %v107
  %v280 = vunpack.c.l.b16 %v108
  %v281 = vunpack.c.h.b16 %v108
  %v282 = vunpack.c.l.b16 %v109
  %v283 = vunpack.c.h.b16 %v109
  %v284 = vunpack.c.l.b16 %v110
  %v285 = vunpack.c.h.b16 %v110
  %v286 = vunpack.c.l.b16 %v111
  %v287 = vunpack.c.h.b16 %v111
  %v288 = vunpack.c.l.b16 %v112
  %v289 = vunpack.c.h.b16 %v112
  %v290 = vunpack.c.l.b16 %v113
  %v291 = vunpack.c.h.b16 %v113
  %v292 = vunpack.c.l.b16 %v114
  %v293 = vunpack.c.h.b16 %v114
  %v294 = vunpack.c.l.b16 %v115
  %v295 = vunpack.c.h.b16 %v115
  %v296 = vunpack.c.l.b16 %v116
  %v297 = vunpack.c.h.b16 %v116
  %v298 = vunpack.c.l.b16 %v117
  %v299 = vunpack.c.h.b16 %v117
  %v300 = vunpack.c.l.b16 %v118
  %v301 = vunpack.c.h.b16 %v118
  %v302 = vunpack.c.l.b16 %v119
  %v303 = vunpack.c.h.b16 %v119
  %v304 = vunpack.c.l.b16 %v120
  %v305 = vunpack.c.h.b16 %v120
  %v306 = vunpack.c.l.b16 %v121
  %v307 = vunpack.c.h.b16 %v121
  %v308 = vunpack.c.l.b16 %v122
  %v309 = vunpack.c.h.b16 %v122
  %v310 = vunpack.c.l.b16 %v123
  %v311 = vunpack.c.h.b16 %v123
  %v312 = vunpack.c.l.b16 %v124
  %v313 = vunpack.c.h.b16 %v124
  %v314 = vunpack.c.l.b16 %v125
  %v315 = vunpack.c.h.b16 %v125
  %v316 = vunpack.c.l.b16 %v126
  %v317 = vunpack.c.h.b16 %v126
  %v318 = vunpack.c.l.b16 %v127
  %v319 = vunpack.c.h.b16 %v127
  %v320 = vunpack.c.l.b16 %v128
  %v321 = vunpack.c.h.b16 %v128
  %v322 = vunpack.c.l.b16 %v129
  %v323 = vunpack.c.h.b16 %v129
  %v324 = vunpack.c.l.b16 %v130
  %v325 = vunpack.c.h.b16 %v130
  %v326 = vunpack.c.l.b16 %v131
  %v327 = vunpack.c.h.b16 %v131
  %v328 = vunpack.c.l.b16 %v132
  %v329 = vunpack.c.h.b16 %v132
  %v330 = vunpack.c.l.b16 %v133
  %v331 = vunpack.c.h.b16 %v133
  %v332 = vunpack.c.l.b16 %v134
  %v333 = vunpack.c.h.b16 %v134
  %v334 = vunpack.c.l.b16 %v135
  %v335 = vunpack.c.h.b16 %v135
  %v336 = vunpack.c.l.b16 %v136
  %v337 = vunpack.c.h.b16 %v136
  %v338 = vunpack.c.l.b16 %v137
  %v339 = vunpack.c.h.b16 %v137
  %v340 = vunpack.c.l.b16 %v138
  %v341 = vunpack.c.h.b16 %v138
  %v342 = vunpack.c.l.b16 %v139
  %v343 = vunpack.c.h.b16 %v139
  %v344 = vunpack.c.l.b16 %v140
  %v345 = vunpack.c.h.b16 %v140
  %v346 = vunpack.c.l.b16 %v141
  %v347 = vunpack.c.h.b16 %v141
  %v348 = vunpack.c.l.b16 %v142
  %v349 = vunpack.c.h.b16 %v142
  %v350 = vunpack.c.l.b16 %v143
  %v351 = vunpack.c.h.b16 %v143
  %v352 = vunpack.c.l.b16 %v144
  %v353 = vunpack.c.h.b16 %v144
  %v354 = vunpack.c.l.b16 %v145
  %v355 = vunpack.c.h.b16 %v145
  %v356 = vpack.c.b16 %v230, %v228
  %v357 = vpack.c.b16 %v231, %v229
  %v358 = vpack.c.b16 %v234, %v232
  %v359 = vpack.c.b16 %v235, %v233
  %v360 = vpack.c.b16 %v238, %v236
  %v361 = vpack.c.b16 %v239, %v237
  %v362 = vpack.c.b16 %v242, %v240
  %v363 = vpack.c.b16 %v243, %v241
  %v364 = vpack.c.b16 %v246, %v244
  %v365 = vpack.c.b16 %v247, %v245
  %v366 = vpack.c.b16 %v250, %v248
  %v367 = vpack.c.b16 %v251, %v249
  %v368 = vpack.c.b16 %v254, %v252
  %v369 = vpack.c.b16 %v255, %v253
  %v370 = vpack.c.b16 %v258, %v256
  %v371 = vpack.c.b16 %v259, %v257
  %v372 = vpack.c.b16 %v262, %v260
  %v373 = vpack.c.b16 %v263, %v261
  %v374 = vpack.c.b16 %v266, %v264
  %v375 = vpack.c.b16 %v267, %v265
  %v376 = vpack.c.b16 %v270, %v268
  %v377 = vpack.c.b16 %v271, %v269
  %v378 = vpack.c.b16 %v274, %v272
  %v379 = vpack.c.b16 %v275, %v273
  %v380 = vpack.c.b16 %v278, %v276
  %v381 = vpack.c.b16 %v279, %v277
  %v382 = vpack.c.b16 %v282, %v280
  %v383 = vpack.c.b16 %v283, %v281
  %v384 = vpack.c.b16 %v286, %v284
  %v385 = vpack.c.b16 %v287, %v285
  %v386 = vpack.c.b16 %v290, %v288
  %v387 = vpack.c.b16 %v291, %v289
  %v388 = vpack.c.b16 %v294, %v292
  %v389 = vpack.c.b16 %v295, %v293
  %v390 = vpack.c.b16 %v298, %v296
  %v391 = vpack.c.b16 %v299, %v297
  %v392 = vpack.c.b16 %v302, %v300
  %v393 = vpack.c.b16 %v303, %v301
  %v394 = vpack.c.b16 %v306, %v304
  %v395 = vpack.c.b16 %v307, %v305
  %v396 = vpack.c.b16 %v310, %v308
  %v397 = vpack.c.b16 %v311, %v309
  %v398 = vpack.c.b16 %v314, %v312
  %v399 = vpack.c.b16 %v315, %v313
  %v400 = vpack.c.b16 %v318, %v316
  %v401 = vpack.c.b16 %v319, %v317
  %v402 = vpack.c.b16 %v322, %v320
  %v403 = vpack.c.b16 %v323, %v321
  %v404 = vpack.c.b16 %v326, %v324
  %v405 = vpack.c.b16 %v327, %v325
  %v406 = vpack.c.b16 %v330, %v328
  %v407 = vpack.c.b16 %v331, %v329
  %v408 = vpack.c.b16 %v334, %v332
  %v409 = vpack.c.b16 %v335, %v333
  %v410 = vpack.c.b16 %v338, %v336
  %v411 = vpack.c.b16 %v339, %v337
  %v412 = vpack.c.b16 %v342, %v340
  %v413 = vpack.c.b16 %v343, %v341
  %v414 = vpack.c.b16 %v346, %v344
  %v415 = vpack.c.b16 %v347, %v345
  %v416 = vpack.c.b16 %v350, %v348
  %v417 = vpack.c.b16 %v351, %v349
  %v418 = vpack.c.b16 %v354, %v352
  %v419 = vpack.c.b16 %v355, %v353
  %v470 = vunpack.c.l.b16 %v146
  %v471 = vunpack.c.l.b16 %v147
  %v472 = vunpack.c.l.b16 %v148
  %v473 = vunpack.c.l.b16 %v149
  %v474 = vunpack.c.l.b16 %v150
  %v475 = vunpack.c.l.b16 %v151
  %v476 = vunpack.c.l.b16 %v152
  %v477 = vunpack.c.l.b16 %v153
  %v478 = vunpack.c.l.b16 %v154
  %v479 = vunpack.c.l.b16 %v155
  %v480 = vunpack.c.l.b16 %v156
  %v481 = vunpack.c.l.b16 %v157
  %v482 = vunpack.c.l.b16 %v158
  %v483 = vunpack.c.l.b16 %v159
  %v484 = vunpack.c.l.b16 %v160
  %v485 = vunpack.c.l.b16 %v161
  %v486 = vunpack.c.l.b16 %v162
  %v487 = vunpack.c.l.b16 %v163
  %v488 = vpack.c.b16 %v471, %v470
  %v489 = vpack.c.b16 %v473, %v472
  %v490 = vpack.c.b16 %v475, %v474
  %v491 = vpack.c.b16 %v477, %v476
  %v492 = vpack.c.b16 %v479, %v478
  %v493 = vpack.c.b16 %v481, %v480
  %v494 = vpack.c.b16 %v483, %v482
  %v495 = vpack.c.b16 %v485, %v484
  %v496 = vpack.c.b16 %v487, %v486
  %vm506 = vcmask 130048
  %v508 = vsel %vm506, %v357, 0
  %v511 = vsel %vm506, %v359, 0
  %v514 = vsel %vm506, %v361, 0
  %v517 = vsel %vm506, %v363, 0
  %v520 = vsel %vm506, %v365, 0
  %v523 = vsel %vm506, %v367, 0
  %v526 = vsel %vm506, %v369, 0
  %v529 = vsel %vm506, %v371, 0
  %v532 = vsel %vm506, %v373, 0
  %v535 = vsel %vm506, %v375, 0
  %v538 = vsel %vm506, %v377, 0
  %v541 = vsel %vm506, %v379, 0
  %v544 = vsel %vm506, %v381, 0
  %v547 = vsel %vm506, %v383, 0
  %v550 = vsel %vm506, %v385, 0
  %v553 = vsel %vm506, %v387, 0
  %v556 = vsel %vm506, %v389, 0
  %v559 = vsel %vm506, %v391, 0
  %v562 = vsel %vm506, %v393, 0
  %v565 = vsel %vm506, %v395, 0
  %v568 = vsel %vm506, %v397, 0
  %v571 = vsel %vm506, %v399, 0
  %v574 = vsel %vm506, %v401, 0
  %v577 = vsel %vm506, %v403, 0
  %v580 = vsel %vm506, %v405, 0
  %v583 = vsel %vm506, %v407, 0
  %v586 = vsel %vm506, %v409, 0
  %v589 = vsel %vm506, %v411, 0
  %v592 = vsel %vm506, %v413, 0
  %v595 = vsel %vm506, %v415, 0
  %v598 = vsel %vm506, %v417, 0
  %v601 = vsel %vm506, %v419, 0
  %603 = vmatprep.subr.bf16.mxu0 0
  %604 = vmatpush1.bf16.msra.mxu0 %v495
  %605 = vmatprep.subr.bf16.mxu0 0
  %606 = vmatpush1.bf16.msra.mxu0 %v494
  %607 = vmatprep.subr.bf16.mxu0 0
  %608 = vmatpush1.bf16.msra.mxu0 %v493
  %609 = vmatprep.subr.bf16.mxu0 0
  %610 = vmatpush1.bf16.msra.mxu0 %v492
  %611 = vmatprep.subr.bf16.mxu0 0
  %612 = vmatpush1.bf16.msra.mxu0 %v491
  %613 = vmatprep.subr.bf16.mxu0 0
  %614 = vmatpush1.bf16.msra.mxu0 %v490
  %615 = vmatprep.subr.bf16.mxu0 0
  %616 = vmatpush1.bf16.msra.mxu0 %v489
  %617 = vmatprep.subr.bf16.mxu0 0
  %618 = vmatpush1.bf16.msra.mxu0 %v488
  %619 = vmatprep.subr.bf16.mxu0 0
  %620 = vmatpush2.bf16.msra.mxu0 0
  %621 = vmatprep.subr.bf16.mxu0 0
  %622 = vmatpush2.bf16.msra.mxu0 0
  %623 = vmatprep.subr.bf16.mxu0 0
  %624 = vmatpush2.bf16.msra.mxu0 0
  %625 = vmatprep.subr.bf16.mxu0 0
  %626 = vmatpush2.bf16.msra.mxu0 0
  %627 = vmatprep.subr.bf16.mxu0 0
  %628 = vmatpush2.bf16.msra.mxu0 0
  %629 = vmatprep.subr.bf16.mxu0 0
  %630 = vmatpush2.bf16.msra.mxu0 0
  %631 = vmatprep.subr.bf16.mxu0 0
  %632 = vmatpush2.bf16.msra.mxu0 0
  %633 = vmatprep.subr.bf16.mxu0 0
  %634 = vmatpush2.bf16.msra.mxu0 %v496
  %635 = vmatprep.mubr.bf16.mxu0 %v508
  %636 = vmatmul.mubr.bf16.gmra.mxu0 %v356
  %v637 = vpop.f32.mrf.mxu0
  %v638 = vadd.f32 0.0, %v637
  %v639 = vpop.f32.mrf.mxu0
  %v640 = vpop.f32.mrf.mxu0
  %v641 = vadd.f32 0.0, %v640
  %v642 = vpop.f32.mrf.mxu0
  %643 = vmatprep.mubr.bf16.mxu0 %v511
  %644 = vmatmul.mubr.bf16.gmra.mxu0 %v358
  %v645 = vpop.f32.mrf.mxu0
  %v646 = vadd.f32 0.0, %v645
  %v647 = vpop.f32.mrf.mxu0
  %v648 = vpop.f32.mrf.mxu0
  %v649 = vadd.f32 0.0, %v648
  %v650 = vpop.f32.mrf.mxu0
  %651 = vmatprep.mubr.bf16.mxu0 %v514
  %652 = vmatmul.mubr.bf16.gmra.mxu0 %v360
  %v653 = vpop.f32.mrf.mxu0
  %v654 = vadd.f32 0.0, %v653
  %v655 = vpop.f32.mrf.mxu0
  %v656 = vpop.f32.mrf.mxu0
  %v657 = vadd.f32 0.0, %v656
  %v658 = vpop.f32.mrf.mxu0
  %659 = vmatprep.mubr.bf16.mxu0 %v517
  %660 = vmatmul.mubr.bf16.gmra.mxu0 %v362
  %v661 = vpop.f32.mrf.mxu0
  %v662 = vadd.f32 0.0, %v661
  %v663 = vpop.f32.mrf.mxu0
  %v664 = vpop.f32.mrf.mxu0
  %v665 = vadd.f32 0.0, %v664
  %v666 = vpop.f32.mrf.mxu0
  %667 = vmatprep.mubr.bf16.mxu0 %v520
  %668 = vmatmul.mubr.bf16.gmra.mxu0 %v364
  %v669 = vpop.f32.mrf.mxu0
  %v670 = vadd.f32 0.0, %v669
  %v671 = vpop.f32.mrf.mxu0
  %v672 = vpop.f32.mrf.mxu0
  %v673 = vadd.f32 0.0, %v672
  %v674 = vpop.f32.mrf.mxu0
  %675 = vmatprep.mubr.bf16.mxu0 %v523
  %676 = vmatmul.mubr.bf16.gmra.mxu0 %v366
  %v677 = vpop.f32.mrf.mxu0
  %v678 = vadd.f32 0.0, %v677
  %v679 = vpop.f32.mrf.mxu0
  %v680 = vpop.f32.mrf.mxu0
  %v681 = vadd.f32 0.0, %v680
  %v682 = vpop.f32.mrf.mxu0
  %683 = vmatprep.mubr.bf16.mxu0 %v526
  %684 = vmatmul.mubr.bf16.gmra.mxu0 %v368
  %v685 = vpop.f32.mrf.mxu0
  %v686 = vadd.f32 0.0, %v685
  %v687 = vpop.f32.mrf.mxu0
  %v688 = vpop.f32.mrf.mxu0
  %v689 = vadd.f32 0.0, %v688
  %v690 = vpop.f32.mrf.mxu0
  %691 = vmatprep.mubr.bf16.mxu0 %v529
  %692 = vmatmul.mubr.bf16.gmra.mxu0 %v370
  %v693 = vpop.f32.mrf.mxu0
  %v694 = vadd.f32 0.0, %v693
  %v695 = vpop.f32.mrf.mxu0
  %v696 = vpop.f32.mrf.mxu0
  %v697 = vadd.f32 0.0, %v696
  %v698 = vpop.f32.mrf.mxu0
  %699 = vmatprep.mubr.bf16.mxu0 %v532
  %700 = vmatmul.mubr.bf16.gmra.mxu0 %v372
  %v701 = vpop.f32.mrf.mxu0
  %v702 = vadd.f32 0.0, %v701
  %v703 = vpop.f32.mrf.mxu0
  %v704 = vpop.f32.mrf.mxu0
  %v705 = vadd.f32 0.0, %v704
  %v706 = vpop.f32.mrf.mxu0
  %707 = vmatprep.mubr.bf16.mxu0 %v535
  %708 = vmatmul.mubr.bf16.gmra.mxu0 %v374
  %v709 = vpop.f32.mrf.mxu0
  %v710 = vadd.f32 0.0, %v709
  %v711 = vpop.f32.mrf.mxu0
  %v712 = vpop.f32.mrf.mxu0
  %v713 = vadd.f32 0.0, %v712
  %v714 = vpop.f32.mrf.mxu0
  %715 = vmatprep.mubr.bf16.mxu0 %v538
  %716 = vmatmul.mubr.bf16.gmra.mxu0 %v376
  %v717 = vpop.f32.mrf.mxu0
  %v718 = vadd.f32 0.0, %v717
  %v719 = vpop.f32.mrf.mxu0
  %v720 = vpop.f32.mrf.mxu0
  %v721 = vadd.f32 0.0, %v720
  %v722 = vpop.f32.mrf.mxu0
  %723 = vmatprep.mubr.bf16.mxu0 %v541
  %724 = vmatmul.mubr.bf16.gmra.mxu0 %v378
  %v725 = vpop.f32.mrf.mxu0
  %v726 = vadd.f32 0.0, %v725
  %v727 = vpop.f32.mrf.mxu0
  %v728 = vpop.f32.mrf.mxu0
  %v729 = vadd.f32 0.0, %v728
  %v730 = vpop.f32.mrf.mxu0
  %731 = vmatprep.mubr.bf16.mxu0 %v544
  %732 = vmatmul.mubr.bf16.gmra.mxu0 %v380
  %v733 = vpop.f32.mrf.mxu0
  %v734 = vadd.f32 0.0, %v733
  %v735 = vpop.f32.mrf.mxu0
  %v736 = vpop.f32.mrf.mxu0
  %v737 = vadd.f32 0.0, %v736
  %v738 = vpop.f32.mrf.mxu0
  %739 = vmatprep.mubr.bf16.mxu0 %v547
  %740 = vmatmul.mubr.bf16.gmra.mxu0 %v382
  %v741 = vpop.f32.mrf.mxu0
  %v742 = vadd.f32 0.0, %v741
  %v743 = vpop.f32.mrf.mxu0
  %v744 = vpop.f32.mrf.mxu0
  %v745 = vadd.f32 0.0, %v744
  %v746 = vpop.f32.mrf.mxu0
  %747 = vmatprep.mubr.bf16.mxu0 %v550
  %748 = vmatmul.mubr.bf16.gmra.mxu0 %v384
  %v749 = vpop.f32.mrf.mxu0
  %v750 = vadd.f32 0.0, %v749
  %v751 = vpop.f32.mrf.mxu0
  %v752 = vpop.f32.mrf.mxu0
  %v753 = vadd.f32 0.0, %v752
  %v754 = vpop.f32.mrf.mxu0
  %755 = vmatprep.mubr.bf16.mxu0 %v553
  %756 = vmatmul.mubr.bf16.gmra.mxu0 %v386
  %v757 = vpop.f32.mrf.mxu0
  %v758 = vadd.f32 0.0, %v757
  %v759 = vpop.f32.mrf.mxu0
  %v760 = vpop.f32.mrf.mxu0
  %v761 = vadd.f32 0.0, %v760
  %v762 = vpop.f32.mrf.mxu0
  %763 = vmatprep.mubr.bf16.mxu0 %v556
  %764 = vmatmul.mubr.bf16.gmra.mxu0 %v388
  %v765 = vpop.f32.mrf.mxu0
  %v766 = vadd.f32 0.0, %v765
  %v767 = vpop.f32.mrf.mxu0
  %v768 = vpop.f32.mrf.mxu0
  %v769 = vadd.f32 0.0, %v768
  %v770 = vpop.f32.mrf.mxu0
  %771 = vmatprep.mubr.bf16.mxu0 %v559
  %772 = vmatmul.mubr.bf16.gmra.mxu0 %v390
  %v773 = vpop.f32.mrf.mxu0
  %v774 = vadd.f32 0.0, %v773
  %v775 = vpop.f32.mrf.mxu0
  %v776 = vpop.f32.mrf.mxu0
  %v777 = vadd.f32 0.0, %v776
  %v778 = vpop.f32.mrf.mxu0
  %779 = vmatprep.mubr.bf16.mxu0 %v562
  %780 = vmatmul.mubr.bf16.gmra.mxu0 %v392
  %v781 = vpop.f32.mrf.mxu0
  %v782 = vadd.f32 0.0, %v781
  %v783 = vpop.f32.mrf.mxu0
  %v784 = vpop.f32.mrf.mxu0
  %v785 = vadd.f32 0.0, %v784
  %v786 = vpop.f32.mrf.mxu0
  %787 = vmatprep.mubr.bf16.mxu0 %v565
  %788 = vmatmul.mubr.bf16.gmra.mxu0 %v394
  %v789 = vpop.f32.mrf.mxu0
  %v790 = vadd.f32 0.0, %v789
  %v791 = vpop.f32.mrf.mxu0
  %v792 = vpop.f32.mrf.mxu0
  %v793 = vadd.f32 0.0, %v792
  %v794 = vpop.f32.mrf.mxu0
  %795 = vmatprep.mubr.bf16.mxu0 %v568
  %796 = vmatmul.mubr.bf16.gmra.mxu0 %v396
  %v797 = vpop.f32.mrf.mxu0
  %v798 = vadd.f32 0.0, %v797
  %v799 = vpop.f32.mrf.mxu0
  %v800 = vpop.f32.mrf.mxu0
  %v801 = vadd.f32 0.0, %v800
  %v802 = vpop.f32.mrf.mxu0
  %803 = vmatprep.mubr.bf16.mxu0 %v571
  %804 = vmatmul.mubr.bf16.gmra.mxu0 %v398
  %v805 = vpop.f32.mrf.mxu0
  %v806 = vadd.f32 0.0, %v805
  %v807 = vpop.f32.mrf.mxu0
  %v808 = vpop.f32.mrf.mxu0
  %v809 = vadd.f32 0.0, %v808
  %v810 = vpop.f32.mrf.mxu0
  %811 = vmatprep.mubr.bf16.mxu0 %v574
  %812 = vmatmul.mubr.bf16.gmra.mxu0 %v400
  %v813 = vpop.f32.mrf.mxu0
  %v814 = vadd.f32 0.0, %v813
  %v815 = vpop.f32.mrf.mxu0
  %v816 = vpop.f32.mrf.mxu0
  %v817 = vadd.f32 0.0, %v816
  %v818 = vpop.f32.mrf.mxu0
  %819 = vmatprep.mubr.bf16.mxu0 %v577
  %820 = vmatmul.mubr.bf16.gmra.mxu0 %v402
  %v821 = vpop.f32.mrf.mxu0
  %v822 = vadd.f32 0.0, %v821
  %v823 = vpop.f32.mrf.mxu0
  %v824 = vpop.f32.mrf.mxu0
  %v825 = vadd.f32 0.0, %v824
  %v826 = vpop.f32.mrf.mxu0
  %827 = vmatprep.mubr.bf16.mxu0 %v580
  %828 = vmatmul.mubr.bf16.gmra.mxu0 %v404
  %v829 = vpop.f32.mrf.mxu0
  %v830 = vadd.f32 0.0, %v829
  %v831 = vpop.f32.mrf.mxu0
  %v832 = vpop.f32.mrf.mxu0
  %v833 = vadd.f32 0.0, %v832
  %v834 = vpop.f32.mrf.mxu0
  %835 = vmatprep.mubr.bf16.mxu0 %v583
  %836 = vmatmul.mubr.bf16.gmra.mxu0 %v406
  %v837 = vpop.f32.mrf.mxu0
  %v838 = vadd.f32 0.0, %v837
  %v839 = vpop.f32.mrf.mxu0
  %v840 = vpop.f32.mrf.mxu0
  %v841 = vadd.f32 0.0, %v840
  %v842 = vpop.f32.mrf.mxu0
  %843 = vmatprep.mubr.bf16.mxu0 %v586
  %844 = vmatmul.mubr.bf16.gmra.mxu0 %v408
  %v845 = vpop.f32.mrf.mxu0
  %v846 = vadd.f32 0.0, %v845
  %v847 = vpop.f32.mrf.mxu0
  %v848 = vpop.f32.mrf.mxu0
  %v849 = vadd.f32 0.0, %v848
  %v850 = vpop.f32.mrf.mxu0
  %851 = vmatprep.mubr.bf16.mxu0 %v589
  %852 = vmatmul.mubr.bf16.gmra.mxu0 %v410
  %v853 = vpop.f32.mrf.mxu0
  %v854 = vadd.f32 0.0, %v853
  %v855 = vpop.f32.mrf.mxu0
  %v856 = vpop.f32.mrf.mxu0
  %v857 = vadd.f32 0.0, %v856
  %v858 = vpop.f32.mrf.mxu0
  %859 = vmatprep.mubr.bf16.mxu0 %v592
  %860 = vmatmul.mubr.bf16.gmra.mxu0 %v412
  %v861 = vpop.f32.mrf.mxu0
  %v862 = vadd.f32 0.0, %v861
  %v863 = vpop.f32.mrf.mxu0
  %v864 = vpop.f32.mrf.mxu0
  %v865 = vadd.f32 0.0, %v864
  %v866 = vpop.f32.mrf.mxu0
  %867 = vmatprep.mubr.bf16.mxu0 %v595
  %868 = vmatmul.mubr.bf16.gmra.mxu0 %v414
  %v869 = vpop.f32.mrf.mxu0
  %v870 = vadd.f32 0.0, %v869
  %v871 = vpop.f32.mrf.mxu0
  %v872 = vpop.f32.mrf.mxu0
  %v873 = vadd.f32 0.0, %v872
  %v874 = vpop.f32.mrf.mxu0
  %875 = vmatprep.mubr.bf16.mxu0 %v598
  %876 = vmatmul.mubr.bf16.gmra.mxu0 %v416
  %v877 = vpop.f32.mrf.mxu0
  %v878 = vadd.f32 0.0, %v877
  %v879 = vpop.f32.mrf.mxu0
  %v880 = vpop.f32.mrf.mxu0
  %v881 = vadd.f32 0.0, %v880
  %v882 = vpop.f32.mrf.mxu0
  %883 = vmatprep.mubr.bf16.mxu0 %v601
  %884 = vmatmul.mubr.bf16.gmra.mxu0 %v418
  %v885 = vpop.f32.mrf.mxu0
  %v886 = vadd.f32 0.0, %v885
  %v887 = vpop.f32.mrf.mxu0
  %v888 = vpop.f32.mrf.mxu0
  %v889 = vadd.f32 0.0, %v888
  %v890 = vpop.f32.mrf.mxu0
  %891 = vdwg.mxu0
  %v892 = vld [vmem:[%s2] sm:$0x1]
  %v894 = vlaneseq
  %v895 = vshrl.u32 %v894, 7
  %v896 = vsub.s32 0, %v895
  %v897 = vrot.slane %v892, %v896
  %v899 = vmul.f32 %v638, %v897
  %v900 = vmul.f32 %v641, %v897
  %v901 = vmul.f32 %v646, %v897
  %v902 = vmul.f32 %v649, %v897
  %v903 = vmul.f32 %v654, %v897
  %v904 = vmul.f32 %v657, %v897
  %v905 = vmul.f32 %v662, %v897
  %v906 = vmul.f32 %v665, %v897
  %v907 = vmul.f32 %v670, %v897
  %v908 = vmul.f32 %v673, %v897
  %v909 = vmul.f32 %v678, %v897
  %v910 = vmul.f32 %v681, %v897
  %v911 = vmul.f32 %v686, %v897
  %v912 = vmul.f32 %v689, %v897
  %v913 = vmul.f32 %v694, %v897
  %v914 = vmul.f32 %v697, %v897
  %v915 = vmul.f32 %v702, %v897
  %v916 = vmul.f32 %v705, %v897
  %v917 = vmul.f32 %v710, %v897
  %v918 = vmul.f32 %v713, %v897
  %v919 = vmul.f32 %v718, %v897
  %v920 = vmul.f32 %v721, %v897
  %v921 = vmul.f32 %v726, %v897
  %v922 = vmul.f32 %v729, %v897
  %v923 = vmul.f32 %v734, %v897
  %v924 = vmul.f32 %v737, %v897
  %v925 = vmul.f32 %v742, %v897
  %v926 = vmul.f32 %v745, %v897
  %v927 = vmul.f32 %v750, %v897
  %v928 = vmul.f32 %v753, %v897
  %v929 = vmul.f32 %v758, %v897
  %v930 = vmul.f32 %v761, %v897
  %v931 = vmul.f32 %v766, %v897
  %v932 = vmul.f32 %v769, %v897
  %v933 = vmul.f32 %v774, %v897
  %v934 = vmul.f32 %v777, %v897
  %v935 = vmul.f32 %v782, %v897
  %v936 = vmul.f32 %v785, %v897
  %v937 = vmul.f32 %v790, %v897
  %v938 = vmul.f32 %v793, %v897
  %v939 = vmul.f32 %v798, %v897
  %v940 = vmul.f32 %v801, %v897
  %v941 = vmul.f32 %v806, %v897
  %v942 = vmul.f32 %v809, %v897
  %v943 = vmul.f32 %v814, %v897
  %v944 = vmul.f32 %v817, %v897
  %v945 = vmul.f32 %v822, %v897
  %v946 = vmul.f32 %v825, %v897
  %v947 = vmul.f32 %v830, %v897
  %v948 = vmul.f32 %v833, %v897
  %v949 = vmul.f32 %v838, %v897
  %v950 = vmul.f32 %v841, %v897
  %v951 = vmul.f32 %v846, %v897
  %v952 = vmul.f32 %v849, %v897
  %v953 = vmul.f32 %v854, %v897
  %v954 = vmul.f32 %v857, %v897
  %v955 = vmul.f32 %v862, %v897
  %v956 = vmul.f32 %v865, %v897
  %v957 = vmul.f32 %v870, %v897
  %v958 = vmul.f32 %v873, %v897
  %v959 = vmul.f32 %v878, %v897
  %v960 = vmul.f32 %v881, %v897
  %v961 = vmul.f32 %v886, %v897
  %v962 = vmul.f32 %v889, %v897
  %v963 = vld [vmem:[%s3] sm:$0x1]
  %v965 = vlaneseq
  %v966 = vshrl.u32 %v965, 7
  %v967 = vsub.s32 0, %v966
  %v968 = vrot.slane %v963, %v967
  %v970 = vadd.f32 %v899, %v968
  %v971 = vadd.f32 %v900, %v968
  %v972 = vadd.f32 %v901, %v968
  %v973 = vadd.f32 %v902, %v968
  %v974 = vadd.f32 %v903, %v968
  %v975 = vadd.f32 %v904, %v968
  %v976 = vadd.f32 %v905, %v968
  %v977 = vadd.f32 %v906, %v968
  %v978 = vadd.f32 %v907, %v968
  %v979 = vadd.f32 %v908, %v968
  %v980 = vadd.f32 %v909, %v968
  %v981 = vadd.f32 %v910, %v968
  %v982 = vadd.f32 %v911, %v968
  %v983 = vadd.f32 %v912, %v968
  %v984 = vadd.f32 %v913, %v968
  %v985 = vadd.f32 %v914, %v968
  %v986 = vadd.f32 %v915, %v968
  %v987 = vadd.f32 %v916, %v968
  %v988 = vadd.f32 %v917, %v968
  %v989 = vadd.f32 %v918, %v968
  %v990 = vadd.f32 %v919, %v968
  %v991 = vadd.f32 %v920, %v968
  %v992 = vadd.f32 %v921, %v968
  %v993 = vadd.f32 %v922, %v968
  %v994 = vadd.f32 %v923, %v968
  %v995 = vadd.f32 %v924, %v968
  %v996 = vadd.f32 %v925, %v968
  %v997 = vadd.f32 %v926, %v968
  %v998 = vadd.f32 %v927, %v968
  %v999 = vadd.f32 %v928, %v968
  %v1000 = vadd.f32 %v929, %v968
  %v1001 = vadd.f32 %v930, %v968
  %v1002 = vadd.f32 %v931, %v968
  %v1003 = vadd.f32 %v932, %v968
  %v1004 = vadd.f32 %v933, %v968
  %v1005 = vadd.f32 %v934, %v968
  %v1006 = vadd.f32 %v935, %v968
  %v1007 = vadd.f32 %v936, %v968
  %v1008 = vadd.f32 %v937, %v968
  %v1009 = vadd.f32 %v938, %v968
  %v1010 = vadd.f32 %v939, %v968
  %v1011 = vadd.f32 %v940, %v968
  %v1012 = vadd.f32 %v941, %v968
  %v1013 = vadd.f32 %v942, %v968
  %v1014 = vadd.f32 %v943, %v968
  %v1015 = vadd.f32 %v944, %v968
  %v1016 = vadd.f32 %v945, %v968
  %v1017 = vadd.f32 %v946, %v968
  %v1018 = vadd.f32 %v947, %v968
  %v1019 = vadd.f32 %v948, %v968
  %v1020 = vadd.f32 %v949, %v968
  %v1021 = vadd.f32 %v950, %v968
  %v1022 = vadd.f32 %v951, %v968
  %v1023 = vadd.f32 %v952, %v968
  %v1024 = vadd.f32 %v953, %v968
  %v1025 = vadd.f32 %v954, %v968
  %v1026 = vadd.f32 %v955, %v968
  %v1027 = vadd.f32 %v956, %v968
  %v1028 = vadd.f32 %v957, %v968
  %v1029 = vadd.f32 %v958, %v968
  %v1030 = vadd.f32 %v959, %v968
  %v1031 = vadd.f32 %v960, %v968
  %v1032 = vadd.f32 %v961, %v968
  %v1033 = vadd.f32 %v962, %v968
  %v1034 = vtanh.pop %v970
  %v1035 = vtanh.pop %v971
  %v1036 = vtanh.pop %v972
  %v1037 = vtanh.pop %v973
  %v1038 = vtanh.pop %v974
  %v1039 = vtanh.pop %v975
  %v1040 = vtanh.pop %v976
  %v1041 = vtanh.pop %v977
  %v1042 = vtanh.pop %v978
  %v1043 = vtanh.pop %v979
  %v1044 = vtanh.pop %v980
  %v1045 = vtanh.pop %v981
  %v1046 = vtanh.pop %v982
  %v1047 = vtanh.pop %v983
  %v1048 = vtanh.pop %v984
  %v1049 = vtanh.pop %v985
  %v1050 = vtanh.pop %v986
  %v1051 = vtanh.pop %v987
  %v1052 = vtanh.pop %v988
  %v1053 = vtanh.pop %v989
  %v1054 = vtanh.pop %v990
  %v1055 = vtanh.pop %v991
  %v1056 = vtanh.pop %v992
  %v1057 = vtanh.pop %v993
  %v1058 = vtanh.pop %v994
  %v1059 = vtanh.pop %v995
  %v1060 = vtanh.pop %v996
  %v1061 = vtanh.pop %v997
  %v1062 = vtanh.pop %v998
  %v1063 = vtanh.pop %v999
  %v1064 = vtanh.pop %v1000
  %v1065 = vtanh.pop %v1001
  %v1066 = vtanh.pop %v1002
  %v1067 = vtanh.pop %v1003
  %v1068 = vtanh.pop %v1004
  %v1069 = vtanh.pop %v1005
  %v1070 = vtanh.pop %v1006
  %v1071 = vtanh.pop %v1007
  %v1072 = vtanh.pop %v1008
  %v1073 = vtanh.pop %v1009
  %v1074 = vtanh.pop %v1010
  %v1075 = vtanh.pop %v1011
  %v1076 = vtanh.pop %v1012
  %v1077 = vtanh.pop %v1013
  %v1078 = vtanh.pop %v1014
  %v1079 = vtanh.pop %v1015
  %v1080 = vtanh.pop %v1016
  %v1081 = vtanh.pop %v1017
  %v1082 = vtanh.pop %v1018
  %v1083 = vtanh.pop %v1019
  %v1084 = vtanh.pop %v1020
  %v1085 = vtanh.pop %v1021
  %v1086 = vtanh.pop %v1022
  %v1087 = vtanh.pop %v1023
  %v1088 = vtanh.pop %v1024
  %v1089 = vtanh.pop %v1025
  %v1090 = vtanh.pop %v1026
  %v1091 = vtanh.pop %v1027
  %v1092 = vtanh.pop %v1028
  %v1093 = vtanh.pop %v1029
  %v1094 = vtanh.pop %v1030
  %v1095 = vtanh.pop %v1031
  %v1096 = vtanh.pop %v1032
  %v1097 = vtanh.pop %v1033
  %1098 = vst [vmem:[%s4] sm:$0xff] %v1034
  %1099 = vst [vmem:[%s4 + $0x8] sm:$0xff] %v1035
  %1100 = vst [vmem:[%s4 + $0x10] sm:$0xff] %v1036
  %1101 = vst [vmem:[%s4 + $0x18] sm:$0xff] %v1037
  %1102 = vst [vmem:[%s4 + $0x20] sm:$0xff] %v1038
  %1103 = vst [vmem:[%s4 + $0x28] sm:$0xff] %v1039
  %1104 = vst [vmem:[%s4 + $0x30] sm:$0xff] %v1040
  %1105 = vst [vmem:[%s4 + $0x38] sm:$0xff] %v1041
  %1106 = vst [vmem:[%s4 + $0x40] sm:$0xff] %v1042
  %1107 = vst [vmem:[%s4 + $0x48] sm:$0xff] %v1043
  %1108 = vst [vmem:[%s4 + $0x50] sm:$0xff] %v1044
  %1109 = vst [vmem:[%s4 + $0x58] sm:$0xff] %v1045
  %1110 = vst [vmem:[%s4 + $0x60] sm:$0xff] %v1046
  %1111 = vst [vmem:[%s4 + $0x68] sm:$0xff] %v1047
  %1112 = vst [vmem:[%s4 + $0x70] sm:$0xff] %v1048
  %1113 = vst [vmem:[%s4 + $0x78] sm:$0xff] %v1049
  %1114 = vst [vmem:[%s4 + $0x80] sm:$0xff] %v1050
  %1115 = vst [vmem:[%s4 + $0x88] sm:$0xff] %v1051
  %1116 = vst [vmem:[%s4 + $0x90] sm:$0xff] %v1052
  %1117 = vst [vmem:[%s4 + $0x98] sm:$0xff] %v1053
  %1118 = vst [vmem:[%s4 + $0xa0] sm:$0xff] %v1054
  %1119 = vst [vmem:[%s4 + $0xa8] sm:$0xff] %v1055
  %1120 = vst [vmem:[%s4 + $0xb0] sm:$0xff] %v1056
  %1121 = vst [vmem:[%s4 + $0xb8] sm:$0xff] %v1057
  %1122 = vst [vmem:[%s4 + $0xc0] sm:$0xff] %v1058
  %1123 = vst [vmem:[%s4 + $0xc8] sm:$0xff] %v1059
  %1124 = vst [vmem:[%s4 + $0xd0] sm:$0xff] %v1060
  %1125 = vst [vmem:[%s4 + $0xd8] sm:$0xff] %v1061
  %1126 = vst [vmem:[%s4 + $0xe0] sm:$0xff] %v1062
  %1127 = vst [vmem:[%s4 + $0xe8] sm:$0xff] %v1063
  %1128 = vst [vmem:[%s4 + $0xf0] sm:$0xff] %v1064
  %1129 = vst [vmem:[%s4 + $0xf8] sm:$0xff] %v1065
  %1130 = vst [vmem:[%s4 + $0x100] sm:$0xff] %v1066
  %1131 = vst [vmem:[%s4 + $0x108] sm:$0xff] %v1067
  %1132 = vst [vmem:[%s4 + $0x110] sm:$0xff] %v1068
  %1133 = vst [vmem:[%s4 + $0x118] sm:$0xff] %v1069
  %1134 = vst [vmem:[%s4 + $0x120] sm:$0xff] %v1070
  %1135 = vst [vmem:[%s4 + $0x128] sm:$0xff] %v1071
  %1136 = vst [vmem:[%s4 + $0x130] sm:$0xff] %v1072
  %1137 = vst [vmem:[%s4 + $0x138] sm:$0xff] %v1073
  %1138 = vst [vmem:[%s4 + $0x140] sm:$0xff] %v1074
  %1139 = vst [vmem:[%s4 + $0x148] sm:$0xff] %v1075
  %1140 = vst [vmem:[%s4 + $0x150] sm:$0xff] %v1076
  %1141 = vst [vmem:[%s4 + $0x158] sm:$0xff] %v1077
  %1142 = vst [vmem:[%s4 + $0x160] sm:$0xff] %v1078
  %1143 = vst [vmem:[%s4 + $0x168] sm:$0xff] %v1079
  %1144 = vst [vmem:[%s4 + $0x170] sm:$0xff] %v1080
  %1145 = vst [vmem:[%s4 + $0x178] sm:$0xff] %v1081
  %1146 = vst [vmem:[%s4 + $0x180] sm:$0xff] %v1082
  %1147 = vst [vmem:[%s4 + $0x188] sm:$0xff] %v1083
  %1148 = vst [vmem:[%s4 + $0x190] sm:$0xff] %v1084
  %1149 = vst [vmem:[%s4 + $0x198] sm:$0xff] %v1085
  %1150 = vst [vmem:[%s4 + $0x1a0] sm:$0xff] %v1086
  %1151 = vst [vmem:[%s4 + $0x1a8] sm:$0xff] %v1087
  %1152 = vst [vmem:[%s4 + $0x1b0] sm:$0xff] %v1088
  %1153 = vst [vmem:[%s4 + $0x1b8] sm:$0xff] %v1089
  %1154 = vst [vmem:[%s4 + $0x1c0] sm:$0xff] %v1090
  %1155 = vst [vmem:[%s4 + $0x1c8] sm:$0xff] %v1091
  %1156 = vst [vmem:[%s4 + $0x1d0] sm:$0xff] %v1092
  %1157 = vst [vmem:[%s4 + $0x1d8] sm:$0xff] %v1093
  %1158 = vst [vmem:[%s4 + $0x1e0] sm:$0xff] %v1094
  %1159 = vst [vmem:[%s4 + $0x1e8] sm:$0xff] %v1095
  %1160 = vst [vmem:[%s4 + $0x1f0] sm:$0xff] %v1096
  %1161 = vst [vmem:[%s4 + $0x1f8] sm:$0xff] %v1097
  // Predicated region
  $region18: #{unet_generator_forward.19} parent=0 // pred_check
    _
  $region19: #{unet_generator_forward.19} parent=0 // pred_check_branch
    %1163 = sbr.rel (0) target = $region21
  $region20: #{unet_generator_forward.19} parent=0 // pred_region
    _
  $region21: #{unet_generator_forward.19} parent=0 // pred_fallthru
    _
  // Predicated region
  $region22: #{unet_generator_forward.19} parent=0 // pred_check
    _
  $region23: #{unet_generator_forward.19} parent=0 // pred_check_branch
    %1165 = sbr.rel (0) target = $region25
  $region24: #{unet_generator_forward.19} parent=0 // pred_region
    _
  $region25: #{unet_generator_forward.19} parent=0 // pred_fallthru
    _

</llo_original>
